<compile_context>
chip_gen: v7x
topology: tpu7x:2x2x1
jax: 0.10.0
libtpu: 0.0.40
codegen_flags: <defaults>
</compile_context>

<pallas_src>
import functools

import jax
import jax.numpy as jnp
from jax.experimental import pallas as pl
from jax.experimental.pallas import tpu as pltpu


def _round_up(x, m):
    return ((x + m - 1) // m) * m


def _basic_block_kernel(x_ref, w1_ref, b1_ref, w2_ref, b2_ref, o_ref,
                        xpad_ref, h1pad_ref, *col_refs, stride, fuse_k):
    """Fused BasicBlock forward for one batch block of B_t images.

    x_ref:      (B_t, H, W, Ck_in)        bf16 NHWC input (channel-padded)
    w1_ref:     (9*Ck_in, Ck_mid)         conv1 weights (BN1 scale folded), bf16
    b1_ref:     (1, Ck_mid)               folded BN1 bias, f32
    w2_ref:     (9*Ck_mid, Cp_out)        conv2 weights (BN2 scale folded), bf16
    b2_ref:     (1, Cp_out)               folded BN2 bias, f32
    o_ref:      (B_t, H1*W1, Cp_out)      lane-dense f32 output
    xpad_ref:   (B_t, H+2, W+2, Ck_in)    bf16 scratch, haloed input
    h1pad_ref:  (B_t, H1+2, W1+2, Ck_mid) bf16 scratch, haloed stage-1 act
    col_refs:   ((M, 9*Ck_in), (M, 9*Ck_mid)) bf16 im2col scratch (fused path)
    """
    Bt, H, W, Ck_in = x_ref.shape
    _, Hp, Wp, Ck_mid = h1pad_ref.shape
    H1, W1 = Hp - 2, Wp - 2
    Cp_out = o_ref.shape[-1]
    M = Bt * H1 * W1
    taps = [(kh, kw) for kh in range(3) for kw in range(3)]
    zdt = xpad_ref.dtype

    def conv3x3(pad_ref, write_interior, Ck, w_ref, col_ref, s, h_in, w_in):
        # Zero only the 1-px halo border; interior is fully overwritten below.
        pad_ref[:, 0:1, :, :] = jnp.zeros((Bt, 1, w_in + 2, Ck), zdt)
        pad_ref[:, h_in + 1:h_in + 2, :, :] = jnp.zeros((Bt, 1, w_in + 2, Ck), zdt)
        pad_ref[:, :, 0:1, :] = jnp.zeros((Bt, h_in + 2, 1, Ck), zdt)
        pad_ref[:, :, w_in + 1:w_in + 2, :] = jnp.zeros((Bt, h_in + 2, 1, Ck), zdt)
        write_interior()
        padded = pad_ref[...]
        hs = (H1 - 1) * s + 1
        ws = (W1 - 1) * s + 1
        if col_ref is not None:
            # Fused im2col: K = 9*Ck single MXU matmul (v6e/v7x 256-deep MXU).
            for t, (kh, kw) in enumerate(taps):
                patch = padded[:, kh:kh + hs:s, kw:kw + ws:s, :]
                col_ref[:, t * Ck:(t + 1) * Ck] = patch.reshape(M, Ck)
            return jnp.dot(col_ref[...], w_ref[...],
                           preferred_element_type=jnp.float32)
        # 9-tap accumulating form (v5e, per-tap K >= 128): no im2col copies.
        acc = jnp.zeros((M, w_ref.shape[-1]), jnp.float32)
        for t, (kh, kw) in enumerate(taps):
            patch = padded[:, kh:kh + hs:s, kw:kw + ws:s, :].reshape(M, Ck)
            acc = acc + jnp.dot(patch, w_ref[t * Ck:(t + 1) * Ck, :],
                                preferred_element_type=jnp.float32)
        return acc

    col1 = col_refs[0] if fuse_k else None
    col2 = col_refs[1] if fuse_k else None

    # ---------- stage 1: conv1(stride) + BN1 + ReLU (kept in VMEM) ----------
    def write_x():
        xpad_ref[:, 1:H + 1, 1:W + 1, :] = x_ref[...]

    acc1 = conv3x3(xpad_ref, write_x, Ck_in, w1_ref, col1, stride, H, W)
    y1 = jnp.maximum(acc1 + b1_ref[...], 0.0).astype(zdt)        # (M, Ck_mid)

    # ---------- stage 2: conv2(stride=1) + BN2 + ReLU ----------
    def write_y1():
        h1pad_ref[:, 1:H1 + 1, 1:W1 + 1, :] = y1.reshape(Bt, H1, W1, Ck_mid)

    acc2 = conv3x3(h1pad_ref, write_y1, Ck_mid, w2_ref, col2, 1, H1, W1)
    o_ref[...] = jnp.maximum(acc2 + b2_ref[...], 0.0).reshape(Bt, H1 * W1, Cp_out)


def basic_block_forward(x_nhwc, w1m, b1p, w2m, b2p, cout, stride=1):
    """NHWC f32 in, NHWC f32 out. w1m/w2m are BN-folded, padded, bf16 im2col
    weight matrices; b1p/b2p are padded f32 biases (see BasicBlockPallas)."""
    N, H, W, Cin = x_nhwc.shape
    Ck_in = w1m.shape[0] // 9
    Ck_mid = w1m.shape[1]
    Cp_out = w2m.shape[1]

    H1 = (H + 2 - 3) // stride + 1
    W1 = (W + 2 - 3) // stride + 1
    M_img = H1 * W1

    # Channel-pad + cast the input once so the in-kernel halo copy is a
    # full-channel-width store and the HBM read is bf16.
    if Ck_in > Cin:
        x_nhwc = jnp.pad(x_nhwc, ((0, 0), (0, 0), (0, 0), (0, Ck_in - Cin)))
    x_bf16 = x_nhwc.astype(jnp.bfloat16)

    # Generation-aware VMEM budget (v5e/v6e: 128 MiB physical, v7x: 64 MiB).
    try:
        vmem_cap = pltpu.get_tpu_info().vmem_capacity_bytes
    except Exception:
        vmem_cap = 64 * 1024 * 1024
    vmem_limit = min(int(vmem_cap * 0.82), 110 * 1024 * 1024)

    try:
        kind = jax.devices()[0].device_kind.lower()
    except Exception:
        kind = ""
    is_v5e = ("v5 lite" in kind) or ("v5e" in kind) or ("v5lite" in kind)
    # v5e's MXU is 128 deep: per-tap K >= 128 already fills it, so skip the
    # im2col copy there; keep the fused K = 9*C matmul on 256-deep v6e/v7x.
    fuse_k = not (is_v5e and min(Ck_in, Ck_mid) >= 128)

    # Batch block: keep M = B_t*H1*W1 large enough to feed the MXU, within a
    # conservative slice of the VMEM budget (lane-padded footprints).
    lane = lambda c: _round_up(c, 128)
    per_img = (
        2 * (H + 2) * (W + 2) * lane(Ck_in)                 # xpad scratch (bf16)
        + 2 * (H1 + 2) * (W1 + 2) * lane(Ck_mid)            # h1pad scratch (bf16)
        + (2 * M_img * (lane(9 * Ck_in) + lane(9 * Ck_mid)) if fuse_k else 0)
        + 2 * 2 * H * W * lane(Ck_in)                       # x block, dbl-buffered
        + 2 * 4 * M_img * Cp_out                            # out block, dbl-buffered
        + 4 * M_img * (lane(Ck_mid) + 2 * Cp_out)           # f32 accumulators
    )
    fixed = (2 * 2 * (w1m.shape[0] * lane(w1m.shape[1])
                      + w2m.shape[0] * lane(w2m.shape[1]))  # dbl-buffered weights
             + (2 << 20))                                   # slack
    budget = int(vmem_limit * 0.6)
    b_t = int(max(1, min(N, (budget - fixed) // max(per_img, 1))))
    while N % b_t:
        b_t -= 1
    M = b_t * M_img

    kernel = functools.partial(_basic_block_kernel, stride=stride, fuse_k=fuse_k)

    scratch = [
        pltpu.VMEM((b_t, H + 2, W + 2, Ck_in), jnp.bfloat16),
        pltpu.VMEM((b_t, H1 + 2, W1 + 2, Ck_mid), jnp.bfloat16),
    ]
    if fuse_k:
        scratch += [
            pltpu.VMEM((M, 9 * Ck_in), jnp.bfloat16),
            pltpu.VMEM((M, 9 * Ck_mid), jnp.bfloat16),
        ]

    out = pl.pallas_call(
        kernel,
        out_shape=jax.ShapeDtypeStruct((N, M_img, Cp_out), jnp.float32),
        grid=(N // b_t,),
        in_specs=[
            pl.BlockSpec((b_t, H, W, Ck_in), lambda n: (n, 0, 0, 0)),
            pl.BlockSpec((9 * Ck_in, Ck_mid), lambda n: (0, 0)),
            pl.BlockSpec((1, Ck_mid), lambda n: (0, 0)),
            pl.BlockSpec((9 * Ck_mid, Cp_out), lambda n: (0, 0)),
            pl.BlockSpec((1, Cp_out), lambda n: (0, 0)),
        ],
        out_specs=pl.BlockSpec((b_t, M_img, Cp_out), lambda n: (n, 0, 0)),
        scratch_shapes=scratch,
        compiler_params=pltpu.CompilerParams(
            dimension_semantics=("parallel",),   # split batch over TCs (v7x)
            vmem_limit_bytes=vmem_limit,
        ),
    )(x_bf16, w1m, b1p, w2m, b2p)

    # Free metadata reshape + slice off the output-channel padding.
    return out.reshape(N, H1, W1, Cp_out)[:, :, :, :cout]


class BasicBlockPallas:
    """Pallas implementation of plainnet.BasicBlock (no residual connection)."""

    expansion = 1
    eps = 1e-5  # PyTorch BatchNorm2d default

    def __init__(self, inplanes, planes, stride=1, key=None):
        if key is None:
            key = jax.random.PRNGKey(0)
        ks = jax.random.split(key, 10)

        self.inplanes, self.planes, self.stride = inplanes, planes, stride

        # conv weights, HWIO layout, deterministic init
        self.w1 = 0.1 * jax.random.normal(ks[0], (3, 3, inplanes, planes), jnp.float32)
        self.w2 = 0.1 * jax.random.normal(ks[1], (3, 3, planes, planes), jnp.float32)

        # BatchNorm parameters (inference / running-stats mode)
        self.gamma1 = 1.0 + 0.1 * jax.random.normal(ks[2], (planes,), jnp.float32)
        self.beta1 = 0.1 * jax.random.normal(ks[3], (planes,), jnp.float32)
        self.mean1 = 0.05 * jax.random.normal(ks[4], (planes,), jnp.float32)
        self.var1 = 1.0 + 0.1 * jax.random.uniform(ks[5], (planes,), jnp.float32)

        self.gamma2 = 1.0 + 0.1 * jax.random.normal(ks[6], (planes,), jnp.float32)
        self.beta2 = 0.1 * jax.random.normal(ks[7], (planes,), jnp.float32)
        self.mean2 = 0.05 * jax.random.normal(ks[8], (planes,), jnp.float32)
        self.var2 = 1.0 + 0.1 * jax.random.uniform(ks[9], (planes,), jnp.float32)

        self._prepare_kernel_params()

    def _folded_bn(self, gamma, beta, mean, var):
        scale = gamma / jnp.sqrt(var + self.eps)
        bias = beta - mean * scale
        return scale, bias

    def _prepare_kernel_params(self):
        """Fold BN scale into conv weights and pre-pack them once: contraction
        channels rounded to the bf16 sublane tile (16), final output channels
        to 128 (lane-dense store), im2col layout, bf16."""
        cin, cmid, cout = self.inplanes, self.planes, self.planes
        ck_in = _round_up(cin, 16)
        ck_mid = _round_up(cmid, 16)
        cp_out = _round_up(cout, 128)

        s1, b1 = self._folded_bn(self.gamma1, self.beta1, self.mean1, self.var1)
        s2, b2 = self._folded_bn(self.gamma2, self.beta2, self.mean2, self.var2)

        w1f = self.w1 * s1                       # fold BN1 scale into out-columns
        w2f = self.w2 * s2

        w1p = jnp.zeros((3, 3, ck_in, ck_mid), jnp.float32)
        w1p = w1p.at[:, :, :cin, :cmid].set(w1f)
        self.w1m = w1p.reshape(9 * ck_in, ck_mid).astype(jnp.bfloat16)
        self.b1p = jnp.zeros((1, ck_mid), jnp.float32).at[0, :cmid].set(b1)

        w2p = jnp.zeros((3, 3, ck_mid, cp_out), jnp.float32)
        w2p = w2p.at[:, :, :cmid, :cout].set(w2f)
        self.w2m = w2p.reshape(9 * ck_mid, cp_out).astype(jnp.bfloat16)
        self.b2p = jnp.zeros((1, cp_out), jnp.float32).at[0, :cout].set(b2)

    def __call__(self, x_nchw):
        # NCHW (PyTorch) -> NHWC (kernel layout)
        x = jnp.transpose(x_nchw, (0, 2, 3, 1)).astype(jnp.float32)
        out = basic_block_forward(x, self.w1m, self.b1p, self.w2m, self.b2p,
                                  self.planes, stride=self.stride)
        # NHWC -> NCHW
        return jnp.transpose(out, (0, 3, 1, 2))


def _reference_forward(block, x_nchw):
    """Pure-JAX reference (lax conv, bf16 operands / f32 accumulation)."""
    x = jnp.transpose(x_nchw, (0, 2, 3, 1)).astype(jnp.float32)

    def conv_bn_relu(x, w, gamma, beta, mean, var, stride):
        y = jax.lax.conv_general_dilated(
            x.astype(jnp.bfloat16), w.astype(jnp.bfloat16),
            window_strides=(stride, stride), padding=((1, 1), (1, 1)),
            dimension_numbers=("NHWC", "HWIO", "NHWC"),
            preferred_element_type=jnp.float32)
        scale = gamma / jnp.sqrt(var + block.eps)
        y = y * scale + (beta - mean * scale)
        return jnp.maximum(y, 0.0)

    y = conv_bn_relu(x, block.w1, block.gamma1, block.beta1,
                     block.mean1, block.var1, block.stride)
    y = conv_bn_relu(y, block.w2, block.gamma2, block.beta2,
                     block.mean2, block.var2, 1)
    return jnp.transpose(y, (0, 3, 1, 2))


if __name__ == "__main__":
    key = jax.random.PRNGKey(0)
    k_x, k_p1, k_p2 = jax.random.split(key, 3)

    # Small shapes consistent with the module: N=2, inplanes=4, planes=8, 16x16.
    x = jax.random.normal(k_x, (2, 4, 16, 16), jnp.float32)

    # stride = 1
    block1 = BasicBlockPallas(inplanes=4, planes=8, stride=1, key=k_p1)
    out1 = jax.block_until_ready(block1(x))
    ref1 = jax.block_until_ready(_reference_forward(block1, x))
    assert out1.shape == (2, 8, 16, 16), out1.shape
    assert jnp.allclose(out1, ref1, atol=2e-2, rtol=2e-2), \
        float(jnp.max(jnp.abs(out1 - ref1)))

    # stride = 2 (exercises the strided conv path)
    block2 = BasicBlockPallas(inplanes=4, planes=8, stride=2, key=k_p2)
    out2 = jax.block_until_ready(block2(x))
    ref2 = jax.block_until_ready(_reference_forward(block2, x))
    assert out2.shape == (2, 8, 8, 8), out2.shape
    assert jnp.allclose(out2, ref2, atol=2e-2, rtol=2e-2), \
        float(jnp.max(jnp.abs(out2 - ref2)))

    print("KERNEL_OK")
</pallas_src>

<mosaic_0001>
module attributes {stable_mosaic.version = 11 : i64} {
  func.func @_basic_block_kernel(%arg0: i32, %arg1: memref<2x16x16x16xbf16, #tpu.memory_space<vmem>>, %arg2: memref<144x16xbf16, #tpu.memory_space<vmem>>, %arg3: memref<1x16xf32, #tpu.memory_space<vmem>>, %arg4: memref<144x128xbf16, #tpu.memory_space<vmem>>, %arg5: memref<1x128xf32, #tpu.memory_space<vmem>>, %arg6: memref<2x256x128xf32, #tpu.memory_space<vmem>>, %arg7: memref<2x18x18x16xbf16, #tpu.memory_space<vmem>>, %arg8: memref<2x18x18x16xbf16, #tpu.memory_space<vmem>>, %arg9: memref<512x144xbf16, #tpu.memory_space<vmem>>, %arg10: memref<512x144xbf16, #tpu.memory_space<vmem>>) attributes {dimension_semantics = [#tpu.dimension_semantics<parallel>], iteration_bounds = array<i64: 1>, scalar_prefetch = 0 : i64, scratch_operands = 4 : i64, tpu.core_type = #tpu.core_type<tc>, window_params = [{transform_indices = @transform_0, window_bounds = array<i64: 2, 16, 16, 16>}, {pipeline_mode = #tpu.pipeline_mode<synchronous>, transform_indices = @transform_1, window_bounds = array<i64: 144, 16>}, {pipeline_mode = #tpu.pipeline_mode<synchronous>, transform_indices = @transform_2, window_bounds = array<i64: 1, 16>}, {pipeline_mode = #tpu.pipeline_mode<synchronous>, transform_indices = @transform_3, window_bounds = array<i64: 144, 128>}, {pipeline_mode = #tpu.pipeline_mode<synchronous>, transform_indices = @transform_4, window_bounds = array<i64: 1, 128>}, {transform_indices = @transform_5, window_bounds = array<i64: 2, 256, 128>}]} {
    %cst = arith.constant 0.000000e+00 : bf16
    %0 = vector.broadcast %cst : bf16 to vector<2x1x18x16xbf16>
    %c0 = arith.constant 0 : index
    %c0_0 = arith.constant 0 : index
    %c0_1 = arith.constant 0 : index
    %c0_2 = arith.constant 0 : index
    %1 = vector.load %arg7[%c0, %c0_0, %c0_1, %c0_2] : memref<2x18x18x16xbf16, #tpu.memory_space<vmem>>, vector<2x1x18x16xbf16>
    tpu.vector_store %arg7[%c0, %c0_0, %c0_1, %c0_2], %0 {strides = array<i32>} : memref<2x18x18x16xbf16, #tpu.memory_space<vmem>>, vector<2x1x18x16xbf16>,
    %cst_3 = arith.constant 0.000000e+00 : bf16
    %2 = vector.broadcast %cst_3 : bf16 to vector<2x1x18x16xbf16>
    %c0_4 = arith.constant 0 : index
    %c17 = arith.constant 17 : index
    %c0_5 = arith.constant 0 : index
    %c0_6 = arith.constant 0 : index
    %3 = vector.load %arg7[%c0_4, %c17, %c0_5, %c0_6] : memref<2x18x18x16xbf16, #tpu.memory_space<vmem>>, vector<2x1x18x16xbf16>
    tpu.vector_store %arg7[%c0_4, %c17, %c0_5, %c0_6], %2 {strides = array<i32>} : memref<2x18x18x16xbf16, #tpu.memory_space<vmem>>, vector<2x1x18x16xbf16>,
    %cst_7 = arith.constant 0.000000e+00 : bf16
    %4 = vector.broadcast %cst_7 : bf16 to vector<2x18x1x16xbf16>
    %c0_8 = arith.constant 0 : index
    %c0_9 = arith.constant 0 : index
    %c0_10 = arith.constant 0 : index
    %c0_11 = arith.constant 0 : index
    %5 = vector.load %arg7[%c0_8, %c0_9, %c0_10, %c0_11] : memref<2x18x18x16xbf16, #tpu.memory_space<vmem>>, vector<2x18x1x16xbf16>
    tpu.vector_store %arg7[%c0_8, %c0_9, %c0_10, %c0_11], %4 {strides = array<i32>} : memref<2x18x18x16xbf16, #tpu.memory_space<vmem>>, vector<2x18x1x16xbf16>,
    %cst_12 = arith.constant 0.000000e+00 : bf16
    %6 = vector.broadcast %cst_12 : bf16 to vector<2x18x1x16xbf16>
    %c0_13 = arith.constant 0 : index
    %c0_14 = arith.constant 0 : index
    %c17_15 = arith.constant 17 : index
    %c0_16 = arith.constant 0 : index
    %7 = vector.load %arg7[%c0_13, %c0_14, %c17_15, %c0_16] : memref<2x18x18x16xbf16, #tpu.memory_space<vmem>>, vector<2x18x1x16xbf16>
    tpu.vector_store %arg7[%c0_13, %c0_14, %c17_15, %c0_16], %6 {strides = array<i32>} : memref<2x18x18x16xbf16, #tpu.memory_space<vmem>>, vector<2x18x1x16xbf16>,
    %c0_17 = arith.constant 0 : index
    %c0_18 = arith.constant 0 : index
    %c0_19 = arith.constant 0 : index
    %c0_20 = arith.constant 0 : index
    %8 = vector.load %arg1[%c0_17, %c0_18, %c0_19, %c0_20] : memref<2x16x16x16xbf16, #tpu.memory_space<vmem>>, vector<2x16x16x16xbf16>
    %c0_21 = arith.constant 0 : index
    %c1 = arith.constant 1 : index
    %c1_22 = arith.constant 1 : index
    %c0_23 = arith.constant 0 : index
    %9 = vector.load %arg7[%c0_21, %c1, %c1_22, %c0_23] : memref<2x18x18x16xbf16, #tpu.memory_space<vmem>>, vector<2x16x16x16xbf16>
    tpu.vector_store %arg7[%c0_21, %c1, %c1_22, %c0_23], %8 {strides = array<i32>} : memref<2x18x18x16xbf16, #tpu.memory_space<vmem>>, vector<2x16x16x16xbf16>,
    %c0_24 = arith.constant 0 : index
    %c0_25 = arith.constant 0 : index
    %c0_26 = arith.constant 0 : index
    %c0_27 = arith.constant 0 : index
    %10 = vector.load %arg7[%c0_24, %c0_25, %c0_26, %c0_27] : memref<2x18x18x16xbf16, #tpu.memory_space<vmem>>, vector<2x18x18x16xbf16>
    %11 = vector.extract_strided_slice %10 {offsets = [0, 0, 0, 0], sizes = [2, 16, 16, 16], strides = [1, 1, 1, 1]} : vector<2x18x18x16xbf16> to vector<2x16x16x16xbf16>
    %12 = vector.shape_cast %11 : vector<2x16x16x16xbf16> to vector<512x16xbf16>
    %c0_28 = arith.constant 0 : index
    %c0_29 = arith.constant 0 : index
    %13 = vector.load %arg9[%c0_28, %c0_29] : memref<512x144xbf16, #tpu.memory_space<vmem>>, vector<512x16xbf16>
    tpu.vector_store %arg9[%c0_28, %c0_29], %12 {strides = array<i32>} : memref<512x144xbf16, #tpu.memory_space<vmem>>, vector<512x16xbf16>,
    %14 = vector.extract_strided_slice %10 {offsets = [0, 0, 1, 0], sizes = [2, 16, 16, 16], strides = [1, 1, 1, 1]} : vector<2x18x18x16xbf16> to vector<2x16x16x16xbf16>
    %15 = vector.shape_cast %14 : vector<2x16x16x16xbf16> to vector<512x16xbf16>
    %c0_30 = arith.constant 0 : index
    %c16 = arith.constant 16 : index
    %16 = vector.load %arg9[%c0_30, %c16] : memref<512x144xbf16, #tpu.memory_space<vmem>>, vector<512x16xbf16>
    tpu.vector_store %arg9[%c0_30, %c16], %15 {strides = array<i32>} : memref<512x144xbf16, #tpu.memory_space<vmem>>, vector<512x16xbf16>,
    %17 = vector.extract_strided_slice %10 {offsets = [0, 0, 2, 0], sizes = [2, 16, 16, 16], strides = [1, 1, 1, 1]} : vector<2x18x18x16xbf16> to vector<2x16x16x16xbf16>
    %18 = vector.shape_cast %17 : vector<2x16x16x16xbf16> to vector<512x16xbf16>
    %c0_31 = arith.constant 0 : index
    %c32 = arith.constant 32 : index
    %19 = vector.load %arg9[%c0_31, %c32] : memref<512x144xbf16, #tpu.memory_space<vmem>>, vector<512x16xbf16>
    tpu.vector_store %arg9[%c0_31, %c32], %18 {strides = array<i32>} : memref<512x144xbf16, #tpu.memory_space<vmem>>, vector<512x16xbf16>,
    %20 = vector.extract_strided_slice %10 {offsets = [0, 1, 0, 0], sizes = [2, 16, 16, 16], strides = [1, 1, 1, 1]} : vector<2x18x18x16xbf16> to vector<2x16x16x16xbf16>
    %21 = vector.shape_cast %20 : vector<2x16x16x16xbf16> to vector<512x16xbf16>
    %c0_32 = arith.constant 0 : index
    %c48 = arith.constant 48 : index
    %22 = vector.load %arg9[%c0_32, %c48] : memref<512x144xbf16, #tpu.memory_space<vmem>>, vector<512x16xbf16>
    tpu.vector_store %arg9[%c0_32, %c48], %21 {strides = array<i32>} : memref<512x144xbf16, #tpu.memory_space<vmem>>, vector<512x16xbf16>,
    %23 = vector.extract_strided_slice %10 {offsets = [0, 1, 1, 0], sizes = [2, 16, 16, 16], strides = [1, 1, 1, 1]} : vector<2x18x18x16xbf16> to vector<2x16x16x16xbf16>
    %24 = vector.shape_cast %23 : vector<2x16x16x16xbf16> to vector<512x16xbf16>
    %c0_33 = arith.constant 0 : index
    %c64 = arith.constant 64 : index
    %25 = vector.load %arg9[%c0_33, %c64] : memref<512x144xbf16, #tpu.memory_space<vmem>>, vector<512x16xbf16>
    tpu.vector_store %arg9[%c0_33, %c64], %24 {strides = array<i32>} : memref<512x144xbf16, #tpu.memory_space<vmem>>, vector<512x16xbf16>,
    %26 = vector.extract_strided_slice %10 {offsets = [0, 1, 2, 0], sizes = [2, 16, 16, 16], strides = [1, 1, 1, 1]} : vector<2x18x18x16xbf16> to vector<2x16x16x16xbf16>
    %27 = vector.shape_cast %26 : vector<2x16x16x16xbf16> to vector<512x16xbf16>
    %c0_34 = arith.constant 0 : index
    %c80 = arith.constant 80 : index
    %28 = vector.load %arg9[%c0_34, %c80] : memref<512x144xbf16, #tpu.memory_space<vmem>>, vector<512x16xbf16>
    tpu.vector_store %arg9[%c0_34, %c80], %27 {strides = array<i32>} : memref<512x144xbf16, #tpu.memory_space<vmem>>, vector<512x16xbf16>,
    %29 = vector.extract_strided_slice %10 {offsets = [0, 2, 0, 0], sizes = [2, 16, 16, 16], strides = [1, 1, 1, 1]} : vector<2x18x18x16xbf16> to vector<2x16x16x16xbf16>
    %30 = vector.shape_cast %29 : vector<2x16x16x16xbf16> to vector<512x16xbf16>
    %c0_35 = arith.constant 0 : index
    %c96 = arith.constant 96 : index
    %31 = vector.load %arg9[%c0_35, %c96] : memref<512x144xbf16, #tpu.memory_space<vmem>>, vector<512x16xbf16>
    tpu.vector_store %arg9[%c0_35, %c96], %30 {strides = array<i32>} : memref<512x144xbf16, #tpu.memory_space<vmem>>, vector<512x16xbf16>,
    %32 = vector.extract_strided_slice %10 {offsets = [0, 2, 1, 0], sizes = [2, 16, 16, 16], strides = [1, 1, 1, 1]} : vector<2x18x18x16xbf16> to vector<2x16x16x16xbf16>
    %33 = vector.shape_cast %32 : vector<2x16x16x16xbf16> to vector<512x16xbf16>
    %c0_36 = arith.constant 0 : index
    %c112 = arith.constant 112 : index
    %34 = vector.load %arg9[%c0_36, %c112] : memref<512x144xbf16, #tpu.memory_space<vmem>>, vector<512x16xbf16>
    tpu.vector_store %arg9[%c0_36, %c112], %33 {strides = array<i32>} : memref<512x144xbf16, #tpu.memory_space<vmem>>, vector<512x16xbf16>,
    %35 = vector.extract_strided_slice %10 {offsets = [0, 2, 2, 0], sizes = [2, 16, 16, 16], strides = [1, 1, 1, 1]} : vector<2x18x18x16xbf16> to vector<2x16x16x16xbf16>
    %36 = vector.shape_cast %35 : vector<2x16x16x16xbf16> to vector<512x16xbf16>
    %c0_37 = arith.constant 0 : index
    %c128 = arith.constant 128 : index
    %37 = vector.load %arg9[%c0_37, %c128] : memref<512x144xbf16, #tpu.memory_space<vmem>>, vector<512x16xbf16>
    tpu.vector_store %arg9[%c0_37, %c128], %36 {strides = array<i32>} : memref<512x144xbf16, #tpu.memory_space<vmem>>, vector<512x16xbf16>,
    %c0_38 = arith.constant 0 : index
    %c0_39 = arith.constant 0 : index
    %38 = vector.load %arg9[%c0_38, %c0_39] : memref<512x144xbf16, #tpu.memory_space<vmem>>, vector<512x144xbf16>
    %c0_40 = arith.constant 0 : index
    %c0_41 = arith.constant 0 : index
    %39 = vector.load %arg2[%c0_40, %c0_41] : memref<144x16xbf16, #tpu.memory_space<vmem>>, vector<144x16xbf16>
    %cst_42 = arith.constant dense<0.000000e+00> : vector<512x16xf32>
    %40 = tpu.matmul %38, %39, %cst_42 {dimension_numbers = #tpu.dot_dimension_numbers<[1], [0], [0], [1], [0, 0, 1, 1], [], []>} : vector<512x144xbf16>, vector<144x16xbf16>, vector<512x16xf32> -> vector<512x16xf32>
    %c0_43 = arith.constant 0 : index
    %c0_44 = arith.constant 0 : index
    %41 = vector.load %arg3[%c0_43, %c0_44] : memref<1x16xf32, #tpu.memory_space<vmem>>, vector<1x16xf32>
    %42 = vector.broadcast %41 : vector<1x16xf32> to vector<512x16xf32>
    %43 = arith.addf %40, %42 : vector<512x16xf32>
    %cst_45 = arith.constant 0.000000e+00 : f32
    %44 = vector.broadcast %cst_45 : f32 to vector<512x16xf32>
    %45 = arith.maximumf %43, %44 : vector<512x16xf32>
    %46 = arith.truncf %45 : vector<512x16xf32> to vector<512x16xbf16>
    %cst_46 = arith.constant 0.000000e+00 : bf16
    %47 = vector.broadcast %cst_46 : bf16 to vector<2x1x18x16xbf16>
    %c0_47 = arith.constant 0 : index
    %c0_48 = arith.constant 0 : index
    %c0_49 = arith.constant 0 : index
    %c0_50 = arith.constant 0 : index
    %48 = vector.load %arg8[%c0_47, %c0_48, %c0_49, %c0_50] : memref<2x18x18x16xbf16, #tpu.memory_space<vmem>>, vector<2x1x18x16xbf16>
    tpu.vector_store %arg8[%c0_47, %c0_48, %c0_49, %c0_50], %47 {strides = array<i32>} : memref<2x18x18x16xbf16, #tpu.memory_space<vmem>>, vector<2x1x18x16xbf16>,
    %cst_51 = arith.constant 0.000000e+00 : bf16
    %49 = vector.broadcast %cst_51 : bf16 to vector<2x1x18x16xbf16>
    %c0_52 = arith.constant 0 : index
    %c17_53 = arith.constant 17 : index
    %c0_54 = arith.constant 0 : index
    %c0_55 = arith.constant 0 : index
    %50 = vector.load %arg8[%c0_52, %c17_53, %c0_54, %c0_55] : memref<2x18x18x16xbf16, #tpu.memory_space<vmem>>, vector<2x1x18x16xbf16>
    tpu.vector_store %arg8[%c0_52, %c17_53, %c0_54, %c0_55], %49 {strides = array<i32>} : memref<2x18x18x16xbf16, #tpu.memory_space<vmem>>, vector<2x1x18x16xbf16>,
    %cst_56 = arith.constant 0.000000e+00 : bf16
    %51 = vector.broadcast %cst_56 : bf16 to vector<2x18x1x16xbf16>
    %c0_57 = arith.constant 0 : index
    %c0_58 = arith.constant 0 : index
    %c0_59 = arith.constant 0 : index
    %c0_60 = arith.constant 0 : index
    %52 = vector.load %arg8[%c0_57, %c0_58, %c0_59, %c0_60] : memref<2x18x18x16xbf16, #tpu.memory_space<vmem>>, vector<2x18x1x16xbf16>
    tpu.vector_store %arg8[%c0_57, %c0_58, %c0_59, %c0_60], %51 {strides = array<i32>} : memref<2x18x18x16xbf16, #tpu.memory_space<vmem>>, vector<2x18x1x16xbf16>,
    %cst_61 = arith.constant 0.000000e+00 : bf16
    %53 = vector.broadcast %cst_61 : bf16 to vector<2x18x1x16xbf16>
    %c0_62 = arith.constant 0 : index
    %c0_63 = arith.constant 0 : index
    %c17_64 = arith.constant 17 : index
    %c0_65 = arith.constant 0 : index
    %54 = vector.load %arg8[%c0_62, %c0_63, %c17_64, %c0_65] : memref<2x18x18x16xbf16, #tpu.memory_space<vmem>>, vector<2x18x1x16xbf16>
    tpu.vector_store %arg8[%c0_62, %c0_63, %c17_64, %c0_65], %53 {strides = array<i32>} : memref<2x18x18x16xbf16, #tpu.memory_space<vmem>>, vector<2x18x1x16xbf16>,
    %55 = vector.shape_cast %46 : vector<512x16xbf16> to vector<2x16x16x16xbf16>
    %c0_66 = arith.constant 0 : index
    %c1_67 = arith.constant 1 : index
    %c1_68 = arith.constant 1 : index
    %c0_69 = arith.constant 0 : index
    %56 = vector.load %arg8[%c0_66, %c1_67, %c1_68, %c0_69] : memref<2x18x18x16xbf16, #tpu.memory_space<vmem>>, vector<2x16x16x16xbf16>
    tpu.vector_store %arg8[%c0_66, %c1_67, %c1_68, %c0_69], %55 {strides = array<i32>} : memref<2x18x18x16xbf16, #tpu.memory_space<vmem>>, vector<2x16x16x16xbf16>,
    %c0_70 = arith.constant 0 : index
    %c0_71 = arith.constant 0 : index
    %c0_72 = arith.constant 0 : index
    %c0_73 = arith.constant 0 : index
    %57 = vector.load %arg8[%c0_70, %c0_71, %c0_72, %c0_73] : memref<2x18x18x16xbf16, #tpu.memory_space<vmem>>, vector<2x18x18x16xbf16>
    %58 = vector.extract_strided_slice %57 {offsets = [0, 0, 0, 0], sizes = [2, 16, 16, 16], strides = [1, 1, 1, 1]} : vector<2x18x18x16xbf16> to vector<2x16x16x16xbf16>
    %59 = vector.shape_cast %58 : vector<2x16x16x16xbf16> to vector<512x16xbf16>
    %c0_74 = arith.constant 0 : index
    %c0_75 = arith.constant 0 : index
    %60 = vector.load %arg10[%c0_74, %c0_75] : memref<512x144xbf16, #tpu.memory_space<vmem>>, vector<512x16xbf16>
    tpu.vector_store %arg10[%c0_74, %c0_75], %59 {strides = array<i32>} : memref<512x144xbf16, #tpu.memory_space<vmem>>, vector<512x16xbf16>,
    %61 = vector.extract_strided_slice %57 {offsets = [0, 0, 1, 0], sizes = [2, 16, 16, 16], strides = [1, 1, 1, 1]} : vector<2x18x18x16xbf16> to vector<2x16x16x16xbf16>
    %62 = vector.shape_cast %61 : vector<2x16x16x16xbf16> to vector<512x16xbf16>
    %c0_76 = arith.constant 0 : index
    %c16_77 = arith.constant 16 : index
    %63 = vector.load %arg10[%c0_76, %c16_77] : memref<512x144xbf16, #tpu.memory_space<vmem>>, vector<512x16xbf16>
    tpu.vector_store %arg10[%c0_76, %c16_77], %62 {strides = array<i32>} : memref<512x144xbf16, #tpu.memory_space<vmem>>, vector<512x16xbf16>,
    %64 = vector.extract_strided_slice %57 {offsets = [0, 0, 2, 0], sizes = [2, 16, 16, 16], strides = [1, 1, 1, 1]} : vector<2x18x18x16xbf16> to vector<2x16x16x16xbf16>
    %65 = vector.shape_cast %64 : vector<2x16x16x16xbf16> to vector<512x16xbf16>
    %c0_78 = arith.constant 0 : index
    %c32_79 = arith.constant 32 : index
    %66 = vector.load %arg10[%c0_78, %c32_79] : memref<512x144xbf16, #tpu.memory_space<vmem>>, vector<512x16xbf16>
    tpu.vector_store %arg10[%c0_78, %c32_79], %65 {strides = array<i32>} : memref<512x144xbf16, #tpu.memory_space<vmem>>, vector<512x16xbf16>,
    %67 = vector.extract_strided_slice %57 {offsets = [0, 1, 0, 0], sizes = [2, 16, 16, 16], strides = [1, 1, 1, 1]} : vector<2x18x18x16xbf16> to vector<2x16x16x16xbf16>
    %68 = vector.shape_cast %67 : vector<2x16x16x16xbf16> to vector<512x16xbf16>
    %c0_80 = arith.constant 0 : index
    %c48_81 = arith.constant 48 : index
    %69 = vector.load %arg10[%c0_80, %c48_81] : memref<512x144xbf16, #tpu.memory_space<vmem>>, vector<512x16xbf16>
    tpu.vector_store %arg10[%c0_80, %c48_81], %68 {strides = array<i32>} : memref<512x144xbf16, #tpu.memory_space<vmem>>, vector<512x16xbf16>,
    %70 = vector.extract_strided_slice %57 {offsets = [0, 1, 1, 0], sizes = [2, 16, 16, 16], strides = [1, 1, 1, 1]} : vector<2x18x18x16xbf16> to vector<2x16x16x16xbf16>
    %71 = vector.shape_cast %70 : vector<2x16x16x16xbf16> to vector<512x16xbf16>
    %c0_82 = arith.constant 0 : index
    %c64_83 = arith.constant 64 : index
    %72 = vector.load %arg10[%c0_82, %c64_83] : memref<512x144xbf16, #tpu.memory_space<vmem>>, vector<512x16xbf16>
    tpu.vector_store %arg10[%c0_82, %c64_83], %71 {strides = array<i32>} : memref<512x144xbf16, #tpu.memory_space<vmem>>, vector<512x16xbf16>,
    %73 = vector.extract_strided_slice %57 {offsets = [0, 1, 2, 0], sizes = [2, 16, 16, 16], strides = [1, 1, 1, 1]} : vector<2x18x18x16xbf16> to vector<2x16x16x16xbf16>
    %74 = vector.shape_cast %73 : vector<2x16x16x16xbf16> to vector<512x16xbf16>
    %c0_84 = arith.constant 0 : index
    %c80_85 = arith.constant 80 : index
    %75 = vector.load %arg10[%c0_84, %c80_85] : memref<512x144xbf16, #tpu.memory_space<vmem>>, vector<512x16xbf16>
    tpu.vector_store %arg10[%c0_84, %c80_85], %74 {strides = array<i32>} : memref<512x144xbf16, #tpu.memory_space<vmem>>, vector<512x16xbf16>,
    %76 = vector.extract_strided_slice %57 {offsets = [0, 2, 0, 0], sizes = [2, 16, 16, 16], strides = [1, 1, 1, 1]} : vector<2x18x18x16xbf16> to vector<2x16x16x16xbf16>
    %77 = vector.shape_cast %76 : vector<2x16x16x16xbf16> to vector<512x16xbf16>
    %c0_86 = arith.constant 0 : index
    %c96_87 = arith.constant 96 : index
    %78 = vector.load %arg10[%c0_86, %c96_87] : memref<512x144xbf16, #tpu.memory_space<vmem>>, vector<512x16xbf16>
    tpu.vector_store %arg10[%c0_86, %c96_87], %77 {strides = array<i32>} : memref<512x144xbf16, #tpu.memory_space<vmem>>, vector<512x16xbf16>,
    %79 = vector.extract_strided_slice %57 {offsets = [0, 2, 1, 0], sizes = [2, 16, 16, 16], strides = [1, 1, 1, 1]} : vector<2x18x18x16xbf16> to vector<2x16x16x16xbf16>
    %80 = vector.shape_cast %79 : vector<2x16x16x16xbf16> to vector<512x16xbf16>
    %c0_88 = arith.constant 0 : index
    %c112_89 = arith.constant 112 : index
    %81 = vector.load %arg10[%c0_88, %c112_89] : memref<512x144xbf16, #tpu.memory_space<vmem>>, vector<512x16xbf16>
    tpu.vector_store %arg10[%c0_88, %c112_89], %80 {strides = array<i32>} : memref<512x144xbf16, #tpu.memory_space<vmem>>, vector<512x16xbf16>,
    %82 = vector.extract_strided_slice %57 {offsets = [0, 2, 2, 0], sizes = [2, 16, 16, 16], strides = [1, 1, 1, 1]} : vector<2x18x18x16xbf16> to vector<2x16x16x16xbf16>
    %83 = vector.shape_cast %82 : vector<2x16x16x16xbf16> to vector<512x16xbf16>
    %c0_90 = arith.constant 0 : index
    %c128_91 = arith.constant 128 : index
    %84 = vector.load %arg10[%c0_90, %c128_91] : memref<512x144xbf16, #tpu.memory_space<vmem>>, vector<512x16xbf16>
    tpu.vector_store %arg10[%c0_90, %c128_91], %83 {strides = array<i32>} : memref<512x144xbf16, #tpu.memory_space<vmem>>, vector<512x16xbf16>,
    %c0_92 = arith.constant 0 : index
    %c0_93 = arith.constant 0 : index
    %85 = vector.load %arg10[%c0_92, %c0_93] : memref<512x144xbf16, #tpu.memory_space<vmem>>, vector<512x144xbf16>
    %c0_94 = arith.constant 0 : index
    %c0_95 = arith.constant 0 : index
    %86 = vector.load %arg4[%c0_94, %c0_95] : memref<144x128xbf16, #tpu.memory_space<vmem>>, vector<144x128xbf16>
    %cst_96 = arith.constant dense<0.000000e+00> : vector<512x128xf32>
    %87 = tpu.matmul %85, %86, %cst_96 {dimension_numbers = #tpu.dot_dimension_numbers<[1], [0], [0], [1], [0, 0, 1, 1], [], []>} : vector<512x144xbf16>, vector<144x128xbf16>, vector<512x128xf32> -> vector<512x128xf32>
    %c0_97 = arith.constant 0 : index
    %c0_98 = arith.constant 0 : index
    %88 = vector.load %arg5[%c0_97, %c0_98] : memref<1x128xf32, #tpu.memory_space<vmem>>, vector<1x128xf32>
    %89 = vector.broadcast %88 : vector<1x128xf32> to vector<512x128xf32>
    %90 = arith.addf %87, %89 : vector<512x128xf32>
    %cst_99 = arith.constant 0.000000e+00 : f32
    %91 = vector.broadcast %cst_99 : f32 to vector<512x128xf32>
    %92 = arith.maximumf %90, %91 : vector<512x128xf32>
    %93 = vector.shape_cast %92 : vector<512x128xf32> to vector<2x256x128xf32>
    %c0_100 = arith.constant 0 : index
    %c0_101 = arith.constant 0 : index
    %c0_102 = arith.constant 0 : index
    %94 = vector.load %arg6[%c0_100, %c0_101, %c0_102] : memref<2x256x128xf32, #tpu.memory_space<vmem>>, vector<2x256x128xf32>
    tpu.vector_store %arg6[%c0_100, %c0_101, %c0_102], %93 {strides = array<i32>} : memref<2x256x128xf32, #tpu.memory_space<vmem>>, vector<2x256x128xf32>,
    return
  }
  func.func @transform_0(%arg0: i32) -> (i32, i32, i32, i32) {
    %c0_i32 = arith.constant 0 : i32
    %c0_i32_0 = arith.constant 0 : i32
    %c0_i32_1 = arith.constant 0 : i32
    %c0_i32_2 = arith.constant 0 : i32
    return %arg0, %c0_i32, %c0_i32_0, %c0_i32_1 : i32, i32, i32, i32
  }
  func.func @transform_1(%arg0: i32) -> (i32, i32) {
    %c0_i32 = arith.constant 0 : i32
    %c0_i32_0 = arith.constant 0 : i32
    %c0_i32_1 = arith.constant 0 : i32
    return %c0_i32, %c0_i32_0 : i32, i32
  }
  func.func @transform_2(%arg0: i32) -> (i32, i32) {
    %c0_i32 = arith.constant 0 : i32
    %c0_i32_0 = arith.constant 0 : i32
    %c0_i32_1 = arith.constant 0 : i32
    return %c0_i32, %c0_i32_0 : i32, i32
  }
  func.func @transform_3(%arg0: i32) -> (i32, i32) {
    %c0_i32 = arith.constant 0 : i32
    %c0_i32_0 = arith.constant 0 : i32
    %c0_i32_1 = arith.constant 0 : i32
    return %c0_i32, %c0_i32_0 : i32, i32
  }
  func.func @transform_4(%arg0: i32) -> (i32, i32) {
    %c0_i32 = arith.constant 0 : i32
    %c0_i32_0 = arith.constant 0 : i32
    %c0_i32_1 = arith.constant 0 : i32
    return %c0_i32, %c0_i32_0 : i32, i32
  }
  func.func @transform_5(%arg0: i32) -> (i32, i32, i32) {
    %c0_i32 = arith.constant 0 : i32
    %c0_i32_0 = arith.constant 0 : i32
    %c0_i32_1 = arith.constant 0 : i32
    return %arg0, %c0_i32, %c0_i32_0 : i32, i32, i32
  }
}

</mosaic_0001>

<llo_original>
// kernel: tpu_custom_call.1
$region0: #{tpu_custom_call.1}
  #allocation0 [shape = 'u32[]', space=smem, size = 0x4, offset = 0x4, fixed_abs, tag = 'smem constant byte address 0x4 - core index']
  #allocation1 [shape = 'u32[144,128]{1,0:T(1,128)}', space=vmem, size = 0x12000, scoped, tag = 'internal scratch']
  #allocation2 [shape = 'bf16[2,18,18,16]{3,2,1,0:T(8,128)(2,1)}', space=vmem, size = 0x36000, scoped, tag = 'scratch operand']
  #allocation3 [shape = 'bf16[2,18,18,16]{3,2,1,0:T(8,128)(2,1)}', space=vmem, size = 0x36000, scoped, tag = 'scratch operand']
  #allocation4 [shape = 'bf16[512,144]{1,0:T(16,128)(2,1)}', space=vmem, size = 0x40000, scoped, tag = 'scratch operand']
  #allocation5 [shape = 'bf16[512,144]{1,0:T(16,128)(2,1)}', space=vmem, size = 0x40000, scoped, tag = 'scratch operand']
  %s0 = inlined_call_operand.hbm [shape: bf16[2,16,16,16], index: 0, kind: input, shape index: {}]
  %s1 = inlined_call_operand.vmem [shape: bf16[144,16], index: 1, kind: input, shape index: {}]
  %s2 = inlined_call_operand.vmem [shape: f32[1,16], index: 2, kind: input, shape index: {}]
  %s3 = inlined_call_operand.vmem [shape: bf16[144,128], index: 3, kind: input, shape index: {}]
  %s4 = inlined_call_operand.vmem [shape: f32[1,128], index: 4, kind: input, shape index: {}]
  %s5 = inlined_call_operand.hbm [shape: f32[2,256,128], index: 5, kind: output, shape index: {}]
  %s6 = sld [smem:[#allocation0]]
  $region34: #{tpu_custom_call.1} parent=0
    _
  %s8 = ssub.s32 1, %s6
  %s9 = scalar_select 0, %s8, %s6
  $region1: #{tpu_custom_call.1} parent=0
    #allocation6 [shape = 'u8[131072]{0}', space=vmem, size = 0x20000, scoped, tag = 'input window, operand 0, single buffered']
    #allocation7 [shape = 's32[1]{0}', space=sflag, size = 0x4, scoped, tag = 'scoped memory for tpu_custom_call.1']
    #allocation8 [shape = 's32[1]{0}', space=sflag, size = 0x4, scoped, tag = 'scoped memory for tpu_custom_call.1']
    #allocation9 [shape = 'u8[262144]{0}', space=vmem, size = 0x40000, scoped, tag = 'output window, operand 0, single buffered']
    %10 = vsyncpa [#allocation7], 0
    %11 = vsyncpa [#allocation8], 0
    // Predicated region
    $region2: #{tpu_custom_call.1} parent=1 // pred_check
      _
    $region3: #{tpu_custom_call.1} parent=1 // pred_check_branch
      %13 = sbr.rel (0) target = $region5
    $region4: #{tpu_custom_call.1} parent=1 // pred_region
      %s15 = ssub.s32 4096, 4096
      %16 = vsyncadd [#allocation7], %s15
      %s17 = sshll.u32 [#allocation6], 4
      %s18 = int_to_ptr.vmem [resolvable:$true] %s17
      %23 = dma.hbm_to_vmem [thread:$0]  %s0, 4096, %s18, [#allocation7], 64, 64, 4
    $region5: #{tpu_custom_call.1} parent=1 // pred_fallthru
      _
    // Predicated region
    $region6: #{tpu_custom_call.1} parent=1 // pred_check
      _
    $region7: #{tpu_custom_call.1} parent=1 // pred_check_branch
      %25 = sbr.rel (0) target = $region9
    $region8: #{tpu_custom_call.1} parent=1 // pred_region
      _
    $region9: #{tpu_custom_call.1} parent=1 // pred_fallthru
      _
    // Predicated region
    $region10: #{tpu_custom_call.1} parent=1 // pred_check
      _
    $region11: #{tpu_custom_call.1} parent=1 // pred_check_branch
      %27 = sbr.rel (0) target = $region13
    $region12: #{tpu_custom_call.1} parent=1 // pred_region
      _
    $region13: #{tpu_custom_call.1} parent=1 // pred_fallthru
      _
    // Predicated region
    $region14: #{tpu_custom_call.1} parent=1 // pred_check
      _
    $region15: #{tpu_custom_call.1} parent=1 // pred_check_branch
      %29 = sbr.rel (0) target = $region17
    $region16: #{tpu_custom_call.1} parent=1 // pred_region
      _
    $region17: #{tpu_custom_call.1} parent=1 // pred_fallthru
      _
    // Predicated region
    $region18: #{tpu_custom_call.1} parent=1 // pred_check
      _
    $region19: #{tpu_custom_call.1} parent=1 // pred_check_branch
      %31 = sbr.rel (0) target = $region21
    $region20: #{tpu_custom_call.1} parent=1 // pred_region
      _
    $region21: #{tpu_custom_call.1} parent=1 // pred_fallthru
      _
    // Predicated region
    $region22: #{tpu_custom_call.1} parent=1 // pred_check
      _
    $region23: #{tpu_custom_call.1} parent=1 // pred_check_branch
      %33 = sbr.rel (0) target = $region25
    $region24: #{tpu_custom_call.1} parent=1 // pred_region
      %34 = dma.done [#allocation7], 4096
    $region25: #{tpu_custom_call.1} parent=1 // pred_fallthru
      _
    %vm36 = vcmask 125952
    %37 = vst.msk [vmem:[#allocation2] sm:$0xf] %vm36, 0
    %38 = vst.msk [vmem:[#allocation2 + $0x4] sm:$0xf] %vm36, 0
    %vm39 = vcmask 122880
    %40 = vst.msk [vmem:[#allocation2 + $0x8] sm:$0x1] %vm39, 0
    %41 = vst.msk [vmem:[#allocation2 + $0xd8] sm:$0xf] %vm36, 0
    %42 = vst.msk [vmem:[#allocation2 + $0xdc] sm:$0xf] %vm36, 0
    %43 = vst.msk [vmem:[#allocation2 + $0xe0] sm:$0x1] %vm39, 0
    %s44 = scalar_lea.vmem [#allocation2], 204
    %45 = vst.msk [vmem:[%s44] sm:$0xf] %vm36, 0
    %46 = vst.msk [vmem:[%s44 + $0x4] sm:$0xf] %vm36, 0
    %47 = vst.msk [vmem:[%s44 + $0x8] sm:$0x1] %vm39, 0
    %48 = vst.msk [vmem:[%s44 + $0xd8] sm:$0xf] %vm36, 0
    %49 = vst.msk [vmem:[%s44 + $0xdc] sm:$0xf] %vm36, 0
    %50 = vst.msk [vmem:[%s44 + $0xe0] sm:$0x1] %vm39, 0
    %vm51 = vcmask 122880
    %vm52 = vsmask.f32 256
    %vm53 = vmand %vm51, %vm52
    %v54 = vld [vmem:[#allocation2] sm:$0x1]
    %v55 = vsel %vm53, 0, %v54
    %56 = vst [vmem:[#allocation2] sm:$0x1] %v55
    %v57 = vld [vmem:[#allocation2 + $0xc] sm:$0x1]
    %v58 = vsel %vm53, 0, %v57
    %59 = vst [vmem:[#allocation2 + $0xc] sm:$0x1] %v58
    %v60 = vld [vmem:[#allocation2 + $0x18] sm:$0x1]
    %v61 = vsel %vm53, 0, %v60
    %62 = vst [vmem:[#allocation2 + $0x18] sm:$0x1] %v61
    %v63 = vld [vmem:[#allocation2 + $0x24] sm:$0x1]
    %v64 = vsel %vm53, 0, %v63
    %65 = vst [vmem:[#allocation2 + $0x24] sm:$0x1] %v64
    %v66 = vld [vmem:[#allocation2 + $0x30] sm:$0x1]
    %v67 = vsel %vm53, 0, %v66
    %68 = vst [vmem:[#allocation2 + $0x30] sm:$0x1] %v67
    %v69 = vld [vmem:[#allocation2 + $0x3c] sm:$0x1]
    %v70 = vsel %vm53, 0, %v69
    %71 = vst [vmem:[#allocation2 + $0x3c] sm:$0x1] %v70
    %v72 = vld [vmem:[#allocation2 + $0x48] sm:$0x1]
    %v73 = vsel %vm53, 0, %v72
    %74 = vst [vmem:[#allocation2 + $0x48] sm:$0x1] %v73
    %v75 = vld [vmem:[#allocation2 + $0x54] sm:$0x1]
    %v76 = vsel %vm53, 0, %v75
    %77 = vst [vmem:[#allocation2 + $0x54] sm:$0x1] %v76
    %v78 = vld [vmem:[#allocation2 + $0x60] sm:$0x1]
    %v79 = vsel %vm53, 0, %v78
    %80 = vst [vmem:[#allocation2 + $0x60] sm:$0x1] %v79
    %v81 = vld [vmem:[#allocation2 + $0x6c] sm:$0x1]
    %v82 = vsel %vm53, 0, %v81
    %83 = vst [vmem:[#allocation2 + $0x6c] sm:$0x1] %v82
    %v84 = vld [vmem:[#allocation2 + $0x78] sm:$0x1]
    %v85 = vsel %vm53, 0, %v84
    %86 = vst [vmem:[#allocation2 + $0x78] sm:$0x1] %v85
    %v87 = vld [vmem:[#allocation2 + $0x84] sm:$0x1]
    %v88 = vsel %vm53, 0, %v87
    %89 = vst [vmem:[#allocation2 + $0x84] sm:$0x1] %v88
    %v90 = vld [vmem:[#allocation2 + $0x90] sm:$0x1]
    %v91 = vsel %vm53, 0, %v90
    %92 = vst [vmem:[#allocation2 + $0x90] sm:$0x1] %v91
    %v93 = vld [vmem:[#allocation2 + $0x9c] sm:$0x1]
    %v94 = vsel %vm53, 0, %v93
    %95 = vst [vmem:[#allocation2 + $0x9c] sm:$0x1] %v94
    %v96 = vld [vmem:[#allocation2 + $0xa8] sm:$0x1]
    %v97 = vsel %vm53, 0, %v96
    %98 = vst [vmem:[#allocation2 + $0xa8] sm:$0x1] %v97
    %v99 = vld [vmem:[#allocation2 + $0xb4] sm:$0x1]
    %v100 = vsel %vm53, 0, %v99
    %101 = vst [vmem:[#allocation2 + $0xb4] sm:$0x1] %v100
    %v102 = vld [vmem:[#allocation2 + $0xc0] sm:$0x1]
    %v103 = vsel %vm53, 0, %v102
    %104 = vst [vmem:[#allocation2 + $0xc0] sm:$0x1] %v103
    %v105 = vld [vmem:[#allocation2 + $0xcc] sm:$0x1]
    %v106 = vsel %vm53, 0, %v105
    %107 = vst [vmem:[#allocation2 + $0xcc] sm:$0x1] %v106
    %v108 = vld [vmem:[#allocation2 + $0xd8] sm:$0x1]
    %v109 = vsel %vm53, 0, %v108
    %110 = vst [vmem:[#allocation2 + $0xd8] sm:$0x1] %v109
    %v111 = vld [vmem:[#allocation2 + $0xe4] sm:$0x1]
    %v112 = vsel %vm53, 0, %v111
    %113 = vst [vmem:[#allocation2 + $0xe4] sm:$0x1] %v112
    %v114 = vld [vmem:[#allocation2 + $0xf0] sm:$0x1]
    %v115 = vsel %vm53, 0, %v114
    %116 = vst [vmem:[#allocation2 + $0xf0] sm:$0x1] %v115
    %v117 = vld [vmem:[#allocation2 + $0xfc] sm:$0x1]
    %v118 = vsel %vm53, 0, %v117
    %119 = vst [vmem:[#allocation2 + $0xfc] sm:$0x1] %v118
    %v120 = vld [vmem:[#allocation2 + $0x108] sm:$0x1]
    %v121 = vsel %vm53, 0, %v120
    %122 = vst [vmem:[#allocation2 + $0x108] sm:$0x1] %v121
    %v123 = vld [vmem:[#allocation2 + $0x114] sm:$0x1]
    %v124 = vsel %vm53, 0, %v123
    %125 = vst [vmem:[#allocation2 + $0x114] sm:$0x1] %v124
    %v126 = vld [vmem:[#allocation2 + $0x120] sm:$0x1]
    %v127 = vsel %vm53, 0, %v126
    %128 = vst [vmem:[#allocation2 + $0x120] sm:$0x1] %v127
    %v129 = vld [vmem:[#allocation2 + $0x12c] sm:$0x1]
    %v130 = vsel %vm53, 0, %v129
    %131 = vst [vmem:[#allocation2 + $0x12c] sm:$0x1] %v130
    %v132 = vld [vmem:[#allocation2 + $0x138] sm:$0x1]
    %v133 = vsel %vm53, 0, %v132
    %134 = vst [vmem:[#allocation2 + $0x138] sm:$0x1] %v133
    %v135 = vld [vmem:[#allocation2 + $0x144] sm:$0x1]
    %v136 = vsel %vm53, 0, %v135
    %137 = vst [vmem:[#allocation2 + $0x144] sm:$0x1] %v136
    %v138 = vld [vmem:[#allocation2 + $0x150] sm:$0x1]
    %v139 = vsel %vm53, 0, %v138
    %140 = vst [vmem:[#allocation2 + $0x150] sm:$0x1] %v139
    %v141 = vld [vmem:[#allocation2 + $0x15c] sm:$0x1]
    %v142 = vsel %vm53, 0, %v141
    %143 = vst [vmem:[#allocation2 + $0x15c] sm:$0x1] %v142
    %v144 = vld [vmem:[#allocation2 + $0x168] sm:$0x1]
    %v145 = vsel %vm53, 0, %v144
    %146 = vst [vmem:[#allocation2 + $0x168] sm:$0x1] %v145
    %v147 = vld [vmem:[#allocation2 + $0x174] sm:$0x1]
    %v148 = vsel %vm53, 0, %v147
    %149 = vst [vmem:[#allocation2 + $0x174] sm:$0x1] %v148
    %v150 = vld [vmem:[#allocation2 + $0x180] sm:$0x1]
    %v151 = vsel %vm53, 0, %v150
    %152 = vst [vmem:[#allocation2 + $0x180] sm:$0x1] %v151
    %v153 = vld [vmem:[#allocation2 + $0x18c] sm:$0x1]
    %v154 = vsel %vm53, 0, %v153
    %155 = vst [vmem:[#allocation2 + $0x18c] sm:$0x1] %v154
    %v156 = vld [vmem:[#allocation2 + $0x198] sm:$0x1]
    %v157 = vsel %vm53, 0, %v156
    %158 = vst [vmem:[#allocation2 + $0x198] sm:$0x1] %v157
    %v159 = vld [vmem:[#allocation2 + $0x1a4] sm:$0x1]
    %v160 = vsel %vm53, 0, %v159
    %161 = vst [vmem:[#allocation2 + $0x1a4] sm:$0x1] %v160
    %vm162 = vsmask.f32 7938
    %vm163 = vmand %vm51, %vm162
    %v164 = vld [vmem:[#allocation2 + $0x8] sm:$0x1]
    %v165 = vsel %vm163, 0, %v164
    %166 = vst [vmem:[#allocation2 + $0x8] sm:$0x1] %v165
    %v167 = vld [vmem:[#allocation2 + $0x14] sm:$0x1]
    %v168 = vsel %vm163, 0, %v167
    %169 = vst [vmem:[#allocation2 + $0x14] sm:$0x1] %v168
    %v170 = vld [vmem:[#allocation2 + $0x20] sm:$0x1]
    %v171 = vsel %vm163, 0, %v170
    %172 = vst [vmem:[#allocation2 + $0x20] sm:$0x1] %v171
    %v173 = vld [vmem:[#allocation2 + $0x2c] sm:$0x1]
    %v174 = vsel %vm163, 0, %v173
    %175 = vst [vmem:[#allocation2 + $0x2c] sm:$0x1] %v174
    %v176 = vld [vmem:[#allocation2 + $0x38] sm:$0x1]
    %v177 = vsel %vm163, 0, %v176
    %178 = vst [vmem:[#allocation2 + $0x38] sm:$0x1] %v177
    %v179 = vld [vmem:[#allocation2 + $0x44] sm:$0x1]
    %v180 = vsel %vm163, 0, %v179
    %181 = vst [vmem:[#allocation2 + $0x44] sm:$0x1] %v180
    %v182 = vld [vmem:[#allocation2 + $0x50] sm:$0x1]
    %v183 = vsel %vm163, 0, %v182
    %184 = vst [vmem:[#allocation2 + $0x50] sm:$0x1] %v183
    %v185 = vld [vmem:[#allocation2 + $0x5c] sm:$0x1]
    %v186 = vsel %vm163, 0, %v185
    %187 = vst [vmem:[#allocation2 + $0x5c] sm:$0x1] %v186
    %v188 = vld [vmem:[#allocation2 + $0x68] sm:$0x1]
    %v189 = vsel %vm163, 0, %v188
    %190 = vst [vmem:[#allocation2 + $0x68] sm:$0x1] %v189
    %v191 = vld [vmem:[#allocation2 + $0x74] sm:$0x1]
    %v192 = vsel %vm163, 0, %v191
    %193 = vst [vmem:[#allocation2 + $0x74] sm:$0x1] %v192
    %v194 = vld [vmem:[#allocation2 + $0x80] sm:$0x1]
    %v195 = vsel %vm163, 0, %v194
    %196 = vst [vmem:[#allocation2 + $0x80] sm:$0x1] %v195
    %v197 = vld [vmem:[#allocation2 + $0x8c] sm:$0x1]
    %v198 = vsel %vm163, 0, %v197
    %199 = vst [vmem:[#allocation2 + $0x8c] sm:$0x1] %v198
    %v200 = vld [vmem:[#allocation2 + $0x98] sm:$0x1]
    %v201 = vsel %vm163, 0, %v200
    %202 = vst [vmem:[#allocation2 + $0x98] sm:$0x1] %v201
    %v203 = vld [vmem:[#allocation2 + $0xa4] sm:$0x1]
    %v204 = vsel %vm163, 0, %v203
    %205 = vst [vmem:[#allocation2 + $0xa4] sm:$0x1] %v204
    %v206 = vld [vmem:[#allocation2 + $0xb0] sm:$0x1]
    %v207 = vsel %vm163, 0, %v206
    %208 = vst [vmem:[#allocation2 + $0xb0] sm:$0x1] %v207
    %v209 = vld [vmem:[#allocation2 + $0xbc] sm:$0x1]
    %v210 = vsel %vm163, 0, %v209
    %211 = vst [vmem:[#allocation2 + $0xbc] sm:$0x1] %v210
    %v212 = vld [vmem:[#allocation2 + $0xc8] sm:$0x1]
    %v213 = vsel %vm163, 0, %v212
    %214 = vst [vmem:[#allocation2 + $0xc8] sm:$0x1] %v213
    %v215 = vld [vmem:[#allocation2 + $0xd4] sm:$0x1]
    %v216 = vsel %vm163, 0, %v215
    %217 = vst [vmem:[#allocation2 + $0xd4] sm:$0x1] %v216
    %v218 = vld [vmem:[#allocation2 + $0xe0] sm:$0x1]
    %v219 = vsel %vm163, 0, %v218
    %220 = vst [vmem:[#allocation2 + $0xe0] sm:$0x1] %v219
    %v221 = vld [vmem:[#allocation2 + $0xec] sm:$0x1]
    %v222 = vsel %vm163, 0, %v221
    %223 = vst [vmem:[#allocation2 + $0xec] sm:$0x1] %v222
    %v224 = vld [vmem:[#allocation2 + $0xf8] sm:$0x1]
    %v225 = vsel %vm163, 0, %v224
    %226 = vst [vmem:[#allocation2 + $0xf8] sm:$0x1] %v225
    %v227 = vld [vmem:[#allocation2 + $0x104] sm:$0x1]
    %v228 = vsel %vm163, 0, %v227
    %229 = vst [vmem:[#allocation2 + $0x104] sm:$0x1] %v228
    %v230 = vld [vmem:[#allocation2 + $0x110] sm:$0x1]
    %v231 = vsel %vm163, 0, %v230
    %232 = vst [vmem:[#allocation2 + $0x110] sm:$0x1] %v231
    %v233 = vld [vmem:[#allocation2 + $0x11c] sm:$0x1]
    %v234 = vsel %vm163, 0, %v233
    %235 = vst [vmem:[#allocation2 + $0x11c] sm:$0x1] %v234
    %v236 = vld [vmem:[#allocation2 + $0x128] sm:$0x1]
    %v237 = vsel %vm163, 0, %v236
    %238 = vst [vmem:[#allocation2 + $0x128] sm:$0x1] %v237
    %v239 = vld [vmem:[#allocation2 + $0x134] sm:$0x1]
    %v240 = vsel %vm163, 0, %v239
    %241 = vst [vmem:[#allocation2 + $0x134] sm:$0x1] %v240
    %v242 = vld [vmem:[#allocation2 + $0x140] sm:$0x1]
    %v243 = vsel %vm163, 0, %v242
    %244 = vst [vmem:[#allocation2 + $0x140] sm:$0x1] %v243
    %v245 = vld [vmem:[#allocation2 + $0x14c] sm:$0x1]
    %v246 = vsel %vm163, 0, %v245
    %247 = vst [vmem:[#allocation2 + $0x14c] sm:$0x1] %v246
    %v248 = vld [vmem:[#allocation2 + $0x158] sm:$0x1]
    %v249 = vsel %vm163, 0, %v248
    %250 = vst [vmem:[#allocation2 + $0x158] sm:$0x1] %v249
    %v251 = vld [vmem:[#allocation2 + $0x164] sm:$0x1]
    %v252 = vsel %vm163, 0, %v251
    %253 = vst [vmem:[#allocation2 + $0x164] sm:$0x1] %v252
    %v254 = vld [vmem:[#allocation2 + $0x170] sm:$0x1]
    %v255 = vsel %vm163, 0, %v254
    %256 = vst [vmem:[#allocation2 + $0x170] sm:$0x1] %v255
    %v257 = vld [vmem:[#allocation2 + $0x17c] sm:$0x1]
    %v258 = vsel %vm163, 0, %v257
    %259 = vst [vmem:[#allocation2 + $0x17c] sm:$0x1] %v258
    %v260 = vld [vmem:[#allocation2 + $0x188] sm:$0x1]
    %v261 = vsel %vm163, 0, %v260
    %262 = vst [vmem:[#allocation2 + $0x188] sm:$0x1] %v261
    %v263 = vld [vmem:[#allocation2 + $0x194] sm:$0x1]
    %v264 = vsel %vm163, 0, %v263
    %265 = vst [vmem:[#allocation2 + $0x194] sm:$0x1] %v264
    %v266 = vld [vmem:[#allocation2 + $0x1a0] sm:$0x1]
    %v267 = vsel %vm163, 0, %v266
    %268 = vst [vmem:[#allocation2 + $0x1a0] sm:$0x1] %v267
    %v269 = vld [vmem:[#allocation2 + $0x1ac] sm:$0x1]
    %v270 = vsel %vm163, 0, %v269
    %271 = vst [vmem:[#allocation2 + $0x1ac] sm:$0x1] %v270
    %v272 = vld [vmem:[#allocation6] sm:$0xf]
    %v273 = vld [vmem:[#allocation6 + $0x4] sm:$0xf]
    %v274 = vld [vmem:[#allocation6 + $0x8] sm:$0xf]
    %v275 = vld [vmem:[#allocation6 + $0xc] sm:$0xf]
    %v276 = vld [vmem:[#allocation6 + $0x10] sm:$0xf]
    %v277 = vld [vmem:[#allocation6 + $0x14] sm:$0xf]
    %v278 = vld [vmem:[#allocation6 + $0x18] sm:$0xf]
    %v279 = vld [vmem:[#allocation6 + $0x1c] sm:$0xf]
    %v280 = vld [vmem:[#allocation6 + $0x20] sm:$0xf]
    %v281 = vld [vmem:[#allocation6 + $0x24] sm:$0xf]
    %v282 = vld [vmem:[#allocation6 + $0x28] sm:$0xf]
    %v283 = vld [vmem:[#allocation6 + $0x2c] sm:$0xf]
    %v284 = vld [vmem:[#allocation6 + $0x30] sm:$0xf]
    %v285 = vld [vmem:[#allocation6 + $0x34] sm:$0xf]
    %v286 = vld [vmem:[#allocation6 + $0x38] sm:$0xf]
    %v287 = vld [vmem:[#allocation6 + $0x3c] sm:$0xf]
    %v288 = vld [vmem:[#allocation6 + $0x40] sm:$0xf]
    %v289 = vld [vmem:[#allocation6 + $0x44] sm:$0xf]
    %v290 = vld [vmem:[#allocation6 + $0x48] sm:$0xf]
    %v291 = vld [vmem:[#allocation6 + $0x4c] sm:$0xf]
    %v292 = vld [vmem:[#allocation6 + $0x50] sm:$0xf]
    %v293 = vld [vmem:[#allocation6 + $0x54] sm:$0xf]
    %v294 = vld [vmem:[#allocation6 + $0x58] sm:$0xf]
    %v295 = vld [vmem:[#allocation6 + $0x5c] sm:$0xf]
    %v296 = vld [vmem:[#allocation6 + $0x60] sm:$0xf]
    %v297 = vld [vmem:[#allocation6 + $0x64] sm:$0xf]
    %v298 = vld [vmem:[#allocation6 + $0x68] sm:$0xf]
    %v299 = vld [vmem:[#allocation6 + $0x6c] sm:$0xf]
    %v300 = vld [vmem:[#allocation6 + $0x70] sm:$0xf]
    %v301 = vld [vmem:[#allocation6 + $0x74] sm:$0xf]
    %v302 = vld [vmem:[#allocation6 + $0x78] sm:$0xf]
    %v303 = vld [vmem:[#allocation6 + $0x7c] sm:$0xf]
    %v304 = vld [vmem:[#allocation6 + $0x80] sm:$0xf]
    %v305 = vld [vmem:[#allocation6 + $0x84] sm:$0xf]
    %v306 = vld [vmem:[#allocation6 + $0x88] sm:$0xf]
    %v307 = vld [vmem:[#allocation6 + $0x8c] sm:$0xf]
    %v308 = vld [vmem:[#allocation6 + $0x90] sm:$0xf]
    %v309 = vld [vmem:[#allocation6 + $0x94] sm:$0xf]
    %v310 = vld [vmem:[#allocation6 + $0x98] sm:$0xf]
    %v311 = vld [vmem:[#allocation6 + $0x9c] sm:$0xf]
    %v312 = vld [vmem:[#allocation6 + $0xa0] sm:$0xf]
    %v313 = vld [vmem:[#allocation6 + $0xa4] sm:$0xf]
    %v314 = vld [vmem:[#allocation6 + $0xa8] sm:$0xf]
    %v315 = vld [vmem:[#allocation6 + $0xac] sm:$0xf]
    %v316 = vld [vmem:[#allocation6 + $0xb0] sm:$0xf]
    %v317 = vld [vmem:[#allocation6 + $0xb4] sm:$0xf]
    %v318 = vld [vmem:[#allocation6 + $0xb8] sm:$0xf]
    %v319 = vld [vmem:[#allocation6 + $0xbc] sm:$0xf]
    %v320 = vld [vmem:[#allocation6 + $0xc0] sm:$0xf]
    %v321 = vld [vmem:[#allocation6 + $0xc4] sm:$0xf]
    %v322 = vld [vmem:[#allocation6 + $0xc8] sm:$0xf]
    %v323 = vld [vmem:[#allocation6 + $0xcc] sm:$0xf]
    %v324 = vld [vmem:[#allocation6 + $0xd0] sm:$0xf]
    %v325 = vld [vmem:[#allocation6 + $0xd4] sm:$0xf]
    %v326 = vld [vmem:[#allocation6 + $0xd8] sm:$0xf]
    %v327 = vld [vmem:[#allocation6 + $0xdc] sm:$0xf]
    %v328 = vld [vmem:[#allocation6 + $0xe0] sm:$0xf]
    %v329 = vld [vmem:[#allocation6 + $0xe4] sm:$0xf]
    %v330 = vld [vmem:[#allocation6 + $0xe8] sm:$0xf]
    %v331 = vld [vmem:[#allocation6 + $0xec] sm:$0xf]
    %v332 = vld [vmem:[#allocation6 + $0xf0] sm:$0xf]
    %v333 = vld [vmem:[#allocation6 + $0xf4] sm:$0xf]
    %v334 = vld [vmem:[#allocation6 + $0xf8] sm:$0xf]
    %v335 = vld [vmem:[#allocation6 + $0xfc] sm:$0xf]
    %vm336 = vsmask.f32 4368
    %vm337 = vmor %vm52, %vm336
    %v339 = vshrl.u32 %v272, 16
    %v341 = vrot.slane %v339, 7
    %v342 = vshll.u32 %v272, 16
    %v344 = vor.u32 %v341, %v342
    %v345 = vrot.slane %v341, 4
    %v347 = vshrl.u32 %v273, 16
    %v349 = vrot.slane %v347, 7
    %v350 = vshll.u32 %v273, 16
    %v352 = vor.u32 %v349, %v350
    %v353 = vsel %vm337, %v345, %v352
    %v354 = vrot.slane %v349, 4
    %v356 = vshrl.u32 %v274, 16
    %v358 = vrot.slane %v356, 7
    %v359 = vshll.u32 %v274, 16
    %v361 = vor.u32 %v358, %v359
    %v362 = vrot.slane %v358, 4
    %v364 = vshrl.u32 %v275, 16
    %v366 = vrot.slane %v364, 7
    %v367 = vshll.u32 %v275, 16
    %v369 = vor.u32 %v366, %v367
    %v370 = vsel %vm337, %v362, %v369
    %v371 = vrot.slane %v366, 4
    %v373 = vshrl.u32 %v276, 16
    %v375 = vrot.slane %v373, 7
    %v376 = vshll.u32 %v276, 16
    %v378 = vor.u32 %v375, %v376
    %v379 = vrot.slane %v375, 4
    %v381 = vshrl.u32 %v277, 16
    %v383 = vrot.slane %v381, 7
    %v384 = vshll.u32 %v277, 16
    %v386 = vor.u32 %v383, %v384
    %v387 = vsel %vm337, %v379, %v386
    %v388 = vrot.slane %v383, 4
    %v390 = vshrl.u32 %v278, 16
    %v392 = vrot.slane %v390, 7
    %v393 = vshll.u32 %v278, 16
    %v395 = vor.u32 %v392, %v393
    %v396 = vrot.slane %v392, 4
    %v398 = vshrl.u32 %v279, 16
    %v400 = vrot.slane %v398, 7
    %v401 = vshll.u32 %v279, 16
    %v403 = vor.u32 %v400, %v401
    %v404 = vsel %vm337, %v396, %v403
    %v405 = vrot.slane %v400, 4
    %v407 = vshrl.u32 %v280, 16
    %v409 = vrot.slane %v407, 7
    %v410 = vshll.u32 %v280, 16
    %v412 = vor.u32 %v409, %v410
    %v413 = vrot.slane %v409, 4
    %v415 = vshrl.u32 %v281, 16
    %v417 = vrot.slane %v415, 7
    %v418 = vshll.u32 %v281, 16
    %v420 = vor.u32 %v417, %v418
    %v421 = vsel %vm337, %v413, %v420
    %v422 = vrot.slane %v417, 4
    %v424 = vshrl.u32 %v282, 16
    %v426 = vrot.slane %v424, 7
    %v427 = vshll.u32 %v282, 16
    %v429 = vor.u32 %v426, %v427
    %v430 = vrot.slane %v426, 4
    %v432 = vshrl.u32 %v283, 16
    %v434 = vrot.slane %v432, 7
    %v435 = vshll.u32 %v283, 16
    %v437 = vor.u32 %v434, %v435
    %v438 = vsel %vm337, %v430, %v437
    %v439 = vrot.slane %v434, 4
    %v441 = vshrl.u32 %v284, 16
    %v443 = vrot.slane %v441, 7
    %v444 = vshll.u32 %v284, 16
    %v446 = vor.u32 %v443, %v444
    %v447 = vrot.slane %v443, 4
    %v449 = vshrl.u32 %v285, 16
    %v451 = vrot.slane %v449, 7
    %v452 = vshll.u32 %v285, 16
    %v454 = vor.u32 %v451, %v452
    %v455 = vsel %vm337, %v447, %v454
    %v456 = vrot.slane %v451, 4
    %v458 = vshrl.u32 %v286, 16
    %v460 = vrot.slane %v458, 7
    %v461 = vshll.u32 %v286, 16
    %v463 = vor.u32 %v460, %v461
    %v464 = vrot.slane %v460, 4
    %v466 = vshrl.u32 %v287, 16
    %v468 = vrot.slane %v466, 7
    %v469 = vshll.u32 %v287, 16
    %v471 = vor.u32 %v468, %v469
    %v472 = vsel %vm337, %v464, %v471
    %v473 = vrot.slane %v468, 4
    %v475 = vshrl.u32 %v288, 16
    %v477 = vrot.slane %v475, 7
    %v478 = vshll.u32 %v288, 16
    %v480 = vor.u32 %v477, %v478
    %v481 = vrot.slane %v477, 4
    %v483 = vshrl.u32 %v289, 16
    %v485 = vrot.slane %v483, 7
    %v486 = vshll.u32 %v289, 16
    %v488 = vor.u32 %v485, %v486
    %v489 = vsel %vm337, %v481, %v488
    %v490 = vrot.slane %v485, 4
    %v492 = vshrl.u32 %v290, 16
    %v494 = vrot.slane %v492, 7
    %v495 = vshll.u32 %v290, 16
    %v497 = vor.u32 %v494, %v495
    %v498 = vrot.slane %v494, 4
    %v500 = vshrl.u32 %v291, 16
    %v502 = vrot.slane %v500, 7
    %v503 = vshll.u32 %v291, 16
    %v505 = vor.u32 %v502, %v503
    %v506 = vsel %vm337, %v498, %v505
    %v507 = vrot.slane %v502, 4
    %v509 = vshrl.u32 %v292, 16
    %v511 = vrot.slane %v509, 7
    %v512 = vshll.u32 %v292, 16
    %v514 = vor.u32 %v511, %v512
    %v515 = vrot.slane %v511, 4
    %v517 = vshrl.u32 %v293, 16
    %v519 = vrot.slane %v517, 7
    %v520 = vshll.u32 %v293, 16
    %v522 = vor.u32 %v519, %v520
    %v523 = vsel %vm337, %v515, %v522
    %v524 = vrot.slane %v519, 4
    %v526 = vshrl.u32 %v294, 16
    %v528 = vrot.slane %v526, 7
    %v529 = vshll.u32 %v294, 16
    %v531 = vor.u32 %v528, %v529
    %v532 = vrot.slane %v528, 4
    %v534 = vshrl.u32 %v295, 16
    %v536 = vrot.slane %v534, 7
    %v537 = vshll.u32 %v295, 16
    %v539 = vor.u32 %v536, %v537
    %v540 = vsel %vm337, %v532, %v539
    %v541 = vrot.slane %v536, 4
    %v543 = vshrl.u32 %v296, 16
    %v545 = vrot.slane %v543, 7
    %v546 = vshll.u32 %v296, 16
    %v548 = vor.u32 %v545, %v546
    %v549 = vrot.slane %v545, 4
    %v551 = vshrl.u32 %v297, 16
    %v553 = vrot.slane %v551, 7
    %v554 = vshll.u32 %v297, 16
    %v556 = vor.u32 %v553, %v554
    %v557 = vsel %vm337, %v549, %v556
    %v558 = vrot.slane %v553, 4
    %v560 = vshrl.u32 %v298, 16
    %v562 = vrot.slane %v560, 7
    %v563 = vshll.u32 %v298, 16
    %v565 = vor.u32 %v562, %v563
    %v566 = vrot.slane %v562, 4
    %v568 = vshrl.u32 %v299, 16
    %v570 = vrot.slane %v568, 7
    %v571 = vshll.u32 %v299, 16
    %v573 = vor.u32 %v570, %v571
    %v574 = vsel %vm337, %v566, %v573
    %v575 = vrot.slane %v570, 4
    %v577 = vshrl.u32 %v300, 16
    %v579 = vrot.slane %v577, 7
    %v580 = vshll.u32 %v300, 16
    %v582 = vor.u32 %v579, %v580
    %v583 = vrot.slane %v579, 4
    %v585 = vshrl.u32 %v301, 16
    %v587 = vrot.slane %v585, 7
    %v588 = vshll.u32 %v301, 16
    %v590 = vor.u32 %v587, %v588
    %v591 = vsel %vm337, %v583, %v590
    %v592 = vrot.slane %v587, 4
    %v594 = vshrl.u32 %v302, 16
    %v596 = vrot.slane %v594, 7
    %v597 = vshll.u32 %v302, 16
    %v599 = vor.u32 %v596, %v597
    %v600 = vrot.slane %v596, 4
    %v602 = vshrl.u32 %v303, 16
    %v604 = vrot.slane %v602, 7
    %v605 = vshll.u32 %v303, 16
    %v607 = vor.u32 %v604, %v605
    %v608 = vsel %vm337, %v600, %v607
    %v609 = vrot.slane %v604, 4
    %v611 = vshrl.u32 %v304, 16
    %v613 = vrot.slane %v611, 7
    %v614 = vshll.u32 %v304, 16
    %v616 = vor.u32 %v613, %v614
    %v617 = vrot.slane %v613, 4
    %v619 = vshrl.u32 %v305, 16
    %v621 = vrot.slane %v619, 7
    %v622 = vshll.u32 %v305, 16
    %v624 = vor.u32 %v621, %v622
    %v625 = vsel %vm337, %v617, %v624
    %v626 = vrot.slane %v621, 4
    %v628 = vshrl.u32 %v306, 16
    %v630 = vrot.slane %v628, 7
    %v631 = vshll.u32 %v306, 16
    %v633 = vor.u32 %v630, %v631
    %v634 = vrot.slane %v630, 4
    %v636 = vshrl.u32 %v307, 16
    %v638 = vrot.slane %v636, 7
    %v639 = vshll.u32 %v307, 16
    %v641 = vor.u32 %v638, %v639
    %v642 = vsel %vm337, %v634, %v641
    %v643 = vrot.slane %v638, 4
    %v645 = vshrl.u32 %v308, 16
    %v647 = vrot.slane %v645, 7
    %v648 = vshll.u32 %v308, 16
    %v650 = vor.u32 %v647, %v648
    %v651 = vrot.slane %v647, 4
    %v653 = vshrl.u32 %v309, 16
    %v655 = vrot.slane %v653, 7
    %v656 = vshll.u32 %v309, 16
    %v658 = vor.u32 %v655, %v656
    %v659 = vsel %vm337, %v651, %v658
    %v660 = vrot.slane %v655, 4
    %v662 = vshrl.u32 %v310, 16
    %v664 = vrot.slane %v662, 7
    %v665 = vshll.u32 %v310, 16
    %v667 = vor.u32 %v664, %v665
    %v668 = vrot.slane %v664, 4
    %v670 = vshrl.u32 %v311, 16
    %v672 = vrot.slane %v670, 7
    %v673 = vshll.u32 %v311, 16
    %v675 = vor.u32 %v672, %v673
    %v676 = vsel %vm337, %v668, %v675
    %v677 = vrot.slane %v672, 4
    %v679 = vshrl.u32 %v312, 16
    %v681 = vrot.slane %v679, 7
    %v682 = vshll.u32 %v312, 16
    %v684 = vor.u32 %v681, %v682
    %v685 = vrot.slane %v681, 4
    %v687 = vshrl.u32 %v313, 16
    %v689 = vrot.slane %v687, 7
    %v690 = vshll.u32 %v313, 16
    %v692 = vor.u32 %v689, %v690
    %v693 = vsel %vm337, %v685, %v692
    %v694 = vrot.slane %v689, 4
    %v696 = vshrl.u32 %v314, 16
    %v698 = vrot.slane %v696, 7
    %v699 = vshll.u32 %v314, 16
    %v701 = vor.u32 %v698, %v699
    %v702 = vrot.slane %v698, 4
    %v704 = vshrl.u32 %v315, 16
    %v706 = vrot.slane %v704, 7
    %v707 = vshll.u32 %v315, 16
    %v709 = vor.u32 %v706, %v707
    %v710 = vsel %vm337, %v702, %v709
    %v711 = vrot.slane %v706, 4
    %v713 = vshrl.u32 %v316, 16
    %v715 = vrot.slane %v713, 7
    %v716 = vshll.u32 %v316, 16
    %v718 = vor.u32 %v715, %v716
    %v719 = vrot.slane %v715, 4
    %v721 = vshrl.u32 %v317, 16
    %v723 = vrot.slane %v721, 7
    %v724 = vshll.u32 %v317, 16
    %v726 = vor.u32 %v723, %v724
    %v727 = vsel %vm337, %v719, %v726
    %v728 = vrot.slane %v723, 4
    %v730 = vshrl.u32 %v318, 16
    %v732 = vrot.slane %v730, 7
    %v733 = vshll.u32 %v318, 16
    %v735 = vor.u32 %v732, %v733
    %v736 = vrot.slane %v732, 4
    %v738 = vshrl.u32 %v319, 16
    %v740 = vrot.slane %v738, 7
    %v741 = vshll.u32 %v319, 16
    %v743 = vor.u32 %v740, %v741
    %v744 = vsel %vm337, %v736, %v743
    %v745 = vrot.slane %v740, 4
    %v747 = vshrl.u32 %v320, 16
    %v749 = vrot.slane %v747, 7
    %v750 = vshll.u32 %v320, 16
    %v752 = vor.u32 %v749, %v750
    %v753 = vrot.slane %v749, 4
    %v755 = vshrl.u32 %v321, 16
    %v757 = vrot.slane %v755, 7
    %v758 = vshll.u32 %v321, 16
    %v760 = vor.u32 %v757, %v758
    %v761 = vsel %vm337, %v753, %v760
    %v762 = vrot.slane %v757, 4
    %v764 = vshrl.u32 %v322, 16
    %v766 = vrot.slane %v764, 7
    %v767 = vshll.u32 %v322, 16
    %v769 = vor.u32 %v766, %v767
    %v770 = vrot.slane %v766, 4
    %v772 = vshrl.u32 %v323, 16
    %v774 = vrot.slane %v772, 7
    %v775 = vshll.u32 %v323, 16
    %v777 = vor.u32 %v774, %v775
    %v778 = vsel %vm337, %v770, %v777
    %v779 = vrot.slane %v774, 4
    %v781 = vshrl.u32 %v324, 16
    %v783 = vrot.slane %v781, 7
    %v784 = vshll.u32 %v324, 16
    %v786 = vor.u32 %v783, %v784
    %v787 = vrot.slane %v783, 4
    %v789 = vshrl.u32 %v325, 16
    %v791 = vrot.slane %v789, 7
    %v792 = vshll.u32 %v325, 16
    %v794 = vor.u32 %v791, %v792
    %v795 = vsel %vm337, %v787, %v794
    %v796 = vrot.slane %v791, 4
    %v798 = vshrl.u32 %v326, 16
    %v800 = vrot.slane %v798, 7
    %v801 = vshll.u32 %v326, 16
    %v803 = vor.u32 %v800, %v801
    %v804 = vrot.slane %v800, 4
    %v806 = vshrl.u32 %v327, 16
    %v808 = vrot.slane %v806, 7
    %v809 = vshll.u32 %v327, 16
    %v811 = vor.u32 %v808, %v809
    %v812 = vsel %vm337, %v804, %v811
    %v813 = vrot.slane %v808, 4
    %v815 = vshrl.u32 %v328, 16
    %v817 = vrot.slane %v815, 7
    %v818 = vshll.u32 %v328, 16
    %v820 = vor.u32 %v817, %v818
    %v821 = vrot.slane %v817, 4
    %v823 = vshrl.u32 %v329, 16
    %v825 = vrot.slane %v823, 7
    %v826 = vshll.u32 %v329, 16
    %v828 = vor.u32 %v825, %v826
    %v829 = vsel %vm337, %v821, %v828
    %v830 = vrot.slane %v825, 4
    %v832 = vshrl.u32 %v330, 16
    %v834 = vrot.slane %v832, 7
    %v835 = vshll.u32 %v330, 16
    %v837 = vor.u32 %v834, %v835
    %v838 = vrot.slane %v834, 4
    %v840 = vshrl.u32 %v331, 16
    %v842 = vrot.slane %v840, 7
    %v843 = vshll.u32 %v331, 16
    %v845 = vor.u32 %v842, %v843
    %v846 = vsel %vm337, %v838, %v845
    %v847 = vrot.slane %v842, 4
    %v849 = vshrl.u32 %v332, 16
    %v851 = vrot.slane %v849, 7
    %v852 = vshll.u32 %v332, 16
    %v854 = vor.u32 %v851, %v852
    %v855 = vrot.slane %v851, 4
    %v857 = vshrl.u32 %v333, 16
    %v859 = vrot.slane %v857, 7
    %v860 = vshll.u32 %v333, 16
    %v862 = vor.u32 %v859, %v860
    %v863 = vsel %vm337, %v855, %v862
    %v864 = vrot.slane %v859, 4
    %v866 = vshrl.u32 %v334, 16
    %v868 = vrot.slane %v866, 7
    %v869 = vshll.u32 %v334, 16
    %v871 = vor.u32 %v868, %v869
    %v872 = vrot.slane %v868, 4
    %v874 = vshrl.u32 %v335, 16
    %v876 = vrot.slane %v874, 7
    %v877 = vshll.u32 %v335, 16
    %v879 = vor.u32 %v876, %v877
    %v880 = vsel %vm337, %v872, %v879
    %v881 = vrot.slane %v876, 4
    %s978 = scalar_lea.vmem [#allocation2], 12
    %vm979 = vcmask 125952
    %vm980 = vmand %vm979, %vm162
    %v981 = vld [vmem:[%s978] sm:$0xf]
    %v982 = vsel %vm980, %v344, %v981
    %983 = vst [vmem:[%s978] sm:$0xf] %v982
    %984 = vst.msk [vmem:[%s978 + $0x4] sm:$0xf] %vm36, %v353
    %v985 = vld [vmem:[%s978 + $0x8] sm:$0x1]
    %v986 = vsel %vm53, %v354, %v985
    %987 = vst [vmem:[%s978 + $0x8] sm:$0x1] %v986
    %v988 = vld [vmem:[%s978 + $0xc] sm:$0xf]
    %v989 = vsel %vm980, %v361, %v988
    %990 = vst [vmem:[%s978 + $0xc] sm:$0xf] %v989
    %991 = vst.msk [vmem:[%s978 + $0x10] sm:$0xf] %vm36, %v370
    %v992 = vld [vmem:[%s978 + $0x14] sm:$0x1]
    %v993 = vsel %vm53, %v371, %v992
    %994 = vst [vmem:[%s978 + $0x14] sm:$0x1] %v993
    %v995 = vld [vmem:[%s978 + $0x18] sm:$0xf]
    %v996 = vsel %vm980, %v378, %v995
    %997 = vst [vmem:[%s978 + $0x18] sm:$0xf] %v996
    %998 = vst.msk [vmem:[%s978 + $0x1c] sm:$0xf] %vm36, %v387
    %v999 = vld [vmem:[%s978 + $0x20] sm:$0x1]
    %v1000 = vsel %vm53, %v388, %v999
    %1001 = vst [vmem:[%s978 + $0x20] sm:$0x1] %v1000
    %v1002 = vld [vmem:[%s978 + $0x24] sm:$0xf]
    %v1003 = vsel %vm980, %v395, %v1002
    %1004 = vst [vmem:[%s978 + $0x24] sm:$0xf] %v1003
    %1005 = vst.msk [vmem:[%s978 + $0x28] sm:$0xf] %vm36, %v404
    %v1006 = vld [vmem:[%s978 + $0x2c] sm:$0x1]
    %v1007 = vsel %vm53, %v405, %v1006
    %1008 = vst [vmem:[%s978 + $0x2c] sm:$0x1] %v1007
    %v1009 = vld [vmem:[%s978 + $0x30] sm:$0xf]
    %v1010 = vsel %vm980, %v412, %v1009
    %1011 = vst [vmem:[%s978 + $0x30] sm:$0xf] %v1010
    %1012 = vst.msk [vmem:[%s978 + $0x34] sm:$0xf] %vm36, %v421
    %v1013 = vld [vmem:[%s978 + $0x38] sm:$0x1]
    %v1014 = vsel %vm53, %v422, %v1013
    %1015 = vst [vmem:[%s978 + $0x38] sm:$0x1] %v1014
    %v1016 = vld [vmem:[%s978 + $0x3c] sm:$0xf]
    %v1017 = vsel %vm980, %v429, %v1016
    %1018 = vst [vmem:[%s978 + $0x3c] sm:$0xf] %v1017
    %1019 = vst.msk [vmem:[%s978 + $0x40] sm:$0xf] %vm36, %v438
    %v1020 = vld [vmem:[%s978 + $0x44] sm:$0x1]
    %v1021 = vsel %vm53, %v439, %v1020
    %1022 = vst [vmem:[%s978 + $0x44] sm:$0x1] %v1021
    %v1023 = vld [vmem:[%s978 + $0x48] sm:$0xf]
    %v1024 = vsel %vm980, %v446, %v1023
    %1025 = vst [vmem:[%s978 + $0x48] sm:$0xf] %v1024
    %1026 = vst.msk [vmem:[%s978 + $0x4c] sm:$0xf] %vm36, %v455
    %v1027 = vld [vmem:[%s978 + $0x50] sm:$0x1]
    %v1028 = vsel %vm53, %v456, %v1027
    %1029 = vst [vmem:[%s978 + $0x50] sm:$0x1] %v1028
    %v1030 = vld [vmem:[%s978 + $0x54] sm:$0xf]
    %v1031 = vsel %vm980, %v463, %v1030
    %1032 = vst [vmem:[%s978 + $0x54] sm:$0xf] %v1031
    %1033 = vst.msk [vmem:[%s978 + $0x58] sm:$0xf] %vm36, %v472
    %v1034 = vld [vmem:[%s978 + $0x5c] sm:$0x1]
    %v1035 = vsel %vm53, %v473, %v1034
    %1036 = vst [vmem:[%s978 + $0x5c] sm:$0x1] %v1035
    %v1037 = vld [vmem:[%s978 + $0x60] sm:$0xf]
    %v1038 = vsel %vm980, %v480, %v1037
    %1039 = vst [vmem:[%s978 + $0x60] sm:$0xf] %v1038
    %1040 = vst.msk [vmem:[%s978 + $0x64] sm:$0xf] %vm36, %v489
    %v1041 = vld [vmem:[%s978 + $0x68] sm:$0x1]
    %v1042 = vsel %vm53, %v490, %v1041
    %1043 = vst [vmem:[%s978 + $0x68] sm:$0x1] %v1042
    %v1044 = vld [vmem:[%s978 + $0x6c] sm:$0xf]
    %v1045 = vsel %vm980, %v497, %v1044
    %1046 = vst [vmem:[%s978 + $0x6c] sm:$0xf] %v1045
    %1047 = vst.msk [vmem:[%s978 + $0x70] sm:$0xf] %vm36, %v506
    %v1048 = vld [vmem:[%s978 + $0x74] sm:$0x1]
    %v1049 = vsel %vm53, %v507, %v1048
    %1050 = vst [vmem:[%s978 + $0x74] sm:$0x1] %v1049
    %v1051 = vld [vmem:[%s978 + $0x78] sm:$0xf]
    %v1052 = vsel %vm980, %v514, %v1051
    %1053 = vst [vmem:[%s978 + $0x78] sm:$0xf] %v1052
    %1054 = vst.msk [vmem:[%s978 + $0x7c] sm:$0xf] %vm36, %v523
    %v1055 = vld [vmem:[%s978 + $0x80] sm:$0x1]
    %v1056 = vsel %vm53, %v524, %v1055
    %1057 = vst [vmem:[%s978 + $0x80] sm:$0x1] %v1056
    %v1058 = vld [vmem:[%s978 + $0x84] sm:$0xf]
    %v1059 = vsel %vm980, %v531, %v1058
    %1060 = vst [vmem:[%s978 + $0x84] sm:$0xf] %v1059
    %1061 = vst.msk [vmem:[%s978 + $0x88] sm:$0xf] %vm36, %v540
    %v1062 = vld [vmem:[%s978 + $0x8c] sm:$0x1]
    %v1063 = vsel %vm53, %v541, %v1062
    %1064 = vst [vmem:[%s978 + $0x8c] sm:$0x1] %v1063
    %v1065 = vld [vmem:[%s978 + $0x90] sm:$0xf]
    %v1066 = vsel %vm980, %v548, %v1065
    %1067 = vst [vmem:[%s978 + $0x90] sm:$0xf] %v1066
    %1068 = vst.msk [vmem:[%s978 + $0x94] sm:$0xf] %vm36, %v557
    %v1069 = vld [vmem:[%s978 + $0x98] sm:$0x1]
    %v1070 = vsel %vm53, %v558, %v1069
    %1071 = vst [vmem:[%s978 + $0x98] sm:$0x1] %v1070
    %v1072 = vld [vmem:[%s978 + $0x9c] sm:$0xf]
    %v1073 = vsel %vm980, %v565, %v1072
    %1074 = vst [vmem:[%s978 + $0x9c] sm:$0xf] %v1073
    %1075 = vst.msk [vmem:[%s978 + $0xa0] sm:$0xf] %vm36, %v574
    %v1076 = vld [vmem:[%s978 + $0xa4] sm:$0x1]
    %v1077 = vsel %vm53, %v575, %v1076
    %1078 = vst [vmem:[%s978 + $0xa4] sm:$0x1] %v1077
    %v1079 = vld [vmem:[%s978 + $0xa8] sm:$0xf]
    %v1080 = vsel %vm980, %v582, %v1079
    %1081 = vst [vmem:[%s978 + $0xa8] sm:$0xf] %v1080
    %1082 = vst.msk [vmem:[%s978 + $0xac] sm:$0xf] %vm36, %v591
    %v1083 = vld [vmem:[%s978 + $0xb0] sm:$0x1]
    %v1084 = vsel %vm53, %v592, %v1083
    %1085 = vst [vmem:[%s978 + $0xb0] sm:$0x1] %v1084
    %v1086 = vld [vmem:[%s978 + $0xb4] sm:$0xf]
    %v1087 = vsel %vm980, %v599, %v1086
    %1088 = vst [vmem:[%s978 + $0xb4] sm:$0xf] %v1087
    %1089 = vst.msk [vmem:[%s978 + $0xb8] sm:$0xf] %vm36, %v608
    %v1090 = vld [vmem:[%s978 + $0xbc] sm:$0x1]
    %v1091 = vsel %vm53, %v609, %v1090
    %1092 = vst [vmem:[%s978 + $0xbc] sm:$0x1] %v1091
    %v1093 = vld [vmem:[%s978 + $0xd8] sm:$0xf]
    %v1094 = vsel %vm980, %v616, %v1093
    %1095 = vst [vmem:[%s978 + $0xd8] sm:$0xf] %v1094
    %1096 = vst.msk [vmem:[%s978 + $0xdc] sm:$0xf] %vm36, %v625
    %v1097 = vld [vmem:[%s978 + $0xe0] sm:$0x1]
    %v1098 = vsel %vm53, %v626, %v1097
    %1099 = vst [vmem:[%s978 + $0xe0] sm:$0x1] %v1098
    %v1100 = vld [vmem:[%s978 + $0xe4] sm:$0xf]
    %v1101 = vsel %vm980, %v633, %v1100
    %1102 = vst [vmem:[%s978 + $0xe4] sm:$0xf] %v1101
    %1103 = vst.msk [vmem:[%s978 + $0xe8] sm:$0xf] %vm36, %v642
    %v1104 = vld [vmem:[%s978 + $0xec] sm:$0x1]
    %v1105 = vsel %vm53, %v643, %v1104
    %1106 = vst [vmem:[%s978 + $0xec] sm:$0x1] %v1105
    %v1107 = vld [vmem:[%s978 + $0xf0] sm:$0xf]
    %v1108 = vsel %vm980, %v650, %v1107
    %1109 = vst [vmem:[%s978 + $0xf0] sm:$0xf] %v1108
    %1110 = vst.msk [vmem:[%s978 + $0xf4] sm:$0xf] %vm36, %v659
    %v1111 = vld [vmem:[%s978 + $0xf8] sm:$0x1]
    %v1112 = vsel %vm53, %v660, %v1111
    %1113 = vst [vmem:[%s978 + $0xf8] sm:$0x1] %v1112
    %v1114 = vld [vmem:[%s978 + $0xfc] sm:$0xf]
    %v1115 = vsel %vm980, %v667, %v1114
    %1116 = vst [vmem:[%s978 + $0xfc] sm:$0xf] %v1115
    %1117 = vst.msk [vmem:[%s978 + $0x100] sm:$0xf] %vm36, %v676
    %v1118 = vld [vmem:[%s978 + $0x104] sm:$0x1]
    %v1119 = vsel %vm53, %v677, %v1118
    %1120 = vst [vmem:[%s978 + $0x104] sm:$0x1] %v1119
    %v1121 = vld [vmem:[%s978 + $0x108] sm:$0xf]
    %v1122 = vsel %vm980, %v684, %v1121
    %1123 = vst [vmem:[%s978 + $0x108] sm:$0xf] %v1122
    %1124 = vst.msk [vmem:[%s978 + $0x10c] sm:$0xf] %vm36, %v693
    %v1125 = vld [vmem:[%s978 + $0x110] sm:$0x1]
    %v1126 = vsel %vm53, %v694, %v1125
    %1127 = vst [vmem:[%s978 + $0x110] sm:$0x1] %v1126
    %v1128 = vld [vmem:[%s978 + $0x114] sm:$0xf]
    %v1129 = vsel %vm980, %v701, %v1128
    %1130 = vst [vmem:[%s978 + $0x114] sm:$0xf] %v1129
    %1131 = vst.msk [vmem:[%s978 + $0x118] sm:$0xf] %vm36, %v710
    %v1132 = vld [vmem:[%s978 + $0x11c] sm:$0x1]
    %v1133 = vsel %vm53, %v711, %v1132
    %1134 = vst [vmem:[%s978 + $0x11c] sm:$0x1] %v1133
    %v1135 = vld [vmem:[%s978 + $0x120] sm:$0xf]
    %v1136 = vsel %vm980, %v718, %v1135
    %1137 = vst [vmem:[%s978 + $0x120] sm:$0xf] %v1136
    %1138 = vst.msk [vmem:[%s978 + $0x124] sm:$0xf] %vm36, %v727
    %v1139 = vld [vmem:[%s978 + $0x128] sm:$0x1]
    %v1140 = vsel %vm53, %v728, %v1139
    %1141 = vst [vmem:[%s978 + $0x128] sm:$0x1] %v1140
    %v1142 = vld [vmem:[%s978 + $0x12c] sm:$0xf]
    %v1143 = vsel %vm980, %v735, %v1142
    %1144 = vst [vmem:[%s978 + $0x12c] sm:$0xf] %v1143
    %1145 = vst.msk [vmem:[%s978 + $0x130] sm:$0xf] %vm36, %v744
    %v1146 = vld [vmem:[%s978 + $0x134] sm:$0x1]
    %v1147 = vsel %vm53, %v745, %v1146
    %1148 = vst [vmem:[%s978 + $0x134] sm:$0x1] %v1147
    %v1149 = vld [vmem:[%s978 + $0x138] sm:$0xf]
    %v1150 = vsel %vm980, %v752, %v1149
    %1151 = vst [vmem:[%s978 + $0x138] sm:$0xf] %v1150
    %1152 = vst.msk [vmem:[%s978 + $0x13c] sm:$0xf] %vm36, %v761
    %v1153 = vld [vmem:[%s978 + $0x140] sm:$0x1]
    %v1154 = vsel %vm53, %v762, %v1153
    %1155 = vst [vmem:[%s978 + $0x140] sm:$0x1] %v1154
    %v1156 = vld [vmem:[%s978 + $0x144] sm:$0xf]
    %v1157 = vsel %vm980, %v769, %v1156
    %1158 = vst [vmem:[%s978 + $0x144] sm:$0xf] %v1157
    %1159 = vst.msk [vmem:[%s978 + $0x148] sm:$0xf] %vm36, %v778
    %v1160 = vld [vmem:[%s978 + $0x14c] sm:$0x1]
    %v1161 = vsel %vm53, %v779, %v1160
    %1162 = vst [vmem:[%s978 + $0x14c] sm:$0x1] %v1161
    %v1163 = vld [vmem:[%s978 + $0x150] sm:$0xf]
    %v1164 = vsel %vm980, %v786, %v1163
    %1165 = vst [vmem:[%s978 + $0x150] sm:$0xf] %v1164
    %1166 = vst.msk [vmem:[%s978 + $0x154] sm:$0xf] %vm36, %v795
    %v1167 = vld [vmem:[%s978 + $0x158] sm:$0x1]
    %v1168 = vsel %vm53, %v796, %v1167
    %1169 = vst [vmem:[%s978 + $0x158] sm:$0x1] %v1168
    %v1170 = vld [vmem:[%s978 + $0x15c] sm:$0xf]
    %v1171 = vsel %vm980, %v803, %v1170
    %1172 = vst [vmem:[%s978 + $0x15c] sm:$0xf] %v1171
    %1173 = vst.msk [vmem:[%s978 + $0x160] sm:$0xf] %vm36, %v812
    %v1174 = vld [vmem:[%s978 + $0x164] sm:$0x1]
    %v1175 = vsel %vm53, %v813, %v1174
    %1176 = vst [vmem:[%s978 + $0x164] sm:$0x1] %v1175
    %v1177 = vld [vmem:[%s978 + $0x168] sm:$0xf]
    %v1178 = vsel %vm980, %v820, %v1177
    %1179 = vst [vmem:[%s978 + $0x168] sm:$0xf] %v1178
    %1180 = vst.msk [vmem:[%s978 + $0x16c] sm:$0xf] %vm36, %v829
    %v1181 = vld [vmem:[%s978 + $0x170] sm:$0x1]
    %v1182 = vsel %vm53, %v830, %v1181
    %1183 = vst [vmem:[%s978 + $0x170] sm:$0x1] %v1182
    %v1184 = vld [vmem:[%s978 + $0x174] sm:$0xf]
    %v1185 = vsel %vm980, %v837, %v1184
    %1186 = vst [vmem:[%s978 + $0x174] sm:$0xf] %v1185
    %1187 = vst.msk [vmem:[%s978 + $0x178] sm:$0xf] %vm36, %v846
    %v1188 = vld [vmem:[%s978 + $0x17c] sm:$0x1]
    %v1189 = vsel %vm53, %v847, %v1188
    %1190 = vst [vmem:[%s978 + $0x17c] sm:$0x1] %v1189
    %v1191 = vld [vmem:[%s978 + $0x180] sm:$0xf]
    %v1192 = vsel %vm980, %v854, %v1191
    %1193 = vst [vmem:[%s978 + $0x180] sm:$0xf] %v1192
    %1194 = vst.msk [vmem:[%s978 + $0x184] sm:$0xf] %vm36, %v863
    %v1195 = vld [vmem:[%s978 + $0x188] sm:$0x1]
    %v1196 = vsel %vm53, %v864, %v1195
    %1197 = vst [vmem:[%s978 + $0x188] sm:$0x1] %v1196
    %v1198 = vld [vmem:[%s978 + $0x18c] sm:$0xf]
    %v1199 = vsel %vm980, %v871, %v1198
    %1200 = vst [vmem:[%s978 + $0x18c] sm:$0xf] %v1199
    %1201 = vst.msk [vmem:[%s978 + $0x190] sm:$0xf] %vm36, %v880
    %v1202 = vld [vmem:[%s978 + $0x194] sm:$0x1]
    %v1203 = vsel %vm53, %v881, %v1202
    %1204 = vst [vmem:[%s978 + $0x194] sm:$0x1] %v1203
    %v1205 = vld [vmem:[#allocation2] sm:$0xf]
    %v1206 = vld [vmem:[#allocation2 + $0x4] sm:$0xf]
    %v1207 = vld [vmem:[#allocation2 + $0x8] sm:$0x1]
    %v1208 = vld [vmem:[#allocation2 + $0xc] sm:$0xf]
    %v1209 = vld [vmem:[#allocation2 + $0x10] sm:$0xf]
    %v1210 = vld [vmem:[#allocation2 + $0x14] sm:$0x1]
    %v1211 = vld [vmem:[#allocation2 + $0x18] sm:$0xf]
    %v1212 = vld [vmem:[#allocation2 + $0x1c] sm:$0xf]
    %v1213 = vld [vmem:[#allocation2 + $0x20] sm:$0x1]
    %v1214 = vld [vmem:[#allocation2 + $0x24] sm:$0xf]
    %v1215 = vld [vmem:[#allocation2 + $0x28] sm:$0xf]
    %v1216 = vld [vmem:[#allocation2 + $0x2c] sm:$0x1]
    %v1217 = vld [vmem:[#allocation2 + $0x30] sm:$0xf]
    %v1218 = vld [vmem:[#allocation2 + $0x34] sm:$0xf]
    %v1219 = vld [vmem:[#allocation2 + $0x38] sm:$0x1]
    %v1220 = vld [vmem:[#allocation2 + $0x3c] sm:$0xf]
    %v1221 = vld [vmem:[#allocation2 + $0x40] sm:$0xf]
    %v1222 = vld [vmem:[#allocation2 + $0x44] sm:$0x1]
    %v1223 = vld [vmem:[#allocation2 + $0x48] sm:$0xf]
    %v1224 = vld [vmem:[#allocation2 + $0x4c] sm:$0xf]
    %v1225 = vld [vmem:[#allocation2 + $0x50] sm:$0x1]
    %v1226 = vld [vmem:[#allocation2 + $0x54] sm:$0xf]
    %v1227 = vld [vmem:[#allocation2 + $0x58] sm:$0xf]
    %v1228 = vld [vmem:[#allocation2 + $0x5c] sm:$0x1]
    %v1229 = vld [vmem:[#allocation2 + $0x60] sm:$0xf]
    %v1230 = vld [vmem:[#allocation2 + $0x64] sm:$0xf]
    %v1231 = vld [vmem:[#allocation2 + $0x68] sm:$0x1]
    %v1232 = vld [vmem:[#allocation2 + $0x6c] sm:$0xf]
    %v1233 = vld [vmem:[#allocation2 + $0x70] sm:$0xf]
    %v1234 = vld [vmem:[#allocation2 + $0x74] sm:$0x1]
    %v1235 = vld [vmem:[#allocation2 + $0x78] sm:$0xf]
    %v1236 = vld [vmem:[#allocation2 + $0x7c] sm:$0xf]
    %v1237 = vld [vmem:[#allocation2 + $0x80] sm:$0x1]
    %v1238 = vld [vmem:[#allocation2 + $0x84] sm:$0xf]
    %v1239 = vld [vmem:[#allocation2 + $0x88] sm:$0xf]
    %v1240 = vld [vmem:[#allocation2 + $0x8c] sm:$0x1]
    %v1241 = vld [vmem:[#allocation2 + $0x90] sm:$0xf]
    %v1242 = vld [vmem:[#allocation2 + $0x94] sm:$0xf]
    %v1243 = vld [vmem:[#allocation2 + $0x98] sm:$0x1]
    %v1244 = vld [vmem:[#allocation2 + $0x9c] sm:$0xf]
    %v1245 = vld [vmem:[#allocation2 + $0xa0] sm:$0xf]
    %v1246 = vld [vmem:[#allocation2 + $0xa4] sm:$0x1]
    %v1247 = vld [vmem:[#allocation2 + $0xa8] sm:$0xf]
    %v1248 = vld [vmem:[#allocation2 + $0xac] sm:$0xf]
    %v1249 = vld [vmem:[#allocation2 + $0xb0] sm:$0x1]
    %v1250 = vld [vmem:[#allocation2 + $0xb4] sm:$0xf]
    %v1251 = vld [vmem:[#allocation2 + $0xb8] sm:$0xf]
    %v1252 = vld [vmem:[#allocation2 + $0xbc] sm:$0x1]
    %v1253 = vld [vmem:[#allocation2 + $0xc0] sm:$0xf]
    %v1254 = vld [vmem:[#allocation2 + $0xc4] sm:$0xf]
    %v1255 = vld [vmem:[#allocation2 + $0xc8] sm:$0x1]
    %v1256 = vld [vmem:[#allocation2 + $0xcc] sm:$0xf]
    %v1257 = vld [vmem:[#allocation2 + $0xd0] sm:$0xf]
    %v1258 = vld [vmem:[#allocation2 + $0xd4] sm:$0x1]
    %v1259 = vld [vmem:[#allocation2 + $0xd8] sm:$0xf]
    %v1260 = vld [vmem:[#allocation2 + $0xdc] sm:$0xf]
    %v1261 = vld [vmem:[#allocation2 + $0xe0] sm:$0x1]
    %v1262 = vld [vmem:[#allocation2 + $0xe4] sm:$0xf]
    %v1263 = vld [vmem:[#allocation2 + $0xe8] sm:$0xf]
    %v1264 = vld [vmem:[#allocation2 + $0xec] sm:$0x1]
    %v1265 = vld [vmem:[#allocation2 + $0xf0] sm:$0xf]
    %v1266 = vld [vmem:[#allocation2 + $0xf4] sm:$0xf]
    %v1267 = vld [vmem:[#allocation2 + $0xf8] sm:$0x1]
    %v1268 = vld [vmem:[#allocation2 + $0xfc] sm:$0xf]
    %v1269 = vld [vmem:[#allocation2 + $0x100] sm:$0xf]
    %v1270 = vld [vmem:[#allocation2 + $0x104] sm:$0x1]
    %v1271 = vld [vmem:[#allocation2 + $0x108] sm:$0xf]
    %v1272 = vld [vmem:[#allocation2 + $0x10c] sm:$0xf]
    %v1273 = vld [vmem:[#allocation2 + $0x110] sm:$0x1]
    %v1274 = vld [vmem:[#allocation2 + $0x114] sm:$0xf]
    %v1275 = vld [vmem:[#allocation2 + $0x118] sm:$0xf]
    %v1276 = vld [vmem:[#allocation2 + $0x11c] sm:$0x1]
    %v1277 = vld [vmem:[#allocation2 + $0x120] sm:$0xf]
    %v1278 = vld [vmem:[#allocation2 + $0x124] sm:$0xf]
    %v1279 = vld [vmem:[#allocation2 + $0x128] sm:$0x1]
    %v1280 = vld [vmem:[#allocation2 + $0x12c] sm:$0xf]
    %v1281 = vld [vmem:[#allocation2 + $0x130] sm:$0xf]
    %v1282 = vld [vmem:[#allocation2 + $0x134] sm:$0x1]
    %v1283 = vld [vmem:[#allocation2 + $0x138] sm:$0xf]
    %v1284 = vld [vmem:[#allocation2 + $0x13c] sm:$0xf]
    %v1285 = vld [vmem:[#allocation2 + $0x140] sm:$0x1]
    %v1286 = vld [vmem:[#allocation2 + $0x144] sm:$0xf]
    %v1287 = vld [vmem:[#allocation2 + $0x148] sm:$0xf]
    %v1288 = vld [vmem:[#allocation2 + $0x14c] sm:$0x1]
    %v1289 = vld [vmem:[#allocation2 + $0x150] sm:$0xf]
    %v1290 = vld [vmem:[#allocation2 + $0x154] sm:$0xf]
    %v1291 = vld [vmem:[#allocation2 + $0x158] sm:$0x1]
    %v1292 = vld [vmem:[#allocation2 + $0x15c] sm:$0xf]
    %v1293 = vld [vmem:[#allocation2 + $0x160] sm:$0xf]
    %v1294 = vld [vmem:[#allocation2 + $0x164] sm:$0x1]
    %v1295 = vld [vmem:[#allocation2 + $0x168] sm:$0xf]
    %v1296 = vld [vmem:[#allocation2 + $0x16c] sm:$0xf]
    %v1297 = vld [vmem:[#allocation2 + $0x170] sm:$0x1]
    %v1298 = vld [vmem:[#allocation2 + $0x174] sm:$0xf]
    %v1299 = vld [vmem:[#allocation2 + $0x178] sm:$0xf]
    %v1300 = vld [vmem:[#allocation2 + $0x17c] sm:$0x1]
    %v1301 = vld [vmem:[#allocation2 + $0x180] sm:$0xf]
    %v1302 = vld [vmem:[#allocation2 + $0x184] sm:$0xf]
    %v1303 = vld [vmem:[#allocation2 + $0x188] sm:$0x1]
    %v1304 = vld [vmem:[#allocation2 + $0x18c] sm:$0xf]
    %v1305 = vld [vmem:[#allocation2 + $0x190] sm:$0xf]
    %v1306 = vld [vmem:[#allocation2 + $0x194] sm:$0x1]
    %v1307 = vld [vmem:[#allocation2 + $0x198] sm:$0xf]
    %v1308 = vld [vmem:[#allocation2 + $0x19c] sm:$0xf]
    %v1309 = vld [vmem:[#allocation2 + $0x1a0] sm:$0x1]
    %v1310 = vld [vmem:[#allocation2 + $0x1a4] sm:$0xf]
    %v1311 = vld [vmem:[#allocation2 + $0x1a8] sm:$0xf]
    %v1312 = vld [vmem:[#allocation2 + $0x1ac] sm:$0x1]
    %v1377 = vunpack.c.l.b16 %v1205
    %v1378 = vunpack.c.l.b16 %v1206
    %v1379 = vunpack.c.l.b16 %v1208
    %v1380 = vunpack.c.l.b16 %v1209
    %v1381 = vunpack.c.l.b16 %v1211
    %v1382 = vunpack.c.l.b16 %v1212
    %v1383 = vunpack.c.l.b16 %v1214
    %v1384 = vunpack.c.l.b16 %v1215
    %v1385 = vunpack.c.l.b16 %v1217
    %v1386 = vunpack.c.l.b16 %v1218
    %v1387 = vunpack.c.l.b16 %v1220
    %v1388 = vunpack.c.l.b16 %v1221
    %v1389 = vunpack.c.l.b16 %v1223
    %v1390 = vunpack.c.l.b16 %v1224
    %v1391 = vunpack.c.l.b16 %v1226
    %v1392 = vunpack.c.l.b16 %v1227
    %v1393 = vunpack.c.l.b16 %v1229
    %v1394 = vunpack.c.l.b16 %v1230
    %v1395 = vunpack.c.l.b16 %v1232
    %v1396 = vunpack.c.l.b16 %v1233
    %v1397 = vunpack.c.l.b16 %v1235
    %v1398 = vunpack.c.l.b16 %v1236
    %v1399 = vunpack.c.l.b16 %v1238
    %v1400 = vunpack.c.l.b16 %v1239
    %v1401 = vunpack.c.l.b16 %v1241
    %v1402 = vunpack.c.l.b16 %v1242
    %v1403 = vunpack.c.l.b16 %v1244
    %v1404 = vunpack.c.l.b16 %v1245
    %v1405 = vunpack.c.l.b16 %v1247
    %v1406 = vunpack.c.l.b16 %v1248
    %v1407 = vunpack.c.l.b16 %v1250
    %v1408 = vunpack.c.l.b16 %v1251
    %v1409 = vunpack.c.l.b16 %v1259
    %v1410 = vunpack.c.l.b16 %v1260
    %v1411 = vunpack.c.l.b16 %v1262
    %v1412 = vunpack.c.l.b16 %v1263
    %v1413 = vunpack.c.l.b16 %v1265
    %v1414 = vunpack.c.l.b16 %v1266
    %v1415 = vunpack.c.l.b16 %v1268
    %v1416 = vunpack.c.l.b16 %v1269
    %v1417 = vunpack.c.l.b16 %v1271
    %v1418 = vunpack.c.l.b16 %v1272
    %v1419 = vunpack.c.l.b16 %v1274
    %v1420 = vunpack.c.l.b16 %v1275
    %v1421 = vunpack.c.l.b16 %v1277
    %v1422 = vunpack.c.l.b16 %v1278
    %v1423 = vunpack.c.l.b16 %v1280
    %v1424 = vunpack.c.l.b16 %v1281
    %v1425 = vunpack.c.l.b16 %v1283
    %v1426 = vunpack.c.l.b16 %v1284
    %v1427 = vunpack.c.l.b16 %v1286
    %v1428 = vunpack.c.l.b16 %v1287
    %v1429 = vunpack.c.l.b16 %v1289
    %v1430 = vunpack.c.l.b16 %v1290
    %v1431 = vunpack.c.l.b16 %v1292
    %v1432 = vunpack.c.l.b16 %v1293
    %v1433 = vunpack.c.l.b16 %v1295
    %v1434 = vunpack.c.l.b16 %v1296
    %v1435 = vunpack.c.l.b16 %v1298
    %v1436 = vunpack.c.l.b16 %v1299
    %v1437 = vunpack.c.l.b16 %v1301
    %v1438 = vunpack.c.l.b16 %v1302
    %v1439 = vunpack.c.l.b16 %v1304
    %v1440 = vunpack.c.l.b16 %v1305
    %v1441 = vpack.c.b16 %v1378, %v1377
    %v1442 = vpack.c.b16 %v1380, %v1379
    %v1443 = vpack.c.b16 %v1382, %v1381
    %v1444 = vpack.c.b16 %v1384, %v1383
    %v1445 = vpack.c.b16 %v1386, %v1385
    %v1446 = vpack.c.b16 %v1388, %v1387
    %v1447 = vpack.c.b16 %v1390, %v1389
    %v1448 = vpack.c.b16 %v1392, %v1391
    %v1449 = vpack.c.b16 %v1394, %v1393
    %v1450 = vpack.c.b16 %v1396, %v1395
    %v1451 = vpack.c.b16 %v1398, %v1397
    %v1452 = vpack.c.b16 %v1400, %v1399
    %v1453 = vpack.c.b16 %v1402, %v1401
    %v1454 = vpack.c.b16 %v1404, %v1403
    %v1455 = vpack.c.b16 %v1406, %v1405
    %v1456 = vpack.c.b16 %v1408, %v1407
    %v1457 = vpack.c.b16 %v1410, %v1409
    %v1458 = vpack.c.b16 %v1412, %v1411
    %v1459 = vpack.c.b16 %v1414, %v1413
    %v1460 = vpack.c.b16 %v1416, %v1415
    %v1461 = vpack.c.b16 %v1418, %v1417
    %v1462 = vpack.c.b16 %v1420, %v1419
    %v1463 = vpack.c.b16 %v1422, %v1421
    %v1464 = vpack.c.b16 %v1424, %v1423
    %v1465 = vpack.c.b16 %v1426, %v1425
    %v1466 = vpack.c.b16 %v1428, %v1427
    %v1467 = vpack.c.b16 %v1430, %v1429
    %v1468 = vpack.c.b16 %v1432, %v1431
    %v1469 = vpack.c.b16 %v1434, %v1433
    %v1470 = vpack.c.b16 %v1436, %v1435
    %v1471 = vpack.c.b16 %v1438, %v1437
    %v1472 = vpack.c.b16 %v1440, %v1439
    %vm1505 = vcmask 130048
    %1506 = vst.msk [vmem:[#allocation4] sm:$0xff] %vm1505, %v1441
    %1507 = vst.msk [vmem:[#allocation4 + $0x10] sm:$0xff] %vm1505, %v1442
    %1508 = vst.msk [vmem:[#allocation4 + $0x20] sm:$0xff] %vm1505, %v1443
    %1509 = vst.msk [vmem:[#allocation4 + $0x30] sm:$0xff] %vm1505, %v1444
    %1510 = vst.msk [vmem:[#allocation4 + $0x40] sm:$0xff] %vm1505, %v1445
    %1511 = vst.msk [vmem:[#allocation4 + $0x50] sm:$0xff] %vm1505, %v1446
    %1512 = vst.msk [vmem:[#allocation4 + $0x60] sm:$0xff] %vm1505, %v1447
    %1513 = vst.msk [vmem:[#allocation4 + $0x70] sm:$0xff] %vm1505, %v1448
    %1514 = vst.msk [vmem:[#allocation4 + $0x80] sm:$0xff] %vm1505, %v1449
    %1515 = vst.msk [vmem:[#allocation4 + $0x90] sm:$0xff] %vm1505, %v1450
    %1516 = vst.msk [vmem:[#allocation4 + $0xa0] sm:$0xff] %vm1505, %v1451
    %1517 = vst.msk [vmem:[#allocation4 + $0xb0] sm:$0xff] %vm1505, %v1452
    %1518 = vst.msk [vmem:[#allocation4 + $0xc0] sm:$0xff] %vm1505, %v1453
    %1519 = vst.msk [vmem:[#allocation4 + $0xd0] sm:$0xff] %vm1505, %v1454
    %1520 = vst.msk [vmem:[#allocation4 + $0xe0] sm:$0xff] %vm1505, %v1455
    %1521 = vst.msk [vmem:[#allocation4 + $0xf0] sm:$0xff] %vm1505, %v1456
    %1522 = vst.msk [vmem:[#allocation4 + $0x100] sm:$0xff] %vm1505, %v1457
    %1523 = vst.msk [vmem:[#allocation4 + $0x110] sm:$0xff] %vm1505, %v1458
    %1524 = vst.msk [vmem:[#allocation4 + $0x120] sm:$0xff] %vm1505, %v1459
    %1525 = vst.msk [vmem:[#allocation4 + $0x130] sm:$0xff] %vm1505, %v1460
    %1526 = vst.msk [vmem:[#allocation4 + $0x140] sm:$0xff] %vm1505, %v1461
    %1527 = vst.msk [vmem:[#allocation4 + $0x150] sm:$0xff] %vm1505, %v1462
    %1528 = vst.msk [vmem:[#allocation4 + $0x160] sm:$0xff] %vm1505, %v1463
    %1529 = vst.msk [vmem:[#allocation4 + $0x170] sm:$0xff] %vm1505, %v1464
    %1530 = vst.msk [vmem:[#allocation4 + $0x180] sm:$0xff] %vm1505, %v1465
    %1531 = vst.msk [vmem:[#allocation4 + $0x190] sm:$0xff] %vm1505, %v1466
    %1532 = vst.msk [vmem:[#allocation4 + $0x1a0] sm:$0xff] %vm1505, %v1467
    %1533 = vst.msk [vmem:[#allocation4 + $0x1b0] sm:$0xff] %vm1505, %v1468
    %1534 = vst.msk [vmem:[#allocation4 + $0x1c0] sm:$0xff] %vm1505, %v1469
    %1535 = vst.msk [vmem:[#allocation4 + $0x1d0] sm:$0xff] %vm1505, %v1470
    %1536 = vst.msk [vmem:[#allocation4 + $0x1e0] sm:$0xff] %vm1505, %v1471
    %1537 = vst.msk [vmem:[#allocation4 + $0x1f0] sm:$0xff] %vm1505, %v1472
    %vm1538 = vsmask.f32 3328
    %vm1539 = vsmask.f32 7440
    %vm1540 = vmor %vm1538, %vm1539
    %v1542 = vshrl.u32 %v1205, 16
    %v1544 = vrot.slane %v1542, 4
    %v1545 = vshll.u32 %v1205, 16
    %v1547 = vrot.slane %v1545, 5
    %v1548 = vor.u32 %v1544, %v1547
    %v1549 = vrot.slane %v1548, 4
    %v1551 = vshll.u32 %v1206, 16
    %v1553 = vrot.slane %v1551, 5
    %v1554 = vsel %vm1540, %v1549, %v1553
    %v1555 = vshrl.u32 %v1206, 16
    %v1557 = vrot.slane %v1555, 4
    %v1558 = vor.u32 %v1557, %v1553
    %v1559 = vrot.slane %v1558, 4
    %v1561 = vshll.u32 %v1207, 16
    %v1563 = vrot.slane %v1561, 5
    %v1564 = vsel %vm1540, %v1559, %v1563
    %v1566 = vshrl.u32 %v1208, 16
    %v1568 = vrot.slane %v1566, 4
    %v1569 = vshll.u32 %v1208, 16
    %v1571 = vrot.slane %v1569, 5
    %v1572 = vor.u32 %v1568, %v1571
    %v1573 = vrot.slane %v1572, 4
    %v1575 = vshll.u32 %v1209, 16
    %v1577 = vrot.slane %v1575, 5
    %v1578 = vsel %vm1540, %v1573, %v1577
    %v1579 = vshrl.u32 %v1209, 16
    %v1581 = vrot.slane %v1579, 4
    %v1582 = vor.u32 %v1581, %v1577
    %v1583 = vrot.slane %v1582, 4
    %v1585 = vshll.u32 %v1210, 16
    %v1587 = vrot.slane %v1585, 5
    %v1588 = vsel %vm1540, %v1583, %v1587
    %v1590 = vshrl.u32 %v1211, 16
    %v1592 = vrot.slane %v1590, 4
    %v1593 = vshll.u32 %v1211, 16
    %v1595 = vrot.slane %v1593, 5
    %v1596 = vor.u32 %v1592, %v1595
    %v1597 = vrot.slane %v1596, 4
    %v1599 = vshll.u32 %v1212, 16
    %v1601 = vrot.slane %v1599, 5
    %v1602 = vsel %vm1540, %v1597, %v1601
    %v1603 = vshrl.u32 %v1212, 16
    %v1605 = vrot.slane %v1603, 4
    %v1606 = vor.u32 %v1605, %v1601
    %v1607 = vrot.slane %v1606, 4
    %v1609 = vshll.u32 %v1213, 16
    %v1611 = vrot.slane %v1609, 5
    %v1612 = vsel %vm1540, %v1607, %v1611
    %v1614 = vshrl.u32 %v1214, 16
    %v1616 = vrot.slane %v1614, 4
    %v1617 = vshll.u32 %v1214, 16
    %v1619 = vrot.slane %v1617, 5
    %v1620 = vor.u32 %v1616, %v1619
    %v1621 = vrot.slane %v1620, 4
    %v1623 = vshll.u32 %v1215, 16
    %v1625 = vrot.slane %v1623, 5
    %v1626 = vsel %vm1540, %v1621, %v1625
    %v1627 = vshrl.u32 %v1215, 16
    %v1629 = vrot.slane %v1627, 4
    %v1630 = vor.u32 %v1629, %v1625
    %v1631 = vrot.slane %v1630, 4
    %v1633 = vshll.u32 %v1216, 16
    %v1635 = vrot.slane %v1633, 5
    %v1636 = vsel %vm1540, %v1631, %v1635
    %v1638 = vshrl.u32 %v1217, 16
    %v1640 = vrot.slane %v1638, 4
    %v1641 = vshll.u32 %v1217, 16
    %v1643 = vrot.slane %v1641, 5
    %v1644 = vor.u32 %v1640, %v1643
    %v1645 = vrot.slane %v1644, 4
    %v1647 = vshll.u32 %v1218, 16
    %v1649 = vrot.slane %v1647, 5
    %v1650 = vsel %vm1540, %v1645, %v1649
    %v1651 = vshrl.u32 %v1218, 16
    %v1653 = vrot.slane %v1651, 4
    %v1654 = vor.u32 %v1653, %v1649
    %v1655 = vrot.slane %v1654, 4
    %v1657 = vshll.u32 %v1219, 16
    %v1659 = vrot.slane %v1657, 5
    %v1660 = vsel %vm1540, %v1655, %v1659
    %v1662 = vshrl.u32 %v1220, 16
    %v1664 = vrot.slane %v1662, 4
    %v1665 = vshll.u32 %v1220, 16
    %v1667 = vrot.slane %v1665, 5
    %v1668 = vor.u32 %v1664, %v1667
    %v1669 = vrot.slane %v1668, 4
    %v1671 = vshll.u32 %v1221, 16
    %v1673 = vrot.slane %v1671, 5
    %v1674 = vsel %vm1540, %v1669, %v1673
    %v1675 = vshrl.u32 %v1221, 16
    %v1677 = vrot.slane %v1675, 4
    %v1678 = vor.u32 %v1677, %v1673
    %v1679 = vrot.slane %v1678, 4
    %v1681 = vshll.u32 %v1222, 16
    %v1683 = vrot.slane %v1681, 5
    %v1684 = vsel %vm1540, %v1679, %v1683
    %v1686 = vshrl.u32 %v1223, 16
    %v1688 = vrot.slane %v1686, 4
    %v1689 = vshll.u32 %v1223, 16
    %v1691 = vrot.slane %v1689, 5
    %v1692 = vor.u32 %v1688, %v1691
    %v1693 = vrot.slane %v1692, 4
    %v1695 = vshll.u32 %v1224, 16
    %v1697 = vrot.slane %v1695, 5
    %v1698 = vsel %vm1540, %v1693, %v1697
    %v1699 = vshrl.u32 %v1224, 16
    %v1701 = vrot.slane %v1699, 4
    %v1702 = vor.u32 %v1701, %v1697
    %v1703 = vrot.slane %v1702, 4
    %v1705 = vshll.u32 %v1225, 16
    %v1707 = vrot.slane %v1705, 5
    %v1708 = vsel %vm1540, %v1703, %v1707
    %v1710 = vshrl.u32 %v1226, 16
    %v1712 = vrot.slane %v1710, 4
    %v1713 = vshll.u32 %v1226, 16
    %v1715 = vrot.slane %v1713, 5
    %v1716 = vor.u32 %v1712, %v1715
    %v1717 = vrot.slane %v1716, 4
    %v1719 = vshll.u32 %v1227, 16
    %v1721 = vrot.slane %v1719, 5
    %v1722 = vsel %vm1540, %v1717, %v1721
    %v1723 = vshrl.u32 %v1227, 16
    %v1725 = vrot.slane %v1723, 4
    %v1726 = vor.u32 %v1725, %v1721
    %v1727 = vrot.slane %v1726, 4
    %v1729 = vshll.u32 %v1228, 16
    %v1731 = vrot.slane %v1729, 5
    %v1732 = vsel %vm1540, %v1727, %v1731
    %v1734 = vshrl.u32 %v1229, 16
    %v1736 = vrot.slane %v1734, 4
    %v1737 = vshll.u32 %v1229, 16
    %v1739 = vrot.slane %v1737, 5
    %v1740 = vor.u32 %v1736, %v1739
    %v1741 = vrot.slane %v1740, 4
    %v1743 = vshll.u32 %v1230, 16
    %v1745 = vrot.slane %v1743, 5
    %v1746 = vsel %vm1540, %v1741, %v1745
    %v1747 = vshrl.u32 %v1230, 16
    %v1749 = vrot.slane %v1747, 4
    %v1750 = vor.u32 %v1749, %v1745
    %v1751 = vrot.slane %v1750, 4
    %v1753 = vshll.u32 %v1231, 16
    %v1755 = vrot.slane %v1753, 5
    %v1756 = vsel %vm1540, %v1751, %v1755
    %v1758 = vshrl.u32 %v1232, 16
    %v1760 = vrot.slane %v1758, 4
    %v1761 = vshll.u32 %v1232, 16
    %v1763 = vrot.slane %v1761, 5
    %v1764 = vor.u32 %v1760, %v1763
    %v1765 = vrot.slane %v1764, 4
    %v1767 = vshll.u32 %v1233, 16
    %v1769 = vrot.slane %v1767, 5
    %v1770 = vsel %vm1540, %v1765, %v1769
    %v1771 = vshrl.u32 %v1233, 16
    %v1773 = vrot.slane %v1771, 4
    %v1774 = vor.u32 %v1773, %v1769
    %v1775 = vrot.slane %v1774, 4
    %v1777 = vshll.u32 %v1234, 16
    %v1779 = vrot.slane %v1777, 5
    %v1780 = vsel %vm1540, %v1775, %v1779
    %v1782 = vshrl.u32 %v1235, 16
    %v1784 = vrot.slane %v1782, 4
    %v1785 = vshll.u32 %v1235, 16
    %v1787 = vrot.slane %v1785, 5
    %v1788 = vor.u32 %v1784, %v1787
    %v1789 = vrot.slane %v1788, 4
    %v1791 = vshll.u32 %v1236, 16
    %v1793 = vrot.slane %v1791, 5
    %v1794 = vsel %vm1540, %v1789, %v1793
    %v1795 = vshrl.u32 %v1236, 16
    %v1797 = vrot.slane %v1795, 4
    %v1798 = vor.u32 %v1797, %v1793
    %v1799 = vrot.slane %v1798, 4
    %v1801 = vshll.u32 %v1237, 16
    %v1803 = vrot.slane %v1801, 5
    %v1804 = vsel %vm1540, %v1799, %v1803
    %v1806 = vshrl.u32 %v1238, 16
    %v1808 = vrot.slane %v1806, 4
    %v1809 = vshll.u32 %v1238, 16
    %v1811 = vrot.slane %v1809, 5
    %v1812 = vor.u32 %v1808, %v1811
    %v1813 = vrot.slane %v1812, 4
    %v1815 = vshll.u32 %v1239, 16
    %v1817 = vrot.slane %v1815, 5
    %v1818 = vsel %vm1540, %v1813, %v1817
    %v1819 = vshrl.u32 %v1239, 16
    %v1821 = vrot.slane %v1819, 4
    %v1822 = vor.u32 %v1821, %v1817
    %v1823 = vrot.slane %v1822, 4
    %v1825 = vshll.u32 %v1240, 16
    %v1827 = vrot.slane %v1825, 5
    %v1828 = vsel %vm1540, %v1823, %v1827
    %v1830 = vshrl.u32 %v1241, 16
    %v1832 = vrot.slane %v1830, 4
    %v1833 = vshll.u32 %v1241, 16
    %v1835 = vrot.slane %v1833, 5
    %v1836 = vor.u32 %v1832, %v1835
    %v1837 = vrot.slane %v1836, 4
    %v1839 = vshll.u32 %v1242, 16
    %v1841 = vrot.slane %v1839, 5
    %v1842 = vsel %vm1540, %v1837, %v1841
    %v1843 = vshrl.u32 %v1242, 16
    %v1845 = vrot.slane %v1843, 4
    %v1846 = vor.u32 %v1845, %v1841
    %v1847 = vrot.slane %v1846, 4
    %v1849 = vshll.u32 %v1243, 16
    %v1851 = vrot.slane %v1849, 5
    %v1852 = vsel %vm1540, %v1847, %v1851
    %v1854 = vshrl.u32 %v1244, 16
    %v1856 = vrot.slane %v1854, 4
    %v1857 = vshll.u32 %v1244, 16
    %v1859 = vrot.slane %v1857, 5
    %v1860 = vor.u32 %v1856, %v1859
    %v1861 = vrot.slane %v1860, 4
    %v1863 = vshll.u32 %v1245, 16
    %v1865 = vrot.slane %v1863, 5
    %v1866 = vsel %vm1540, %v1861, %v1865
    %v1867 = vshrl.u32 %v1245, 16
    %v1869 = vrot.slane %v1867, 4
    %v1870 = vor.u32 %v1869, %v1865
    %v1871 = vrot.slane %v1870, 4
    %v1873 = vshll.u32 %v1246, 16
    %v1875 = vrot.slane %v1873, 5
    %v1876 = vsel %vm1540, %v1871, %v1875
    %v1878 = vshrl.u32 %v1247, 16
    %v1880 = vrot.slane %v1878, 4
    %v1881 = vshll.u32 %v1247, 16
    %v1883 = vrot.slane %v1881, 5
    %v1884 = vor.u32 %v1880, %v1883
    %v1885 = vrot.slane %v1884, 4
    %v1887 = vshll.u32 %v1248, 16
    %v1889 = vrot.slane %v1887, 5
    %v1890 = vsel %vm1540, %v1885, %v1889
    %v1891 = vshrl.u32 %v1248, 16
    %v1893 = vrot.slane %v1891, 4
    %v1894 = vor.u32 %v1893, %v1889
    %v1895 = vrot.slane %v1894, 4
    %v1897 = vshll.u32 %v1249, 16
    %v1899 = vrot.slane %v1897, 5
    %v1900 = vsel %vm1540, %v1895, %v1899
    %v1902 = vshrl.u32 %v1250, 16
    %v1904 = vrot.slane %v1902, 4
    %v1905 = vshll.u32 %v1250, 16
    %v1907 = vrot.slane %v1905, 5
    %v1908 = vor.u32 %v1904, %v1907
    %v1909 = vrot.slane %v1908, 4
    %v1911 = vshll.u32 %v1251, 16
    %v1913 = vrot.slane %v1911, 5
    %v1914 = vsel %vm1540, %v1909, %v1913
    %v1915 = vshrl.u32 %v1251, 16
    %v1917 = vrot.slane %v1915, 4
    %v1918 = vor.u32 %v1917, %v1913
    %v1919 = vrot.slane %v1918, 4
    %v1921 = vshll.u32 %v1252, 16
    %v1923 = vrot.slane %v1921, 5
    %v1924 = vsel %vm1540, %v1919, %v1923
    %v1926 = vshrl.u32 %v1259, 16
    %v1928 = vrot.slane %v1926, 4
    %v1929 = vshll.u32 %v1259, 16
    %v1931 = vrot.slane %v1929, 5
    %v1932 = vor.u32 %v1928, %v1931
    %v1933 = vrot.slane %v1932, 4
    %v1935 = vshll.u32 %v1260, 16
    %v1937 = vrot.slane %v1935, 5
    %v1938 = vsel %vm1540, %v1933, %v1937
    %v1939 = vshrl.u32 %v1260, 16
    %v1941 = vrot.slane %v1939, 4
    %v1942 = vor.u32 %v1941, %v1937
    %v1943 = vrot.slane %v1942, 4
    %v1945 = vshll.u32 %v1261, 16
    %v1947 = vrot.slane %v1945, 5
    %v1948 = vsel %vm1540, %v1943, %v1947
    %v1950 = vshrl.u32 %v1262, 16
    %v1952 = vrot.slane %v1950, 4
    %v1953 = vshll.u32 %v1262, 16
    %v1955 = vrot.slane %v1953, 5
    %v1956 = vor.u32 %v1952, %v1955
    %v1957 = vrot.slane %v1956, 4
    %v1959 = vshll.u32 %v1263, 16
    %v1961 = vrot.slane %v1959, 5
    %v1962 = vsel %vm1540, %v1957, %v1961
    %v1963 = vshrl.u32 %v1263, 16
    %v1965 = vrot.slane %v1963, 4
    %v1966 = vor.u32 %v1965, %v1961
    %v1967 = vrot.slane %v1966, 4
    %v1969 = vshll.u32 %v1264, 16
    %v1971 = vrot.slane %v1969, 5
    %v1972 = vsel %vm1540, %v1967, %v1971
    %v1974 = vshrl.u32 %v1265, 16
    %v1976 = vrot.slane %v1974, 4
    %v1977 = vshll.u32 %v1265, 16
    %v1979 = vrot.slane %v1977, 5
    %v1980 = vor.u32 %v1976, %v1979
    %v1981 = vrot.slane %v1980, 4
    %v1983 = vshll.u32 %v1266, 16
    %v1985 = vrot.slane %v1983, 5
    %v1986 = vsel %vm1540, %v1981, %v1985
    %v1987 = vshrl.u32 %v1266, 16
    %v1989 = vrot.slane %v1987, 4
    %v1990 = vor.u32 %v1989, %v1985
    %v1991 = vrot.slane %v1990, 4
    %v1993 = vshll.u32 %v1267, 16
    %v1995 = vrot.slane %v1993, 5
    %v1996 = vsel %vm1540, %v1991, %v1995
    %v1998 = vshrl.u32 %v1268, 16
    %v2000 = vrot.slane %v1998, 4
    %v2001 = vshll.u32 %v1268, 16
    %v2003 = vrot.slane %v2001, 5
    %v2004 = vor.u32 %v2000, %v2003
    %v2005 = vrot.slane %v2004, 4
    %v2007 = vshll.u32 %v1269, 16
    %v2009 = vrot.slane %v2007, 5
    %v2010 = vsel %vm1540, %v2005, %v2009
    %v2011 = vshrl.u32 %v1269, 16
    %v2013 = vrot.slane %v2011, 4
    %v2014 = vor.u32 %v2013, %v2009
    %v2015 = vrot.slane %v2014, 4
    %v2017 = vshll.u32 %v1270, 16
    %v2019 = vrot.slane %v2017, 5
    %v2020 = vsel %vm1540, %v2015, %v2019
    %v2022 = vshrl.u32 %v1271, 16
    %v2024 = vrot.slane %v2022, 4
    %v2025 = vshll.u32 %v1271, 16
    %v2027 = vrot.slane %v2025, 5
    %v2028 = vor.u32 %v2024, %v2027
    %v2029 = vrot.slane %v2028, 4
    %v2031 = vshll.u32 %v1272, 16
    %v2033 = vrot.slane %v2031, 5
    %v2034 = vsel %vm1540, %v2029, %v2033
    %v2035 = vshrl.u32 %v1272, 16
    %v2037 = vrot.slane %v2035, 4
    %v2038 = vor.u32 %v2037, %v2033
    %v2039 = vrot.slane %v2038, 4
    %v2041 = vshll.u32 %v1273, 16
    %v2043 = vrot.slane %v2041, 5
    %v2044 = vsel %vm1540, %v2039, %v2043
    %v2046 = vshrl.u32 %v1274, 16
    %v2048 = vrot.slane %v2046, 4
    %v2049 = vshll.u32 %v1274, 16
    %v2051 = vrot.slane %v2049, 5
    %v2052 = vor.u32 %v2048, %v2051
    %v2053 = vrot.slane %v2052, 4
    %v2055 = vshll.u32 %v1275, 16
    %v2057 = vrot.slane %v2055, 5
    %v2058 = vsel %vm1540, %v2053, %v2057
    %v2059 = vshrl.u32 %v1275, 16
    %v2061 = vrot.slane %v2059, 4
    %v2062 = vor.u32 %v2061, %v2057
    %v2063 = vrot.slane %v2062, 4
    %v2065 = vshll.u32 %v1276, 16
    %v2067 = vrot.slane %v2065, 5
    %v2068 = vsel %vm1540, %v2063, %v2067
    %v2070 = vshrl.u32 %v1277, 16
    %v2072 = vrot.slane %v2070, 4
    %v2073 = vshll.u32 %v1277, 16
    %v2075 = vrot.slane %v2073, 5
    %v2076 = vor.u32 %v2072, %v2075
    %v2077 = vrot.slane %v2076, 4
    %v2079 = vshll.u32 %v1278, 16
    %v2081 = vrot.slane %v2079, 5
    %v2082 = vsel %vm1540, %v2077, %v2081
    %v2083 = vshrl.u32 %v1278, 16
    %v2085 = vrot.slane %v2083, 4
    %v2086 = vor.u32 %v2085, %v2081
    %v2087 = vrot.slane %v2086, 4
    %v2089 = vshll.u32 %v1279, 16
    %v2091 = vrot.slane %v2089, 5
    %v2092 = vsel %vm1540, %v2087, %v2091
    %v2094 = vshrl.u32 %v1280, 16
    %v2096 = vrot.slane %v2094, 4
    %v2097 = vshll.u32 %v1280, 16
    %v2099 = vrot.slane %v2097, 5
    %v2100 = vor.u32 %v2096, %v2099
    %v2101 = vrot.slane %v2100, 4
    %v2103 = vshll.u32 %v1281, 16
    %v2105 = vrot.slane %v2103, 5
    %v2106 = vsel %vm1540, %v2101, %v2105
    %v2107 = vshrl.u32 %v1281, 16
    %v2109 = vrot.slane %v2107, 4
    %v2110 = vor.u32 %v2109, %v2105
    %v2111 = vrot.slane %v2110, 4
    %v2113 = vshll.u32 %v1282, 16
    %v2115 = vrot.slane %v2113, 5
    %v2116 = vsel %vm1540, %v2111, %v2115
    %v2118 = vshrl.u32 %v1283, 16
    %v2120 = vrot.slane %v2118, 4
    %v2121 = vshll.u32 %v1283, 16
    %v2123 = vrot.slane %v2121, 5
    %v2124 = vor.u32 %v2120, %v2123
    %v2125 = vrot.slane %v2124, 4
    %v2127 = vshll.u32 %v1284, 16
    %v2129 = vrot.slane %v2127, 5
    %v2130 = vsel %vm1540, %v2125, %v2129
    %v2131 = vshrl.u32 %v1284, 16
    %v2133 = vrot.slane %v2131, 4
    %v2134 = vor.u32 %v2133, %v2129
    %v2135 = vrot.slane %v2134, 4
    %v2137 = vshll.u32 %v1285, 16
    %v2139 = vrot.slane %v2137, 5
    %v2140 = vsel %vm1540, %v2135, %v2139
    %v2142 = vshrl.u32 %v1286, 16
    %v2144 = vrot.slane %v2142, 4
    %v2145 = vshll.u32 %v1286, 16
    %v2147 = vrot.slane %v2145, 5
    %v2148 = vor.u32 %v2144, %v2147
    %v2149 = vrot.slane %v2148, 4
    %v2151 = vshll.u32 %v1287, 16
    %v2153 = vrot.slane %v2151, 5
    %v2154 = vsel %vm1540, %v2149, %v2153
    %v2155 = vshrl.u32 %v1287, 16
    %v2157 = vrot.slane %v2155, 4
    %v2158 = vor.u32 %v2157, %v2153
    %v2159 = vrot.slane %v2158, 4
    %v2161 = vshll.u32 %v1288, 16
    %v2163 = vrot.slane %v2161, 5
    %v2164 = vsel %vm1540, %v2159, %v2163
    %v2166 = vshrl.u32 %v1289, 16
    %v2168 = vrot.slane %v2166, 4
    %v2169 = vshll.u32 %v1289, 16
    %v2171 = vrot.slane %v2169, 5
    %v2172 = vor.u32 %v2168, %v2171
    %v2173 = vrot.slane %v2172, 4
    %v2175 = vshll.u32 %v1290, 16
    %v2177 = vrot.slane %v2175, 5
    %v2178 = vsel %vm1540, %v2173, %v2177
    %v2179 = vshrl.u32 %v1290, 16
    %v2181 = vrot.slane %v2179, 4
    %v2182 = vor.u32 %v2181, %v2177
    %v2183 = vrot.slane %v2182, 4
    %v2185 = vshll.u32 %v1291, 16
    %v2187 = vrot.slane %v2185, 5
    %v2188 = vsel %vm1540, %v2183, %v2187
    %v2190 = vshrl.u32 %v1292, 16
    %v2192 = vrot.slane %v2190, 4
    %v2193 = vshll.u32 %v1292, 16
    %v2195 = vrot.slane %v2193, 5
    %v2196 = vor.u32 %v2192, %v2195
    %v2197 = vrot.slane %v2196, 4
    %v2199 = vshll.u32 %v1293, 16
    %v2201 = vrot.slane %v2199, 5
    %v2202 = vsel %vm1540, %v2197, %v2201
    %v2203 = vshrl.u32 %v1293, 16
    %v2205 = vrot.slane %v2203, 4
    %v2206 = vor.u32 %v2205, %v2201
    %v2207 = vrot.slane %v2206, 4
    %v2209 = vshll.u32 %v1294, 16
    %v2211 = vrot.slane %v2209, 5
    %v2212 = vsel %vm1540, %v2207, %v2211
    %v2214 = vshrl.u32 %v1295, 16
    %v2216 = vrot.slane %v2214, 4
    %v2217 = vshll.u32 %v1295, 16
    %v2219 = vrot.slane %v2217, 5
    %v2220 = vor.u32 %v2216, %v2219
    %v2221 = vrot.slane %v2220, 4
    %v2223 = vshll.u32 %v1296, 16
    %v2225 = vrot.slane %v2223, 5
    %v2226 = vsel %vm1540, %v2221, %v2225
    %v2227 = vshrl.u32 %v1296, 16
    %v2229 = vrot.slane %v2227, 4
    %v2230 = vor.u32 %v2229, %v2225
    %v2231 = vrot.slane %v2230, 4
    %v2233 = vshll.u32 %v1297, 16
    %v2235 = vrot.slane %v2233, 5
    %v2236 = vsel %vm1540, %v2231, %v2235
    %v2238 = vshrl.u32 %v1298, 16
    %v2240 = vrot.slane %v2238, 4
    %v2241 = vshll.u32 %v1298, 16
    %v2243 = vrot.slane %v2241, 5
    %v2244 = vor.u32 %v2240, %v2243
    %v2245 = vrot.slane %v2244, 4
    %v2247 = vshll.u32 %v1299, 16
    %v2249 = vrot.slane %v2247, 5
    %v2250 = vsel %vm1540, %v2245, %v2249
    %v2251 = vshrl.u32 %v1299, 16
    %v2253 = vrot.slane %v2251, 4
    %v2254 = vor.u32 %v2253, %v2249
    %v2255 = vrot.slane %v2254, 4
    %v2257 = vshll.u32 %v1300, 16
    %v2259 = vrot.slane %v2257, 5
    %v2260 = vsel %vm1540, %v2255, %v2259
    %v2262 = vshrl.u32 %v1301, 16
    %v2264 = vrot.slane %v2262, 4
    %v2265 = vshll.u32 %v1301, 16
    %v2267 = vrot.slane %v2265, 5
    %v2268 = vor.u32 %v2264, %v2267
    %v2269 = vrot.slane %v2268, 4
    %v2271 = vshll.u32 %v1302, 16
    %v2273 = vrot.slane %v2271, 5
    %v2274 = vsel %vm1540, %v2269, %v2273
    %v2275 = vshrl.u32 %v1302, 16
    %v2277 = vrot.slane %v2275, 4
    %v2278 = vor.u32 %v2277, %v2273
    %v2279 = vrot.slane %v2278, 4
    %v2281 = vshll.u32 %v1303, 16
    %v2283 = vrot.slane %v2281, 5
    %v2284 = vsel %vm1540, %v2279, %v2283
    %v2286 = vshrl.u32 %v1304, 16
    %v2288 = vrot.slane %v2286, 4
    %v2289 = vshll.u32 %v1304, 16
    %v2291 = vrot.slane %v2289, 5
    %v2292 = vor.u32 %v2288, %v2291
    %v2293 = vrot.slane %v2292, 4
    %v2295 = vshll.u32 %v1305, 16
    %v2297 = vrot.slane %v2295, 5
    %v2298 = vsel %vm1540, %v2293, %v2297
    %v2299 = vshrl.u32 %v1305, 16
    %v2301 = vrot.slane %v2299, 4
    %v2302 = vor.u32 %v2301, %v2297
    %v2303 = vrot.slane %v2302, 4
    %v2305 = vshll.u32 %v1306, 16
    %v2307 = vrot.slane %v2305, 5
    %v2308 = vsel %vm1540, %v2303, %v2307
    %v2309 = vunpack.c.l.b16 %v1554
    %v2310 = vunpack.c.l.b16 %v1564
    %v2311 = vunpack.c.l.b16 %v1578
    %v2312 = vunpack.c.l.b16 %v1588
    %v2313 = vunpack.c.l.b16 %v1602
    %v2314 = vunpack.c.l.b16 %v1612
    %v2315 = vunpack.c.l.b16 %v1626
    %v2316 = vunpack.c.l.b16 %v1636
    %v2317 = vunpack.c.l.b16 %v1650
    %v2318 = vunpack.c.l.b16 %v1660
    %v2319 = vunpack.c.l.b16 %v1674
    %v2320 = vunpack.c.l.b16 %v1684
    %v2321 = vunpack.c.l.b16 %v1698
    %v2322 = vunpack.c.l.b16 %v1708
    %v2323 = vunpack.c.l.b16 %v1722
    %v2324 = vunpack.c.l.b16 %v1732
    %v2325 = vunpack.c.l.b16 %v1746
    %v2326 = vunpack.c.l.b16 %v1756
    %v2327 = vunpack.c.l.b16 %v1770
    %v2328 = vunpack.c.l.b16 %v1780
    %v2329 = vunpack.c.l.b16 %v1794
    %v2330 = vunpack.c.l.b16 %v1804
    %v2331 = vunpack.c.l.b16 %v1818
    %v2332 = vunpack.c.l.b16 %v1828
    %v2333 = vunpack.c.l.b16 %v1842
    %v2334 = vunpack.c.l.b16 %v1852
    %v2335 = vunpack.c.l.b16 %v1866
    %v2336 = vunpack.c.l.b16 %v1876
    %v2337 = vunpack.c.l.b16 %v1890
    %v2338 = vunpack.c.l.b16 %v1900
    %v2339 = vunpack.c.l.b16 %v1914
    %v2340 = vunpack.c.l.b16 %v1924
    %v2341 = vunpack.c.l.b16 %v1938
    %v2342 = vunpack.c.l.b16 %v1948
    %v2343 = vunpack.c.l.b16 %v1962
    %v2344 = vunpack.c.l.b16 %v1972
    %v2345 = vunpack.c.l.b16 %v1986
    %v2346 = vunpack.c.l.b16 %v1996
    %v2347 = vunpack.c.l.b16 %v2010
    %v2348 = vunpack.c.l.b16 %v2020
    %v2349 = vunpack.c.l.b16 %v2034
    %v2350 = vunpack.c.l.b16 %v2044
    %v2351 = vunpack.c.l.b16 %v2058
    %v2352 = vunpack.c.l.b16 %v2068
    %v2353 = vunpack.c.l.b16 %v2082
    %v2354 = vunpack.c.l.b16 %v2092
    %v2355 = vunpack.c.l.b16 %v2106
    %v2356 = vunpack.c.l.b16 %v2116
    %v2357 = vunpack.c.l.b16 %v2130
    %v2358 = vunpack.c.l.b16 %v2140
    %v2359 = vunpack.c.l.b16 %v2154
    %v2360 = vunpack.c.l.b16 %v2164
    %v2361 = vunpack.c.l.b16 %v2178
    %v2362 = vunpack.c.l.b16 %v2188
    %v2363 = vunpack.c.l.b16 %v2202
    %v2364 = vunpack.c.l.b16 %v2212
    %v2365 = vunpack.c.l.b16 %v2226
    %v2366 = vunpack.c.l.b16 %v2236
    %v2367 = vunpack.c.l.b16 %v2250
    %v2368 = vunpack.c.l.b16 %v2260
    %v2369 = vunpack.c.l.b16 %v2274
    %v2370 = vunpack.c.l.b16 %v2284
    %v2371 = vunpack.c.l.b16 %v2298
    %v2372 = vunpack.c.l.b16 %v2308
    %v2373 = vpack.c.b16 %v2310, %v2309
    %v2374 = vpack.c.b16 %v2312, %v2311
    %v2375 = vpack.c.b16 %v2314, %v2313
    %v2376 = vpack.c.b16 %v2316, %v2315
    %v2377 = vpack.c.b16 %v2318, %v2317
    %v2378 = vpack.c.b16 %v2320, %v2319
    %v2379 = vpack.c.b16 %v2322, %v2321
    %v2380 = vpack.c.b16 %v2324, %v2323
    %v2381 = vpack.c.b16 %v2326, %v2325
    %v2382 = vpack.c.b16 %v2328, %v2327
    %v2383 = vpack.c.b16 %v2330, %v2329
    %v2384 = vpack.c.b16 %v2332, %v2331
    %v2385 = vpack.c.b16 %v2334, %v2333
    %v2386 = vpack.c.b16 %v2336, %v2335
    %v2387 = vpack.c.b16 %v2338, %v2337
    %v2388 = vpack.c.b16 %v2340, %v2339
    %v2389 = vpack.c.b16 %v2342, %v2341
    %v2390 = vpack.c.b16 %v2344, %v2343
    %v2391 = vpack.c.b16 %v2346, %v2345
    %v2392 = vpack.c.b16 %v2348, %v2347
    %v2393 = vpack.c.b16 %v2350, %v2349
    %v2394 = vpack.c.b16 %v2352, %v2351
    %v2395 = vpack.c.b16 %v2354, %v2353
    %v2396 = vpack.c.b16 %v2356, %v2355
    %v2397 = vpack.c.b16 %v2358, %v2357
    %v2398 = vpack.c.b16 %v2360, %v2359
    %v2399 = vpack.c.b16 %v2362, %v2361
    %v2400 = vpack.c.b16 %v2364, %v2363
    %v2401 = vpack.c.b16 %v2366, %v2365
    %v2402 = vpack.c.b16 %v2368, %v2367
    %v2403 = vpack.c.b16 %v2370, %v2369
    %v2404 = vpack.c.b16 %v2372, %v2371
    %2405 = vrot.lane.b32.xlu0 %v2373, 16
    %v2406 = vpop.permute.xlu0 %2405
    %2407 = vrot.lane.b32.xlu0 %v2374, 16
    %v2408 = vpop.permute.xlu0 %2407
    %2409 = vrot.lane.b32.xlu0 %v2375, 16
    %v2410 = vpop.permute.xlu0 %2409
    %2411 = vrot.lane.b32.xlu0 %v2376, 16
    %v2412 = vpop.permute.xlu0 %2411
    %2413 = vrot.lane.b32.xlu0 %v2377, 16
    %v2414 = vpop.permute.xlu0 %2413
    %2415 = vrot.lane.b32.xlu0 %v2378, 16
    %v2416 = vpop.permute.xlu0 %2415
    %2417 = vrot.lane.b32.xlu0 %v2379, 16
    %v2418 = vpop.permute.xlu0 %2417
    %2419 = vrot.lane.b32.xlu0 %v2380, 16
    %v2420 = vpop.permute.xlu0 %2419
    %2421 = vrot.lane.b32.xlu0 %v2381, 16
    %v2422 = vpop.permute.xlu0 %2421
    %2423 = vrot.lane.b32.xlu0 %v2382, 16
    %v2424 = vpop.permute.xlu0 %2423
    %2425 = vrot.lane.b32.xlu0 %v2383, 16
    %v2426 = vpop.permute.xlu0 %2425
    %2427 = vrot.lane.b32.xlu0 %v2384, 16
    %v2428 = vpop.permute.xlu0 %2427
    %2429 = vrot.lane.b32.xlu0 %v2385, 16
    %v2430 = vpop.permute.xlu0 %2429
    %2431 = vrot.lane.b32.xlu0 %v2386, 16
    %v2432 = vpop.permute.xlu0 %2431
    %2433 = vrot.lane.b32.xlu0 %v2387, 16
    %v2434 = vpop.permute.xlu0 %2433
    %2435 = vrot.lane.b32.xlu0 %v2388, 16
    %v2436 = vpop.permute.xlu0 %2435
    %2437 = vrot.lane.b32.xlu0 %v2389, 16
    %v2438 = vpop.permute.xlu0 %2437
    %2439 = vrot.lane.b32.xlu0 %v2390, 16
    %v2440 = vpop.permute.xlu0 %2439
    %2441 = vrot.lane.b32.xlu0 %v2391, 16
    %v2442 = vpop.permute.xlu0 %2441
    %2443 = vrot.lane.b32.xlu0 %v2392, 16
    %v2444 = vpop.permute.xlu0 %2443
    %2445 = vrot.lane.b32.xlu0 %v2393, 16
    %v2446 = vpop.permute.xlu0 %2445
    %2447 = vrot.lane.b32.xlu0 %v2394, 16
    %v2448 = vpop.permute.xlu0 %2447
    %2449 = vrot.lane.b32.xlu0 %v2395, 16
    %v2450 = vpop.permute.xlu0 %2449
    %2451 = vrot.lane.b32.xlu0 %v2396, 16
    %v2452 = vpop.permute.xlu0 %2451
    %2453 = vrot.lane.b32.xlu0 %v2397, 16
    %v2454 = vpop.permute.xlu0 %2453
    %2455 = vrot.lane.b32.xlu0 %v2398, 16
    %v2456 = vpop.permute.xlu0 %2455
    %2457 = vrot.lane.b32.xlu0 %v2399, 16
    %v2458 = vpop.permute.xlu0 %2457
    %2459 = vrot.lane.b32.xlu0 %v2400, 16
    %v2460 = vpop.permute.xlu0 %2459
    %2461 = vrot.lane.b32.xlu0 %v2401, 16
    %v2462 = vpop.permute.xlu0 %2461
    %2463 = vrot.lane.b32.xlu0 %v2402, 16
    %v2464 = vpop.permute.xlu0 %2463
    %2465 = vrot.lane.b32.xlu0 %v2403, 16
    %v2466 = vpop.permute.xlu0 %2465
    %2467 = vrot.lane.b32.xlu0 %v2404, 16
    %v2468 = vpop.permute.xlu0 %2467
    %vm2501 = vcmask 261248
    %2502 = vst.msk [vmem:[#allocation4] sm:$0xff] %vm2501, %v2406
    %2503 = vst.msk [vmem:[#allocation4 + $0x10] sm:$0xff] %vm2501, %v2408
    %2504 = vst.msk [vmem:[#allocation4 + $0x20] sm:$0xff] %vm2501, %v2410
    %2505 = vst.msk [vmem:[#allocation4 + $0x30] sm:$0xff] %vm2501, %v2412
    %2506 = vst.msk [vmem:[#allocation4 + $0x40] sm:$0xff] %vm2501, %v2414
    %2507 = vst.msk [vmem:[#allocation4 + $0x50] sm:$0xff] %vm2501, %v2416
    %2508 = vst.msk [vmem:[#allocation4 + $0x60] sm:$0xff] %vm2501, %v2418
    %2509 = vst.msk [vmem:[#allocation4 + $0x70] sm:$0xff] %vm2501, %v2420
    %2510 = vst.msk [vmem:[#allocation4 + $0x80] sm:$0xff] %vm2501, %v2422
    %2511 = vst.msk [vmem:[#allocation4 + $0x90] sm:$0xff] %vm2501, %v2424
    %2512 = vst.msk [vmem:[#allocation4 + $0xa0] sm:$0xff] %vm2501, %v2426
    %2513 = vst.msk [vmem:[#allocation4 + $0xb0] sm:$0xff] %vm2501, %v2428
    %2514 = vst.msk [vmem:[#allocation4 + $0xc0] sm:$0xff] %vm2501, %v2430
    %2515 = vst.msk [vmem:[#allocation4 + $0xd0] sm:$0xff] %vm2501, %v2432
    %2516 = vst.msk [vmem:[#allocation4 + $0xe0] sm:$0xff] %vm2501, %v2434
    %2517 = vst.msk [vmem:[#allocation4 + $0xf0] sm:$0xff] %vm2501, %v2436
    %2518 = vst.msk [vmem:[#allocation4 + $0x100] sm:$0xff] %vm2501, %v2438
    %2519 = vst.msk [vmem:[#allocation4 + $0x110] sm:$0xff] %vm2501, %v2440
    %2520 = vst.msk [vmem:[#allocation4 + $0x120] sm:$0xff] %vm2501, %v2442
    %2521 = vst.msk [vmem:[#allocation4 + $0x130] sm:$0xff] %vm2501, %v2444
    %2522 = vst.msk [vmem:[#allocation4 + $0x140] sm:$0xff] %vm2501, %v2446
    %2523 = vst.msk [vmem:[#allocation4 + $0x150] sm:$0xff] %vm2501, %v2448
    %2524 = vst.msk [vmem:[#allocation4 + $0x160] sm:$0xff] %vm2501, %v2450
    %2525 = vst.msk [vmem:[#allocation4 + $0x170] sm:$0xff] %vm2501, %v2452
    %2526 = vst.msk [vmem:[#allocation4 + $0x180] sm:$0xff] %vm2501, %v2454
    %2527 = vst.msk [vmem:[#allocation4 + $0x190] sm:$0xff] %vm2501, %v2456
    %2528 = vst.msk [vmem:[#allocation4 + $0x1a0] sm:$0xff] %vm2501, %v2458
    %2529 = vst.msk [vmem:[#allocation4 + $0x1b0] sm:$0xff] %vm2501, %v2460
    %2530 = vst.msk [vmem:[#allocation4 + $0x1c0] sm:$0xff] %vm2501, %v2462
    %2531 = vst.msk [vmem:[#allocation4 + $0x1d0] sm:$0xff] %vm2501, %v2464
    %2532 = vst.msk [vmem:[#allocation4 + $0x1e0] sm:$0xff] %vm2501, %v2466
    %2533 = vst.msk [vmem:[#allocation4 + $0x1f0] sm:$0xff] %vm2501, %v2468
    %vm2566 = vcmask 1042432
    %vm2567 = vcmask 1046532
    %vm2568 = vmor %vm2566, %vm2567
    %v2569 = vrot.slane %v1205, 5
    %v2570 = vrot.slane %v2569, 4
    %v2571 = vrot.slane %v1206, 5
    %v2572 = vsel %vm2568, %v2570, %v2571
    %v2573 = vrot.slane %v2571, 4
    %v2574 = vrot.slane %v1207, 5
    %v2575 = vsel %vm2568, %v2573, %v2574
    %v2576 = vrot.slane %v1208, 5
    %v2577 = vrot.slane %v2576, 4
    %v2578 = vrot.slane %v1209, 5
    %v2579 = vsel %vm2568, %v2577, %v2578
    %v2580 = vrot.slane %v2578, 4
    %v2581 = vrot.slane %v1210, 5
    %v2582 = vsel %vm2568, %v2580, %v2581
    %v2583 = vrot.slane %v1211, 5
    %v2584 = vrot.slane %v2583, 4
    %v2585 = vrot.slane %v1212, 5
    %v2586 = vsel %vm2568, %v2584, %v2585
    %v2587 = vrot.slane %v2585, 4
    %v2588 = vrot.slane %v1213, 5
    %v2589 = vsel %vm2568, %v2587, %v2588
    %v2590 = vrot.slane %v1214, 5
    %v2591 = vrot.slane %v2590, 4
    %v2592 = vrot.slane %v1215, 5
    %v2593 = vsel %vm2568, %v2591, %v2592
    %v2594 = vrot.slane %v2592, 4
    %v2595 = vrot.slane %v1216, 5
    %v2596 = vsel %vm2568, %v2594, %v2595
    %v2597 = vrot.slane %v1217, 5
    %v2598 = vrot.slane %v2597, 4
    %v2599 = vrot.slane %v1218, 5
    %v2600 = vsel %vm2568, %v2598, %v2599
    %v2601 = vrot.slane %v2599, 4
    %v2602 = vrot.slane %v1219, 5
    %v2603 = vsel %vm2568, %v2601, %v2602
    %v2604 = vrot.slane %v1220, 5
    %v2605 = vrot.slane %v2604, 4
    %v2606 = vrot.slane %v1221, 5
    %v2607 = vsel %vm2568, %v2605, %v2606
    %v2608 = vrot.slane %v2606, 4
    %v2609 = vrot.slane %v1222, 5
    %v2610 = vsel %vm2568, %v2608, %v2609
    %v2611 = vrot.slane %v1223, 5
    %v2612 = vrot.slane %v2611, 4
    %v2613 = vrot.slane %v1224, 5
    %v2614 = vsel %vm2568, %v2612, %v2613
    %v2615 = vrot.slane %v2613, 4
    %v2616 = vrot.slane %v1225, 5
    %v2617 = vsel %vm2568, %v2615, %v2616
    %v2618 = vrot.slane %v1226, 5
    %v2619 = vrot.slane %v2618, 4
    %v2620 = vrot.slane %v1227, 5
    %v2621 = vsel %vm2568, %v2619, %v2620
    %v2622 = vrot.slane %v2620, 4
    %v2623 = vrot.slane %v1228, 5
    %v2624 = vsel %vm2568, %v2622, %v2623
    %v2625 = vrot.slane %v1229, 5
    %v2626 = vrot.slane %v2625, 4
    %v2627 = vrot.slane %v1230, 5
    %v2628 = vsel %vm2568, %v2626, %v2627
    %v2629 = vrot.slane %v2627, 4
    %v2630 = vrot.slane %v1231, 5
    %v2631 = vsel %vm2568, %v2629, %v2630
    %v2632 = vrot.slane %v1232, 5
    %v2633 = vrot.slane %v2632, 4
    %v2634 = vrot.slane %v1233, 5
    %v2635 = vsel %vm2568, %v2633, %v2634
    %v2636 = vrot.slane %v2634, 4
    %v2637 = vrot.slane %v1234, 5
    %v2638 = vsel %vm2568, %v2636, %v2637
    %v2639 = vrot.slane %v1235, 5
    %v2640 = vrot.slane %v2639, 4
    %v2641 = vrot.slane %v1236, 5
    %v2642 = vsel %vm2568, %v2640, %v2641
    %v2643 = vrot.slane %v2641, 4
    %v2644 = vrot.slane %v1237, 5
    %v2645 = vsel %vm2568, %v2643, %v2644
    %v2646 = vrot.slane %v1238, 5
    %v2647 = vrot.slane %v2646, 4
    %v2648 = vrot.slane %v1239, 5
    %v2649 = vsel %vm2568, %v2647, %v2648
    %v2650 = vrot.slane %v2648, 4
    %v2651 = vrot.slane %v1240, 5
    %v2652 = vsel %vm2568, %v2650, %v2651
    %v2653 = vrot.slane %v1241, 5
    %v2654 = vrot.slane %v2653, 4
    %v2655 = vrot.slane %v1242, 5
    %v2656 = vsel %vm2568, %v2654, %v2655
    %v2657 = vrot.slane %v2655, 4
    %v2658 = vrot.slane %v1243, 5
    %v2659 = vsel %vm2568, %v2657, %v2658
    %v2660 = vrot.slane %v1244, 5
    %v2661 = vrot.slane %v2660, 4
    %v2662 = vrot.slane %v1245, 5
    %v2663 = vsel %vm2568, %v2661, %v2662
    %v2664 = vrot.slane %v2662, 4
    %v2665 = vrot.slane %v1246, 5
    %v2666 = vsel %vm2568, %v2664, %v2665
    %v2667 = vrot.slane %v1247, 5
    %v2668 = vrot.slane %v2667, 4
    %v2669 = vrot.slane %v1248, 5
    %v2670 = vsel %vm2568, %v2668, %v2669
    %v2671 = vrot.slane %v2669, 4
    %v2672 = vrot.slane %v1249, 5
    %v2673 = vsel %vm2568, %v2671, %v2672
    %v2674 = vrot.slane %v1250, 5
    %v2675 = vrot.slane %v2674, 4
    %v2676 = vrot.slane %v1251, 5
    %v2677 = vsel %vm2568, %v2675, %v2676
    %v2678 = vrot.slane %v2676, 4
    %v2679 = vrot.slane %v1252, 5
    %v2680 = vsel %vm2568, %v2678, %v2679
    %v2681 = vrot.slane %v1259, 5
    %v2682 = vrot.slane %v2681, 4
    %v2683 = vrot.slane %v1260, 5
    %v2684 = vsel %vm2568, %v2682, %v2683
    %v2685 = vrot.slane %v2683, 4
    %v2686 = vrot.slane %v1261, 5
    %v2687 = vsel %vm2568, %v2685, %v2686
    %v2688 = vrot.slane %v1262, 5
    %v2689 = vrot.slane %v2688, 4
    %v2690 = vrot.slane %v1263, 5
    %v2691 = vsel %vm2568, %v2689, %v2690
    %v2692 = vrot.slane %v2690, 4
    %v2693 = vrot.slane %v1264, 5
    %v2694 = vsel %vm2568, %v2692, %v2693
    %v2695 = vrot.slane %v1265, 5
    %v2696 = vrot.slane %v2695, 4
    %v2697 = vrot.slane %v1266, 5
    %v2698 = vsel %vm2568, %v2696, %v2697
    %v2699 = vrot.slane %v2697, 4
    %v2700 = vrot.slane %v1267, 5
    %v2701 = vsel %vm2568, %v2699, %v2700
    %v2702 = vrot.slane %v1268, 5
    %v2703 = vrot.slane %v2702, 4
    %v2704 = vrot.slane %v1269, 5
    %v2705 = vsel %vm2568, %v2703, %v2704
    %v2706 = vrot.slane %v2704, 4
    %v2707 = vrot.slane %v1270, 5
    %v2708 = vsel %vm2568, %v2706, %v2707
    %v2709 = vrot.slane %v1271, 5
    %v2710 = vrot.slane %v2709, 4
    %v2711 = vrot.slane %v1272, 5
    %v2712 = vsel %vm2568, %v2710, %v2711
    %v2713 = vrot.slane %v2711, 4
    %v2714 = vrot.slane %v1273, 5
    %v2715 = vsel %vm2568, %v2713, %v2714
    %v2716 = vrot.slane %v1274, 5
    %v2717 = vrot.slane %v2716, 4
    %v2718 = vrot.slane %v1275, 5
    %v2719 = vsel %vm2568, %v2717, %v2718
    %v2720 = vrot.slane %v2718, 4
    %v2721 = vrot.slane %v1276, 5
    %v2722 = vsel %vm2568, %v2720, %v2721
    %v2723 = vrot.slane %v1277, 5
    %v2724 = vrot.slane %v2723, 4
    %v2725 = vrot.slane %v1278, 5
    %v2726 = vsel %vm2568, %v2724, %v2725
    %v2727 = vrot.slane %v2725, 4
    %v2728 = vrot.slane %v1279, 5
    %v2729 = vsel %vm2568, %v2727, %v2728
    %v2730 = vrot.slane %v1280, 5
    %v2731 = vrot.slane %v2730, 4
    %v2732 = vrot.slane %v1281, 5
    %v2733 = vsel %vm2568, %v2731, %v2732
    %v2734 = vrot.slane %v2732, 4
    %v2735 = vrot.slane %v1282, 5
    %v2736 = vsel %vm2568, %v2734, %v2735
    %v2737 = vrot.slane %v1283, 5
    %v2738 = vrot.slane %v2737, 4
    %v2739 = vrot.slane %v1284, 5
    %v2740 = vsel %vm2568, %v2738, %v2739
    %v2741 = vrot.slane %v2739, 4
    %v2742 = vrot.slane %v1285, 5
    %v2743 = vsel %vm2568, %v2741, %v2742
    %v2744 = vrot.slane %v1286, 5
    %v2745 = vrot.slane %v2744, 4
    %v2746 = vrot.slane %v1287, 5
    %v2747 = vsel %vm2568, %v2745, %v2746
    %v2748 = vrot.slane %v2746, 4
    %v2749 = vrot.slane %v1288, 5
    %v2750 = vsel %vm2568, %v2748, %v2749
    %v2751 = vrot.slane %v1289, 5
    %v2752 = vrot.slane %v2751, 4
    %v2753 = vrot.slane %v1290, 5
    %v2754 = vsel %vm2568, %v2752, %v2753
    %v2755 = vrot.slane %v2753, 4
    %v2756 = vrot.slane %v1291, 5
    %v2757 = vsel %vm2568, %v2755, %v2756
    %v2758 = vrot.slane %v1292, 5
    %v2759 = vrot.slane %v2758, 4
    %v2760 = vrot.slane %v1293, 5
    %v2761 = vsel %vm2568, %v2759, %v2760
    %v2762 = vrot.slane %v2760, 4
    %v2763 = vrot.slane %v1294, 5
    %v2764 = vsel %vm2568, %v2762, %v2763
    %v2765 = vrot.slane %v1295, 5
    %v2766 = vrot.slane %v2765, 4
    %v2767 = vrot.slane %v1296, 5
    %v2768 = vsel %vm2568, %v2766, %v2767
    %v2769 = vrot.slane %v2767, 4
    %v2770 = vrot.slane %v1297, 5
    %v2771 = vsel %vm2568, %v2769, %v2770
    %v2772 = vrot.slane %v1298, 5
    %v2773 = vrot.slane %v2772, 4
    %v2774 = vrot.slane %v1299, 5
    %v2775 = vsel %vm2568, %v2773, %v2774
    %v2776 = vrot.slane %v2774, 4
    %v2777 = vrot.slane %v1300, 5
    %v2778 = vsel %vm2568, %v2776, %v2777
    %v2779 = vrot.slane %v1301, 5
    %v2780 = vrot.slane %v2779, 4
    %v2781 = vrot.slane %v1302, 5
    %v2782 = vsel %vm2568, %v2780, %v2781
    %v2783 = vrot.slane %v2781, 4
    %v2784 = vrot.slane %v1303, 5
    %v2785 = vsel %vm2568, %v2783, %v2784
    %v2786 = vrot.slane %v1304, 5
    %v2787 = vrot.slane %v2786, 4
    %v2788 = vrot.slane %v1305, 5
    %v2789 = vsel %vm2568, %v2787, %v2788
    %v2790 = vrot.slane %v2788, 4
    %v2791 = vrot.slane %v1306, 5
    %v2792 = vsel %vm2568, %v2790, %v2791
    %v2793 = vunpack.c.l.b16 %v2572
    %v2794 = vunpack.c.l.b16 %v2575
    %v2795 = vunpack.c.l.b16 %v2579
    %v2796 = vunpack.c.l.b16 %v2582
    %v2797 = vunpack.c.l.b16 %v2586
    %v2798 = vunpack.c.l.b16 %v2589
    %v2799 = vunpack.c.l.b16 %v2593
    %v2800 = vunpack.c.l.b16 %v2596
    %v2801 = vunpack.c.l.b16 %v2600
    %v2802 = vunpack.c.l.b16 %v2603
    %v2803 = vunpack.c.l.b16 %v2607
    %v2804 = vunpack.c.l.b16 %v2610
    %v2805 = vunpack.c.l.b16 %v2614
    %v2806 = vunpack.c.l.b16 %v2617
    %v2807 = vunpack.c.l.b16 %v2621
    %v2808 = vunpack.c.l.b16 %v2624
    %v2809 = vunpack.c.l.b16 %v2628
    %v2810 = vunpack.c.l.b16 %v2631
    %v2811 = vunpack.c.l.b16 %v2635
    %v2812 = vunpack.c.l.b16 %v2638
    %v2813 = vunpack.c.l.b16 %v2642
    %v2814 = vunpack.c.l.b16 %v2645
    %v2815 = vunpack.c.l.b16 %v2649
    %v2816 = vunpack.c.l.b16 %v2652
    %v2817 = vunpack.c.l.b16 %v2656
    %v2818 = vunpack.c.l.b16 %v2659
    %v2819 = vunpack.c.l.b16 %v2663
    %v2820 = vunpack.c.l.b16 %v2666
    %v2821 = vunpack.c.l.b16 %v2670
    %v2822 = vunpack.c.l.b16 %v2673
    %v2823 = vunpack.c.l.b16 %v2677
    %v2824 = vunpack.c.l.b16 %v2680
    %v2825 = vunpack.c.l.b16 %v2684
    %v2826 = vunpack.c.l.b16 %v2687
    %v2827 = vunpack.c.l.b16 %v2691
    %v2828 = vunpack.c.l.b16 %v2694
    %v2829 = vunpack.c.l.b16 %v2698
    %v2830 = vunpack.c.l.b16 %v2701
    %v2831 = vunpack.c.l.b16 %v2705
    %v2832 = vunpack.c.l.b16 %v2708
    %v2833 = vunpack.c.l.b16 %v2712
    %v2834 = vunpack.c.l.b16 %v2715
    %v2835 = vunpack.c.l.b16 %v2719
    %v2836 = vunpack.c.l.b16 %v2722
    %v2837 = vunpack.c.l.b16 %v2726
    %v2838 = vunpack.c.l.b16 %v2729
    %v2839 = vunpack.c.l.b16 %v2733
    %v2840 = vunpack.c.l.b16 %v2736
    %v2841 = vunpack.c.l.b16 %v2740
    %v2842 = vunpack.c.l.b16 %v2743
    %v2843 = vunpack.c.l.b16 %v2747
    %v2844 = vunpack.c.l.b16 %v2750
    %v2845 = vunpack.c.l.b16 %v2754
    %v2846 = vunpack.c.l.b16 %v2757
    %v2847 = vunpack.c.l.b16 %v2761
    %v2848 = vunpack.c.l.b16 %v2764
    %v2849 = vunpack.c.l.b16 %v2768
    %v2850 = vunpack.c.l.b16 %v2771
    %v2851 = vunpack.c.l.b16 %v2775
    %v2852 = vunpack.c.l.b16 %v2778
    %v2853 = vunpack.c.l.b16 %v2782
    %v2854 = vunpack.c.l.b16 %v2785
    %v2855 = vunpack.c.l.b16 %v2789
    %v2856 = vunpack.c.l.b16 %v2792
    %v2857 = vpack.c.b16 %v2794, %v2793
    %v2858 = vpack.c.b16 %v2796, %v2795
    %v2859 = vpack.c.b16 %v2798, %v2797
    %v2860 = vpack.c.b16 %v2800, %v2799
    %v2861 = vpack.c.b16 %v2802, %v2801
    %v2862 = vpack.c.b16 %v2804, %v2803
    %v2863 = vpack.c.b16 %v2806, %v2805
    %v2864 = vpack.c.b16 %v2808, %v2807
    %v2865 = vpack.c.b16 %v2810, %v2809
    %v2866 = vpack.c.b16 %v2812, %v2811
    %v2867 = vpack.c.b16 %v2814, %v2813
    %v2868 = vpack.c.b16 %v2816, %v2815
    %v2869 = vpack.c.b16 %v2818, %v2817
    %v2870 = vpack.c.b16 %v2820, %v2819
    %v2871 = vpack.c.b16 %v2822, %v2821
    %v2872 = vpack.c.b16 %v2824, %v2823
    %v2873 = vpack.c.b16 %v2826, %v2825
    %v2874 = vpack.c.b16 %v2828, %v2827
    %v2875 = vpack.c.b16 %v2830, %v2829
    %v2876 = vpack.c.b16 %v2832, %v2831
    %v2877 = vpack.c.b16 %v2834, %v2833
    %v2878 = vpack.c.b16 %v2836, %v2835
    %v2879 = vpack.c.b16 %v2838, %v2837
    %v2880 = vpack.c.b16 %v2840, %v2839
    %v2881 = vpack.c.b16 %v2842, %v2841
    %v2882 = vpack.c.b16 %v2844, %v2843
    %v2883 = vpack.c.b16 %v2846, %v2845
    %v2884 = vpack.c.b16 %v2848, %v2847
    %v2885 = vpack.c.b16 %v2850, %v2849
    %v2886 = vpack.c.b16 %v2852, %v2851
    %v2887 = vpack.c.b16 %v2854, %v2853
    %v2888 = vpack.c.b16 %v2856, %v2855
    %2889 = vrot.lane.b32.xlu0 %v2857, 32
    %v2890 = vpop.permute.xlu0 %2889
    %2891 = vrot.lane.b32.xlu0 %v2858, 32
    %v2892 = vpop.permute.xlu0 %2891
    %2893 = vrot.lane.b32.xlu0 %v2859, 32
    %v2894 = vpop.permute.xlu0 %2893
    %2895 = vrot.lane.b32.xlu0 %v2860, 32
    %v2896 = vpop.permute.xlu0 %2895
    %2897 = vrot.lane.b32.xlu0 %v2861, 32
    %v2898 = vpop.permute.xlu0 %2897
    %2899 = vrot.lane.b32.xlu0 %v2862, 32
    %v2900 = vpop.permute.xlu0 %2899
    %2901 = vrot.lane.b32.xlu0 %v2863, 32
    %v2902 = vpop.permute.xlu0 %2901
    %2903 = vrot.lane.b32.xlu0 %v2864, 32
    %v2904 = vpop.permute.xlu0 %2903
    %2905 = vrot.lane.b32.xlu0 %v2865, 32
    %v2906 = vpop.permute.xlu0 %2905
    %2907 = vrot.lane.b32.xlu0 %v2866, 32
    %v2908 = vpop.permute.xlu0 %2907
    %2909 = vrot.lane.b32.xlu0 %v2867, 32
    %v2910 = vpop.permute.xlu0 %2909
    %2911 = vrot.lane.b32.xlu0 %v2868, 32
    %v2912 = vpop.permute.xlu0 %2911
    %2913 = vrot.lane.b32.xlu0 %v2869, 32
    %v2914 = vpop.permute.xlu0 %2913
    %2915 = vrot.lane.b32.xlu0 %v2870, 32
    %v2916 = vpop.permute.xlu0 %2915
    %2917 = vrot.lane.b32.xlu0 %v2871, 32
    %v2918 = vpop.permute.xlu0 %2917
    %2919 = vrot.lane.b32.xlu0 %v2872, 32
    %v2920 = vpop.permute.xlu0 %2919
    %2921 = vrot.lane.b32.xlu0 %v2873, 32
    %v2922 = vpop.permute.xlu0 %2921
    %2923 = vrot.lane.b32.xlu0 %v2874, 32
    %v2924 = vpop.permute.xlu0 %2923
    %2925 = vrot.lane.b32.xlu0 %v2875, 32
    %v2926 = vpop.permute.xlu0 %2925
    %2927 = vrot.lane.b32.xlu0 %v2876, 32
    %v2928 = vpop.permute.xlu0 %2927
    %2929 = vrot.lane.b32.xlu0 %v2877, 32
    %v2930 = vpop.permute.xlu0 %2929
    %2931 = vrot.lane.b32.xlu0 %v2878, 32
    %v2932 = vpop.permute.xlu0 %2931
    %2933 = vrot.lane.b32.xlu0 %v2879, 32
    %v2934 = vpop.permute.xlu0 %2933
    %2935 = vrot.lane.b32.xlu0 %v2880, 32
    %v2936 = vpop.permute.xlu0 %2935
    %2937 = vrot.lane.b32.xlu0 %v2881, 32
    %v2938 = vpop.permute.xlu0 %2937
    %2939 = vrot.lane.b32.xlu0 %v2882, 32
    %v2940 = vpop.permute.xlu0 %2939
    %2941 = vrot.lane.b32.xlu0 %v2883, 32
    %v2942 = vpop.permute.xlu0 %2941
    %2943 = vrot.lane.b32.xlu0 %v2884, 32
    %v2944 = vpop.permute.xlu0 %2943
    %2945 = vrot.lane.b32.xlu0 %v2885, 32
    %v2946 = vpop.permute.xlu0 %2945
    %2947 = vrot.lane.b32.xlu0 %v2886, 32
    %v2948 = vpop.permute.xlu0 %2947
    %2949 = vrot.lane.b32.xlu0 %v2887, 32
    %v2950 = vpop.permute.xlu0 %2949
    %2951 = vrot.lane.b32.xlu0 %v2888, 32
    %v2952 = vpop.permute.xlu0 %2951
    %vm2985 = vcmask 392448
    %2986 = vst.msk [vmem:[#allocation4] sm:$0xff] %vm2985, %v2890
    %2987 = vst.msk [vmem:[#allocation4 + $0x10] sm:$0xff] %vm2985, %v2892
    %2988 = vst.msk [vmem:[#allocation4 + $0x20] sm:$0xff] %vm2985, %v2894
    %2989 = vst.msk [vmem:[#allocation4 + $0x30] sm:$0xff] %vm2985, %v2896
    %2990 = vst.msk [vmem:[#allocation4 + $0x40] sm:$0xff] %vm2985, %v2898
    %2991 = vst.msk [vmem:[#allocation4 + $0x50] sm:$0xff] %vm2985, %v2900
    %2992 = vst.msk [vmem:[#allocation4 + $0x60] sm:$0xff] %vm2985, %v2902
    %2993 = vst.msk [vmem:[#allocation4 + $0x70] sm:$0xff] %vm2985, %v2904
    %2994 = vst.msk [vmem:[#allocation4 + $0x80] sm:$0xff] %vm2985, %v2906
    %2995 = vst.msk [vmem:[#allocation4 + $0x90] sm:$0xff] %vm2985, %v2908
    %2996 = vst.msk [vmem:[#allocation4 + $0xa0] sm:$0xff] %vm2985, %v2910
    %2997 = vst.msk [vmem:[#allocation4 + $0xb0] sm:$0xff] %vm2985, %v2912
    %2998 = vst.msk [vmem:[#allocation4 + $0xc0] sm:$0xff] %vm2985, %v2914
    %2999 = vst.msk [vmem:[#allocation4 + $0xd0] sm:$0xff] %vm2985, %v2916
    %3000 = vst.msk [vmem:[#allocation4 + $0xe0] sm:$0xff] %vm2985, %v2918
    %3001 = vst.msk [vmem:[#allocation4 + $0xf0] sm:$0xff] %vm2985, %v2920
    %3002 = vst.msk [vmem:[#allocation4 + $0x100] sm:$0xff] %vm2985, %v2922
    %3003 = vst.msk [vmem:[#allocation4 + $0x110] sm:$0xff] %vm2985, %v2924
    %3004 = vst.msk [vmem:[#allocation4 + $0x120] sm:$0xff] %vm2985, %v2926
    %3005 = vst.msk [vmem:[#allocation4 + $0x130] sm:$0xff] %vm2985, %v2928
    %3006 = vst.msk [vmem:[#allocation4 + $0x140] sm:$0xff] %vm2985, %v2930
    %3007 = vst.msk [vmem:[#allocation4 + $0x150] sm:$0xff] %vm2985, %v2932
    %3008 = vst.msk [vmem:[#allocation4 + $0x160] sm:$0xff] %vm2985, %v2934
    %3009 = vst.msk [vmem:[#allocation4 + $0x170] sm:$0xff] %vm2985, %v2936
    %3010 = vst.msk [vmem:[#allocation4 + $0x180] sm:$0xff] %vm2985, %v2938
    %3011 = vst.msk [vmem:[#allocation4 + $0x190] sm:$0xff] %vm2985, %v2940
    %3012 = vst.msk [vmem:[#allocation4 + $0x1a0] sm:$0xff] %vm2985, %v2942
    %3013 = vst.msk [vmem:[#allocation4 + $0x1b0] sm:$0xff] %vm2985, %v2944
    %3014 = vst.msk [vmem:[#allocation4 + $0x1c0] sm:$0xff] %vm2985, %v2946
    %3015 = vst.msk [vmem:[#allocation4 + $0x1d0] sm:$0xff] %vm2985, %v2948
    %3016 = vst.msk [vmem:[#allocation4 + $0x1e0] sm:$0xff] %vm2985, %v2950
    %3017 = vst.msk [vmem:[#allocation4 + $0x1f0] sm:$0xff] %vm2985, %v2952
    %v3022 = vunpack.c.l.b16 %v1253
    %v3023 = vunpack.c.l.b16 %v1254
    %v3024 = vunpack.c.l.b16 %v1307
    %v3025 = vunpack.c.l.b16 %v1308
    %v3026 = vpack.c.b16 %v3023, %v3022
    %v3027 = vpack.c.b16 %v3025, %v3024
    %3028 = vrot.lane.b32.xlu0 %v1442, 48
    %v3029 = vpop.permute.xlu0 %3028
    %3030 = vrot.lane.b32.xlu0 %v1443, 48
    %v3031 = vpop.permute.xlu0 %3030
    %3032 = vrot.lane.b32.xlu0 %v1444, 48
    %v3033 = vpop.permute.xlu0 %3032
    %3034 = vrot.lane.b32.xlu0 %v1445, 48
    %v3035 = vpop.permute.xlu0 %3034
    %3036 = vrot.lane.b32.xlu0 %v1446, 48
    %v3037 = vpop.permute.xlu0 %3036
    %3038 = vrot.lane.b32.xlu0 %v1447, 48
    %v3039 = vpop.permute.xlu0 %3038
    %3040 = vrot.lane.b32.xlu0 %v1448, 48
    %v3041 = vpop.permute.xlu0 %3040
    %3042 = vrot.lane.b32.xlu0 %v1449, 48
    %v3043 = vpop.permute.xlu0 %3042
    %3044 = vrot.lane.b32.xlu0 %v1450, 48
    %v3045 = vpop.permute.xlu0 %3044
    %3046 = vrot.lane.b32.xlu0 %v1451, 48
    %v3047 = vpop.permute.xlu0 %3046
    %3048 = vrot.lane.b32.xlu0 %v1452, 48
    %v3049 = vpop.permute.xlu0 %3048
    %3050 = vrot.lane.b32.xlu0 %v1453, 48
    %v3051 = vpop.permute.xlu0 %3050
    %3052 = vrot.lane.b32.xlu0 %v1454, 48
    %v3053 = vpop.permute.xlu0 %3052
    %3054 = vrot.lane.b32.xlu0 %v1455, 48
    %v3055 = vpop.permute.xlu0 %3054
    %3056 = vrot.lane.b32.xlu0 %v1456, 48
    %v3057 = vpop.permute.xlu0 %3056
    %3058 = vrot.lane.b32.xlu0 %v3026, 48
    %v3059 = vpop.permute.xlu0 %3058
    %3060 = vrot.lane.b32.xlu0 %v1458, 48
    %v3061 = vpop.permute.xlu0 %3060
    %3062 = vrot.lane.b32.xlu0 %v1459, 48
    %v3063 = vpop.permute.xlu0 %3062
    %3064 = vrot.lane.b32.xlu0 %v1460, 48
    %v3065 = vpop.permute.xlu0 %3064
    %3066 = vrot.lane.b32.xlu0 %v1461, 48
    %v3067 = vpop.permute.xlu0 %3066
    %3068 = vrot.lane.b32.xlu0 %v1462, 48
    %v3069 = vpop.permute.xlu0 %3068
    %3070 = vrot.lane.b32.xlu0 %v1463, 48
    %v3071 = vpop.permute.xlu0 %3070
    %3072 = vrot.lane.b32.xlu0 %v1464, 48
    %v3073 = vpop.permute.xlu0 %3072
    %3074 = vrot.lane.b32.xlu0 %v1465, 48
    %v3075 = vpop.permute.xlu0 %3074
    %3076 = vrot.lane.b32.xlu0 %v1466, 48
    %v3077 = vpop.permute.xlu0 %3076
    %3078 = vrot.lane.b32.xlu0 %v1467, 48
    %v3079 = vpop.permute.xlu0 %3078
    %3080 = vrot.lane.b32.xlu0 %v1468, 48
    %v3081 = vpop.permute.xlu0 %3080
    %3082 = vrot.lane.b32.xlu0 %v1469, 48
    %v3083 = vpop.permute.xlu0 %3082
    %3084 = vrot.lane.b32.xlu0 %v1470, 48
    %v3085 = vpop.permute.xlu0 %3084
    %3086 = vrot.lane.b32.xlu0 %v1471, 48
    %v3087 = vpop.permute.xlu0 %3086
    %3088 = vrot.lane.b32.xlu0 %v1472, 48
    %v3089 = vpop.permute.xlu0 %3088
    %3090 = vrot.lane.b32.xlu0 %v3027, 48
    %v3091 = vpop.permute.xlu0 %3090
    %vm3124 = vcmask 523648
    %3125 = vst.msk [vmem:[#allocation4] sm:$0xff] %vm3124, %v3029
    %3126 = vst.msk [vmem:[#allocation4 + $0x10] sm:$0xff] %vm3124, %v3031
    %3127 = vst.msk [vmem:[#allocation4 + $0x20] sm:$0xff] %vm3124, %v3033
    %3128 = vst.msk [vmem:[#allocation4 + $0x30] sm:$0xff] %vm3124, %v3035
    %3129 = vst.msk [vmem:[#allocation4 + $0x40] sm:$0xff] %vm3124, %v3037
    %3130 = vst.msk [vmem:[#allocation4 + $0x50] sm:$0xff] %vm3124, %v3039
    %3131 = vst.msk [vmem:[#allocation4 + $0x60] sm:$0xff] %vm3124, %v3041
    %3132 = vst.msk [vmem:[#allocation4 + $0x70] sm:$0xff] %vm3124, %v3043
    %3133 = vst.msk [vmem:[#allocation4 + $0x80] sm:$0xff] %vm3124, %v3045
    %3134 = vst.msk [vmem:[#allocation4 + $0x90] sm:$0xff] %vm3124, %v3047
    %3135 = vst.msk [vmem:[#allocation4 + $0xa0] sm:$0xff] %vm3124, %v3049
    %3136 = vst.msk [vmem:[#allocation4 + $0xb0] sm:$0xff] %vm3124, %v3051
    %3137 = vst.msk [vmem:[#allocation4 + $0xc0] sm:$0xff] %vm3124, %v3053
    %3138 = vst.msk [vmem:[#allocation4 + $0xd0] sm:$0xff] %vm3124, %v3055
    %3139 = vst.msk [vmem:[#allocation4 + $0xe0] sm:$0xff] %vm3124, %v3057
    %3140 = vst.msk [vmem:[#allocation4 + $0xf0] sm:$0xff] %vm3124, %v3059
    %3141 = vst.msk [vmem:[#allocation4 + $0x100] sm:$0xff] %vm3124, %v3061
    %3142 = vst.msk [vmem:[#allocation4 + $0x110] sm:$0xff] %vm3124, %v3063
    %3143 = vst.msk [vmem:[#allocation4 + $0x120] sm:$0xff] %vm3124, %v3065
    %3144 = vst.msk [vmem:[#allocation4 + $0x130] sm:$0xff] %vm3124, %v3067
    %3145 = vst.msk [vmem:[#allocation4 + $0x140] sm:$0xff] %vm3124, %v3069
    %3146 = vst.msk [vmem:[#allocation4 + $0x150] sm:$0xff] %vm3124, %v3071
    %3147 = vst.msk [vmem:[#allocation4 + $0x160] sm:$0xff] %vm3124, %v3073
    %3148 = vst.msk [vmem:[#allocation4 + $0x170] sm:$0xff] %vm3124, %v3075
    %3149 = vst.msk [vmem:[#allocation4 + $0x180] sm:$0xff] %vm3124, %v3077
    %3150 = vst.msk [vmem:[#allocation4 + $0x190] sm:$0xff] %vm3124, %v3079
    %3151 = vst.msk [vmem:[#allocation4 + $0x1a0] sm:$0xff] %vm3124, %v3081
    %3152 = vst.msk [vmem:[#allocation4 + $0x1b0] sm:$0xff] %vm3124, %v3083
    %3153 = vst.msk [vmem:[#allocation4 + $0x1c0] sm:$0xff] %vm3124, %v3085
    %3154 = vst.msk [vmem:[#allocation4 + $0x1d0] sm:$0xff] %vm3124, %v3087
    %3155 = vst.msk [vmem:[#allocation4 + $0x1e0] sm:$0xff] %vm3124, %v3089
    %3156 = vst.msk [vmem:[#allocation4 + $0x1f0] sm:$0xff] %vm3124, %v3091
    %v3158 = vshrl.u32 %v1253, 16
    %v3160 = vrot.slane %v3158, 4
    %v3161 = vshll.u32 %v1253, 16
    %v3163 = vrot.slane %v3161, 5
    %v3164 = vor.u32 %v3160, %v3163
    %v3165 = vrot.slane %v3164, 4
    %v3167 = vshll.u32 %v1254, 16
    %v3169 = vrot.slane %v3167, 5
    %v3170 = vsel %vm1540, %v3165, %v3169
    %v3171 = vshrl.u32 %v1254, 16
    %v3173 = vrot.slane %v3171, 4
    %v3174 = vor.u32 %v3173, %v3169
    %v3175 = vrot.slane %v3174, 4
    %v3177 = vshll.u32 %v1255, 16
    %v3179 = vrot.slane %v3177, 5
    %v3180 = vsel %vm1540, %v3175, %v3179
    %v3182 = vshrl.u32 %v1307, 16
    %v3184 = vrot.slane %v3182, 4
    %v3185 = vshll.u32 %v1307, 16
    %v3187 = vrot.slane %v3185, 5
    %v3188 = vor.u32 %v3184, %v3187
    %v3189 = vrot.slane %v3188, 4
    %v3191 = vshll.u32 %v1308, 16
    %v3193 = vrot.slane %v3191, 5
    %v3194 = vsel %vm1540, %v3189, %v3193
    %v3195 = vshrl.u32 %v1308, 16
    %v3197 = vrot.slane %v3195, 4
    %v3198 = vor.u32 %v3197, %v3193
    %v3199 = vrot.slane %v3198, 4
    %v3201 = vshll.u32 %v1309, 16
    %v3203 = vrot.slane %v3201, 5
    %v3204 = vsel %vm1540, %v3199, %v3203
    %v3205 = vunpack.c.l.b16 %v3170
    %v3206 = vunpack.c.l.b16 %v3180
    %v3207 = vunpack.c.l.b16 %v3194
    %v3208 = vunpack.c.l.b16 %v3204
    %v3209 = vpack.c.b16 %v3206, %v3205
    %v3210 = vpack.c.b16 %v3208, %v3207
    %3211 = vrot.lane.b32.xlu0 %v2374, 64
    %v3212 = vpop.permute.xlu0 %3211
    %3213 = vrot.lane.b32.xlu0 %v2375, 64
    %v3214 = vpop.permute.xlu0 %3213
    %3215 = vrot.lane.b32.xlu0 %v2376, 64
    %v3216 = vpop.permute.xlu0 %3215
    %3217 = vrot.lane.b32.xlu0 %v2377, 64
    %v3218 = vpop.permute.xlu0 %3217
    %3219 = vrot.lane.b32.xlu0 %v2378, 64
    %v3220 = vpop.permute.xlu0 %3219
    %3221 = vrot.lane.b32.xlu0 %v2379, 64
    %v3222 = vpop.permute.xlu0 %3221
    %3223 = vrot.lane.b32.xlu0 %v2380, 64
    %v3224 = vpop.permute.xlu0 %3223
    %3225 = vrot.lane.b32.xlu0 %v2381, 64
    %v3226 = vpop.permute.xlu0 %3225
    %3227 = vrot.lane.b32.xlu0 %v2382, 64
    %v3228 = vpop.permute.xlu0 %3227
    %3229 = vrot.lane.b32.xlu0 %v2383, 64
    %v3230 = vpop.permute.xlu0 %3229
    %3231 = vrot.lane.b32.xlu0 %v2384, 64
    %v3232 = vpop.permute.xlu0 %3231
    %3233 = vrot.lane.b32.xlu0 %v2385, 64
    %v3234 = vpop.permute.xlu0 %3233
    %3235 = vrot.lane.b32.xlu0 %v2386, 64
    %v3236 = vpop.permute.xlu0 %3235
    %3237 = vrot.lane.b32.xlu0 %v2387, 64
    %v3238 = vpop.permute.xlu0 %3237
    %3239 = vrot.lane.b32.xlu0 %v2388, 64
    %v3240 = vpop.permute.xlu0 %3239
    %3241 = vrot.lane.b32.xlu0 %v3209, 64
    %v3242 = vpop.permute.xlu0 %3241
    %3243 = vrot.lane.b32.xlu0 %v2390, 64
    %v3244 = vpop.permute.xlu0 %3243
    %3245 = vrot.lane.b32.xlu0 %v2391, 64
    %v3246 = vpop.permute.xlu0 %3245
    %3247 = vrot.lane.b32.xlu0 %v2392, 64
    %v3248 = vpop.permute.xlu0 %3247
    %3249 = vrot.lane.b32.xlu0 %v2393, 64
    %v3250 = vpop.permute.xlu0 %3249
    %3251 = vrot.lane.b32.xlu0 %v2394, 64
    %v3252 = vpop.permute.xlu0 %3251
    %3253 = vrot.lane.b32.xlu0 %v2395, 64
    %v3254 = vpop.permute.xlu0 %3253
    %3255 = vrot.lane.b32.xlu0 %v2396, 64
    %v3256 = vpop.permute.xlu0 %3255
    %3257 = vrot.lane.b32.xlu0 %v2397, 64
    %v3258 = vpop.permute.xlu0 %3257
    %3259 = vrot.lane.b32.xlu0 %v2398, 64
    %v3260 = vpop.permute.xlu0 %3259
    %3261 = vrot.lane.b32.xlu0 %v2399, 64
    %v3262 = vpop.permute.xlu0 %3261
    %3263 = vrot.lane.b32.xlu0 %v2400, 64
    %v3264 = vpop.permute.xlu0 %3263
    %3265 = vrot.lane.b32.xlu0 %v2401, 64
    %v3266 = vpop.permute.xlu0 %3265
    %3267 = vrot.lane.b32.xlu0 %v2402, 64
    %v3268 = vpop.permute.xlu0 %3267
    %3269 = vrot.lane.b32.xlu0 %v2403, 64
    %v3270 = vpop.permute.xlu0 %3269
    %3271 = vrot.lane.b32.xlu0 %v2404, 64
    %v3272 = vpop.permute.xlu0 %3271
    %3273 = vrot.lane.b32.xlu0 %v3210, 64
    %v3274 = vpop.permute.xlu0 %3273
    %vm3307 = vcmask 654848
    %3308 = vst.msk [vmem:[#allocation4] sm:$0xff] %vm3307, %v3212
    %3309 = vst.msk [vmem:[#allocation4 + $0x10] sm:$0xff] %vm3307, %v3214
    %3310 = vst.msk [vmem:[#allocation4 + $0x20] sm:$0xff] %vm3307, %v3216
    %3311 = vst.msk [vmem:[#allocation4 + $0x30] sm:$0xff] %vm3307, %v3218
    %3312 = vst.msk [vmem:[#allocation4 + $0x40] sm:$0xff] %vm3307, %v3220
    %3313 = vst.msk [vmem:[#allocation4 + $0x50] sm:$0xff] %vm3307, %v3222
    %3314 = vst.msk [vmem:[#allocation4 + $0x60] sm:$0xff] %vm3307, %v3224
    %3315 = vst.msk [vmem:[#allocation4 + $0x70] sm:$0xff] %vm3307, %v3226
    %3316 = vst.msk [vmem:[#allocation4 + $0x80] sm:$0xff] %vm3307, %v3228
    %3317 = vst.msk [vmem:[#allocation4 + $0x90] sm:$0xff] %vm3307, %v3230
    %3318 = vst.msk [vmem:[#allocation4 + $0xa0] sm:$0xff] %vm3307, %v3232
    %3319 = vst.msk [vmem:[#allocation4 + $0xb0] sm:$0xff] %vm3307, %v3234
    %3320 = vst.msk [vmem:[#allocation4 + $0xc0] sm:$0xff] %vm3307, %v3236
    %3321 = vst.msk [vmem:[#allocation4 + $0xd0] sm:$0xff] %vm3307, %v3238
    %3322 = vst.msk [vmem:[#allocation4 + $0xe0] sm:$0xff] %vm3307, %v3240
    %3323 = vst.msk [vmem:[#allocation4 + $0xf0] sm:$0xff] %vm3307, %v3242
    %3324 = vst.msk [vmem:[#allocation4 + $0x100] sm:$0xff] %vm3307, %v3244
    %3325 = vst.msk [vmem:[#allocation4 + $0x110] sm:$0xff] %vm3307, %v3246
    %3326 = vst.msk [vmem:[#allocation4 + $0x120] sm:$0xff] %vm3307, %v3248
    %3327 = vst.msk [vmem:[#allocation4 + $0x130] sm:$0xff] %vm3307, %v3250
    %3328 = vst.msk [vmem:[#allocation4 + $0x140] sm:$0xff] %vm3307, %v3252
    %3329 = vst.msk [vmem:[#allocation4 + $0x150] sm:$0xff] %vm3307, %v3254
    %3330 = vst.msk [vmem:[#allocation4 + $0x160] sm:$0xff] %vm3307, %v3256
    %3331 = vst.msk [vmem:[#allocation4 + $0x170] sm:$0xff] %vm3307, %v3258
    %3332 = vst.msk [vmem:[#allocation4 + $0x180] sm:$0xff] %vm3307, %v3260
    %3333 = vst.msk [vmem:[#allocation4 + $0x190] sm:$0xff] %vm3307, %v3262
    %3334 = vst.msk [vmem:[#allocation4 + $0x1a0] sm:$0xff] %vm3307, %v3264
    %3335 = vst.msk [vmem:[#allocation4 + $0x1b0] sm:$0xff] %vm3307, %v3266
    %3336 = vst.msk [vmem:[#allocation4 + $0x1c0] sm:$0xff] %vm3307, %v3268
    %3337 = vst.msk [vmem:[#allocation4 + $0x1d0] sm:$0xff] %vm3307, %v3270
    %3338 = vst.msk [vmem:[#allocation4 + $0x1e0] sm:$0xff] %vm3307, %v3272
    %3339 = vst.msk [vmem:[#allocation4 + $0x1f0] sm:$0xff] %vm3307, %v3274
    %v3342 = vrot.slane %v1253, 5
    %v3343 = vrot.slane %v3342, 4
    %v3344 = vrot.slane %v1254, 5
    %v3345 = vsel %vm2568, %v3343, %v3344
    %v3346 = vrot.slane %v3344, 4
    %v3347 = vrot.slane %v1255, 5
    %v3348 = vsel %vm2568, %v3346, %v3347
    %v3349 = vrot.slane %v1307, 5
    %v3350 = vrot.slane %v3349, 4
    %v3351 = vrot.slane %v1308, 5
    %v3352 = vsel %vm2568, %v3350, %v3351
    %v3353 = vrot.slane %v3351, 4
    %v3354 = vrot.slane %v1309, 5
    %v3355 = vsel %vm2568, %v3353, %v3354
    %v3356 = vunpack.c.l.b16 %v3345
    %v3357 = vunpack.c.l.b16 %v3348
    %v3358 = vunpack.c.l.b16 %v3352
    %v3359 = vunpack.c.l.b16 %v3355
    %v3360 = vpack.c.b16 %v3357, %v3356
    %v3361 = vpack.c.b16 %v3359, %v3358
    %3362 = vrot.lane.b32.xlu0 %v2858, 80
    %v3363 = vpop.permute.xlu0 %3362
    %3364 = vrot.lane.b32.xlu0 %v2859, 80
    %v3365 = vpop.permute.xlu0 %3364
    %3366 = vrot.lane.b32.xlu0 %v2860, 80
    %v3367 = vpop.permute.xlu0 %3366
    %3368 = vrot.lane.b32.xlu0 %v2861, 80
    %v3369 = vpop.permute.xlu0 %3368
    %3370 = vrot.lane.b32.xlu0 %v2862, 80
    %v3371 = vpop.permute.xlu0 %3370
    %3372 = vrot.lane.b32.xlu0 %v2863, 80
    %v3373 = vpop.permute.xlu0 %3372
    %3374 = vrot.lane.b32.xlu0 %v2864, 80
    %v3375 = vpop.permute.xlu0 %3374
    %3376 = vrot.lane.b32.xlu0 %v2865, 80
    %v3377 = vpop.permute.xlu0 %3376
    %3378 = vrot.lane.b32.xlu0 %v2866, 80
    %v3379 = vpop.permute.xlu0 %3378
    %3380 = vrot.lane.b32.xlu0 %v2867, 80
    %v3381 = vpop.permute.xlu0 %3380
    %3382 = vrot.lane.b32.xlu0 %v2868, 80
    %v3383 = vpop.permute.xlu0 %3382
    %3384 = vrot.lane.b32.xlu0 %v2869, 80
    %v3385 = vpop.permute.xlu0 %3384
    %3386 = vrot.lane.b32.xlu0 %v2870, 80
    %v3387 = vpop.permute.xlu0 %3386
    %3388 = vrot.lane.b32.xlu0 %v2871, 80
    %v3389 = vpop.permute.xlu0 %3388
    %3390 = vrot.lane.b32.xlu0 %v2872, 80
    %v3391 = vpop.permute.xlu0 %3390
    %3392 = vrot.lane.b32.xlu0 %v3360, 80
    %v3393 = vpop.permute.xlu0 %3392
    %3394 = vrot.lane.b32.xlu0 %v2874, 80
    %v3395 = vpop.permute.xlu0 %3394
    %3396 = vrot.lane.b32.xlu0 %v2875, 80
    %v3397 = vpop.permute.xlu0 %3396
    %3398 = vrot.lane.b32.xlu0 %v2876, 80
    %v3399 = vpop.permute.xlu0 %3398
    %3400 = vrot.lane.b32.xlu0 %v2877, 80
    %v3401 = vpop.permute.xlu0 %3400
    %3402 = vrot.lane.b32.xlu0 %v2878, 80
    %v3403 = vpop.permute.xlu0 %3402
    %3404 = vrot.lane.b32.xlu0 %v2879, 80
    %v3405 = vpop.permute.xlu0 %3404
    %3406 = vrot.lane.b32.xlu0 %v2880, 80
    %v3407 = vpop.permute.xlu0 %3406
    %3408 = vrot.lane.b32.xlu0 %v2881, 80
    %v3409 = vpop.permute.xlu0 %3408
    %3410 = vrot.lane.b32.xlu0 %v2882, 80
    %v3411 = vpop.permute.xlu0 %3410
    %3412 = vrot.lane.b32.xlu0 %v2883, 80
    %v3413 = vpop.permute.xlu0 %3412
    %3414 = vrot.lane.b32.xlu0 %v2884, 80
    %v3415 = vpop.permute.xlu0 %3414
    %3416 = vrot.lane.b32.xlu0 %v2885, 80
    %v3417 = vpop.permute.xlu0 %3416
    %3418 = vrot.lane.b32.xlu0 %v2886, 80
    %v3419 = vpop.permute.xlu0 %3418
    %3420 = vrot.lane.b32.xlu0 %v2887, 80
    %v3421 = vpop.permute.xlu0 %3420
    %3422 = vrot.lane.b32.xlu0 %v2888, 80
    %v3423 = vpop.permute.xlu0 %3422
    %3424 = vrot.lane.b32.xlu0 %v3361, 80
    %v3425 = vpop.permute.xlu0 %3424
    %vm3458 = vcmask 786048
    %3459 = vst.msk [vmem:[#allocation4] sm:$0xff] %vm3458, %v3363
    %3460 = vst.msk [vmem:[#allocation4 + $0x10] sm:$0xff] %vm3458, %v3365
    %3461 = vst.msk [vmem:[#allocation4 + $0x20] sm:$0xff] %vm3458, %v3367
    %3462 = vst.msk [vmem:[#allocation4 + $0x30] sm:$0xff] %vm3458, %v3369
    %3463 = vst.msk [vmem:[#allocation4 + $0x40] sm:$0xff] %vm3458, %v3371
    %3464 = vst.msk [vmem:[#allocation4 + $0x50] sm:$0xff] %vm3458, %v3373
    %3465 = vst.msk [vmem:[#allocation4 + $0x60] sm:$0xff] %vm3458, %v3375
    %3466 = vst.msk [vmem:[#allocation4 + $0x70] sm:$0xff] %vm3458, %v3377
    %3467 = vst.msk [vmem:[#allocation4 + $0x80] sm:$0xff] %vm3458, %v3379
    %3468 = vst.msk [vmem:[#allocation4 + $0x90] sm:$0xff] %vm3458, %v3381
    %3469 = vst.msk [vmem:[#allocation4 + $0xa0] sm:$0xff] %vm3458, %v3383
    %3470 = vst.msk [vmem:[#allocation4 + $0xb0] sm:$0xff] %vm3458, %v3385
    %3471 = vst.msk [vmem:[#allocation4 + $0xc0] sm:$0xff] %vm3458, %v3387
    %3472 = vst.msk [vmem:[#allocation4 + $0xd0] sm:$0xff] %vm3458, %v3389
    %3473 = vst.msk [vmem:[#allocation4 + $0xe0] sm:$0xff] %vm3458, %v3391
    %3474 = vst.msk [vmem:[#allocation4 + $0xf0] sm:$0xff] %vm3458, %v3393
    %3475 = vst.msk [vmem:[#allocation4 + $0x100] sm:$0xff] %vm3458, %v3395
    %3476 = vst.msk [vmem:[#allocation4 + $0x110] sm:$0xff] %vm3458, %v3397
    %3477 = vst.msk [vmem:[#allocation4 + $0x120] sm:$0xff] %vm3458, %v3399
    %3478 = vst.msk [vmem:[#allocation4 + $0x130] sm:$0xff] %vm3458, %v3401
    %3479 = vst.msk [vmem:[#allocation4 + $0x140] sm:$0xff] %vm3458, %v3403
    %3480 = vst.msk [vmem:[#allocation4 + $0x150] sm:$0xff] %vm3458, %v3405
    %3481 = vst.msk [vmem:[#allocation4 + $0x160] sm:$0xff] %vm3458, %v3407
    %3482 = vst.msk [vmem:[#allocation4 + $0x170] sm:$0xff] %vm3458, %v3409
    %3483 = vst.msk [vmem:[#allocation4 + $0x180] sm:$0xff] %vm3458, %v3411
    %3484 = vst.msk [vmem:[#allocation4 + $0x190] sm:$0xff] %vm3458, %v3413
    %3485 = vst.msk [vmem:[#allocation4 + $0x1a0] sm:$0xff] %vm3458, %v3415
    %3486 = vst.msk [vmem:[#allocation4 + $0x1b0] sm:$0xff] %vm3458, %v3417
    %3487 = vst.msk [vmem:[#allocation4 + $0x1c0] sm:$0xff] %vm3458, %v3419
    %3488 = vst.msk [vmem:[#allocation4 + $0x1d0] sm:$0xff] %vm3458, %v3421
    %3489 = vst.msk [vmem:[#allocation4 + $0x1e0] sm:$0xff] %vm3458, %v3423
    %3490 = vst.msk [vmem:[#allocation4 + $0x1f0] sm:$0xff] %vm3458, %v3425
    %v3495 = vunpack.c.l.b16 %v1256
    %v3496 = vunpack.c.l.b16 %v1257
    %v3497 = vunpack.c.l.b16 %v1310
    %v3498 = vunpack.c.l.b16 %v1311
    %v3499 = vpack.c.b16 %v3496, %v3495
    %v3500 = vpack.c.b16 %v3498, %v3497
    %3501 = vrot.lane.b32.xlu0 %v1443, 96
    %v3502 = vpop.permute.xlu0 %3501
    %3503 = vrot.lane.b32.xlu0 %v1444, 96
    %v3504 = vpop.permute.xlu0 %3503
    %3505 = vrot.lane.b32.xlu0 %v1445, 96
    %v3506 = vpop.permute.xlu0 %3505
    %3507 = vrot.lane.b32.xlu0 %v1446, 96
    %v3508 = vpop.permute.xlu0 %3507
    %3509 = vrot.lane.b32.xlu0 %v1447, 96
    %v3510 = vpop.permute.xlu0 %3509
    %3511 = vrot.lane.b32.xlu0 %v1448, 96
    %v3512 = vpop.permute.xlu0 %3511
    %3513 = vrot.lane.b32.xlu0 %v1449, 96
    %v3514 = vpop.permute.xlu0 %3513
    %3515 = vrot.lane.b32.xlu0 %v1450, 96
    %v3516 = vpop.permute.xlu0 %3515
    %3517 = vrot.lane.b32.xlu0 %v1451, 96
    %v3518 = vpop.permute.xlu0 %3517
    %3519 = vrot.lane.b32.xlu0 %v1452, 96
    %v3520 = vpop.permute.xlu0 %3519
    %3521 = vrot.lane.b32.xlu0 %v1453, 96
    %v3522 = vpop.permute.xlu0 %3521
    %3523 = vrot.lane.b32.xlu0 %v1454, 96
    %v3524 = vpop.permute.xlu0 %3523
    %3525 = vrot.lane.b32.xlu0 %v1455, 96
    %v3526 = vpop.permute.xlu0 %3525
    %3527 = vrot.lane.b32.xlu0 %v1456, 96
    %v3528 = vpop.permute.xlu0 %3527
    %3529 = vrot.lane.b32.xlu0 %v3026, 96
    %v3530 = vpop.permute.xlu0 %3529
    %3531 = vrot.lane.b32.xlu0 %v3499, 96
    %v3532 = vpop.permute.xlu0 %3531
    %3533 = vrot.lane.b32.xlu0 %v1459, 96
    %v3534 = vpop.permute.xlu0 %3533
    %3535 = vrot.lane.b32.xlu0 %v1460, 96
    %v3536 = vpop.permute.xlu0 %3535
    %3537 = vrot.lane.b32.xlu0 %v1461, 96
    %v3538 = vpop.permute.xlu0 %3537
    %3539 = vrot.lane.b32.xlu0 %v1462, 96
    %v3540 = vpop.permute.xlu0 %3539
    %3541 = vrot.lane.b32.xlu0 %v1463, 96
    %v3542 = vpop.permute.xlu0 %3541
    %3543 = vrot.lane.b32.xlu0 %v1464, 96
    %v3544 = vpop.permute.xlu0 %3543
    %3545 = vrot.lane.b32.xlu0 %v1465, 96
    %v3546 = vpop.permute.xlu0 %3545
    %3547 = vrot.lane.b32.xlu0 %v1466, 96
    %v3548 = vpop.permute.xlu0 %3547
    %3549 = vrot.lane.b32.xlu0 %v1467, 96
    %v3550 = vpop.permute.xlu0 %3549
    %3551 = vrot.lane.b32.xlu0 %v1468, 96
    %v3552 = vpop.permute.xlu0 %3551
    %3553 = vrot.lane.b32.xlu0 %v1469, 96
    %v3554 = vpop.permute.xlu0 %3553
    %3555 = vrot.lane.b32.xlu0 %v1470, 96
    %v3556 = vpop.permute.xlu0 %3555
    %3557 = vrot.lane.b32.xlu0 %v1471, 96
    %v3558 = vpop.permute.xlu0 %3557
    %3559 = vrot.lane.b32.xlu0 %v1472, 96
    %v3560 = vpop.permute.xlu0 %3559
    %3561 = vrot.lane.b32.xlu0 %v3027, 96
    %v3562 = vpop.permute.xlu0 %3561
    %3563 = vrot.lane.b32.xlu0 %v3500, 96
    %v3564 = vpop.permute.xlu0 %3563
    %vm3597 = vcmask 917248
    %3598 = vst.msk [vmem:[#allocation4] sm:$0xff] %vm3597, %v3502
    %3599 = vst.msk [vmem:[#allocation4 + $0x10] sm:$0xff] %vm3597, %v3504
    %3600 = vst.msk [vmem:[#allocation4 + $0x20] sm:$0xff] %vm3597, %v3506
    %3601 = vst.msk [vmem:[#allocation4 + $0x30] sm:$0xff] %vm3597, %v3508
    %3602 = vst.msk [vmem:[#allocation4 + $0x40] sm:$0xff] %vm3597, %v3510
    %3603 = vst.msk [vmem:[#allocation4 + $0x50] sm:$0xff] %vm3597, %v3512
    %3604 = vst.msk [vmem:[#allocation4 + $0x60] sm:$0xff] %vm3597, %v3514
    %3605 = vst.msk [vmem:[#allocation4 + $0x70] sm:$0xff] %vm3597, %v3516
    %3606 = vst.msk [vmem:[#allocation4 + $0x80] sm:$0xff] %vm3597, %v3518
    %3607 = vst.msk [vmem:[#allocation4 + $0x90] sm:$0xff] %vm3597, %v3520
    %3608 = vst.msk [vmem:[#allocation4 + $0xa0] sm:$0xff] %vm3597, %v3522
    %3609 = vst.msk [vmem:[#allocation4 + $0xb0] sm:$0xff] %vm3597, %v3524
    %3610 = vst.msk [vmem:[#allocation4 + $0xc0] sm:$0xff] %vm3597, %v3526
    %3611 = vst.msk [vmem:[#allocation4 + $0xd0] sm:$0xff] %vm3597, %v3528
    %3612 = vst.msk [vmem:[#allocation4 + $0xe0] sm:$0xff] %vm3597, %v3530
    %3613 = vst.msk [vmem:[#allocation4 + $0xf0] sm:$0xff] %vm3597, %v3532
    %3614 = vst.msk [vmem:[#allocation4 + $0x100] sm:$0xff] %vm3597, %v3534
    %3615 = vst.msk [vmem:[#allocation4 + $0x110] sm:$0xff] %vm3597, %v3536
    %3616 = vst.msk [vmem:[#allocation4 + $0x120] sm:$0xff] %vm3597, %v3538
    %3617 = vst.msk [vmem:[#allocation4 + $0x130] sm:$0xff] %vm3597, %v3540
    %3618 = vst.msk [vmem:[#allocation4 + $0x140] sm:$0xff] %vm3597, %v3542
    %3619 = vst.msk [vmem:[#allocation4 + $0x150] sm:$0xff] %vm3597, %v3544
    %3620 = vst.msk [vmem:[#allocation4 + $0x160] sm:$0xff] %vm3597, %v3546
    %3621 = vst.msk [vmem:[#allocation4 + $0x170] sm:$0xff] %vm3597, %v3548
    %3622 = vst.msk [vmem:[#allocation4 + $0x180] sm:$0xff] %vm3597, %v3550
    %3623 = vst.msk [vmem:[#allocation4 + $0x190] sm:$0xff] %vm3597, %v3552
    %3624 = vst.msk [vmem:[#allocation4 + $0x1a0] sm:$0xff] %vm3597, %v3554
    %3625 = vst.msk [vmem:[#allocation4 + $0x1b0] sm:$0xff] %vm3597, %v3556
    %3626 = vst.msk [vmem:[#allocation4 + $0x1c0] sm:$0xff] %vm3597, %v3558
    %3627 = vst.msk [vmem:[#allocation4 + $0x1d0] sm:$0xff] %vm3597, %v3560
    %3628 = vst.msk [vmem:[#allocation4 + $0x1e0] sm:$0xff] %vm3597, %v3562
    %3629 = vst.msk [vmem:[#allocation4 + $0x1f0] sm:$0xff] %vm3597, %v3564
    %v3631 = vshrl.u32 %v1256, 16
    %v3633 = vrot.slane %v3631, 4
    %v3634 = vshll.u32 %v1256, 16
    %v3636 = vrot.slane %v3634, 5
    %v3637 = vor.u32 %v3633, %v3636
    %v3638 = vrot.slane %v3637, 4
    %v3640 = vshll.u32 %v1257, 16
    %v3642 = vrot.slane %v3640, 5
    %v3643 = vsel %vm1540, %v3638, %v3642
    %v3644 = vshrl.u32 %v1257, 16
    %v3646 = vrot.slane %v3644, 4
    %v3647 = vor.u32 %v3646, %v3642
    %v3648 = vrot.slane %v3647, 4
    %v3650 = vshll.u32 %v1258, 16
    %v3652 = vrot.slane %v3650, 5
    %v3653 = vsel %vm1540, %v3648, %v3652
    %v3655 = vshrl.u32 %v1310, 16
    %v3657 = vrot.slane %v3655, 4
    %v3658 = vshll.u32 %v1310, 16
    %v3660 = vrot.slane %v3658, 5
    %v3661 = vor.u32 %v3657, %v3660
    %v3662 = vrot.slane %v3661, 4
    %v3664 = vshll.u32 %v1311, 16
    %v3666 = vrot.slane %v3664, 5
    %v3667 = vsel %vm1540, %v3662, %v3666
    %v3668 = vshrl.u32 %v1311, 16
    %v3670 = vrot.slane %v3668, 4
    %v3671 = vor.u32 %v3670, %v3666
    %v3672 = vrot.slane %v3671, 4
    %v3674 = vshll.u32 %v1312, 16
    %v3676 = vrot.slane %v3674, 5
    %v3677 = vsel %vm1540, %v3672, %v3676
    %v3678 = vunpack.c.l.b16 %v3643
    %v3679 = vunpack.c.l.b16 %v3653
    %v3680 = vunpack.c.l.b16 %v3667
    %v3681 = vunpack.c.l.b16 %v3677
    %v3682 = vpack.c.b16 %v3679, %v3678
    %v3683 = vpack.c.b16 %v3681, %v3680
    %3684 = vrot.lane.b32.xlu0 %v2375, 112
    %v3685 = vpop.permute.xlu0 %3684
    %3686 = vrot.lane.b32.xlu0 %v2376, 112
    %v3687 = vpop.permute.xlu0 %3686
    %3688 = vrot.lane.b32.xlu0 %v2377, 112
    %v3689 = vpop.permute.xlu0 %3688
    %3690 = vrot.lane.b32.xlu0 %v2378, 112
    %v3691 = vpop.permute.xlu0 %3690
    %3692 = vrot.lane.b32.xlu0 %v2379, 112
    %v3693 = vpop.permute.xlu0 %3692
    %3694 = vrot.lane.b32.xlu0 %v2380, 112
    %v3695 = vpop.permute.xlu0 %3694
    %3696 = vrot.lane.b32.xlu0 %v2381, 112
    %v3697 = vpop.permute.xlu0 %3696
    %3698 = vrot.lane.b32.xlu0 %v2382, 112
    %v3699 = vpop.permute.xlu0 %3698
    %3700 = vrot.lane.b32.xlu0 %v2383, 112
    %v3701 = vpop.permute.xlu0 %3700
    %3702 = vrot.lane.b32.xlu0 %v2384, 112
    %v3703 = vpop.permute.xlu0 %3702
    %3704 = vrot.lane.b32.xlu0 %v2385, 112
    %v3705 = vpop.permute.xlu0 %3704
    %3706 = vrot.lane.b32.xlu0 %v2386, 112
    %v3707 = vpop.permute.xlu0 %3706
    %3708 = vrot.lane.b32.xlu0 %v2387, 112
    %v3709 = vpop.permute.xlu0 %3708
    %3710 = vrot.lane.b32.xlu0 %v2388, 112
    %v3711 = vpop.permute.xlu0 %3710
    %3712 = vrot.lane.b32.xlu0 %v3209, 112
    %v3713 = vpop.permute.xlu0 %3712
    %3714 = vrot.lane.b32.xlu0 %v3682, 112
    %v3715 = vpop.permute.xlu0 %3714
    %3716 = vrot.lane.b32.xlu0 %v2391, 112
    %v3717 = vpop.permute.xlu0 %3716
    %3718 = vrot.lane.b32.xlu0 %v2392, 112
    %v3719 = vpop.permute.xlu0 %3718
    %3720 = vrot.lane.b32.xlu0 %v2393, 112
    %v3721 = vpop.permute.xlu0 %3720
    %3722 = vrot.lane.b32.xlu0 %v2394, 112
    %v3723 = vpop.permute.xlu0 %3722
    %3724 = vrot.lane.b32.xlu0 %v2395, 112
    %v3725 = vpop.permute.xlu0 %3724
    %3726 = vrot.lane.b32.xlu0 %v2396, 112
    %v3727 = vpop.permute.xlu0 %3726
    %3728 = vrot.lane.b32.xlu0 %v2397, 112
    %v3729 = vpop.permute.xlu0 %3728
    %3730 = vrot.lane.b32.xlu0 %v2398, 112
    %v3731 = vpop.permute.xlu0 %3730
    %3732 = vrot.lane.b32.xlu0 %v2399, 112
    %v3733 = vpop.permute.xlu0 %3732
    %3734 = vrot.lane.b32.xlu0 %v2400, 112
    %v3735 = vpop.permute.xlu0 %3734
    %3736 = vrot.lane.b32.xlu0 %v2401, 112
    %v3737 = vpop.permute.xlu0 %3736
    %3738 = vrot.lane.b32.xlu0 %v2402, 112
    %v3739 = vpop.permute.xlu0 %3738
    %3740 = vrot.lane.b32.xlu0 %v2403, 112
    %v3741 = vpop.permute.xlu0 %3740
    %3742 = vrot.lane.b32.xlu0 %v2404, 112
    %v3743 = vpop.permute.xlu0 %3742
    %3744 = vrot.lane.b32.xlu0 %v3210, 112
    %v3745 = vpop.permute.xlu0 %3744
    %3746 = vrot.lane.b32.xlu0 %v3683, 112
    %v3747 = vpop.permute.xlu0 %3746
    %vm3780 = vcmask 1048448
    %3781 = vst.msk [vmem:[#allocation4] sm:$0xff] %vm3780, %v3685
    %3782 = vst.msk [vmem:[#allocation4 + $0x10] sm:$0xff] %vm3780, %v3687
    %3783 = vst.msk [vmem:[#allocation4 + $0x20] sm:$0xff] %vm3780, %v3689
    %3784 = vst.msk [vmem:[#allocation4 + $0x30] sm:$0xff] %vm3780, %v3691
    %3785 = vst.msk [vmem:[#allocation4 + $0x40] sm:$0xff] %vm3780, %v3693
    %3786 = vst.msk [vmem:[#allocation4 + $0x50] sm:$0xff] %vm3780, %v3695
    %3787 = vst.msk [vmem:[#allocation4 + $0x60] sm:$0xff] %vm3780, %v3697
    %3788 = vst.msk [vmem:[#allocation4 + $0x70] sm:$0xff] %vm3780, %v3699
    %3789 = vst.msk [vmem:[#allocation4 + $0x80] sm:$0xff] %vm3780, %v3701
    %3790 = vst.msk [vmem:[#allocation4 + $0x90] sm:$0xff] %vm3780, %v3703
    %3791 = vst.msk [vmem:[#allocation4 + $0xa0] sm:$0xff] %vm3780, %v3705
    %3792 = vst.msk [vmem:[#allocation4 + $0xb0] sm:$0xff] %vm3780, %v3707
    %3793 = vst.msk [vmem:[#allocation4 + $0xc0] sm:$0xff] %vm3780, %v3709
    %3794 = vst.msk [vmem:[#allocation4 + $0xd0] sm:$0xff] %vm3780, %v3711
    %3795 = vst.msk [vmem:[#allocation4 + $0xe0] sm:$0xff] %vm3780, %v3713
    %3796 = vst.msk [vmem:[#allocation4 + $0xf0] sm:$0xff] %vm3780, %v3715
    %3797 = vst.msk [vmem:[#allocation4 + $0x100] sm:$0xff] %vm3780, %v3717
    %3798 = vst.msk [vmem:[#allocation4 + $0x110] sm:$0xff] %vm3780, %v3719
    %3799 = vst.msk [vmem:[#allocation4 + $0x120] sm:$0xff] %vm3780, %v3721
    %3800 = vst.msk [vmem:[#allocation4 + $0x130] sm:$0xff] %vm3780, %v3723
    %3801 = vst.msk [vmem:[#allocation4 + $0x140] sm:$0xff] %vm3780, %v3725
    %3802 = vst.msk [vmem:[#allocation4 + $0x150] sm:$0xff] %vm3780, %v3727
    %3803 = vst.msk [vmem:[#allocation4 + $0x160] sm:$0xff] %vm3780, %v3729
    %3804 = vst.msk [vmem:[#allocation4 + $0x170] sm:$0xff] %vm3780, %v3731
    %3805 = vst.msk [vmem:[#allocation4 + $0x180] sm:$0xff] %vm3780, %v3733
    %3806 = vst.msk [vmem:[#allocation4 + $0x190] sm:$0xff] %vm3780, %v3735
    %3807 = vst.msk [vmem:[#allocation4 + $0x1a0] sm:$0xff] %vm3780, %v3737
    %3808 = vst.msk [vmem:[#allocation4 + $0x1b0] sm:$0xff] %vm3780, %v3739
    %3809 = vst.msk [vmem:[#allocation4 + $0x1c0] sm:$0xff] %vm3780, %v3741
    %3810 = vst.msk [vmem:[#allocation4 + $0x1d0] sm:$0xff] %vm3780, %v3743
    %3811 = vst.msk [vmem:[#allocation4 + $0x1e0] sm:$0xff] %vm3780, %v3745
    %3812 = vst.msk [vmem:[#allocation4 + $0x1f0] sm:$0xff] %vm3780, %v3747
    %v3815 = vrot.slane %v1256, 5
    %v3816 = vrot.slane %v3815, 4
    %v3817 = vrot.slane %v1257, 5
    %v3818 = vsel %vm2568, %v3816, %v3817
    %v3819 = vrot.slane %v3817, 4
    %v3820 = vrot.slane %v1258, 5
    %v3821 = vsel %vm2568, %v3819, %v3820
    %v3822 = vrot.slane %v1310, 5
    %v3823 = vrot.slane %v3822, 4
    %v3824 = vrot.slane %v1311, 5
    %v3825 = vsel %vm2568, %v3823, %v3824
    %v3826 = vrot.slane %v3824, 4
    %v3827 = vrot.slane %v1312, 5
    %v3828 = vsel %vm2568, %v3826, %v3827
    %v3829 = vunpack.c.l.b16 %v3818
    %v3830 = vunpack.c.l.b16 %v3821
    %v3831 = vunpack.c.l.b16 %v3825
    %v3832 = vunpack.c.l.b16 %v3828
    %v3833 = vpack.c.b16 %v3830, %v3829
    %v3834 = vpack.c.b16 %v3832, %v3831
    %3867 = vst.msk [vmem:[#allocation4 + $0x8] sm:$0xff] %vm1505, %v2859
    %3868 = vst.msk [vmem:[#allocation4 + $0x18] sm:$0xff] %vm1505, %v2860
    %3869 = vst.msk [vmem:[#allocation4 + $0x28] sm:$0xff] %vm1505, %v2861
    %3870 = vst.msk [vmem:[#allocation4 + $0x38] sm:$0xff] %vm1505, %v2862
    %3871 = vst.msk [vmem:[#allocation4 + $0x48] sm:$0xff] %vm1505, %v2863
    %3872 = vst.msk [vmem:[#allocation4 + $0x58] sm:$0xff] %vm1505, %v2864
    %3873 = vst.msk [vmem:[#allocation4 + $0x68] sm:$0xff] %vm1505, %v2865
    %3874 = vst.msk [vmem:[#allocation4 + $0x78] sm:$0xff] %vm1505, %v2866
    %3875 = vst.msk [vmem:[#allocation4 + $0x88] sm:$0xff] %vm1505, %v2867
    %3876 = vst.msk [vmem:[#allocation4 + $0x98] sm:$0xff] %vm1505, %v2868
    %3877 = vst.msk [vmem:[#allocation4 + $0xa8] sm:$0xff] %vm1505, %v2869
    %3878 = vst.msk [vmem:[#allocation4 + $0xb8] sm:$0xff] %vm1505, %v2870
    %3879 = vst.msk [vmem:[#allocation4 + $0xc8] sm:$0xff] %vm1505, %v2871
    %3880 = vst.msk [vmem:[#allocation4 + $0xd8] sm:$0xff] %vm1505, %v2872
    %3881 = vst.msk [vmem:[#allocation4 + $0xe8] sm:$0xff] %vm1505, %v3360
    %3882 = vst.msk [vmem:[#allocation4 + $0xf8] sm:$0xff] %vm1505, %v3833
    %3883 = vst.msk [vmem:[#allocation4 + $0x108] sm:$0xff] %vm1505, %v2875
    %3884 = vst.msk [vmem:[#allocation4 + $0x118] sm:$0xff] %vm1505, %v2876
    %3885 = vst.msk [vmem:[#allocation4 + $0x128] sm:$0xff] %vm1505, %v2877
    %3886 = vst.msk [vmem:[#allocation4 + $0x138] sm:$0xff] %vm1505, %v2878
    %3887 = vst.msk [vmem:[#allocation4 + $0x148] sm:$0xff] %vm1505, %v2879
    %3888 = vst.msk [vmem:[#allocation4 + $0x158] sm:$0xff] %vm1505, %v2880
    %3889 = vst.msk [vmem:[#allocation4 + $0x168] sm:$0xff] %vm1505, %v2881
    %3890 = vst.msk [vmem:[#allocation4 + $0x178] sm:$0xff] %vm1505, %v2882
    %3891 = vst.msk [vmem:[#allocation4 + $0x188] sm:$0xff] %vm1505, %v2883
    %3892 = vst.msk [vmem:[#allocation4 + $0x198] sm:$0xff] %vm1505, %v2884
    %3893 = vst.msk [vmem:[#allocation4 + $0x1a8] sm:$0xff] %vm1505, %v2885
    %3894 = vst.msk [vmem:[#allocation4 + $0x1b8] sm:$0xff] %vm1505, %v2886
    %3895 = vst.msk [vmem:[#allocation4 + $0x1c8] sm:$0xff] %vm1505, %v2887
    %3896 = vst.msk [vmem:[#allocation4 + $0x1d8] sm:$0xff] %vm1505, %v2888
    %3897 = vst.msk [vmem:[#allocation4 + $0x1e8] sm:$0xff] %vm1505, %v3361
    %3898 = vst.msk [vmem:[#allocation4 + $0x1f8] sm:$0xff] %vm1505, %v3834
    %v3899 = vld [vmem:[#allocation4] sm:$0xff]
    %v3900 = vld [vmem:[#allocation4 + $0x8] sm:$0xff]
    %v3901 = vld [vmem:[#allocation4 + $0x10] sm:$0xff]
    %v3902 = vld [vmem:[#allocation4 + $0x18] sm:$0xff]
    %v3903 = vld [vmem:[#allocation4 + $0x20] sm:$0xff]
    %v3904 = vld [vmem:[#allocation4 + $0x28] sm:$0xff]
    %v3905 = vld [vmem:[#allocation4 + $0x30] sm:$0xff]
    %v3906 = vld [vmem:[#allocation4 + $0x38] sm:$0xff]
    %v3907 = vld [vmem:[#allocation4 + $0x40] sm:$0xff]
    %v3908 = vld [vmem:[#allocation4 + $0x48] sm:$0xff]
    %v3909 = vld [vmem:[#allocation4 + $0x50] sm:$0xff]
    %v3910 = vld [vmem:[#allocation4 + $0x58] sm:$0xff]
    %v3911 = vld [vmem:[#allocation4 + $0x60] sm:$0xff]
    %v3912 = vld [vmem:[#allocation4 + $0x68] sm:$0xff]
    %v3913 = vld [vmem:[#allocation4 + $0x70] sm:$0xff]
    %v3914 = vld [vmem:[#allocation4 + $0x78] sm:$0xff]
    %v3915 = vld [vmem:[#allocation4 + $0x80] sm:$0xff]
    %v3916 = vld [vmem:[#allocation4 + $0x88] sm:$0xff]
    %v3917 = vld [vmem:[#allocation4 + $0x90] sm:$0xff]
    %v3918 = vld [vmem:[#allocation4 + $0x98] sm:$0xff]
    %v3919 = vld [vmem:[#allocation4 + $0xa0] sm:$0xff]
    %v3920 = vld [vmem:[#allocation4 + $0xa8] sm:$0xff]
    %v3921 = vld [vmem:[#allocation4 + $0xb0] sm:$0xff]
    %v3922 = vld [vmem:[#allocation4 + $0xb8] sm:$0xff]
    %v3923 = vld [vmem:[#allocation4 + $0xc0] sm:$0xff]
    %v3924 = vld [vmem:[#allocation4 + $0xc8] sm:$0xff]
    %v3925 = vld [vmem:[#allocation4 + $0xd0] sm:$0xff]
    %v3926 = vld [vmem:[#allocation4 + $0xd8] sm:$0xff]
    %v3927 = vld [vmem:[#allocation4 + $0xe0] sm:$0xff]
    %v3928 = vld [vmem:[#allocation4 + $0xe8] sm:$0xff]
    %v3929 = vld [vmem:[#allocation4 + $0xf0] sm:$0xff]
    %v3930 = vld [vmem:[#allocation4 + $0xf8] sm:$0xff]
    %v3931 = vld [vmem:[#allocation4 + $0x100] sm:$0xff]
    %v3932 = vld [vmem:[#allocation4 + $0x108] sm:$0xff]
    %v3933 = vld [vmem:[#allocation4 + $0x110] sm:$0xff]
    %v3934 = vld [vmem:[#allocation4 + $0x118] sm:$0xff]
    %v3935 = vld [vmem:[#allocation4 + $0x120] sm:$0xff]
    %v3936 = vld [vmem:[#allocation4 + $0x128] sm:$0xff]
    %v3937 = vld [vmem:[#allocation4 + $0x130] sm:$0xff]
    %v3938 = vld [vmem:[#allocation4 + $0x138] sm:$0xff]
    %v3939 = vld [vmem:[#allocation4 + $0x140] sm:$0xff]
    %v3940 = vld [vmem:[#allocation4 + $0x148] sm:$0xff]
    %v3941 = vld [vmem:[#allocation4 + $0x150] sm:$0xff]
    %v3942 = vld [vmem:[#allocation4 + $0x158] sm:$0xff]
    %v3943 = vld [vmem:[#allocation4 + $0x160] sm:$0xff]
    %v3944 = vld [vmem:[#allocation4 + $0x168] sm:$0xff]
    %v3945 = vld [vmem:[#allocation4 + $0x170] sm:$0xff]
    %v3946 = vld [vmem:[#allocation4 + $0x178] sm:$0xff]
    %v3947 = vld [vmem:[#allocation4 + $0x180] sm:$0xff]
    %v3948 = vld [vmem:[#allocation4 + $0x188] sm:$0xff]
    %v3949 = vld [vmem:[#allocation4 + $0x190] sm:$0xff]
    %v3950 = vld [vmem:[#allocation4 + $0x198] sm:$0xff]
    %v3951 = vld [vmem:[#allocation4 + $0x1a0] sm:$0xff]
    %v3952 = vld [vmem:[#allocation4 + $0x1a8] sm:$0xff]
    %v3953 = vld [vmem:[#allocation4 + $0x1b0] sm:$0xff]
    %v3954 = vld [vmem:[#allocation4 + $0x1b8] sm:$0xff]
    %v3955 = vld [vmem:[#allocation4 + $0x1c0] sm:$0xff]
    %v3956 = vld [vmem:[#allocation4 + $0x1c8] sm:$0xff]
    %v3957 = vld [vmem:[#allocation4 + $0x1d0] sm:$0xff]
    %v3958 = vld [vmem:[#allocation4 + $0x1d8] sm:$0xff]
    %v3959 = vld [vmem:[#allocation4 + $0x1e0] sm:$0xff]
    %v3960 = vld [vmem:[#allocation4 + $0x1e8] sm:$0xff]
    %v3961 = vld [vmem:[#allocation4 + $0x1f0] sm:$0xff]
    %v3962 = vld [vmem:[#allocation4 + $0x1f8] sm:$0xff]
    %v3963 = vld [vmem:[%s1] sm:$0xf]
    %v3964 = vld [vmem:[%s1 + $0x4] sm:$0xf]
    %v3965 = vld [vmem:[%s1 + $0x8] sm:$0xf]
    %v3966 = vld [vmem:[%s1 + $0xc] sm:$0xf]
    %v3967 = vld [vmem:[%s1 + $0x10] sm:$0xf]
    %v3968 = vld [vmem:[%s1 + $0x14] sm:$0xf]
    %v3969 = vld [vmem:[%s1 + $0x18] sm:$0xf]
    %v3970 = vld [vmem:[%s1 + $0x1c] sm:$0xf]
    %v3971 = vld [vmem:[%s1 + $0x20] sm:$0xf]
    %v3972 = vld [vmem:[%s1 + $0x24] sm:$0xf]
    %v3973 = vld [vmem:[%s1 + $0x28] sm:$0xf]
    %v3974 = vld [vmem:[%s1 + $0x2c] sm:$0xf]
    %v3975 = vld [vmem:[%s1 + $0x30] sm:$0xf]
    %v3976 = vld [vmem:[%s1 + $0x34] sm:$0xf]
    %v3977 = vld [vmem:[%s1 + $0x38] sm:$0xf]
    %v3978 = vld [vmem:[%s1 + $0x3c] sm:$0xf]
    %v3979 = vld [vmem:[%s1 + $0x40] sm:$0xf]
    %v3980 = vld [vmem:[%s1 + $0x44] sm:$0xf]
    %v3981 = vld [vmem:[%s2] sm:$0x1]
    %v3983 = vlaneseq
    %v3984 = vshrl.u32 %v3983, 7
    %v3985 = vsub.s32 0, %v3984
    %v3986 = vrot.slane %v3981, %v3985
    %v4006 = vunpack.c.l.b16 %v3963
    %v4007 = vunpack.c.l.b16 %v3964
    %v4008 = vunpack.c.l.b16 %v3965
    %v4009 = vunpack.c.l.b16 %v3966
    %v4010 = vunpack.c.l.b16 %v3967
    %v4011 = vunpack.c.l.b16 %v3968
    %v4012 = vunpack.c.l.b16 %v3969
    %v4013 = vunpack.c.l.b16 %v3970
    %v4014 = vunpack.c.l.b16 %v3971
    %v4015 = vunpack.c.l.b16 %v3972
    %v4016 = vunpack.c.l.b16 %v3973
    %v4017 = vunpack.c.l.b16 %v3974
    %v4018 = vunpack.c.l.b16 %v3975
    %v4019 = vunpack.c.l.b16 %v3976
    %v4020 = vunpack.c.l.b16 %v3977
    %v4021 = vunpack.c.l.b16 %v3978
    %v4022 = vunpack.c.l.b16 %v3979
    %v4023 = vunpack.c.l.b16 %v3980
    %v4024 = vpack.c.b16 %v4007, %v4006
    %v4025 = vpack.c.b16 %v4009, %v4008
    %v4026 = vpack.c.b16 %v4011, %v4010
    %v4027 = vpack.c.b16 %v4013, %v4012
    %v4028 = vpack.c.b16 %v4015, %v4014
    %v4029 = vpack.c.b16 %v4017, %v4016
    %v4030 = vpack.c.b16 %v4019, %v4018
    %v4031 = vpack.c.b16 %v4021, %v4020
    %v4032 = vpack.c.b16 %v4023, %v4022
    %v4043 = vsel %vm1505, %v3900, 0
    %v4046 = vsel %vm1505, %v3902, 0
    %v4049 = vsel %vm1505, %v3904, 0
    %v4052 = vsel %vm1505, %v3906, 0
    %v4055 = vsel %vm1505, %v3908, 0
    %v4058 = vsel %vm1505, %v3910, 0
    %v4061 = vsel %vm1505, %v3912, 0
    %v4064 = vsel %vm1505, %v3914, 0
    %v4067 = vsel %vm1505, %v3916, 0
    %v4070 = vsel %vm1505, %v3918, 0
    %v4073 = vsel %vm1505, %v3920, 0
    %v4076 = vsel %vm1505, %v3922, 0
    %v4079 = vsel %vm1505, %v3924, 0
    %v4082 = vsel %vm1505, %v3926, 0
    %v4085 = vsel %vm1505, %v3928, 0
    %v4088 = vsel %vm1505, %v3930, 0
    %v4091 = vsel %vm1505, %v3932, 0
    %v4094 = vsel %vm1505, %v3934, 0
    %v4097 = vsel %vm1505, %v3936, 0
    %v4100 = vsel %vm1505, %v3938, 0
    %v4103 = vsel %vm1505, %v3940, 0
    %v4106 = vsel %vm1505, %v3942, 0
    %v4109 = vsel %vm1505, %v3944, 0
    %v4112 = vsel %vm1505, %v3946, 0
    %v4115 = vsel %vm1505, %v3948, 0
    %v4118 = vsel %vm1505, %v3950, 0
    %v4121 = vsel %vm1505, %v3952, 0
    %v4124 = vsel %vm1505, %v3954, 0
    %v4127 = vsel %vm1505, %v3956, 0
    %v4130 = vsel %vm1505, %v3958, 0
    %v4133 = vsel %vm1505, %v3960, 0
    %v4136 = vsel %vm1505, %v3962, 0
    %4138 = vmatprep.subr.bf16.mxu0 0
    %4139 = vmatpush1.bf16.msra.mxu0 %v4024
    %4140 = vmatprep.subr.bf16.mxu0 0
    %4141 = vmatpush1.bf16.msra.mxu0 %v4025
    %4142 = vmatprep.subr.bf16.mxu0 0
    %4143 = vmatpush1.bf16.msra.mxu0 %v4026
    %4144 = vmatprep.subr.bf16.mxu0 0
    %4145 = vmatpush1.bf16.msra.mxu0 %v4027
    %4146 = vmatprep.subr.bf16.mxu0 0
    %4147 = vmatpush1.bf16.msra.mxu0 %v4028
    %4148 = vmatprep.subr.bf16.mxu0 0
    %4149 = vmatpush1.bf16.msra.mxu0 %v4029
    %4150 = vmatprep.subr.bf16.mxu0 0
    %4151 = vmatpush1.bf16.msra.mxu0 %v4030
    %4152 = vmatprep.subr.bf16.mxu0 0
    %4153 = vmatpush1.bf16.msra.mxu0 %v4031
    %4154 = vmatprep.subr.bf16.mxu0 0
    %4155 = vmatpush1.bf16.msra.mxu0 %v4032
    %4156 = vmatprep.subr.bf16.mxu0 0
    %4157 = vmatpush1.bf16.msra.mxu0 0
    %4158 = vmatprep.subr.bf16.mxu0 0
    %4159 = vmatpush1.bf16.msra.mxu0 0
    %4160 = vmatprep.subr.bf16.mxu0 0
    %4161 = vmatpush1.bf16.msra.mxu0 0
    %4162 = vmatprep.subr.bf16.mxu0 0
    %4163 = vmatpush1.bf16.msra.mxu0 0
    %4164 = vmatprep.subr.bf16.mxu0 0
    %4165 = vmatpush1.bf16.msra.mxu0 0
    %4166 = vmatprep.subr.bf16.mxu0 0
    %4167 = vmatpush1.bf16.msra.mxu0 0
    %4168 = vmatprep.subr.bf16.mxu0 0
    %4169 = vmatpush1.bf16.msra.mxu0 0
    %4170 = vmatprep.mubr.bf16.mxu0 %v4043
    %4171 = vmatmul.mubr.bf16.gmra.mrb[0].mxu0 %v3899
    %v4172 = vpop.f32.mrb[0].mxu0
    %v4173 = vadd.f32 %v3986, %v4172
    %v4174 = vpop.f32.mrb[0].mxu0
    %v4175 = vpop.f32.mrb[0].mxu0
    %v4176 = vadd.f32 %v3986, %v4175
    %v4177 = vpop.f32.mrb[0].mxu0
    %4178 = vmatprep.mubr.bf16.mxu0 %v4046
    %4179 = vmatmul.mubr.bf16.gmra.mrb[0].mxu0 %v3901
    %v4180 = vpop.f32.mrb[0].mxu0
    %v4181 = vadd.f32 %v3986, %v4180
    %v4182 = vpop.f32.mrb[0].mxu0
    %v4183 = vpop.f32.mrb[0].mxu0
    %v4184 = vadd.f32 %v3986, %v4183
    %v4185 = vpop.f32.mrb[0].mxu0
    %4186 = vmatprep.mubr.bf16.mxu0 %v4049
    %4187 = vmatmul.mubr.bf16.gmra.mrb[0].mxu0 %v3903
    %v4188 = vpop.f32.mrb[0].mxu0
    %v4189 = vadd.f32 %v3986, %v4188
    %v4190 = vpop.f32.mrb[0].mxu0
    %v4191 = vpop.f32.mrb[0].mxu0
    %v4192 = vadd.f32 %v3986, %v4191
    %v4193 = vpop.f32.mrb[0].mxu0
    %4194 = vmatprep.mubr.bf16.mxu0 %v4052
    %4195 = vmatmul.mubr.bf16.gmra.mrb[0].mxu0 %v3905
    %v4196 = vpop.f32.mrb[0].mxu0
    %v4197 = vadd.f32 %v3986, %v4196
    %v4198 = vpop.f32.mrb[0].mxu0
    %v4199 = vpop.f32.mrb[0].mxu0
    %v4200 = vadd.f32 %v3986, %v4199
    %v4201 = vpop.f32.mrb[0].mxu0
    %4202 = vmatprep.mubr.bf16.mxu0 %v4055
    %4203 = vmatmul.mubr.bf16.gmra.mrb[0].mxu0 %v3907
    %v4204 = vpop.f32.mrb[0].mxu0
    %v4205 = vadd.f32 %v3986, %v4204
    %v4206 = vpop.f32.mrb[0].mxu0
    %v4207 = vpop.f32.mrb[0].mxu0
    %v4208 = vadd.f32 %v3986, %v4207
    %v4209 = vpop.f32.mrb[0].mxu0
    %4210 = vmatprep.mubr.bf16.mxu0 %v4058
    %4211 = vmatmul.mubr.bf16.gmra.mrb[0].mxu0 %v3909
    %v4212 = vpop.f32.mrb[0].mxu0
    %v4213 = vadd.f32 %v3986, %v4212
    %v4214 = vpop.f32.mrb[0].mxu0
    %v4215 = vpop.f32.mrb[0].mxu0
    %v4216 = vadd.f32 %v3986, %v4215
    %v4217 = vpop.f32.mrb[0].mxu0
    %4218 = vmatprep.mubr.bf16.mxu0 %v4061
    %4219 = vmatmul.mubr.bf16.gmra.mrb[0].mxu0 %v3911
    %v4220 = vpop.f32.mrb[0].mxu0
    %v4221 = vadd.f32 %v3986, %v4220
    %v4222 = vpop.f32.mrb[0].mxu0
    %v4223 = vpop.f32.mrb[0].mxu0
    %v4224 = vadd.f32 %v3986, %v4223
    %v4225 = vpop.f32.mrb[0].mxu0
    %4226 = vmatprep.mubr.bf16.mxu0 %v4064
    %4227 = vmatmul.mubr.bf16.gmra.mrb[0].mxu0 %v3913
    %v4228 = vpop.f32.mrb[0].mxu0
    %v4229 = vadd.f32 %v3986, %v4228
    %v4230 = vpop.f32.mrb[0].mxu0
    %v4231 = vpop.f32.mrb[0].mxu0
    %v4232 = vadd.f32 %v3986, %v4231
    %v4233 = vpop.f32.mrb[0].mxu0
    %4234 = vmatprep.mubr.bf16.mxu0 %v4067
    %4235 = vmatmul.mubr.bf16.gmra.mrb[0].mxu0 %v3915
    %v4236 = vpop.f32.mrb[0].mxu0
    %v4237 = vadd.f32 %v3986, %v4236
    %v4238 = vpop.f32.mrb[0].mxu0
    %v4239 = vpop.f32.mrb[0].mxu0
    %v4240 = vadd.f32 %v3986, %v4239
    %v4241 = vpop.f32.mrb[0].mxu0
    %4242 = vmatprep.mubr.bf16.mxu0 %v4070
    %4243 = vmatmul.mubr.bf16.gmra.mrb[0].mxu0 %v3917
    %v4244 = vpop.f32.mrb[0].mxu0
    %v4245 = vadd.f32 %v3986, %v4244
    %v4246 = vpop.f32.mrb[0].mxu0
    %v4247 = vpop.f32.mrb[0].mxu0
    %v4248 = vadd.f32 %v3986, %v4247
    %v4249 = vpop.f32.mrb[0].mxu0
    %4250 = vmatprep.mubr.bf16.mxu0 %v4073
    %4251 = vmatmul.mubr.bf16.gmra.mrb[0].mxu0 %v3919
    %v4252 = vpop.f32.mrb[0].mxu0
    %v4253 = vadd.f32 %v3986, %v4252
    %v4254 = vpop.f32.mrb[0].mxu0
    %v4255 = vpop.f32.mrb[0].mxu0
    %v4256 = vadd.f32 %v3986, %v4255
    %v4257 = vpop.f32.mrb[0].mxu0
    %4258 = vmatprep.mubr.bf16.mxu0 %v4076
    %4259 = vmatmul.mubr.bf16.gmra.mrb[0].mxu0 %v3921
    %v4260 = vpop.f32.mrb[0].mxu0
    %v4261 = vadd.f32 %v3986, %v4260
    %v4262 = vpop.f32.mrb[0].mxu0
    %v4263 = vpop.f32.mrb[0].mxu0
    %v4264 = vadd.f32 %v3986, %v4263
    %v4265 = vpop.f32.mrb[0].mxu0
    %4266 = vmatprep.mubr.bf16.mxu0 %v4079
    %4267 = vmatmul.mubr.bf16.gmra.mrb[0].mxu0 %v3923
    %v4268 = vpop.f32.mrb[0].mxu0
    %v4269 = vadd.f32 %v3986, %v4268
    %v4270 = vpop.f32.mrb[0].mxu0
    %v4271 = vpop.f32.mrb[0].mxu0
    %v4272 = vadd.f32 %v3986, %v4271
    %v4273 = vpop.f32.mrb[0].mxu0
    %4274 = vmatprep.mubr.bf16.mxu0 %v4082
    %4275 = vmatmul.mubr.bf16.gmra.mrb[0].mxu0 %v3925
    %v4276 = vpop.f32.mrb[0].mxu0
    %v4277 = vadd.f32 %v3986, %v4276
    %v4278 = vpop.f32.mrb[0].mxu0
    %v4279 = vpop.f32.mrb[0].mxu0
    %v4280 = vadd.f32 %v3986, %v4279
    %v4281 = vpop.f32.mrb[0].mxu0
    %4282 = vmatprep.mubr.bf16.mxu0 %v4085
    %4283 = vmatmul.mubr.bf16.gmra.mrb[0].mxu0 %v3927
    %v4284 = vpop.f32.mrb[0].mxu0
    %v4285 = vadd.f32 %v3986, %v4284
    %v4286 = vpop.f32.mrb[0].mxu0
    %v4287 = vpop.f32.mrb[0].mxu0
    %v4288 = vadd.f32 %v3986, %v4287
    %v4289 = vpop.f32.mrb[0].mxu0
    %4290 = vmatprep.mubr.bf16.mxu0 %v4088
    %4291 = vmatmul.mubr.bf16.gmra.mrb[0].mxu0 %v3929
    %v4292 = vpop.f32.mrb[0].mxu0
    %v4293 = vadd.f32 %v3986, %v4292
    %v4294 = vpop.f32.mrb[0].mxu0
    %v4295 = vpop.f32.mrb[0].mxu0
    %v4296 = vadd.f32 %v3986, %v4295
    %v4297 = vpop.f32.mrb[0].mxu0
    %4298 = vmatprep.mubr.bf16.mxu0 %v4091
    %4299 = vmatmul.mubr.bf16.gmra.mrb[0].mxu0 %v3931
    %v4300 = vpop.f32.mrb[0].mxu0
    %v4301 = vadd.f32 %v3986, %v4300
    %v4302 = vpop.f32.mrb[0].mxu0
    %v4303 = vpop.f32.mrb[0].mxu0
    %v4304 = vadd.f32 %v3986, %v4303
    %v4305 = vpop.f32.mrb[0].mxu0
    %4306 = vmatprep.mubr.bf16.mxu0 %v4094
    %4307 = vmatmul.mubr.bf16.gmra.mrb[0].mxu0 %v3933
    %v4308 = vpop.f32.mrb[0].mxu0
    %v4309 = vadd.f32 %v3986, %v4308
    %v4310 = vpop.f32.mrb[0].mxu0
    %v4311 = vpop.f32.mrb[0].mxu0
    %v4312 = vadd.f32 %v3986, %v4311
    %v4313 = vpop.f32.mrb[0].mxu0
    %4314 = vmatprep.mubr.bf16.mxu0 %v4097
    %4315 = vmatmul.mubr.bf16.gmra.mrb[0].mxu0 %v3935
    %v4316 = vpop.f32.mrb[0].mxu0
    %v4317 = vadd.f32 %v3986, %v4316
    %v4318 = vpop.f32.mrb[0].mxu0
    %v4319 = vpop.f32.mrb[0].mxu0
    %v4320 = vadd.f32 %v3986, %v4319
    %v4321 = vpop.f32.mrb[0].mxu0
    %4322 = vmatprep.mubr.bf16.mxu0 %v4100
    %4323 = vmatmul.mubr.bf16.gmra.mrb[0].mxu0 %v3937
    %v4324 = vpop.f32.mrb[0].mxu0
    %v4325 = vadd.f32 %v3986, %v4324
    %v4326 = vpop.f32.mrb[0].mxu0
    %v4327 = vpop.f32.mrb[0].mxu0
    %v4328 = vadd.f32 %v3986, %v4327
    %v4329 = vpop.f32.mrb[0].mxu0
    %4330 = vmatprep.mubr.bf16.mxu0 %v4103
    %4331 = vmatmul.mubr.bf16.gmra.mrb[0].mxu0 %v3939
    %v4332 = vpop.f32.mrb[0].mxu0
    %v4333 = vadd.f32 %v3986, %v4332
    %v4334 = vpop.f32.mrb[0].mxu0
    %v4335 = vpop.f32.mrb[0].mxu0
    %v4336 = vadd.f32 %v3986, %v4335
    %v4337 = vpop.f32.mrb[0].mxu0
    %4338 = vmatprep.mubr.bf16.mxu0 %v4106
    %4339 = vmatmul.mubr.bf16.gmra.mrb[0].mxu0 %v3941
    %v4340 = vpop.f32.mrb[0].mxu0
    %v4341 = vadd.f32 %v3986, %v4340
    %v4342 = vpop.f32.mrb[0].mxu0
    %v4343 = vpop.f32.mrb[0].mxu0
    %v4344 = vadd.f32 %v3986, %v4343
    %v4345 = vpop.f32.mrb[0].mxu0
    %4346 = vmatprep.mubr.bf16.mxu0 %v4109
    %4347 = vmatmul.mubr.bf16.gmra.mrb[0].mxu0 %v3943
    %v4348 = vpop.f32.mrb[0].mxu0
    %v4349 = vadd.f32 %v3986, %v4348
    %v4350 = vpop.f32.mrb[0].mxu0
    %v4351 = vpop.f32.mrb[0].mxu0
    %v4352 = vadd.f32 %v3986, %v4351
    %v4353 = vpop.f32.mrb[0].mxu0
    %4354 = vmatprep.mubr.bf16.mxu0 %v4112
    %4355 = vmatmul.mubr.bf16.gmra.mrb[0].mxu0 %v3945
    %v4356 = vpop.f32.mrb[0].mxu0
    %v4357 = vadd.f32 %v3986, %v4356
    %v4358 = vpop.f32.mrb[0].mxu0
    %v4359 = vpop.f32.mrb[0].mxu0
    %v4360 = vadd.f32 %v3986, %v4359
    %v4361 = vpop.f32.mrb[0].mxu0
    %4362 = vmatprep.mubr.bf16.mxu0 %v4115
    %4363 = vmatmul.mubr.bf16.gmra.mrb[0].mxu0 %v3947
    %v4364 = vpop.f32.mrb[0].mxu0
    %v4365 = vadd.f32 %v3986, %v4364
    %v4366 = vpop.f32.mrb[0].mxu0
    %v4367 = vpop.f32.mrb[0].mxu0
    %v4368 = vadd.f32 %v3986, %v4367
    %v4369 = vpop.f32.mrb[0].mxu0
    %4370 = vmatprep.mubr.bf16.mxu0 %v4118
    %4371 = vmatmul.mubr.bf16.gmra.mrb[0].mxu0 %v3949
    %v4372 = vpop.f32.mrb[0].mxu0
    %v4373 = vadd.f32 %v3986, %v4372
    %v4374 = vpop.f32.mrb[0].mxu0
    %v4375 = vpop.f32.mrb[0].mxu0
    %v4376 = vadd.f32 %v3986, %v4375
    %v4377 = vpop.f32.mrb[0].mxu0
    %4378 = vmatprep.mubr.bf16.mxu0 %v4121
    %4379 = vmatmul.mubr.bf16.gmra.mrb[0].mxu0 %v3951
    %v4380 = vpop.f32.mrb[0].mxu0
    %v4381 = vadd.f32 %v3986, %v4380
    %v4382 = vpop.f32.mrb[0].mxu0
    %v4383 = vpop.f32.mrb[0].mxu0
    %v4384 = vadd.f32 %v3986, %v4383
    %v4385 = vpop.f32.mrb[0].mxu0
    %4386 = vmatprep.mubr.bf16.mxu0 %v4124
    %4387 = vmatmul.mubr.bf16.gmra.mrb[0].mxu0 %v3953
    %v4388 = vpop.f32.mrb[0].mxu0
    %v4389 = vadd.f32 %v3986, %v4388
    %v4390 = vpop.f32.mrb[0].mxu0
    %v4391 = vpop.f32.mrb[0].mxu0
    %v4392 = vadd.f32 %v3986, %v4391
    %v4393 = vpop.f32.mrb[0].mxu0
    %4394 = vmatprep.mubr.bf16.mxu0 %v4127
    %4395 = vmatmul.mubr.bf16.gmra.mrb[0].mxu0 %v3955
    %v4396 = vpop.f32.mrb[0].mxu0
    %v4397 = vadd.f32 %v3986, %v4396
    %v4398 = vpop.f32.mrb[0].mxu0
    %v4399 = vpop.f32.mrb[0].mxu0
    %v4400 = vadd.f32 %v3986, %v4399
    %v4401 = vpop.f32.mrb[0].mxu0
    %4402 = vmatprep.mubr.bf16.mxu0 %v4130
    %4403 = vmatmul.mubr.bf16.gmra.mrb[0].mxu0 %v3957
    %v4404 = vpop.f32.mrb[0].mxu0
    %v4405 = vadd.f32 %v3986, %v4404
    %v4406 = vpop.f32.mrb[0].mxu0
    %v4407 = vpop.f32.mrb[0].mxu0
    %v4408 = vadd.f32 %v3986, %v4407
    %v4409 = vpop.f32.mrb[0].mxu0
    %4410 = vmatprep.mubr.bf16.mxu0 %v4133
    %4411 = vmatmul.mubr.bf16.gmra.mrb[0].mxu0 %v3959
    %v4412 = vpop.f32.mrb[0].mxu0
    %v4413 = vadd.f32 %v3986, %v4412
    %v4414 = vpop.f32.mrb[0].mxu0
    %v4415 = vpop.f32.mrb[0].mxu0
    %v4416 = vadd.f32 %v3986, %v4415
    %v4417 = vpop.f32.mrb[0].mxu0
    %4418 = vmatprep.mubr.bf16.mxu0 %v4136
    %4419 = vmatmul.mubr.bf16.gmra.mrb[0].mxu0 %v3961
    %v4420 = vpop.f32.mrb[0].mxu0
    %v4421 = vadd.f32 %v3986, %v4420
    %v4422 = vpop.f32.mrb[0].mxu0
    %v4423 = vpop.f32.mrb[0].mxu0
    %v4424 = vadd.f32 %v3986, %v4423
    %v4425 = vpop.f32.mrb[0].mxu0
    %4426 = vdwg.mxu0
    %v4427 = vmax.f32 %v4173, 0.0
    %v4428 = vmax.f32 %v4176, 0.0
    %v4429 = vmax.f32 %v4181, 0.0
    %v4430 = vmax.f32 %v4184, 0.0
    %v4431 = vmax.f32 %v4189, 0.0
    %v4432 = vmax.f32 %v4192, 0.0
    %v4433 = vmax.f32 %v4197, 0.0
    %v4434 = vmax.f32 %v4200, 0.0
    %v4435 = vmax.f32 %v4205, 0.0
    %v4436 = vmax.f32 %v4208, 0.0
    %v4437 = vmax.f32 %v4213, 0.0
    %v4438 = vmax.f32 %v4216, 0.0
    %v4439 = vmax.f32 %v4221, 0.0
    %v4440 = vmax.f32 %v4224, 0.0
    %v4441 = vmax.f32 %v4229, 0.0
    %v4442 = vmax.f32 %v4232, 0.0
    %v4443 = vmax.f32 %v4237, 0.0
    %v4444 = vmax.f32 %v4240, 0.0
    %v4445 = vmax.f32 %v4245, 0.0
    %v4446 = vmax.f32 %v4248, 0.0
    %v4447 = vmax.f32 %v4253, 0.0
    %v4448 = vmax.f32 %v4256, 0.0
    %v4449 = vmax.f32 %v4261, 0.0
    %v4450 = vmax.f32 %v4264, 0.0
    %v4451 = vmax.f32 %v4269, 0.0
    %v4452 = vmax.f32 %v4272, 0.0
    %v4453 = vmax.f32 %v4277, 0.0
    %v4454 = vmax.f32 %v4280, 0.0
    %v4455 = vmax.f32 %v4285, 0.0
    %v4456 = vmax.f32 %v4288, 0.0
    %v4457 = vmax.f32 %v4293, 0.0
    %v4458 = vmax.f32 %v4296, 0.0
    %v4459 = vmax.f32 %v4301, 0.0
    %v4460 = vmax.f32 %v4304, 0.0
    %v4461 = vmax.f32 %v4309, 0.0
    %v4462 = vmax.f32 %v4312, 0.0
    %v4463 = vmax.f32 %v4317, 0.0
    %v4464 = vmax.f32 %v4320, 0.0
    %v4465 = vmax.f32 %v4325, 0.0
    %v4466 = vmax.f32 %v4328, 0.0
    %v4467 = vmax.f32 %v4333, 0.0
    %v4468 = vmax.f32 %v4336, 0.0
    %v4469 = vmax.f32 %v4341, 0.0
    %v4470 = vmax.f32 %v4344, 0.0
    %v4471 = vmax.f32 %v4349, 0.0
    %v4472 = vmax.f32 %v4352, 0.0
    %v4473 = vmax.f32 %v4357, 0.0
    %v4474 = vmax.f32 %v4360, 0.0
    %v4475 = vmax.f32 %v4365, 0.0
    %v4476 = vmax.f32 %v4368, 0.0
    %v4477 = vmax.f32 %v4373, 0.0
    %v4478 = vmax.f32 %v4376, 0.0
    %v4479 = vmax.f32 %v4381, 0.0
    %v4480 = vmax.f32 %v4384, 0.0
    %v4481 = vmax.f32 %v4389, 0.0
    %v4482 = vmax.f32 %v4392, 0.0
    %v4483 = vmax.f32 %v4397, 0.0
    %v4484 = vmax.f32 %v4400, 0.0
    %v4485 = vmax.f32 %v4405, 0.0
    %v4486 = vmax.f32 %v4408, 0.0
    %v4487 = vmax.f32 %v4413, 0.0
    %v4488 = vmax.f32 %v4416, 0.0
    %v4489 = vmax.f32 %v4421, 0.0
    %v4490 = vmax.f32 %v4424, 0.0
    %v4491 = vpack.c.bf16 %v4428, %v4427
    %v4492 = vpack.c.bf16 %v4430, %v4429
    %v4493 = vpack.c.bf16 %v4432, %v4431
    %v4494 = vpack.c.bf16 %v4434, %v4433
    %v4495 = vpack.c.bf16 %v4436, %v4435
    %v4496 = vpack.c.bf16 %v4438, %v4437
    %v4497 = vpack.c.bf16 %v4440, %v4439
    %v4498 = vpack.c.bf16 %v4442, %v4441
    %v4499 = vpack.c.bf16 %v4444, %v4443
    %v4500 = vpack.c.bf16 %v4446, %v4445
    %v4501 = vpack.c.bf16 %v4448, %v4447
    %v4502 = vpack.c.bf16 %v4450, %v4449
    %v4503 = vpack.c.bf16 %v4452, %v4451
    %v4504 = vpack.c.bf16 %v4454, %v4453
    %v4505 = vpack.c.bf16 %v4456, %v4455
    %v4506 = vpack.c.bf16 %v4458, %v4457
    %v4507 = vpack.c.bf16 %v4460, %v4459
    %v4508 = vpack.c.bf16 %v4462, %v4461
    %v4509 = vpack.c.bf16 %v4464, %v4463
    %v4510 = vpack.c.bf16 %v4466, %v4465
    %v4511 = vpack.c.bf16 %v4468, %v4467
    %v4512 = vpack.c.bf16 %v4470, %v4469
    %v4513 = vpack.c.bf16 %v4472, %v4471
    %v4514 = vpack.c.bf16 %v4474, %v4473
    %v4515 = vpack.c.bf16 %v4476, %v4475
    %v4516 = vpack.c.bf16 %v4478, %v4477
    %v4517 = vpack.c.bf16 %v4480, %v4479
    %v4518 = vpack.c.bf16 %v4482, %v4481
    %v4519 = vpack.c.bf16 %v4484, %v4483
    %v4520 = vpack.c.bf16 %v4486, %v4485
    %v4521 = vpack.c.bf16 %v4488, %v4487
    %v4522 = vpack.c.bf16 %v4490, %v4489
    %4523 = vst.msk [vmem:[#allocation3] sm:$0xf] %vm36, 0
    %4524 = vst.msk [vmem:[#allocation3 + $0x4] sm:$0xf] %vm36, 0
    %4525 = vst.msk [vmem:[#allocation3 + $0x8] sm:$0x1] %vm39, 0
    %4526 = vst.msk [vmem:[#allocation3 + $0xd8] sm:$0xf] %vm36, 0
    %4527 = vst.msk [vmem:[#allocation3 + $0xdc] sm:$0xf] %vm36, 0
    %4528 = vst.msk [vmem:[#allocation3 + $0xe0] sm:$0x1] %vm39, 0
    %s4529 = scalar_lea.vmem [#allocation3], 204
    %4530 = vst.msk [vmem:[%s4529] sm:$0xf] %vm36, 0
    %4531 = vst.msk [vmem:[%s4529 + $0x4] sm:$0xf] %vm36, 0
    %4532 = vst.msk [vmem:[%s4529 + $0x8] sm:$0x1] %vm39, 0
    %4533 = vst.msk [vmem:[%s4529 + $0xd8] sm:$0xf] %vm36, 0
    %4534 = vst.msk [vmem:[%s4529 + $0xdc] sm:$0xf] %vm36, 0
    %4535 = vst.msk [vmem:[%s4529 + $0xe0] sm:$0x1] %vm39, 0
    %v4536 = vld [vmem:[#allocation3] sm:$0x1]
    %v4537 = vsel %vm53, 0, %v4536
    %4538 = vst [vmem:[#allocation3] sm:$0x1] %v4537
    %v4539 = vld [vmem:[#allocation3 + $0xc] sm:$0x1]
    %v4540 = vsel %vm53, 0, %v4539
    %4541 = vst [vmem:[#allocation3 + $0xc] sm:$0x1] %v4540
    %v4542 = vld [vmem:[#allocation3 + $0x18] sm:$0x1]
    %v4543 = vsel %vm53, 0, %v4542
    %4544 = vst [vmem:[#allocation3 + $0x18] sm:$0x1] %v4543
    %v4545 = vld [vmem:[#allocation3 + $0x24] sm:$0x1]
    %v4546 = vsel %vm53, 0, %v4545
    %4547 = vst [vmem:[#allocation3 + $0x24] sm:$0x1] %v4546
    %v4548 = vld [vmem:[#allocation3 + $0x30] sm:$0x1]
    %v4549 = vsel %vm53, 0, %v4548
    %4550 = vst [vmem:[#allocation3 + $0x30] sm:$0x1] %v4549
    %v4551 = vld [vmem:[#allocation3 + $0x3c] sm:$0x1]
    %v4552 = vsel %vm53, 0, %v4551
    %4553 = vst [vmem:[#allocation3 + $0x3c] sm:$0x1] %v4552
    %v4554 = vld [vmem:[#allocation3 + $0x48] sm:$0x1]
    %v4555 = vsel %vm53, 0, %v4554
    %4556 = vst [vmem:[#allocation3 + $0x48] sm:$0x1] %v4555
    %v4557 = vld [vmem:[#allocation3 + $0x54] sm:$0x1]
    %v4558 = vsel %vm53, 0, %v4557
    %4559 = vst [vmem:[#allocation3 + $0x54] sm:$0x1] %v4558
    %v4560 = vld [vmem:[#allocation3 + $0x60] sm:$0x1]
    %v4561 = vsel %vm53, 0, %v4560
    %4562 = vst [vmem:[#allocation3 + $0x60] sm:$0x1] %v4561
    %v4563 = vld [vmem:[#allocation3 + $0x6c] sm:$0x1]
    %v4564 = vsel %vm53, 0, %v4563
    %4565 = vst [vmem:[#allocation3 + $0x6c] sm:$0x1] %v4564
    %v4566 = vld [vmem:[#allocation3 + $0x78] sm:$0x1]
    %v4567 = vsel %vm53, 0, %v4566
    %4568 = vst [vmem:[#allocation3 + $0x78] sm:$0x1] %v4567
    %v4569 = vld [vmem:[#allocation3 + $0x84] sm:$0x1]
    %v4570 = vsel %vm53, 0, %v4569
    %4571 = vst [vmem:[#allocation3 + $0x84] sm:$0x1] %v4570
    %v4572 = vld [vmem:[#allocation3 + $0x90] sm:$0x1]
    %v4573 = vsel %vm53, 0, %v4572
    %4574 = vst [vmem:[#allocation3 + $0x90] sm:$0x1] %v4573
    %v4575 = vld [vmem:[#allocation3 + $0x9c] sm:$0x1]
    %v4576 = vsel %vm53, 0, %v4575
    %4577 = vst [vmem:[#allocation3 + $0x9c] sm:$0x1] %v4576
    %v4578 = vld [vmem:[#allocation3 + $0xa8] sm:$0x1]
    %v4579 = vsel %vm53, 0, %v4578
    %4580 = vst [vmem:[#allocation3 + $0xa8] sm:$0x1] %v4579
    %v4581 = vld [vmem:[#allocation3 + $0xb4] sm:$0x1]
    %v4582 = vsel %vm53, 0, %v4581
    %4583 = vst [vmem:[#allocation3 + $0xb4] sm:$0x1] %v4582
    %v4584 = vld [vmem:[#allocation3 + $0xc0] sm:$0x1]
    %v4585 = vsel %vm53, 0, %v4584
    %4586 = vst [vmem:[#allocation3 + $0xc0] sm:$0x1] %v4585
    %v4587 = vld [vmem:[#allocation3 + $0xcc] sm:$0x1]
    %v4588 = vsel %vm53, 0, %v4587
    %4589 = vst [vmem:[#allocation3 + $0xcc] sm:$0x1] %v4588
    %v4590 = vld [vmem:[#allocation3 + $0xd8] sm:$0x1]
    %v4591 = vsel %vm53, 0, %v4590
    %4592 = vst [vmem:[#allocation3 + $0xd8] sm:$0x1] %v4591
    %v4593 = vld [vmem:[#allocation3 + $0xe4] sm:$0x1]
    %v4594 = vsel %vm53, 0, %v4593
    %4595 = vst [vmem:[#allocation3 + $0xe4] sm:$0x1] %v4594
    %v4596 = vld [vmem:[#allocation3 + $0xf0] sm:$0x1]
    %v4597 = vsel %vm53, 0, %v4596
    %4598 = vst [vmem:[#allocation3 + $0xf0] sm:$0x1] %v4597
    %v4599 = vld [vmem:[#allocation3 + $0xfc] sm:$0x1]
    %v4600 = vsel %vm53, 0, %v4599
    %4601 = vst [vmem:[#allocation3 + $0xfc] sm:$0x1] %v4600
    %v4602 = vld [vmem:[#allocation3 + $0x108] sm:$0x1]
    %v4603 = vsel %vm53, 0, %v4602
    %4604 = vst [vmem:[#allocation3 + $0x108] sm:$0x1] %v4603
    %v4605 = vld [vmem:[#allocation3 + $0x114] sm:$0x1]
    %v4606 = vsel %vm53, 0, %v4605
    %4607 = vst [vmem:[#allocation3 + $0x114] sm:$0x1] %v4606
    %v4608 = vld [vmem:[#allocation3 + $0x120] sm:$0x1]
    %v4609 = vsel %vm53, 0, %v4608
    %4610 = vst [vmem:[#allocation3 + $0x120] sm:$0x1] %v4609
    %v4611 = vld [vmem:[#allocation3 + $0x12c] sm:$0x1]
    %v4612 = vsel %vm53, 0, %v4611
    %4613 = vst [vmem:[#allocation3 + $0x12c] sm:$0x1] %v4612
    %v4614 = vld [vmem:[#allocation3 + $0x138] sm:$0x1]
    %v4615 = vsel %vm53, 0, %v4614
    %4616 = vst [vmem:[#allocation3 + $0x138] sm:$0x1] %v4615
    %v4617 = vld [vmem:[#allocation3 + $0x144] sm:$0x1]
    %v4618 = vsel %vm53, 0, %v4617
    %4619 = vst [vmem:[#allocation3 + $0x144] sm:$0x1] %v4618
    %v4620 = vld [vmem:[#allocation3 + $0x150] sm:$0x1]
    %v4621 = vsel %vm53, 0, %v4620
    %4622 = vst [vmem:[#allocation3 + $0x150] sm:$0x1] %v4621
    %v4623 = vld [vmem:[#allocation3 + $0x15c] sm:$0x1]
    %v4624 = vsel %vm53, 0, %v4623
    %4625 = vst [vmem:[#allocation3 + $0x15c] sm:$0x1] %v4624
    %v4626 = vld [vmem:[#allocation3 + $0x168] sm:$0x1]
    %v4627 = vsel %vm53, 0, %v4626
    %4628 = vst [vmem:[#allocation3 + $0x168] sm:$0x1] %v4627
    %v4629 = vld [vmem:[#allocation3 + $0x174] sm:$0x1]
    %v4630 = vsel %vm53, 0, %v4629
    %4631 = vst [vmem:[#allocation3 + $0x174] sm:$0x1] %v4630
    %v4632 = vld [vmem:[#allocation3 + $0x180] sm:$0x1]
    %v4633 = vsel %vm53, 0, %v4632
    %4634 = vst [vmem:[#allocation3 + $0x180] sm:$0x1] %v4633
    %v4635 = vld [vmem:[#allocation3 + $0x18c] sm:$0x1]
    %v4636 = vsel %vm53, 0, %v4635
    %4637 = vst [vmem:[#allocation3 + $0x18c] sm:$0x1] %v4636
    %v4638 = vld [vmem:[#allocation3 + $0x198] sm:$0x1]
    %v4639 = vsel %vm53, 0, %v4638
    %4640 = vst [vmem:[#allocation3 + $0x198] sm:$0x1] %v4639
    %v4641 = vld [vmem:[#allocation3 + $0x1a4] sm:$0x1]
    %v4642 = vsel %vm53, 0, %v4641
    %4643 = vst [vmem:[#allocation3 + $0x1a4] sm:$0x1] %v4642
    %v4644 = vld [vmem:[#allocation3 + $0x8] sm:$0x1]
    %v4645 = vsel %vm163, 0, %v4644
    %4646 = vst [vmem:[#allocation3 + $0x8] sm:$0x1] %v4645
    %v4647 = vld [vmem:[#allocation3 + $0x14] sm:$0x1]
    %v4648 = vsel %vm163, 0, %v4647
    %4649 = vst [vmem:[#allocation3 + $0x14] sm:$0x1] %v4648
    %v4650 = vld [vmem:[#allocation3 + $0x20] sm:$0x1]
    %v4651 = vsel %vm163, 0, %v4650
    %4652 = vst [vmem:[#allocation3 + $0x20] sm:$0x1] %v4651
    %v4653 = vld [vmem:[#allocation3 + $0x2c] sm:$0x1]
    %v4654 = vsel %vm163, 0, %v4653
    %4655 = vst [vmem:[#allocation3 + $0x2c] sm:$0x1] %v4654
    %v4656 = vld [vmem:[#allocation3 + $0x38] sm:$0x1]
    %v4657 = vsel %vm163, 0, %v4656
    %4658 = vst [vmem:[#allocation3 + $0x38] sm:$0x1] %v4657
    %v4659 = vld [vmem:[#allocation3 + $0x44] sm:$0x1]
    %v4660 = vsel %vm163, 0, %v4659
    %4661 = vst [vmem:[#allocation3 + $0x44] sm:$0x1] %v4660
    %v4662 = vld [vmem:[#allocation3 + $0x50] sm:$0x1]
    %v4663 = vsel %vm163, 0, %v4662
    %4664 = vst [vmem:[#allocation3 + $0x50] sm:$0x1] %v4663
    %v4665 = vld [vmem:[#allocation3 + $0x5c] sm:$0x1]
    %v4666 = vsel %vm163, 0, %v4665
    %4667 = vst [vmem:[#allocation3 + $0x5c] sm:$0x1] %v4666
    %v4668 = vld [vmem:[#allocation3 + $0x68] sm:$0x1]
    %v4669 = vsel %vm163, 0, %v4668
    %4670 = vst [vmem:[#allocation3 + $0x68] sm:$0x1] %v4669
    %v4671 = vld [vmem:[#allocation3 + $0x74] sm:$0x1]
    %v4672 = vsel %vm163, 0, %v4671
    %4673 = vst [vmem:[#allocation3 + $0x74] sm:$0x1] %v4672
    %v4674 = vld [vmem:[#allocation3 + $0x80] sm:$0x1]
    %v4675 = vsel %vm163, 0, %v4674
    %4676 = vst [vmem:[#allocation3 + $0x80] sm:$0x1] %v4675
    %v4677 = vld [vmem:[#allocation3 + $0x8c] sm:$0x1]
    %v4678 = vsel %vm163, 0, %v4677
    %4679 = vst [vmem:[#allocation3 + $0x8c] sm:$0x1] %v4678
    %v4680 = vld [vmem:[#allocation3 + $0x98] sm:$0x1]
    %v4681 = vsel %vm163, 0, %v4680
    %4682 = vst [vmem:[#allocation3 + $0x98] sm:$0x1] %v4681
    %v4683 = vld [vmem:[#allocation3 + $0xa4] sm:$0x1]
    %v4684 = vsel %vm163, 0, %v4683
    %4685 = vst [vmem:[#allocation3 + $0xa4] sm:$0x1] %v4684
    %v4686 = vld [vmem:[#allocation3 + $0xb0] sm:$0x1]
    %v4687 = vsel %vm163, 0, %v4686
    %4688 = vst [vmem:[#allocation3 + $0xb0] sm:$0x1] %v4687
    %v4689 = vld [vmem:[#allocation3 + $0xbc] sm:$0x1]
    %v4690 = vsel %vm163, 0, %v4689
    %4691 = vst [vmem:[#allocation3 + $0xbc] sm:$0x1] %v4690
    %v4692 = vld [vmem:[#allocation3 + $0xc8] sm:$0x1]
    %v4693 = vsel %vm163, 0, %v4692
    %4694 = vst [vmem:[#allocation3 + $0xc8] sm:$0x1] %v4693
    %v4695 = vld [vmem:[#allocation3 + $0xd4] sm:$0x1]
    %v4696 = vsel %vm163, 0, %v4695
    %4697 = vst [vmem:[#allocation3 + $0xd4] sm:$0x1] %v4696
    %v4698 = vld [vmem:[#allocation3 + $0xe0] sm:$0x1]
    %v4699 = vsel %vm163, 0, %v4698
    %4700 = vst [vmem:[#allocation3 + $0xe0] sm:$0x1] %v4699
    %v4701 = vld [vmem:[#allocation3 + $0xec] sm:$0x1]
    %v4702 = vsel %vm163, 0, %v4701
    %4703 = vst [vmem:[#allocation3 + $0xec] sm:$0x1] %v4702
    %v4704 = vld [vmem:[#allocation3 + $0xf8] sm:$0x1]
    %v4705 = vsel %vm163, 0, %v4704
    %4706 = vst [vmem:[#allocation3 + $0xf8] sm:$0x1] %v4705
    %v4707 = vld [vmem:[#allocation3 + $0x104] sm:$0x1]
    %v4708 = vsel %vm163, 0, %v4707
    %4709 = vst [vmem:[#allocation3 + $0x104] sm:$0x1] %v4708
    %v4710 = vld [vmem:[#allocation3 + $0x110] sm:$0x1]
    %v4711 = vsel %vm163, 0, %v4710
    %4712 = vst [vmem:[#allocation3 + $0x110] sm:$0x1] %v4711
    %v4713 = vld [vmem:[#allocation3 + $0x11c] sm:$0x1]
    %v4714 = vsel %vm163, 0, %v4713
    %4715 = vst [vmem:[#allocation3 + $0x11c] sm:$0x1] %v4714
    %v4716 = vld [vmem:[#allocation3 + $0x128] sm:$0x1]
    %v4717 = vsel %vm163, 0, %v4716
    %4718 = vst [vmem:[#allocation3 + $0x128] sm:$0x1] %v4717
    %v4719 = vld [vmem:[#allocation3 + $0x134] sm:$0x1]
    %v4720 = vsel %vm163, 0, %v4719
    %4721 = vst [vmem:[#allocation3 + $0x134] sm:$0x1] %v4720
    %v4722 = vld [vmem:[#allocation3 + $0x140] sm:$0x1]
    %v4723 = vsel %vm163, 0, %v4722
    %4724 = vst [vmem:[#allocation3 + $0x140] sm:$0x1] %v4723
    %v4725 = vld [vmem:[#allocation3 + $0x14c] sm:$0x1]
    %v4726 = vsel %vm163, 0, %v4725
    %4727 = vst [vmem:[#allocation3 + $0x14c] sm:$0x1] %v4726
    %v4728 = vld [vmem:[#allocation3 + $0x158] sm:$0x1]
    %v4729 = vsel %vm163, 0, %v4728
    %4730 = vst [vmem:[#allocation3 + $0x158] sm:$0x1] %v4729
    %v4731 = vld [vmem:[#allocation3 + $0x164] sm:$0x1]
    %v4732 = vsel %vm163, 0, %v4731
    %4733 = vst [vmem:[#allocation3 + $0x164] sm:$0x1] %v4732
    %v4734 = vld [vmem:[#allocation3 + $0x170] sm:$0x1]
    %v4735 = vsel %vm163, 0, %v4734
    %4736 = vst [vmem:[#allocation3 + $0x170] sm:$0x1] %v4735
    %v4737 = vld [vmem:[#allocation3 + $0x17c] sm:$0x1]
    %v4738 = vsel %vm163, 0, %v4737
    %4739 = vst [vmem:[#allocation3 + $0x17c] sm:$0x1] %v4738
    %v4740 = vld [vmem:[#allocation3 + $0x188] sm:$0x1]
    %v4741 = vsel %vm163, 0, %v4740
    %4742 = vst [vmem:[#allocation3 + $0x188] sm:$0x1] %v4741
    %v4743 = vld [vmem:[#allocation3 + $0x194] sm:$0x1]
    %v4744 = vsel %vm163, 0, %v4743
    %4745 = vst [vmem:[#allocation3 + $0x194] sm:$0x1] %v4744
    %v4746 = vld [vmem:[#allocation3 + $0x1a0] sm:$0x1]
    %v4747 = vsel %vm163, 0, %v4746
    %4748 = vst [vmem:[#allocation3 + $0x1a0] sm:$0x1] %v4747
    %v4749 = vld [vmem:[#allocation3 + $0x1ac] sm:$0x1]
    %v4750 = vsel %vm163, 0, %v4749
    %4751 = vst [vmem:[#allocation3 + $0x1ac] sm:$0x1] %v4750
    %v4784 = vunpack.c.l.b16 %v4491
    %v4785 = vunpack.c.h.b16 %v4491
    %v4786 = vunpack.c.l.b16 %v4492
    %v4787 = vunpack.c.h.b16 %v4492
    %v4788 = vunpack.c.l.b16 %v4493
    %v4789 = vunpack.c.h.b16 %v4493
    %v4790 = vunpack.c.l.b16 %v4494
    %v4791 = vunpack.c.h.b16 %v4494
    %v4792 = vunpack.c.l.b16 %v4495
    %v4793 = vunpack.c.h.b16 %v4495
    %v4794 = vunpack.c.l.b16 %v4496
    %v4795 = vunpack.c.h.b16 %v4496
    %v4796 = vunpack.c.l.b16 %v4497
    %v4797 = vunpack.c.h.b16 %v4497
    %v4798 = vunpack.c.l.b16 %v4498
    %v4799 = vunpack.c.h.b16 %v4498
    %v4800 = vunpack.c.l.b16 %v4499
    %v4801 = vunpack.c.h.b16 %v4499
    %v4802 = vunpack.c.l.b16 %v4500
    %v4803 = vunpack.c.h.b16 %v4500
    %v4804 = vunpack.c.l.b16 %v4501
    %v4805 = vunpack.c.h.b16 %v4501
    %v4806 = vunpack.c.l.b16 %v4502
    %v4807 = vunpack.c.h.b16 %v4502
    %v4808 = vunpack.c.l.b16 %v4503
    %v4809 = vunpack.c.h.b16 %v4503
    %v4810 = vunpack.c.l.b16 %v4504
    %v4811 = vunpack.c.h.b16 %v4504
    %v4812 = vunpack.c.l.b16 %v4505
    %v4813 = vunpack.c.h.b16 %v4505
    %v4814 = vunpack.c.l.b16 %v4506
    %v4815 = vunpack.c.h.b16 %v4506
    %v4816 = vunpack.c.l.b16 %v4507
    %v4817 = vunpack.c.h.b16 %v4507
    %v4818 = vunpack.c.l.b16 %v4508
    %v4819 = vunpack.c.h.b16 %v4508
    %v4820 = vunpack.c.l.b16 %v4509
    %v4821 = vunpack.c.h.b16 %v4509
    %v4822 = vunpack.c.l.b16 %v4510
    %v4823 = vunpack.c.h.b16 %v4510
    %v4824 = vunpack.c.l.b16 %v4511
    %v4825 = vunpack.c.h.b16 %v4511
    %v4826 = vunpack.c.l.b16 %v4512
    %v4827 = vunpack.c.h.b16 %v4512
    %v4828 = vunpack.c.l.b16 %v4513
    %v4829 = vunpack.c.h.b16 %v4513
    %v4830 = vunpack.c.l.b16 %v4514
    %v4831 = vunpack.c.h.b16 %v4514
    %v4832 = vunpack.c.l.b16 %v4515
    %v4833 = vunpack.c.h.b16 %v4515
    %v4834 = vunpack.c.l.b16 %v4516
    %v4835 = vunpack.c.h.b16 %v4516
    %v4836 = vunpack.c.l.b16 %v4517
    %v4837 = vunpack.c.h.b16 %v4517
    %v4838 = vunpack.c.l.b16 %v4518
    %v4839 = vunpack.c.h.b16 %v4518
    %v4840 = vunpack.c.l.b16 %v4519
    %v4841 = vunpack.c.h.b16 %v4519
    %v4842 = vunpack.c.l.b16 %v4520
    %v4843 = vunpack.c.h.b16 %v4520
    %v4844 = vunpack.c.l.b16 %v4521
    %v4845 = vunpack.c.h.b16 %v4521
    %v4846 = vunpack.c.l.b16 %v4522
    %v4847 = vunpack.c.h.b16 %v4522
    %v4848 = vpack.c.b16 %v4784, %v4784
    %v4849 = vpack.c.b16 %v4785, %v4785
    %v4850 = vpack.c.b16 %v4786, %v4786
    %v4851 = vpack.c.b16 %v4787, %v4787
    %v4852 = vpack.c.b16 %v4788, %v4788
    %v4853 = vpack.c.b16 %v4789, %v4789
    %v4854 = vpack.c.b16 %v4790, %v4790
    %v4855 = vpack.c.b16 %v4791, %v4791
    %v4856 = vpack.c.b16 %v4792, %v4792
    %v4857 = vpack.c.b16 %v4793, %v4793
    %v4858 = vpack.c.b16 %v4794, %v4794
    %v4859 = vpack.c.b16 %v4795, %v4795
    %v4860 = vpack.c.b16 %v4796, %v4796
    %v4861 = vpack.c.b16 %v4797, %v4797
    %v4862 = vpack.c.b16 %v4798, %v4798
    %v4863 = vpack.c.b16 %v4799, %v4799
    %v4864 = vpack.c.b16 %v4800, %v4800
    %v4865 = vpack.c.b16 %v4801, %v4801
    %v4866 = vpack.c.b16 %v4802, %v4802
    %v4867 = vpack.c.b16 %v4803, %v4803
    %v4868 = vpack.c.b16 %v4804, %v4804
    %v4869 = vpack.c.b16 %v4805, %v4805
    %v4870 = vpack.c.b16 %v4806, %v4806
    %v4871 = vpack.c.b16 %v4807, %v4807
    %v4872 = vpack.c.b16 %v4808, %v4808
    %v4873 = vpack.c.b16 %v4809, %v4809
    %v4874 = vpack.c.b16 %v4810, %v4810
    %v4875 = vpack.c.b16 %v4811, %v4811
    %v4876 = vpack.c.b16 %v4812, %v4812
    %v4877 = vpack.c.b16 %v4813, %v4813
    %v4878 = vpack.c.b16 %v4814, %v4814
    %v4879 = vpack.c.b16 %v4815, %v4815
    %v4880 = vpack.c.b16 %v4816, %v4816
    %v4881 = vpack.c.b16 %v4817, %v4817
    %v4882 = vpack.c.b16 %v4818, %v4818
    %v4883 = vpack.c.b16 %v4819, %v4819
    %v4884 = vpack.c.b16 %v4820, %v4820
    %v4885 = vpack.c.b16 %v4821, %v4821
    %v4886 = vpack.c.b16 %v4822, %v4822
    %v4887 = vpack.c.b16 %v4823, %v4823
    %v4888 = vpack.c.b16 %v4824, %v4824
    %v4889 = vpack.c.b16 %v4825, %v4825
    %v4890 = vpack.c.b16 %v4826, %v4826
    %v4891 = vpack.c.b16 %v4827, %v4827
    %v4892 = vpack.c.b16 %v4828, %v4828
    %v4893 = vpack.c.b16 %v4829, %v4829
    %v4894 = vpack.c.b16 %v4830, %v4830
    %v4895 = vpack.c.b16 %v4831, %v4831
    %v4896 = vpack.c.b16 %v4832, %v4832
    %v4897 = vpack.c.b16 %v4833, %v4833
    %v4898 = vpack.c.b16 %v4834, %v4834
    %v4899 = vpack.c.b16 %v4835, %v4835
    %v4900 = vpack.c.b16 %v4836, %v4836
    %v4901 = vpack.c.b16 %v4837, %v4837
    %v4902 = vpack.c.b16 %v4838, %v4838
    %v4903 = vpack.c.b16 %v4839, %v4839
    %v4904 = vpack.c.b16 %v4840, %v4840
    %v4905 = vpack.c.b16 %v4841, %v4841
    %v4906 = vpack.c.b16 %v4842, %v4842
    %v4907 = vpack.c.b16 %v4843, %v4843
    %v4908 = vpack.c.b16 %v4844, %v4844
    %v4909 = vpack.c.b16 %v4845, %v4845
    %v4910 = vpack.c.b16 %v4846, %v4846
    %v4911 = vpack.c.b16 %v4847, %v4847
    %v4913 = vshrl.u32 %v4848, 16
    %v4915 = vrot.slane %v4913, 7
    %v4916 = vshll.u32 %v4848, 16
    %v4918 = vor.u32 %v4915, %v4916
    %v4919 = vrot.slane %v4915, 4
    %v4921 = vshrl.u32 %v4849, 16
    %v4923 = vrot.slane %v4921, 7
    %v4924 = vshll.u32 %v4849, 16
    %v4926 = vor.u32 %v4923, %v4924
    %v4927 = vsel %vm337, %v4919, %v4926
    %v4928 = vrot.slane %v4923, 4
    %v4930 = vshrl.u32 %v4850, 16
    %v4932 = vrot.slane %v4930, 7
    %v4933 = vshll.u32 %v4850, 16
    %v4935 = vor.u32 %v4932, %v4933
    %v4936 = vrot.slane %v4932, 4
    %v4938 = vshrl.u32 %v4851, 16
    %v4940 = vrot.slane %v4938, 7
    %v4941 = vshll.u32 %v4851, 16
    %v4943 = vor.u32 %v4940, %v4941
    %v4944 = vsel %vm337, %v4936, %v4943
    %v4945 = vrot.slane %v4940, 4
    %v4947 = vshrl.u32 %v4852, 16
    %v4949 = vrot.slane %v4947, 7
    %v4950 = vshll.u32 %v4852, 16
    %v4952 = vor.u32 %v4949, %v4950
    %v4953 = vrot.slane %v4949, 4
    %v4955 = vshrl.u32 %v4853, 16
    %v4957 = vrot.slane %v4955, 7
    %v4958 = vshll.u32 %v4853, 16
    %v4960 = vor.u32 %v4957, %v4958
    %v4961 = vsel %vm337, %v4953, %v4960
    %v4962 = vrot.slane %v4957, 4
    %v4964 = vshrl.u32 %v4854, 16
    %v4966 = vrot.slane %v4964, 7
    %v4967 = vshll.u32 %v4854, 16
    %v4969 = vor.u32 %v4966, %v4967
    %v4970 = vrot.slane %v4966, 4
    %v4972 = vshrl.u32 %v4855, 16
    %v4974 = vrot.slane %v4972, 7
    %v4975 = vshll.u32 %v4855, 16
    %v4977 = vor.u32 %v4974, %v4975
    %v4978 = vsel %vm337, %v4970, %v4977
    %v4979 = vrot.slane %v4974, 4
    %v4981 = vshrl.u32 %v4856, 16
    %v4983 = vrot.slane %v4981, 7
    %v4984 = vshll.u32 %v4856, 16
    %v4986 = vor.u32 %v4983, %v4984
    %v4987 = vrot.slane %v4983, 4
    %v4989 = vshrl.u32 %v4857, 16
    %v4991 = vrot.slane %v4989, 7
    %v4992 = vshll.u32 %v4857, 16
    %v4994 = vor.u32 %v4991, %v4992
    %v4995 = vsel %vm337, %v4987, %v4994
    %v4996 = vrot.slane %v4991, 4
    %v4998 = vshrl.u32 %v4858, 16
    %v5000 = vrot.slane %v4998, 7
    %v5001 = vshll.u32 %v4858, 16
    %v5003 = vor.u32 %v5000, %v5001
    %v5004 = vrot.slane %v5000, 4
    %v5006 = vshrl.u32 %v4859, 16
    %v5008 = vrot.slane %v5006, 7
    %v5009 = vshll.u32 %v4859, 16
    %v5011 = vor.u32 %v5008, %v5009
    %v5012 = vsel %vm337, %v5004, %v5011
    %v5013 = vrot.slane %v5008, 4
    %v5015 = vshrl.u32 %v4860, 16
    %v5017 = vrot.slane %v5015, 7
    %v5018 = vshll.u32 %v4860, 16
    %v5020 = vor.u32 %v5017, %v5018
    %v5021 = vrot.slane %v5017, 4
    %v5023 = vshrl.u32 %v4861, 16
    %v5025 = vrot.slane %v5023, 7
    %v5026 = vshll.u32 %v4861, 16
    %v5028 = vor.u32 %v5025, %v5026
    %v5029 = vsel %vm337, %v5021, %v5028
    %v5030 = vrot.slane %v5025, 4
    %v5032 = vshrl.u32 %v4862, 16
    %v5034 = vrot.slane %v5032, 7
    %v5035 = vshll.u32 %v4862, 16
    %v5037 = vor.u32 %v5034, %v5035
    %v5038 = vrot.slane %v5034, 4
    %v5040 = vshrl.u32 %v4863, 16
    %v5042 = vrot.slane %v5040, 7
    %v5043 = vshll.u32 %v4863, 16
    %v5045 = vor.u32 %v5042, %v5043
    %v5046 = vsel %vm337, %v5038, %v5045
    %v5047 = vrot.slane %v5042, 4
    %v5049 = vshrl.u32 %v4864, 16
    %v5051 = vrot.slane %v5049, 7
    %v5052 = vshll.u32 %v4864, 16
    %v5054 = vor.u32 %v5051, %v5052
    %v5055 = vrot.slane %v5051, 4
    %v5057 = vshrl.u32 %v4865, 16
    %v5059 = vrot.slane %v5057, 7
    %v5060 = vshll.u32 %v4865, 16
    %v5062 = vor.u32 %v5059, %v5060
    %v5063 = vsel %vm337, %v5055, %v5062
    %v5064 = vrot.slane %v5059, 4
    %v5066 = vshrl.u32 %v4866, 16
    %v5068 = vrot.slane %v5066, 7
    %v5069 = vshll.u32 %v4866, 16
    %v5071 = vor.u32 %v5068, %v5069
    %v5072 = vrot.slane %v5068, 4
    %v5074 = vshrl.u32 %v4867, 16
    %v5076 = vrot.slane %v5074, 7
    %v5077 = vshll.u32 %v4867, 16
    %v5079 = vor.u32 %v5076, %v5077
    %v5080 = vsel %vm337, %v5072, %v5079
    %v5081 = vrot.slane %v5076, 4
    %v5083 = vshrl.u32 %v4868, 16
    %v5085 = vrot.slane %v5083, 7
    %v5086 = vshll.u32 %v4868, 16
    %v5088 = vor.u32 %v5085, %v5086
    %v5089 = vrot.slane %v5085, 4
    %v5091 = vshrl.u32 %v4869, 16
    %v5093 = vrot.slane %v5091, 7
    %v5094 = vshll.u32 %v4869, 16
    %v5096 = vor.u32 %v5093, %v5094
    %v5097 = vsel %vm337, %v5089, %v5096
    %v5098 = vrot.slane %v5093, 4
    %v5100 = vshrl.u32 %v4870, 16
    %v5102 = vrot.slane %v5100, 7
    %v5103 = vshll.u32 %v4870, 16
    %v5105 = vor.u32 %v5102, %v5103
    %v5106 = vrot.slane %v5102, 4
    %v5108 = vshrl.u32 %v4871, 16
    %v5110 = vrot.slane %v5108, 7
    %v5111 = vshll.u32 %v4871, 16
    %v5113 = vor.u32 %v5110, %v5111
    %v5114 = vsel %vm337, %v5106, %v5113
    %v5115 = vrot.slane %v5110, 4
    %v5117 = vshrl.u32 %v4872, 16
    %v5119 = vrot.slane %v5117, 7
    %v5120 = vshll.u32 %v4872, 16
    %v5122 = vor.u32 %v5119, %v5120
    %v5123 = vrot.slane %v5119, 4
    %v5125 = vshrl.u32 %v4873, 16
    %v5127 = vrot.slane %v5125, 7
    %v5128 = vshll.u32 %v4873, 16
    %v5130 = vor.u32 %v5127, %v5128
    %v5131 = vsel %vm337, %v5123, %v5130
    %v5132 = vrot.slane %v5127, 4
    %v5134 = vshrl.u32 %v4874, 16
    %v5136 = vrot.slane %v5134, 7
    %v5137 = vshll.u32 %v4874, 16
    %v5139 = vor.u32 %v5136, %v5137
    %v5140 = vrot.slane %v5136, 4
    %v5142 = vshrl.u32 %v4875, 16
    %v5144 = vrot.slane %v5142, 7
    %v5145 = vshll.u32 %v4875, 16
    %v5147 = vor.u32 %v5144, %v5145
    %v5148 = vsel %vm337, %v5140, %v5147
    %v5149 = vrot.slane %v5144, 4
    %v5151 = vshrl.u32 %v4876, 16
    %v5153 = vrot.slane %v5151, 7
    %v5154 = vshll.u32 %v4876, 16
    %v5156 = vor.u32 %v5153, %v5154
    %v5157 = vrot.slane %v5153, 4
    %v5159 = vshrl.u32 %v4877, 16
    %v5161 = vrot.slane %v5159, 7
    %v5162 = vshll.u32 %v4877, 16
    %v5164 = vor.u32 %v5161, %v5162
    %v5165 = vsel %vm337, %v5157, %v5164
    %v5166 = vrot.slane %v5161, 4
    %v5168 = vshrl.u32 %v4878, 16
    %v5170 = vrot.slane %v5168, 7
    %v5171 = vshll.u32 %v4878, 16
    %v5173 = vor.u32 %v5170, %v5171
    %v5174 = vrot.slane %v5170, 4
    %v5176 = vshrl.u32 %v4879, 16
    %v5178 = vrot.slane %v5176, 7
    %v5179 = vshll.u32 %v4879, 16
    %v5181 = vor.u32 %v5178, %v5179
    %v5182 = vsel %vm337, %v5174, %v5181
    %v5183 = vrot.slane %v5178, 4
    %v5185 = vshrl.u32 %v4880, 16
    %v5187 = vrot.slane %v5185, 7
    %v5188 = vshll.u32 %v4880, 16
    %v5190 = vor.u32 %v5187, %v5188
    %v5191 = vrot.slane %v5187, 4
    %v5193 = vshrl.u32 %v4881, 16
    %v5195 = vrot.slane %v5193, 7
    %v5196 = vshll.u32 %v4881, 16
    %v5198 = vor.u32 %v5195, %v5196
    %v5199 = vsel %vm337, %v5191, %v5198
    %v5200 = vrot.slane %v5195, 4
    %v5202 = vshrl.u32 %v4882, 16
    %v5204 = vrot.slane %v5202, 7
    %v5205 = vshll.u32 %v4882, 16
    %v5207 = vor.u32 %v5204, %v5205
    %v5208 = vrot.slane %v5204, 4
    %v5210 = vshrl.u32 %v4883, 16
    %v5212 = vrot.slane %v5210, 7
    %v5213 = vshll.u32 %v4883, 16
    %v5215 = vor.u32 %v5212, %v5213
    %v5216 = vsel %vm337, %v5208, %v5215
    %v5217 = vrot.slane %v5212, 4
    %v5219 = vshrl.u32 %v4884, 16
    %v5221 = vrot.slane %v5219, 7
    %v5222 = vshll.u32 %v4884, 16
    %v5224 = vor.u32 %v5221, %v5222
    %v5225 = vrot.slane %v5221, 4
    %v5227 = vshrl.u32 %v4885, 16
    %v5229 = vrot.slane %v5227, 7
    %v5230 = vshll.u32 %v4885, 16
    %v5232 = vor.u32 %v5229, %v5230
    %v5233 = vsel %vm337, %v5225, %v5232
    %v5234 = vrot.slane %v5229, 4
    %v5236 = vshrl.u32 %v4886, 16
    %v5238 = vrot.slane %v5236, 7
    %v5239 = vshll.u32 %v4886, 16
    %v5241 = vor.u32 %v5238, %v5239
    %v5242 = vrot.slane %v5238, 4
    %v5244 = vshrl.u32 %v4887, 16
    %v5246 = vrot.slane %v5244, 7
    %v5247 = vshll.u32 %v4887, 16
    %v5249 = vor.u32 %v5246, %v5247
    %v5250 = vsel %vm337, %v5242, %v5249
    %v5251 = vrot.slane %v5246, 4
    %v5253 = vshrl.u32 %v4888, 16
    %v5255 = vrot.slane %v5253, 7
    %v5256 = vshll.u32 %v4888, 16
    %v5258 = vor.u32 %v5255, %v5256
    %v5259 = vrot.slane %v5255, 4
    %v5261 = vshrl.u32 %v4889, 16
    %v5263 = vrot.slane %v5261, 7
    %v5264 = vshll.u32 %v4889, 16
    %v5266 = vor.u32 %v5263, %v5264
    %v5267 = vsel %vm337, %v5259, %v5266
    %v5268 = vrot.slane %v5263, 4
    %v5270 = vshrl.u32 %v4890, 16
    %v5272 = vrot.slane %v5270, 7
    %v5273 = vshll.u32 %v4890, 16
    %v5275 = vor.u32 %v5272, %v5273
    %v5276 = vrot.slane %v5272, 4
    %v5278 = vshrl.u32 %v4891, 16
    %v5280 = vrot.slane %v5278, 7
    %v5281 = vshll.u32 %v4891, 16
    %v5283 = vor.u32 %v5280, %v5281
    %v5284 = vsel %vm337, %v5276, %v5283
    %v5285 = vrot.slane %v5280, 4
    %v5287 = vshrl.u32 %v4892, 16
    %v5289 = vrot.slane %v5287, 7
    %v5290 = vshll.u32 %v4892, 16
    %v5292 = vor.u32 %v5289, %v5290
    %v5293 = vrot.slane %v5289, 4
    %v5295 = vshrl.u32 %v4893, 16
    %v5297 = vrot.slane %v5295, 7
    %v5298 = vshll.u32 %v4893, 16
    %v5300 = vor.u32 %v5297, %v5298
    %v5301 = vsel %vm337, %v5293, %v5300
    %v5302 = vrot.slane %v5297, 4
    %v5304 = vshrl.u32 %v4894, 16
    %v5306 = vrot.slane %v5304, 7
    %v5307 = vshll.u32 %v4894, 16
    %v5309 = vor.u32 %v5306, %v5307
    %v5310 = vrot.slane %v5306, 4
    %v5312 = vshrl.u32 %v4895, 16
    %v5314 = vrot.slane %v5312, 7
    %v5315 = vshll.u32 %v4895, 16
    %v5317 = vor.u32 %v5314, %v5315
    %v5318 = vsel %vm337, %v5310, %v5317
    %v5319 = vrot.slane %v5314, 4
    %v5321 = vshrl.u32 %v4896, 16
    %v5323 = vrot.slane %v5321, 7
    %v5324 = vshll.u32 %v4896, 16
    %v5326 = vor.u32 %v5323, %v5324
    %v5327 = vrot.slane %v5323, 4
    %v5329 = vshrl.u32 %v4897, 16
    %v5331 = vrot.slane %v5329, 7
    %v5332 = vshll.u32 %v4897, 16
    %v5334 = vor.u32 %v5331, %v5332
    %v5335 = vsel %vm337, %v5327, %v5334
    %v5336 = vrot.slane %v5331, 4
    %v5338 = vshrl.u32 %v4898, 16
    %v5340 = vrot.slane %v5338, 7
    %v5341 = vshll.u32 %v4898, 16
    %v5343 = vor.u32 %v5340, %v5341
    %v5344 = vrot.slane %v5340, 4
    %v5346 = vshrl.u32 %v4899, 16
    %v5348 = vrot.slane %v5346, 7
    %v5349 = vshll.u32 %v4899, 16
    %v5351 = vor.u32 %v5348, %v5349
    %v5352 = vsel %vm337, %v5344, %v5351
    %v5353 = vrot.slane %v5348, 4
    %v5355 = vshrl.u32 %v4900, 16
    %v5357 = vrot.slane %v5355, 7
    %v5358 = vshll.u32 %v4900, 16
    %v5360 = vor.u32 %v5357, %v5358
    %v5361 = vrot.slane %v5357, 4
    %v5363 = vshrl.u32 %v4901, 16
    %v5365 = vrot.slane %v5363, 7
    %v5366 = vshll.u32 %v4901, 16
    %v5368 = vor.u32 %v5365, %v5366
    %v5369 = vsel %vm337, %v5361, %v5368
    %v5370 = vrot.slane %v5365, 4
    %v5372 = vshrl.u32 %v4902, 16
    %v5374 = vrot.slane %v5372, 7
    %v5375 = vshll.u32 %v4902, 16
    %v5377 = vor.u32 %v5374, %v5375
    %v5378 = vrot.slane %v5374, 4
    %v5380 = vshrl.u32 %v4903, 16
    %v5382 = vrot.slane %v5380, 7
    %v5383 = vshll.u32 %v4903, 16
    %v5385 = vor.u32 %v5382, %v5383
    %v5386 = vsel %vm337, %v5378, %v5385
    %v5387 = vrot.slane %v5382, 4
    %v5389 = vshrl.u32 %v4904, 16
    %v5391 = vrot.slane %v5389, 7
    %v5392 = vshll.u32 %v4904, 16
    %v5394 = vor.u32 %v5391, %v5392
    %v5395 = vrot.slane %v5391, 4
    %v5397 = vshrl.u32 %v4905, 16
    %v5399 = vrot.slane %v5397, 7
    %v5400 = vshll.u32 %v4905, 16
    %v5402 = vor.u32 %v5399, %v5400
    %v5403 = vsel %vm337, %v5395, %v5402
    %v5404 = vrot.slane %v5399, 4
    %v5406 = vshrl.u32 %v4906, 16
    %v5408 = vrot.slane %v5406, 7
    %v5409 = vshll.u32 %v4906, 16
    %v5411 = vor.u32 %v5408, %v5409
    %v5412 = vrot.slane %v5408, 4
    %v5414 = vshrl.u32 %v4907, 16
    %v5416 = vrot.slane %v5414, 7
    %v5417 = vshll.u32 %v4907, 16
    %v5419 = vor.u32 %v5416, %v5417
    %v5420 = vsel %vm337, %v5412, %v5419
    %v5421 = vrot.slane %v5416, 4
    %v5423 = vshrl.u32 %v4908, 16
    %v5425 = vrot.slane %v5423, 7
    %v5426 = vshll.u32 %v4908, 16
    %v5428 = vor.u32 %v5425, %v5426
    %v5429 = vrot.slane %v5425, 4
    %v5431 = vshrl.u32 %v4909, 16
    %v5433 = vrot.slane %v5431, 7
    %v5434 = vshll.u32 %v4909, 16
    %v5436 = vor.u32 %v5433, %v5434
    %v5437 = vsel %vm337, %v5429, %v5436
    %v5438 = vrot.slane %v5433, 4
    %v5440 = vshrl.u32 %v4910, 16
    %v5442 = vrot.slane %v5440, 7
    %v5443 = vshll.u32 %v4910, 16
    %v5445 = vor.u32 %v5442, %v5443
    %v5446 = vrot.slane %v5442, 4
    %v5448 = vshrl.u32 %v4911, 16
    %v5450 = vrot.slane %v5448, 7
    %v5451 = vshll.u32 %v4911, 16
    %v5453 = vor.u32 %v5450, %v5451
    %v5454 = vsel %vm337, %v5446, %v5453
    %v5455 = vrot.slane %v5450, 4
    %s5552 = scalar_lea.vmem [#allocation3], 12
    %v5553 = vld [vmem:[%s5552] sm:$0xf]
    %v5554 = vsel %vm980, %v4918, %v5553
    %5555 = vst [vmem:[%s5552] sm:$0xf] %v5554
    %5556 = vst.msk [vmem:[%s5552 + $0x4] sm:$0xf] %vm36, %v4927
    %v5557 = vld [vmem:[%s5552 + $0x8] sm:$0x1]
    %v5558 = vsel %vm53, %v4928, %v5557
    %5559 = vst [vmem:[%s5552 + $0x8] sm:$0x1] %v5558
    %v5560 = vld [vmem:[%s5552 + $0xc] sm:$0xf]
    %v5561 = vsel %vm980, %v4935, %v5560
    %5562 = vst [vmem:[%s5552 + $0xc] sm:$0xf] %v5561
    %5563 = vst.msk [vmem:[%s5552 + $0x10] sm:$0xf] %vm36, %v4944
    %v5564 = vld [vmem:[%s5552 + $0x14] sm:$0x1]
    %v5565 = vsel %vm53, %v4945, %v5564
    %5566 = vst [vmem:[%s5552 + $0x14] sm:$0x1] %v5565
    %v5567 = vld [vmem:[%s5552 + $0x18] sm:$0xf]
    %v5568 = vsel %vm980, %v4952, %v5567
    %5569 = vst [vmem:[%s5552 + $0x18] sm:$0xf] %v5568
    %5570 = vst.msk [vmem:[%s5552 + $0x1c] sm:$0xf] %vm36, %v4961
    %v5571 = vld [vmem:[%s5552 + $0x20] sm:$0x1]
    %v5572 = vsel %vm53, %v4962, %v5571
    %5573 = vst [vmem:[%s5552 + $0x20] sm:$0x1] %v5572
    %v5574 = vld [vmem:[%s5552 + $0x24] sm:$0xf]
    %v5575 = vsel %vm980, %v4969, %v5574
    %5576 = vst [vmem:[%s5552 + $0x24] sm:$0xf] %v5575
    %5577 = vst.msk [vmem:[%s5552 + $0x28] sm:$0xf] %vm36, %v4978
    %v5578 = vld [vmem:[%s5552 + $0x2c] sm:$0x1]
    %v5579 = vsel %vm53, %v4979, %v5578
    %5580 = vst [vmem:[%s5552 + $0x2c] sm:$0x1] %v5579
    %v5581 = vld [vmem:[%s5552 + $0x30] sm:$0xf]
    %v5582 = vsel %vm980, %v4986, %v5581
    %5583 = vst [vmem:[%s5552 + $0x30] sm:$0xf] %v5582
    %5584 = vst.msk [vmem:[%s5552 + $0x34] sm:$0xf] %vm36, %v4995
    %v5585 = vld [vmem:[%s5552 + $0x38] sm:$0x1]
    %v5586 = vsel %vm53, %v4996, %v5585
    %5587 = vst [vmem:[%s5552 + $0x38] sm:$0x1] %v5586
    %v5588 = vld [vmem:[%s5552 + $0x3c] sm:$0xf]
    %v5589 = vsel %vm980, %v5003, %v5588
    %5590 = vst [vmem:[%s5552 + $0x3c] sm:$0xf] %v5589
    %5591 = vst.msk [vmem:[%s5552 + $0x40] sm:$0xf] %vm36, %v5012
    %v5592 = vld [vmem:[%s5552 + $0x44] sm:$0x1]
    %v5593 = vsel %vm53, %v5013, %v5592
    %5594 = vst [vmem:[%s5552 + $0x44] sm:$0x1] %v5593
    %v5595 = vld [vmem:[%s5552 + $0x48] sm:$0xf]
    %v5596 = vsel %vm980, %v5020, %v5595
    %5597 = vst [vmem:[%s5552 + $0x48] sm:$0xf] %v5596
    %5598 = vst.msk [vmem:[%s5552 + $0x4c] sm:$0xf] %vm36, %v5029
    %v5599 = vld [vmem:[%s5552 + $0x50] sm:$0x1]
    %v5600 = vsel %vm53, %v5030, %v5599
    %5601 = vst [vmem:[%s5552 + $0x50] sm:$0x1] %v5600
    %v5602 = vld [vmem:[%s5552 + $0x54] sm:$0xf]
    %v5603 = vsel %vm980, %v5037, %v5602
    %5604 = vst [vmem:[%s5552 + $0x54] sm:$0xf] %v5603
    %5605 = vst.msk [vmem:[%s5552 + $0x58] sm:$0xf] %vm36, %v5046
    %v5606 = vld [vmem:[%s5552 + $0x5c] sm:$0x1]
    %v5607 = vsel %vm53, %v5047, %v5606
    %5608 = vst [vmem:[%s5552 + $0x5c] sm:$0x1] %v5607
    %v5609 = vld [vmem:[%s5552 + $0x60] sm:$0xf]
    %v5610 = vsel %vm980, %v5054, %v5609
    %5611 = vst [vmem:[%s5552 + $0x60] sm:$0xf] %v5610
    %5612 = vst.msk [vmem:[%s5552 + $0x64] sm:$0xf] %vm36, %v5063
    %v5613 = vld [vmem:[%s5552 + $0x68] sm:$0x1]
    %v5614 = vsel %vm53, %v5064, %v5613
    %5615 = vst [vmem:[%s5552 + $0x68] sm:$0x1] %v5614
    %v5616 = vld [vmem:[%s5552 + $0x6c] sm:$0xf]
    %v5617 = vsel %vm980, %v5071, %v5616
    %5618 = vst [vmem:[%s5552 + $0x6c] sm:$0xf] %v5617
    %5619 = vst.msk [vmem:[%s5552 + $0x70] sm:$0xf] %vm36, %v5080
    %v5620 = vld [vmem:[%s5552 + $0x74] sm:$0x1]
    %v5621 = vsel %vm53, %v5081, %v5620
    %5622 = vst [vmem:[%s5552 + $0x74] sm:$0x1] %v5621
    %v5623 = vld [vmem:[%s5552 + $0x78] sm:$0xf]
    %v5624 = vsel %vm980, %v5088, %v5623
    %5625 = vst [vmem:[%s5552 + $0x78] sm:$0xf] %v5624
    %5626 = vst.msk [vmem:[%s5552 + $0x7c] sm:$0xf] %vm36, %v5097
    %v5627 = vld [vmem:[%s5552 + $0x80] sm:$0x1]
    %v5628 = vsel %vm53, %v5098, %v5627
    %5629 = vst [vmem:[%s5552 + $0x80] sm:$0x1] %v5628
    %v5630 = vld [vmem:[%s5552 + $0x84] sm:$0xf]
    %v5631 = vsel %vm980, %v5105, %v5630
    %5632 = vst [vmem:[%s5552 + $0x84] sm:$0xf] %v5631
    %5633 = vst.msk [vmem:[%s5552 + $0x88] sm:$0xf] %vm36, %v5114
    %v5634 = vld [vmem:[%s5552 + $0x8c] sm:$0x1]
    %v5635 = vsel %vm53, %v5115, %v5634
    %5636 = vst [vmem:[%s5552 + $0x8c] sm:$0x1] %v5635
    %v5637 = vld [vmem:[%s5552 + $0x90] sm:$0xf]
    %v5638 = vsel %vm980, %v5122, %v5637
    %5639 = vst [vmem:[%s5552 + $0x90] sm:$0xf] %v5638
    %5640 = vst.msk [vmem:[%s5552 + $0x94] sm:$0xf] %vm36, %v5131
    %v5641 = vld [vmem:[%s5552 + $0x98] sm:$0x1]
    %v5642 = vsel %vm53, %v5132, %v5641
    %5643 = vst [vmem:[%s5552 + $0x98] sm:$0x1] %v5642
    %v5644 = vld [vmem:[%s5552 + $0x9c] sm:$0xf]
    %v5645 = vsel %vm980, %v5139, %v5644
    %5646 = vst [vmem:[%s5552 + $0x9c] sm:$0xf] %v5645
    %5647 = vst.msk [vmem:[%s5552 + $0xa0] sm:$0xf] %vm36, %v5148
    %v5648 = vld [vmem:[%s5552 + $0xa4] sm:$0x1]
    %v5649 = vsel %vm53, %v5149, %v5648
    %5650 = vst [vmem:[%s5552 + $0xa4] sm:$0x1] %v5649
    %v5651 = vld [vmem:[%s5552 + $0xa8] sm:$0xf]
    %v5652 = vsel %vm980, %v5156, %v5651
    %5653 = vst [vmem:[%s5552 + $0xa8] sm:$0xf] %v5652
    %5654 = vst.msk [vmem:[%s5552 + $0xac] sm:$0xf] %vm36, %v5165
    %v5655 = vld [vmem:[%s5552 + $0xb0] sm:$0x1]
    %v5656 = vsel %vm53, %v5166, %v5655
    %5657 = vst [vmem:[%s5552 + $0xb0] sm:$0x1] %v5656
    %v5658 = vld [vmem:[%s5552 + $0xb4] sm:$0xf]
    %v5659 = vsel %vm980, %v5173, %v5658
    %5660 = vst [vmem:[%s5552 + $0xb4] sm:$0xf] %v5659
    %5661 = vst.msk [vmem:[%s5552 + $0xb8] sm:$0xf] %vm36, %v5182
    %v5662 = vld [vmem:[%s5552 + $0xbc] sm:$0x1]
    %v5663 = vsel %vm53, %v5183, %v5662
    %5664 = vst [vmem:[%s5552 + $0xbc] sm:$0x1] %v5663
    %v5665 = vld [vmem:[%s5552 + $0xd8] sm:$0xf]
    %v5666 = vsel %vm980, %v5190, %v5665
    %5667 = vst [vmem:[%s5552 + $0xd8] sm:$0xf] %v5666
    %5668 = vst.msk [vmem:[%s5552 + $0xdc] sm:$0xf] %vm36, %v5199
    %v5669 = vld [vmem:[%s5552 + $0xe0] sm:$0x1]
    %v5670 = vsel %vm53, %v5200, %v5669
    %5671 = vst [vmem:[%s5552 + $0xe0] sm:$0x1] %v5670
    %v5672 = vld [vmem:[%s5552 + $0xe4] sm:$0xf]
    %v5673 = vsel %vm980, %v5207, %v5672
    %5674 = vst [vmem:[%s5552 + $0xe4] sm:$0xf] %v5673
    %5675 = vst.msk [vmem:[%s5552 + $0xe8] sm:$0xf] %vm36, %v5216
    %v5676 = vld [vmem:[%s5552 + $0xec] sm:$0x1]
    %v5677 = vsel %vm53, %v5217, %v5676
    %5678 = vst [vmem:[%s5552 + $0xec] sm:$0x1] %v5677
    %v5679 = vld [vmem:[%s5552 + $0xf0] sm:$0xf]
    %v5680 = vsel %vm980, %v5224, %v5679
    %5681 = vst [vmem:[%s5552 + $0xf0] sm:$0xf] %v5680
    %5682 = vst.msk [vmem:[%s5552 + $0xf4] sm:$0xf] %vm36, %v5233
    %v5683 = vld [vmem:[%s5552 + $0xf8] sm:$0x1]
    %v5684 = vsel %vm53, %v5234, %v5683
    %5685 = vst [vmem:[%s5552 + $0xf8] sm:$0x1] %v5684
    %v5686 = vld [vmem:[%s5552 + $0xfc] sm:$0xf]
    %v5687 = vsel %vm980, %v5241, %v5686
    %5688 = vst [vmem:[%s5552 + $0xfc] sm:$0xf] %v5687
    %5689 = vst.msk [vmem:[%s5552 + $0x100] sm:$0xf] %vm36, %v5250
    %v5690 = vld [vmem:[%s5552 + $0x104] sm:$0x1]
    %v5691 = vsel %vm53, %v5251, %v5690
    %5692 = vst [vmem:[%s5552 + $0x104] sm:$0x1] %v5691
    %v5693 = vld [vmem:[%s5552 + $0x108] sm:$0xf]
    %v5694 = vsel %vm980, %v5258, %v5693
    %5695 = vst [vmem:[%s5552 + $0x108] sm:$0xf] %v5694
    %5696 = vst.msk [vmem:[%s5552 + $0x10c] sm:$0xf] %vm36, %v5267
    %v5697 = vld [vmem:[%s5552 + $0x110] sm:$0x1]
    %v5698 = vsel %vm53, %v5268, %v5697
    %5699 = vst [vmem:[%s5552 + $0x110] sm:$0x1] %v5698
    %v5700 = vld [vmem:[%s5552 + $0x114] sm:$0xf]
    %v5701 = vsel %vm980, %v5275, %v5700
    %5702 = vst [vmem:[%s5552 + $0x114] sm:$0xf] %v5701
    %5703 = vst.msk [vmem:[%s5552 + $0x118] sm:$0xf] %vm36, %v5284
    %v5704 = vld [vmem:[%s5552 + $0x11c] sm:$0x1]
    %v5705 = vsel %vm53, %v5285, %v5704
    %5706 = vst [vmem:[%s5552 + $0x11c] sm:$0x1] %v5705
    %v5707 = vld [vmem:[%s5552 + $0x120] sm:$0xf]
    %v5708 = vsel %vm980, %v5292, %v5707
    %5709 = vst [vmem:[%s5552 + $0x120] sm:$0xf] %v5708
    %5710 = vst.msk [vmem:[%s5552 + $0x124] sm:$0xf] %vm36, %v5301
    %v5711 = vld [vmem:[%s5552 + $0x128] sm:$0x1]
    %v5712 = vsel %vm53, %v5302, %v5711
    %5713 = vst [vmem:[%s5552 + $0x128] sm:$0x1] %v5712
    %v5714 = vld [vmem:[%s5552 + $0x12c] sm:$0xf]
    %v5715 = vsel %vm980, %v5309, %v5714
    %5716 = vst [vmem:[%s5552 + $0x12c] sm:$0xf] %v5715
    %5717 = vst.msk [vmem:[%s5552 + $0x130] sm:$0xf] %vm36, %v5318
    %v5718 = vld [vmem:[%s5552 + $0x134] sm:$0x1]
    %v5719 = vsel %vm53, %v5319, %v5718
    %5720 = vst [vmem:[%s5552 + $0x134] sm:$0x1] %v5719
    %v5721 = vld [vmem:[%s5552 + $0x138] sm:$0xf]
    %v5722 = vsel %vm980, %v5326, %v5721
    %5723 = vst [vmem:[%s5552 + $0x138] sm:$0xf] %v5722
    %5724 = vst.msk [vmem:[%s5552 + $0x13c] sm:$0xf] %vm36, %v5335
    %v5725 = vld [vmem:[%s5552 + $0x140] sm:$0x1]
    %v5726 = vsel %vm53, %v5336, %v5725
    %5727 = vst [vmem:[%s5552 + $0x140] sm:$0x1] %v5726
    %v5728 = vld [vmem:[%s5552 + $0x144] sm:$0xf]
    %v5729 = vsel %vm980, %v5343, %v5728
    %5730 = vst [vmem:[%s5552 + $0x144] sm:$0xf] %v5729
    %5731 = vst.msk [vmem:[%s5552 + $0x148] sm:$0xf] %vm36, %v5352
    %v5732 = vld [vmem:[%s5552 + $0x14c] sm:$0x1]
    %v5733 = vsel %vm53, %v5353, %v5732
    %5734 = vst [vmem:[%s5552 + $0x14c] sm:$0x1] %v5733
    %v5735 = vld [vmem:[%s5552 + $0x150] sm:$0xf]
    %v5736 = vsel %vm980, %v5360, %v5735
    %5737 = vst [vmem:[%s5552 + $0x150] sm:$0xf] %v5736
    %5738 = vst.msk [vmem:[%s5552 + $0x154] sm:$0xf] %vm36, %v5369
    %v5739 = vld [vmem:[%s5552 + $0x158] sm:$0x1]
    %v5740 = vsel %vm53, %v5370, %v5739
    %5741 = vst [vmem:[%s5552 + $0x158] sm:$0x1] %v5740
    %v5742 = vld [vmem:[%s5552 + $0x15c] sm:$0xf]
    %v5743 = vsel %vm980, %v5377, %v5742
    %5744 = vst [vmem:[%s5552 + $0x15c] sm:$0xf] %v5743
    %5745 = vst.msk [vmem:[%s5552 + $0x160] sm:$0xf] %vm36, %v5386
    %v5746 = vld [vmem:[%s5552 + $0x164] sm:$0x1]
    %v5747 = vsel %vm53, %v5387, %v5746
    %5748 = vst [vmem:[%s5552 + $0x164] sm:$0x1] %v5747
    %v5749 = vld [vmem:[%s5552 + $0x168] sm:$0xf]
    %v5750 = vsel %vm980, %v5394, %v5749
    %5751 = vst [vmem:[%s5552 + $0x168] sm:$0xf] %v5750
    %5752 = vst.msk [vmem:[%s5552 + $0x16c] sm:$0xf] %vm36, %v5403
    %v5753 = vld [vmem:[%s5552 + $0x170] sm:$0x1]
    %v5754 = vsel %vm53, %v5404, %v5753
    %5755 = vst [vmem:[%s5552 + $0x170] sm:$0x1] %v5754
    %v5756 = vld [vmem:[%s5552 + $0x174] sm:$0xf]
    %v5757 = vsel %vm980, %v5411, %v5756
    %5758 = vst [vmem:[%s5552 + $0x174] sm:$0xf] %v5757
    %5759 = vst.msk [vmem:[%s5552 + $0x178] sm:$0xf] %vm36, %v5420
    %v5760 = vld [vmem:[%s5552 + $0x17c] sm:$0x1]
    %v5761 = vsel %vm53, %v5421, %v5760
    %5762 = vst [vmem:[%s5552 + $0x17c] sm:$0x1] %v5761
    %v5763 = vld [vmem:[%s5552 + $0x180] sm:$0xf]
    %v5764 = vsel %vm980, %v5428, %v5763
    %5765 = vst [vmem:[%s5552 + $0x180] sm:$0xf] %v5764
    %5766 = vst.msk [vmem:[%s5552 + $0x184] sm:$0xf] %vm36, %v5437
    %v5767 = vld [vmem:[%s5552 + $0x188] sm:$0x1]
    %v5768 = vsel %vm53, %v5438, %v5767
    %5769 = vst [vmem:[%s5552 + $0x188] sm:$0x1] %v5768
    %v5770 = vld [vmem:[%s5552 + $0x18c] sm:$0xf]
    %v5771 = vsel %vm980, %v5445, %v5770
    %5772 = vst [vmem:[%s5552 + $0x18c] sm:$0xf] %v5771
    %5773 = vst.msk [vmem:[%s5552 + $0x190] sm:$0xf] %vm36, %v5454
    %v5774 = vld [vmem:[%s5552 + $0x194] sm:$0x1]
    %v5775 = vsel %vm53, %v5455, %v5774
    %5776 = vst [vmem:[%s5552 + $0x194] sm:$0x1] %v5775
    %v5777 = vld [vmem:[#allocation3] sm:$0xf]
    %v5778 = vld [vmem:[#allocation3 + $0x4] sm:$0xf]
    %v5779 = vld [vmem:[#allocation3 + $0x8] sm:$0x1]
    %v5780 = vld [vmem:[#allocation3 + $0xc] sm:$0xf]
    %v5781 = vld [vmem:[#allocation3 + $0x10] sm:$0xf]
    %v5782 = vld [vmem:[#allocation3 + $0x14] sm:$0x1]
    %v5783 = vld [vmem:[#allocation3 + $0x18] sm:$0xf]
    %v5784 = vld [vmem:[#allocation3 + $0x1c] sm:$0xf]
    %v5785 = vld [vmem:[#allocation3 + $0x20] sm:$0x1]
    %v5786 = vld [vmem:[#allocation3 + $0x24] sm:$0xf]
    %v5787 = vld [vmem:[#allocation3 + $0x28] sm:$0xf]
    %v5788 = vld [vmem:[#allocation3 + $0x2c] sm:$0x1]
    %v5789 = vld [vmem:[#allocation3 + $0x30] sm:$0xf]
    %v5790 = vld [vmem:[#allocation3 + $0x34] sm:$0xf]
    %v5791 = vld [vmem:[#allocation3 + $0x38] sm:$0x1]
    %v5792 = vld [vmem:[#allocation3 + $0x3c] sm:$0xf]
    %v5793 = vld [vmem:[#allocation3 + $0x40] sm:$0xf]
    %v5794 = vld [vmem:[#allocation3 + $0x44] sm:$0x1]
    %v5795 = vld [vmem:[#allocation3 + $0x48] sm:$0xf]
    %v5796 = vld [vmem:[#allocation3 + $0x4c] sm:$0xf]
    %v5797 = vld [vmem:[#allocation3 + $0x50] sm:$0x1]
    %v5798 = vld [vmem:[#allocation3 + $0x54] sm:$0xf]
    %v5799 = vld [vmem:[#allocation3 + $0x58] sm:$0xf]
    %v5800 = vld [vmem:[#allocation3 + $0x5c] sm:$0x1]
    %v5801 = vld [vmem:[#allocation3 + $0x60] sm:$0xf]
    %v5802 = vld [vmem:[#allocation3 + $0x64] sm:$0xf]
    %v5803 = vld [vmem:[#allocation3 + $0x68] sm:$0x1]
    %v5804 = vld [vmem:[#allocation3 + $0x6c] sm:$0xf]
    %v5805 = vld [vmem:[#allocation3 + $0x70] sm:$0xf]
    %v5806 = vld [vmem:[#allocation3 + $0x74] sm:$0x1]
    %v5807 = vld [vmem:[#allocation3 + $0x78] sm:$0xf]
    %v5808 = vld [vmem:[#allocation3 + $0x7c] sm:$0xf]
    %v5809 = vld [vmem:[#allocation3 + $0x80] sm:$0x1]
    %v5810 = vld [vmem:[#allocation3 + $0x84] sm:$0xf]
    %v5811 = vld [vmem:[#allocation3 + $0x88] sm:$0xf]
    %v5812 = vld [vmem:[#allocation3 + $0x8c] sm:$0x1]
    %v5813 = vld [vmem:[#allocation3 + $0x90] sm:$0xf]
    %v5814 = vld [vmem:[#allocation3 + $0x94] sm:$0xf]
    %v5815 = vld [vmem:[#allocation3 + $0x98] sm:$0x1]
    %v5816 = vld [vmem:[#allocation3 + $0x9c] sm:$0xf]
    %v5817 = vld [vmem:[#allocation3 + $0xa0] sm:$0xf]
    %v5818 = vld [vmem:[#allocation3 + $0xa4] sm:$0x1]
    %v5819 = vld [vmem:[#allocation3 + $0xa8] sm:$0xf]
    %v5820 = vld [vmem:[#allocation3 + $0xac] sm:$0xf]
    %v5821 = vld [vmem:[#allocation3 + $0xb0] sm:$0x1]
    %v5822 = vld [vmem:[#allocation3 + $0xb4] sm:$0xf]
    %v5823 = vld [vmem:[#allocation3 + $0xb8] sm:$0xf]
    %v5824 = vld [vmem:[#allocation3 + $0xbc] sm:$0x1]
    %v5825 = vld [vmem:[#allocation3 + $0xc0] sm:$0xf]
    %v5826 = vld [vmem:[#allocation3 + $0xc4] sm:$0xf]
    %v5827 = vld [vmem:[#allocation3 + $0xc8] sm:$0x1]
    %v5828 = vld [vmem:[#allocation3 + $0xcc] sm:$0xf]
    %v5829 = vld [vmem:[#allocation3 + $0xd0] sm:$0xf]
    %v5830 = vld [vmem:[#allocation3 + $0xd4] sm:$0x1]
    %v5831 = vld [vmem:[#allocation3 + $0xd8] sm:$0xf]
    %v5832 = vld [vmem:[#allocation3 + $0xdc] sm:$0xf]
    %v5833 = vld [vmem:[#allocation3 + $0xe0] sm:$0x1]
    %v5834 = vld [vmem:[#allocation3 + $0xe4] sm:$0xf]
    %v5835 = vld [vmem:[#allocation3 + $0xe8] sm:$0xf]
    %v5836 = vld [vmem:[#allocation3 + $0xec] sm:$0x1]
    %v5837 = vld [vmem:[#allocation3 + $0xf0] sm:$0xf]
    %v5838 = vld [vmem:[#allocation3 + $0xf4] sm:$0xf]
    %v5839 = vld [vmem:[#allocation3 + $0xf8] sm:$0x1]
    %v5840 = vld [vmem:[#allocation3 + $0xfc] sm:$0xf]
    %v5841 = vld [vmem:[#allocation3 + $0x100] sm:$0xf]
    %v5842 = vld [vmem:[#allocation3 + $0x104] sm:$0x1]
    %v5843 = vld [vmem:[#allocation3 + $0x108] sm:$0xf]
    %v5844 = vld [vmem:[#allocation3 + $0x10c] sm:$0xf]
    %v5845 = vld [vmem:[#allocation3 + $0x110] sm:$0x1]
    %v5846 = vld [vmem:[#allocation3 + $0x114] sm:$0xf]
    %v5847 = vld [vmem:[#allocation3 + $0x118] sm:$0xf]
    %v5848 = vld [vmem:[#allocation3 + $0x11c] sm:$0x1]
    %v5849 = vld [vmem:[#allocation3 + $0x120] sm:$0xf]
    %v5850 = vld [vmem:[#allocation3 + $0x124] sm:$0xf]
    %v5851 = vld [vmem:[#allocation3 + $0x128] sm:$0x1]
    %v5852 = vld [vmem:[#allocation3 + $0x12c] sm:$0xf]
    %v5853 = vld [vmem:[#allocation3 + $0x130] sm:$0xf]
    %v5854 = vld [vmem:[#allocation3 + $0x134] sm:$0x1]
    %v5855 = vld [vmem:[#allocation3 + $0x138] sm:$0xf]
    %v5856 = vld [vmem:[#allocation3 + $0x13c] sm:$0xf]
    %v5857 = vld [vmem:[#allocation3 + $0x140] sm:$0x1]
    %v5858 = vld [vmem:[#allocation3 + $0x144] sm:$0xf]
    %v5859 = vld [vmem:[#allocation3 + $0x148] sm:$0xf]
    %v5860 = vld [vmem:[#allocation3 + $0x14c] sm:$0x1]
    %v5861 = vld [vmem:[#allocation3 + $0x150] sm:$0xf]
    %v5862 = vld [vmem:[#allocation3 + $0x154] sm:$0xf]
    %v5863 = vld [vmem:[#allocation3 + $0x158] sm:$0x1]
    %v5864 = vld [vmem:[#allocation3 + $0x15c] sm:$0xf]
    %v5865 = vld [vmem:[#allocation3 + $0x160] sm:$0xf]
    %v5866 = vld [vmem:[#allocation3 + $0x164] sm:$0x1]
    %v5867 = vld [vmem:[#allocation3 + $0x168] sm:$0xf]
    %v5868 = vld [vmem:[#allocation3 + $0x16c] sm:$0xf]
    %v5869 = vld [vmem:[#allocation3 + $0x170] sm:$0x1]
    %v5870 = vld [vmem:[#allocation3 + $0x174] sm:$0xf]
    %v5871 = vld [vmem:[#allocation3 + $0x178] sm:$0xf]
    %v5872 = vld [vmem:[#allocation3 + $0x17c] sm:$0x1]
    %v5873 = vld [vmem:[#allocation3 + $0x180] sm:$0xf]
    %v5874 = vld [vmem:[#allocation3 + $0x184] sm:$0xf]
    %v5875 = vld [vmem:[#allocation3 + $0x188] sm:$0x1]
    %v5876 = vld [vmem:[#allocation3 + $0x18c] sm:$0xf]
    %v5877 = vld [vmem:[#allocation3 + $0x190] sm:$0xf]
    %v5878 = vld [vmem:[#allocation3 + $0x194] sm:$0x1]
    %v5879 = vld [vmem:[#allocation3 + $0x198] sm:$0xf]
    %v5880 = vld [vmem:[#allocation3 + $0x19c] sm:$0xf]
    %v5881 = vld [vmem:[#allocation3 + $0x1a0] sm:$0x1]
    %v5882 = vld [vmem:[#allocation3 + $0x1a4] sm:$0xf]
    %v5883 = vld [vmem:[#allocation3 + $0x1a8] sm:$0xf]
    %v5884 = vld [vmem:[#allocation3 + $0x1ac] sm:$0x1]
    %v5949 = vunpack.c.l.b16 %v5777
    %v5950 = vunpack.c.l.b16 %v5778
    %v5951 = vunpack.c.l.b16 %v5780
    %v5952 = vunpack.c.l.b16 %v5781
    %v5953 = vunpack.c.l.b16 %v5783
    %v5954 = vunpack.c.l.b16 %v5784
    %v5955 = vunpack.c.l.b16 %v5786
    %v5956 = vunpack.c.l.b16 %v5787
    %v5957 = vunpack.c.l.b16 %v5789
    %v5958 = vunpack.c.l.b16 %v5790
    %v5959 = vunpack.c.l.b16 %v5792
    %v5960 = vunpack.c.l.b16 %v5793
    %v5961 = vunpack.c.l.b16 %v5795
    %v5962 = vunpack.c.l.b16 %v5796
    %v5963 = vunpack.c.l.b16 %v5798
    %v5964 = vunpack.c.l.b16 %v5799
    %v5965 = vunpack.c.l.b16 %v5801
    %v5966 = vunpack.c.l.b16 %v5802
    %v5967 = vunpack.c.l.b16 %v5804
    %v5968 = vunpack.c.l.b16 %v5805
    %v5969 = vunpack.c.l.b16 %v5807
    %v5970 = vunpack.c.l.b16 %v5808
    %v5971 = vunpack.c.l.b16 %v5810
    %v5972 = vunpack.c.l.b16 %v5811
    %v5973 = vunpack.c.l.b16 %v5813
    %v5974 = vunpack.c.l.b16 %v5814
    %v5975 = vunpack.c.l.b16 %v5816
    %v5976 = vunpack.c.l.b16 %v5817
    %v5977 = vunpack.c.l.b16 %v5819
    %v5978 = vunpack.c.l.b16 %v5820
    %v5979 = vunpack.c.l.b16 %v5822
    %v5980 = vunpack.c.l.b16 %v5823
    %v5981 = vunpack.c.l.b16 %v5831
    %v5982 = vunpack.c.l.b16 %v5832
    %v5983 = vunpack.c.l.b16 %v5834
    %v5984 = vunpack.c.l.b16 %v5835
    %v5985 = vunpack.c.l.b16 %v5837
    %v5986 = vunpack.c.l.b16 %v5838
    %v5987 = vunpack.c.l.b16 %v5840
    %v5988 = vunpack.c.l.b16 %v5841
    %v5989 = vunpack.c.l.b16 %v5843
    %v5990 = vunpack.c.l.b16 %v5844
    %v5991 = vunpack.c.l.b16 %v5846
    %v5992 = vunpack.c.l.b16 %v5847
    %v5993 = vunpack.c.l.b16 %v5849
    %v5994 = vunpack.c.l.b16 %v5850
    %v5995 = vunpack.c.l.b16 %v5852
    %v5996 = vunpack.c.l.b16 %v5853
    %v5997 = vunpack.c.l.b16 %v5855
    %v5998 = vunpack.c.l.b16 %v5856
    %v5999 = vunpack.c.l.b16 %v5858
    %v6000 = vunpack.c.l.b16 %v5859
    %v6001 = vunpack.c.l.b16 %v5861
    %v6002 = vunpack.c.l.b16 %v5862
    %v6003 = vunpack.c.l.b16 %v5864
    %v6004 = vunpack.c.l.b16 %v5865
    %v6005 = vunpack.c.l.b16 %v5867
    %v6006 = vunpack.c.l.b16 %v5868
    %v6007 = vunpack.c.l.b16 %v5870
    %v6008 = vunpack.c.l.b16 %v5871
    %v6009 = vunpack.c.l.b16 %v5873
    %v6010 = vunpack.c.l.b16 %v5874
    %v6011 = vunpack.c.l.b16 %v5876
    %v6012 = vunpack.c.l.b16 %v5877
    %v6013 = vpack.c.b16 %v5950, %v5949
    %v6014 = vpack.c.b16 %v5952, %v5951
    %v6015 = vpack.c.b16 %v5954, %v5953
    %v6016 = vpack.c.b16 %v5956, %v5955
    %v6017 = vpack.c.b16 %v5958, %v5957
    %v6018 = vpack.c.b16 %v5960, %v5959
    %v6019 = vpack.c.b16 %v5962, %v5961
    %v6020 = vpack.c.b16 %v5964, %v5963
    %v6021 = vpack.c.b16 %v5966, %v5965
    %v6022 = vpack.c.b16 %v5968, %v5967
    %v6023 = vpack.c.b16 %v5970, %v5969
    %v6024 = vpack.c.b16 %v5972, %v5971
    %v6025 = vpack.c.b16 %v5974, %v5973
    %v6026 = vpack.c.b16 %v5976, %v5975
    %v6027 = vpack.c.b16 %v5978, %v5977
    %v6028 = vpack.c.b16 %v5980, %v5979
    %v6029 = vpack.c.b16 %v5982, %v5981
    %v6030 = vpack.c.b16 %v5984, %v5983
    %v6031 = vpack.c.b16 %v5986, %v5985
    %v6032 = vpack.c.b16 %v5988, %v5987
    %v6033 = vpack.c.b16 %v5990, %v5989
    %v6034 = vpack.c.b16 %v5992, %v5991
    %v6035 = vpack.c.b16 %v5994, %v5993
    %v6036 = vpack.c.b16 %v5996, %v5995
    %v6037 = vpack.c.b16 %v5998, %v5997
    %v6038 = vpack.c.b16 %v6000, %v5999
    %v6039 = vpack.c.b16 %v6002, %v6001
    %v6040 = vpack.c.b16 %v6004, %v6003
    %v6041 = vpack.c.b16 %v6006, %v6005
    %v6042 = vpack.c.b16 %v6008, %v6007
    %v6043 = vpack.c.b16 %v6010, %v6009
    %v6044 = vpack.c.b16 %v6012, %v6011
    %6077 = vst.msk [vmem:[#allocation5] sm:$0xff] %vm1505, %v6013
    %6078 = vst.msk [vmem:[#allocation5 + $0x10] sm:$0xff] %vm1505, %v6014
    %6079 = vst.msk [vmem:[#allocation5 + $0x20] sm:$0xff] %vm1505, %v6015
    %6080 = vst.msk [vmem:[#allocation5 + $0x30] sm:$0xff] %vm1505, %v6016
    %6081 = vst.msk [vmem:[#allocation5 + $0x40] sm:$0xff] %vm1505, %v6017
    %6082 = vst.msk [vmem:[#allocation5 + $0x50] sm:$0xff] %vm1505, %v6018
    %6083 = vst.msk [vmem:[#allocation5 + $0x60] sm:$0xff] %vm1505, %v6019
    %6084 = vst.msk [vmem:[#allocation5 + $0x70] sm:$0xff] %vm1505, %v6020
    %6085 = vst.msk [vmem:[#allocation5 + $0x80] sm:$0xff] %vm1505, %v6021
    %6086 = vst.msk [vmem:[#allocation5 + $0x90] sm:$0xff] %vm1505, %v6022
    %6087 = vst.msk [vmem:[#allocation5 + $0xa0] sm:$0xff] %vm1505, %v6023
    %6088 = vst.msk [vmem:[#allocation5 + $0xb0] sm:$0xff] %vm1505, %v6024
    %6089 = vst.msk [vmem:[#allocation5 + $0xc0] sm:$0xff] %vm1505, %v6025
    %6090 = vst.msk [vmem:[#allocation5 + $0xd0] sm:$0xff] %vm1505, %v6026
    %6091 = vst.msk [vmem:[#allocation5 + $0xe0] sm:$0xff] %vm1505, %v6027
    %6092 = vst.msk [vmem:[#allocation5 + $0xf0] sm:$0xff] %vm1505, %v6028
    %6093 = vst.msk [vmem:[#allocation5 + $0x100] sm:$0xff] %vm1505, %v6029
    %6094 = vst.msk [vmem:[#allocation5 + $0x110] sm:$0xff] %vm1505, %v6030
    %6095 = vst.msk [vmem:[#allocation5 + $0x120] sm:$0xff] %vm1505, %v6031
    %6096 = vst.msk [vmem:[#allocation5 + $0x130] sm:$0xff] %vm1505, %v6032
    %6097 = vst.msk [vmem:[#allocation5 + $0x140] sm:$0xff] %vm1505, %v6033
    %6098 = vst.msk [vmem:[#allocation5 + $0x150] sm:$0xff] %vm1505, %v6034
    %6099 = vst.msk [vmem:[#allocation5 + $0x160] sm:$0xff] %vm1505, %v6035
    %6100 = vst.msk [vmem:[#allocation5 + $0x170] sm:$0xff] %vm1505, %v6036
    %6101 = vst.msk [vmem:[#allocation5 + $0x180] sm:$0xff] %vm1505, %v6037
    %6102 = vst.msk [vmem:[#allocation5 + $0x190] sm:$0xff] %vm1505, %v6038
    %6103 = vst.msk [vmem:[#allocation5 + $0x1a0] sm:$0xff] %vm1505, %v6039
    %6104 = vst.msk [vmem:[#allocation5 + $0x1b0] sm:$0xff] %vm1505, %v6040
    %6105 = vst.msk [vmem:[#allocation5 + $0x1c0] sm:$0xff] %vm1505, %v6041
    %6106 = vst.msk [vmem:[#allocation5 + $0x1d0] sm:$0xff] %vm1505, %v6042
    %6107 = vst.msk [vmem:[#allocation5 + $0x1e0] sm:$0xff] %vm1505, %v6043
    %6108 = vst.msk [vmem:[#allocation5 + $0x1f0] sm:$0xff] %vm1505, %v6044
    %v6110 = vshrl.u32 %v5777, 16
    %v6112 = vrot.slane %v6110, 4
    %v6113 = vshll.u32 %v5777, 16
    %v6115 = vrot.slane %v6113, 5
    %v6116 = vor.u32 %v6112, %v6115
    %v6117 = vrot.slane %v6116, 4
    %v6119 = vshll.u32 %v5778, 16
    %v6121 = vrot.slane %v6119, 5
    %v6122 = vsel %vm1540, %v6117, %v6121
    %v6123 = vshrl.u32 %v5778, 16
    %v6125 = vrot.slane %v6123, 4
    %v6126 = vor.u32 %v6125, %v6121
    %v6127 = vrot.slane %v6126, 4
    %v6129 = vshll.u32 %v5779, 16
    %v6131 = vrot.slane %v6129, 5
    %v6132 = vsel %vm1540, %v6127, %v6131
    %v6134 = vshrl.u32 %v5780, 16
    %v6136 = vrot.slane %v6134, 4
    %v6137 = vshll.u32 %v5780, 16
    %v6139 = vrot.slane %v6137, 5
    %v6140 = vor.u32 %v6136, %v6139
    %v6141 = vrot.slane %v6140, 4
    %v6143 = vshll.u32 %v5781, 16
    %v6145 = vrot.slane %v6143, 5
    %v6146 = vsel %vm1540, %v6141, %v6145
    %v6147 = vshrl.u32 %v5781, 16
    %v6149 = vrot.slane %v6147, 4
    %v6150 = vor.u32 %v6149, %v6145
    %v6151 = vrot.slane %v6150, 4
    %v6153 = vshll.u32 %v5782, 16
    %v6155 = vrot.slane %v6153, 5
    %v6156 = vsel %vm1540, %v6151, %v6155
    %v6158 = vshrl.u32 %v5783, 16
    %v6160 = vrot.slane %v6158, 4
    %v6161 = vshll.u32 %v5783, 16
    %v6163 = vrot.slane %v6161, 5
    %v6164 = vor.u32 %v6160, %v6163
    %v6165 = vrot.slane %v6164, 4
    %v6167 = vshll.u32 %v5784, 16
    %v6169 = vrot.slane %v6167, 5
    %v6170 = vsel %vm1540, %v6165, %v6169
    %v6171 = vshrl.u32 %v5784, 16
    %v6173 = vrot.slane %v6171, 4
    %v6174 = vor.u32 %v6173, %v6169
    %v6175 = vrot.slane %v6174, 4
    %v6177 = vshll.u32 %v5785, 16
    %v6179 = vrot.slane %v6177, 5
    %v6180 = vsel %vm1540, %v6175, %v6179
    %v6182 = vshrl.u32 %v5786, 16
    %v6184 = vrot.slane %v6182, 4
    %v6185 = vshll.u32 %v5786, 16
    %v6187 = vrot.slane %v6185, 5
    %v6188 = vor.u32 %v6184, %v6187
    %v6189 = vrot.slane %v6188, 4
    %v6191 = vshll.u32 %v5787, 16
    %v6193 = vrot.slane %v6191, 5
    %v6194 = vsel %vm1540, %v6189, %v6193
    %v6195 = vshrl.u32 %v5787, 16
    %v6197 = vrot.slane %v6195, 4
    %v6198 = vor.u32 %v6197, %v6193
    %v6199 = vrot.slane %v6198, 4
    %v6201 = vshll.u32 %v5788, 16
    %v6203 = vrot.slane %v6201, 5
    %v6204 = vsel %vm1540, %v6199, %v6203
    %v6206 = vshrl.u32 %v5789, 16
    %v6208 = vrot.slane %v6206, 4
    %v6209 = vshll.u32 %v5789, 16
    %v6211 = vrot.slane %v6209, 5
    %v6212 = vor.u32 %v6208, %v6211
    %v6213 = vrot.slane %v6212, 4
    %v6215 = vshll.u32 %v5790, 16
    %v6217 = vrot.slane %v6215, 5
    %v6218 = vsel %vm1540, %v6213, %v6217
    %v6219 = vshrl.u32 %v5790, 16
    %v6221 = vrot.slane %v6219, 4
    %v6222 = vor.u32 %v6221, %v6217
    %v6223 = vrot.slane %v6222, 4
    %v6225 = vshll.u32 %v5791, 16
    %v6227 = vrot.slane %v6225, 5
    %v6228 = vsel %vm1540, %v6223, %v6227
    %v6230 = vshrl.u32 %v5792, 16
    %v6232 = vrot.slane %v6230, 4
    %v6233 = vshll.u32 %v5792, 16
    %v6235 = vrot.slane %v6233, 5
    %v6236 = vor.u32 %v6232, %v6235
    %v6237 = vrot.slane %v6236, 4
    %v6239 = vshll.u32 %v5793, 16
    %v6241 = vrot.slane %v6239, 5
    %v6242 = vsel %vm1540, %v6237, %v6241
    %v6243 = vshrl.u32 %v5793, 16
    %v6245 = vrot.slane %v6243, 4
    %v6246 = vor.u32 %v6245, %v6241
    %v6247 = vrot.slane %v6246, 4
    %v6249 = vshll.u32 %v5794, 16
    %v6251 = vrot.slane %v6249, 5
    %v6252 = vsel %vm1540, %v6247, %v6251
    %v6254 = vshrl.u32 %v5795, 16
    %v6256 = vrot.slane %v6254, 4
    %v6257 = vshll.u32 %v5795, 16
    %v6259 = vrot.slane %v6257, 5
    %v6260 = vor.u32 %v6256, %v6259
    %v6261 = vrot.slane %v6260, 4
    %v6263 = vshll.u32 %v5796, 16
    %v6265 = vrot.slane %v6263, 5
    %v6266 = vsel %vm1540, %v6261, %v6265
    %v6267 = vshrl.u32 %v5796, 16
    %v6269 = vrot.slane %v6267, 4
    %v6270 = vor.u32 %v6269, %v6265
    %v6271 = vrot.slane %v6270, 4
    %v6273 = vshll.u32 %v5797, 16
    %v6275 = vrot.slane %v6273, 5
    %v6276 = vsel %vm1540, %v6271, %v6275
    %v6278 = vshrl.u32 %v5798, 16
    %v6280 = vrot.slane %v6278, 4
    %v6281 = vshll.u32 %v5798, 16
    %v6283 = vrot.slane %v6281, 5
    %v6284 = vor.u32 %v6280, %v6283
    %v6285 = vrot.slane %v6284, 4
    %v6287 = vshll.u32 %v5799, 16
    %v6289 = vrot.slane %v6287, 5
    %v6290 = vsel %vm1540, %v6285, %v6289
    %v6291 = vshrl.u32 %v5799, 16
    %v6293 = vrot.slane %v6291, 4
    %v6294 = vor.u32 %v6293, %v6289
    %v6295 = vrot.slane %v6294, 4
    %v6297 = vshll.u32 %v5800, 16
    %v6299 = vrot.slane %v6297, 5
    %v6300 = vsel %vm1540, %v6295, %v6299
    %v6302 = vshrl.u32 %v5801, 16
    %v6304 = vrot.slane %v6302, 4
    %v6305 = vshll.u32 %v5801, 16
    %v6307 = vrot.slane %v6305, 5
    %v6308 = vor.u32 %v6304, %v6307
    %v6309 = vrot.slane %v6308, 4
    %v6311 = vshll.u32 %v5802, 16
    %v6313 = vrot.slane %v6311, 5
    %v6314 = vsel %vm1540, %v6309, %v6313
    %v6315 = vshrl.u32 %v5802, 16
    %v6317 = vrot.slane %v6315, 4
    %v6318 = vor.u32 %v6317, %v6313
    %v6319 = vrot.slane %v6318, 4
    %v6321 = vshll.u32 %v5803, 16
    %v6323 = vrot.slane %v6321, 5
    %v6324 = vsel %vm1540, %v6319, %v6323
    %v6326 = vshrl.u32 %v5804, 16
    %v6328 = vrot.slane %v6326, 4
    %v6329 = vshll.u32 %v5804, 16
    %v6331 = vrot.slane %v6329, 5
    %v6332 = vor.u32 %v6328, %v6331
    %v6333 = vrot.slane %v6332, 4
    %v6335 = vshll.u32 %v5805, 16
    %v6337 = vrot.slane %v6335, 5
    %v6338 = vsel %vm1540, %v6333, %v6337
    %v6339 = vshrl.u32 %v5805, 16
    %v6341 = vrot.slane %v6339, 4
    %v6342 = vor.u32 %v6341, %v6337
    %v6343 = vrot.slane %v6342, 4
    %v6345 = vshll.u32 %v5806, 16
    %v6347 = vrot.slane %v6345, 5
    %v6348 = vsel %vm1540, %v6343, %v6347
    %v6350 = vshrl.u32 %v5807, 16
    %v6352 = vrot.slane %v6350, 4
    %v6353 = vshll.u32 %v5807, 16
    %v6355 = vrot.slane %v6353, 5
    %v6356 = vor.u32 %v6352, %v6355
    %v6357 = vrot.slane %v6356, 4
    %v6359 = vshll.u32 %v5808, 16
    %v6361 = vrot.slane %v6359, 5
    %v6362 = vsel %vm1540, %v6357, %v6361
    %v6363 = vshrl.u32 %v5808, 16
    %v6365 = vrot.slane %v6363, 4
    %v6366 = vor.u32 %v6365, %v6361
    %v6367 = vrot.slane %v6366, 4
    %v6369 = vshll.u32 %v5809, 16
    %v6371 = vrot.slane %v6369, 5
    %v6372 = vsel %vm1540, %v6367, %v6371
    %v6374 = vshrl.u32 %v5810, 16
    %v6376 = vrot.slane %v6374, 4
    %v6377 = vshll.u32 %v5810, 16
    %v6379 = vrot.slane %v6377, 5
    %v6380 = vor.u32 %v6376, %v6379
    %v6381 = vrot.slane %v6380, 4
    %v6383 = vshll.u32 %v5811, 16
    %v6385 = vrot.slane %v6383, 5
    %v6386 = vsel %vm1540, %v6381, %v6385
    %v6387 = vshrl.u32 %v5811, 16
    %v6389 = vrot.slane %v6387, 4
    %v6390 = vor.u32 %v6389, %v6385
    %v6391 = vrot.slane %v6390, 4
    %v6393 = vshll.u32 %v5812, 16
    %v6395 = vrot.slane %v6393, 5
    %v6396 = vsel %vm1540, %v6391, %v6395
    %v6398 = vshrl.u32 %v5813, 16
    %v6400 = vrot.slane %v6398, 4
    %v6401 = vshll.u32 %v5813, 16
    %v6403 = vrot.slane %v6401, 5
    %v6404 = vor.u32 %v6400, %v6403
    %v6405 = vrot.slane %v6404, 4
    %v6407 = vshll.u32 %v5814, 16
    %v6409 = vrot.slane %v6407, 5
    %v6410 = vsel %vm1540, %v6405, %v6409
    %v6411 = vshrl.u32 %v5814, 16
    %v6413 = vrot.slane %v6411, 4
    %v6414 = vor.u32 %v6413, %v6409
    %v6415 = vrot.slane %v6414, 4
    %v6417 = vshll.u32 %v5815, 16
    %v6419 = vrot.slane %v6417, 5
    %v6420 = vsel %vm1540, %v6415, %v6419
    %v6422 = vshrl.u32 %v5816, 16
    %v6424 = vrot.slane %v6422, 4
    %v6425 = vshll.u32 %v5816, 16
    %v6427 = vrot.slane %v6425, 5
    %v6428 = vor.u32 %v6424, %v6427
    %v6429 = vrot.slane %v6428, 4
    %v6431 = vshll.u32 %v5817, 16
    %v6433 = vrot.slane %v6431, 5
    %v6434 = vsel %vm1540, %v6429, %v6433
    %v6435 = vshrl.u32 %v5817, 16
    %v6437 = vrot.slane %v6435, 4
    %v6438 = vor.u32 %v6437, %v6433
    %v6439 = vrot.slane %v6438, 4
    %v6441 = vshll.u32 %v5818, 16
    %v6443 = vrot.slane %v6441, 5
    %v6444 = vsel %vm1540, %v6439, %v6443
    %v6446 = vshrl.u32 %v5819, 16
    %v6448 = vrot.slane %v6446, 4
    %v6449 = vshll.u32 %v5819, 16
    %v6451 = vrot.slane %v6449, 5
    %v6452 = vor.u32 %v6448, %v6451
    %v6453 = vrot.slane %v6452, 4
    %v6455 = vshll.u32 %v5820, 16
    %v6457 = vrot.slane %v6455, 5
    %v6458 = vsel %vm1540, %v6453, %v6457
    %v6459 = vshrl.u32 %v5820, 16
    %v6461 = vrot.slane %v6459, 4
    %v6462 = vor.u32 %v6461, %v6457
    %v6463 = vrot.slane %v6462, 4
    %v6465 = vshll.u32 %v5821, 16
    %v6467 = vrot.slane %v6465, 5
    %v6468 = vsel %vm1540, %v6463, %v6467
    %v6470 = vshrl.u32 %v5822, 16
    %v6472 = vrot.slane %v6470, 4
    %v6473 = vshll.u32 %v5822, 16
    %v6475 = vrot.slane %v6473, 5
    %v6476 = vor.u32 %v6472, %v6475
    %v6477 = vrot.slane %v6476, 4
    %v6479 = vshll.u32 %v5823, 16
    %v6481 = vrot.slane %v6479, 5
    %v6482 = vsel %vm1540, %v6477, %v6481
    %v6483 = vshrl.u32 %v5823, 16
    %v6485 = vrot.slane %v6483, 4
    %v6486 = vor.u32 %v6485, %v6481
    %v6487 = vrot.slane %v6486, 4
    %v6489 = vshll.u32 %v5824, 16
    %v6491 = vrot.slane %v6489, 5
    %v6492 = vsel %vm1540, %v6487, %v6491
    %v6494 = vshrl.u32 %v5831, 16
    %v6496 = vrot.slane %v6494, 4
    %v6497 = vshll.u32 %v5831, 16
    %v6499 = vrot.slane %v6497, 5
    %v6500 = vor.u32 %v6496, %v6499
    %v6501 = vrot.slane %v6500, 4
    %v6503 = vshll.u32 %v5832, 16
    %v6505 = vrot.slane %v6503, 5
    %v6506 = vsel %vm1540, %v6501, %v6505
    %v6507 = vshrl.u32 %v5832, 16
    %v6509 = vrot.slane %v6507, 4
    %v6510 = vor.u32 %v6509, %v6505
    %v6511 = vrot.slane %v6510, 4
    %v6513 = vshll.u32 %v5833, 16
    %v6515 = vrot.slane %v6513, 5
    %v6516 = vsel %vm1540, %v6511, %v6515
    %v6518 = vshrl.u32 %v5834, 16
    %v6520 = vrot.slane %v6518, 4
    %v6521 = vshll.u32 %v5834, 16
    %v6523 = vrot.slane %v6521, 5
    %v6524 = vor.u32 %v6520, %v6523
    %v6525 = vrot.slane %v6524, 4
    %v6527 = vshll.u32 %v5835, 16
    %v6529 = vrot.slane %v6527, 5
    %v6530 = vsel %vm1540, %v6525, %v6529
    %v6531 = vshrl.u32 %v5835, 16
    %v6533 = vrot.slane %v6531, 4
    %v6534 = vor.u32 %v6533, %v6529
    %v6535 = vrot.slane %v6534, 4
    %v6537 = vshll.u32 %v5836, 16
    %v6539 = vrot.slane %v6537, 5
    %v6540 = vsel %vm1540, %v6535, %v6539
    %v6542 = vshrl.u32 %v5837, 16
    %v6544 = vrot.slane %v6542, 4
    %v6545 = vshll.u32 %v5837, 16
    %v6547 = vrot.slane %v6545, 5
    %v6548 = vor.u32 %v6544, %v6547
    %v6549 = vrot.slane %v6548, 4
    %v6551 = vshll.u32 %v5838, 16
    %v6553 = vrot.slane %v6551, 5
    %v6554 = vsel %vm1540, %v6549, %v6553
    %v6555 = vshrl.u32 %v5838, 16
    %v6557 = vrot.slane %v6555, 4
    %v6558 = vor.u32 %v6557, %v6553
    %v6559 = vrot.slane %v6558, 4
    %v6561 = vshll.u32 %v5839, 16
    %v6563 = vrot.slane %v6561, 5
    %v6564 = vsel %vm1540, %v6559, %v6563
    %v6566 = vshrl.u32 %v5840, 16
    %v6568 = vrot.slane %v6566, 4
    %v6569 = vshll.u32 %v5840, 16
    %v6571 = vrot.slane %v6569, 5
    %v6572 = vor.u32 %v6568, %v6571
    %v6573 = vrot.slane %v6572, 4
    %v6575 = vshll.u32 %v5841, 16
    %v6577 = vrot.slane %v6575, 5
    %v6578 = vsel %vm1540, %v6573, %v6577
    %v6579 = vshrl.u32 %v5841, 16
    %v6581 = vrot.slane %v6579, 4
    %v6582 = vor.u32 %v6581, %v6577
    %v6583 = vrot.slane %v6582, 4
    %v6585 = vshll.u32 %v5842, 16
    %v6587 = vrot.slane %v6585, 5
    %v6588 = vsel %vm1540, %v6583, %v6587
    %v6590 = vshrl.u32 %v5843, 16
    %v6592 = vrot.slane %v6590, 4
    %v6593 = vshll.u32 %v5843, 16
    %v6595 = vrot.slane %v6593, 5
    %v6596 = vor.u32 %v6592, %v6595
    %v6597 = vrot.slane %v6596, 4
    %v6599 = vshll.u32 %v5844, 16
    %v6601 = vrot.slane %v6599, 5
    %v6602 = vsel %vm1540, %v6597, %v6601
    %v6603 = vshrl.u32 %v5844, 16
    %v6605 = vrot.slane %v6603, 4
    %v6606 = vor.u32 %v6605, %v6601
    %v6607 = vrot.slane %v6606, 4
    %v6609 = vshll.u32 %v5845, 16
    %v6611 = vrot.slane %v6609, 5
    %v6612 = vsel %vm1540, %v6607, %v6611
    %v6614 = vshrl.u32 %v5846, 16
    %v6616 = vrot.slane %v6614, 4
    %v6617 = vshll.u32 %v5846, 16
    %v6619 = vrot.slane %v6617, 5
    %v6620 = vor.u32 %v6616, %v6619
    %v6621 = vrot.slane %v6620, 4
    %v6623 = vshll.u32 %v5847, 16
    %v6625 = vrot.slane %v6623, 5
    %v6626 = vsel %vm1540, %v6621, %v6625
    %v6627 = vshrl.u32 %v5847, 16
    %v6629 = vrot.slane %v6627, 4
    %v6630 = vor.u32 %v6629, %v6625
    %v6631 = vrot.slane %v6630, 4
    %v6633 = vshll.u32 %v5848, 16
    %v6635 = vrot.slane %v6633, 5
    %v6636 = vsel %vm1540, %v6631, %v6635
    %v6638 = vshrl.u32 %v5849, 16
    %v6640 = vrot.slane %v6638, 4
    %v6641 = vshll.u32 %v5849, 16
    %v6643 = vrot.slane %v6641, 5
    %v6644 = vor.u32 %v6640, %v6643
    %v6645 = vrot.slane %v6644, 4
    %v6647 = vshll.u32 %v5850, 16
    %v6649 = vrot.slane %v6647, 5
    %v6650 = vsel %vm1540, %v6645, %v6649
    %v6651 = vshrl.u32 %v5850, 16
    %v6653 = vrot.slane %v6651, 4
    %v6654 = vor.u32 %v6653, %v6649
    %v6655 = vrot.slane %v6654, 4
    %v6657 = vshll.u32 %v5851, 16
    %v6659 = vrot.slane %v6657, 5
    %v6660 = vsel %vm1540, %v6655, %v6659
    %v6662 = vshrl.u32 %v5852, 16
    %v6664 = vrot.slane %v6662, 4
    %v6665 = vshll.u32 %v5852, 16
    %v6667 = vrot.slane %v6665, 5
    %v6668 = vor.u32 %v6664, %v6667
    %v6669 = vrot.slane %v6668, 4
    %v6671 = vshll.u32 %v5853, 16
    %v6673 = vrot.slane %v6671, 5
    %v6674 = vsel %vm1540, %v6669, %v6673
    %v6675 = vshrl.u32 %v5853, 16
    %v6677 = vrot.slane %v6675, 4
    %v6678 = vor.u32 %v6677, %v6673
    %v6679 = vrot.slane %v6678, 4
    %v6681 = vshll.u32 %v5854, 16
    %v6683 = vrot.slane %v6681, 5
    %v6684 = vsel %vm1540, %v6679, %v6683
    %v6686 = vshrl.u32 %v5855, 16
    %v6688 = vrot.slane %v6686, 4
    %v6689 = vshll.u32 %v5855, 16
    %v6691 = vrot.slane %v6689, 5
    %v6692 = vor.u32 %v6688, %v6691
    %v6693 = vrot.slane %v6692, 4
    %v6695 = vshll.u32 %v5856, 16
    %v6697 = vrot.slane %v6695, 5
    %v6698 = vsel %vm1540, %v6693, %v6697
    %v6699 = vshrl.u32 %v5856, 16
    %v6701 = vrot.slane %v6699, 4
    %v6702 = vor.u32 %v6701, %v6697
    %v6703 = vrot.slane %v6702, 4
    %v6705 = vshll.u32 %v5857, 16
    %v6707 = vrot.slane %v6705, 5
    %v6708 = vsel %vm1540, %v6703, %v6707
    %v6710 = vshrl.u32 %v5858, 16
    %v6712 = vrot.slane %v6710, 4
    %v6713 = vshll.u32 %v5858, 16
    %v6715 = vrot.slane %v6713, 5
    %v6716 = vor.u32 %v6712, %v6715
    %v6717 = vrot.slane %v6716, 4
    %v6719 = vshll.u32 %v5859, 16
    %v6721 = vrot.slane %v6719, 5
    %v6722 = vsel %vm1540, %v6717, %v6721
    %v6723 = vshrl.u32 %v5859, 16
    %v6725 = vrot.slane %v6723, 4
    %v6726 = vor.u32 %v6725, %v6721
    %v6727 = vrot.slane %v6726, 4
    %v6729 = vshll.u32 %v5860, 16
    %v6731 = vrot.slane %v6729, 5
    %v6732 = vsel %vm1540, %v6727, %v6731
    %v6734 = vshrl.u32 %v5861, 16
    %v6736 = vrot.slane %v6734, 4
    %v6737 = vshll.u32 %v5861, 16
    %v6739 = vrot.slane %v6737, 5
    %v6740 = vor.u32 %v6736, %v6739
    %v6741 = vrot.slane %v6740, 4
    %v6743 = vshll.u32 %v5862, 16
    %v6745 = vrot.slane %v6743, 5
    %v6746 = vsel %vm1540, %v6741, %v6745
    %v6747 = vshrl.u32 %v5862, 16
    %v6749 = vrot.slane %v6747, 4
    %v6750 = vor.u32 %v6749, %v6745
    %v6751 = vrot.slane %v6750, 4
    %v6753 = vshll.u32 %v5863, 16
    %v6755 = vrot.slane %v6753, 5
    %v6756 = vsel %vm1540, %v6751, %v6755
    %v6758 = vshrl.u32 %v5864, 16
    %v6760 = vrot.slane %v6758, 4
    %v6761 = vshll.u32 %v5864, 16
    %v6763 = vrot.slane %v6761, 5
    %v6764 = vor.u32 %v6760, %v6763
    %v6765 = vrot.slane %v6764, 4
    %v6767 = vshll.u32 %v5865, 16
    %v6769 = vrot.slane %v6767, 5
    %v6770 = vsel %vm1540, %v6765, %v6769
    %v6771 = vshrl.u32 %v5865, 16
    %v6773 = vrot.slane %v6771, 4
    %v6774 = vor.u32 %v6773, %v6769
    %v6775 = vrot.slane %v6774, 4
    %v6777 = vshll.u32 %v5866, 16
    %v6779 = vrot.slane %v6777, 5
    %v6780 = vsel %vm1540, %v6775, %v6779
    %v6782 = vshrl.u32 %v5867, 16
    %v6784 = vrot.slane %v6782, 4
    %v6785 = vshll.u32 %v5867, 16
    %v6787 = vrot.slane %v6785, 5
    %v6788 = vor.u32 %v6784, %v6787
    %v6789 = vrot.slane %v6788, 4
    %v6791 = vshll.u32 %v5868, 16
    %v6793 = vrot.slane %v6791, 5
    %v6794 = vsel %vm1540, %v6789, %v6793
    %v6795 = vshrl.u32 %v5868, 16
    %v6797 = vrot.slane %v6795, 4
    %v6798 = vor.u32 %v6797, %v6793
    %v6799 = vrot.slane %v6798, 4
    %v6801 = vshll.u32 %v5869, 16
    %v6803 = vrot.slane %v6801, 5
    %v6804 = vsel %vm1540, %v6799, %v6803
    %v6806 = vshrl.u32 %v5870, 16
    %v6808 = vrot.slane %v6806, 4
    %v6809 = vshll.u32 %v5870, 16
    %v6811 = vrot.slane %v6809, 5
    %v6812 = vor.u32 %v6808, %v6811
    %v6813 = vrot.slane %v6812, 4
    %v6815 = vshll.u32 %v5871, 16
    %v6817 = vrot.slane %v6815, 5
    %v6818 = vsel %vm1540, %v6813, %v6817
    %v6819 = vshrl.u32 %v5871, 16
    %v6821 = vrot.slane %v6819, 4
    %v6822 = vor.u32 %v6821, %v6817
    %v6823 = vrot.slane %v6822, 4
    %v6825 = vshll.u32 %v5872, 16
    %v6827 = vrot.slane %v6825, 5
    %v6828 = vsel %vm1540, %v6823, %v6827
    %v6830 = vshrl.u32 %v5873, 16
    %v6832 = vrot.slane %v6830, 4
    %v6833 = vshll.u32 %v5873, 16
    %v6835 = vrot.slane %v6833, 5
    %v6836 = vor.u32 %v6832, %v6835
    %v6837 = vrot.slane %v6836, 4
    %v6839 = vshll.u32 %v5874, 16
    %v6841 = vrot.slane %v6839, 5
    %v6842 = vsel %vm1540, %v6837, %v6841
    %v6843 = vshrl.u32 %v5874, 16
    %v6845 = vrot.slane %v6843, 4
    %v6846 = vor.u32 %v6845, %v6841
    %v6847 = vrot.slane %v6846, 4
    %v6849 = vshll.u32 %v5875, 16
    %v6851 = vrot.slane %v6849, 5
    %v6852 = vsel %vm1540, %v6847, %v6851
    %v6854 = vshrl.u32 %v5876, 16
    %v6856 = vrot.slane %v6854, 4
    %v6857 = vshll.u32 %v5876, 16
    %v6859 = vrot.slane %v6857, 5
    %v6860 = vor.u32 %v6856, %v6859
    %v6861 = vrot.slane %v6860, 4
    %v6863 = vshll.u32 %v5877, 16
    %v6865 = vrot.slane %v6863, 5
    %v6866 = vsel %vm1540, %v6861, %v6865
    %v6867 = vshrl.u32 %v5877, 16
    %v6869 = vrot.slane %v6867, 4
    %v6870 = vor.u32 %v6869, %v6865
    %v6871 = vrot.slane %v6870, 4
    %v6873 = vshll.u32 %v5878, 16
    %v6875 = vrot.slane %v6873, 5
    %v6876 = vsel %vm1540, %v6871, %v6875
    %v6877 = vunpack.c.l.b16 %v6122
    %v6878 = vunpack.c.l.b16 %v6132
    %v6879 = vunpack.c.l.b16 %v6146
    %v6880 = vunpack.c.l.b16 %v6156
    %v6881 = vunpack.c.l.b16 %v6170
    %v6882 = vunpack.c.l.b16 %v6180
    %v6883 = vunpack.c.l.b16 %v6194
    %v6884 = vunpack.c.l.b16 %v6204
    %v6885 = vunpack.c.l.b16 %v6218
    %v6886 = vunpack.c.l.b16 %v6228
    %v6887 = vunpack.c.l.b16 %v6242
    %v6888 = vunpack.c.l.b16 %v6252
    %v6889 = vunpack.c.l.b16 %v6266
    %v6890 = vunpack.c.l.b16 %v6276
    %v6891 = vunpack.c.l.b16 %v6290
    %v6892 = vunpack.c.l.b16 %v6300
    %v6893 = vunpack.c.l.b16 %v6314
    %v6894 = vunpack.c.l.b16 %v6324
    %v6895 = vunpack.c.l.b16 %v6338
    %v6896 = vunpack.c.l.b16 %v6348
    %v6897 = vunpack.c.l.b16 %v6362
    %v6898 = vunpack.c.l.b16 %v6372
    %v6899 = vunpack.c.l.b16 %v6386
    %v6900 = vunpack.c.l.b16 %v6396
    %v6901 = vunpack.c.l.b16 %v6410
    %v6902 = vunpack.c.l.b16 %v6420
    %v6903 = vunpack.c.l.b16 %v6434
    %v6904 = vunpack.c.l.b16 %v6444
    %v6905 = vunpack.c.l.b16 %v6458
    %v6906 = vunpack.c.l.b16 %v6468
    %v6907 = vunpack.c.l.b16 %v6482
    %v6908 = vunpack.c.l.b16 %v6492
    %v6909 = vunpack.c.l.b16 %v6506
    %v6910 = vunpack.c.l.b16 %v6516
    %v6911 = vunpack.c.l.b16 %v6530
    %v6912 = vunpack.c.l.b16 %v6540
    %v6913 = vunpack.c.l.b16 %v6554
    %v6914 = vunpack.c.l.b16 %v6564
    %v6915 = vunpack.c.l.b16 %v6578
    %v6916 = vunpack.c.l.b16 %v6588
    %v6917 = vunpack.c.l.b16 %v6602
    %v6918 = vunpack.c.l.b16 %v6612
    %v6919 = vunpack.c.l.b16 %v6626
    %v6920 = vunpack.c.l.b16 %v6636
    %v6921 = vunpack.c.l.b16 %v6650
    %v6922 = vunpack.c.l.b16 %v6660
    %v6923 = vunpack.c.l.b16 %v6674
    %v6924 = vunpack.c.l.b16 %v6684
    %v6925 = vunpack.c.l.b16 %v6698
    %v6926 = vunpack.c.l.b16 %v6708
    %v6927 = vunpack.c.l.b16 %v6722
    %v6928 = vunpack.c.l.b16 %v6732
    %v6929 = vunpack.c.l.b16 %v6746
    %v6930 = vunpack.c.l.b16 %v6756
    %v6931 = vunpack.c.l.b16 %v6770
    %v6932 = vunpack.c.l.b16 %v6780
    %v6933 = vunpack.c.l.b16 %v6794
    %v6934 = vunpack.c.l.b16 %v6804
    %v6935 = vunpack.c.l.b16 %v6818
    %v6936 = vunpack.c.l.b16 %v6828
    %v6937 = vunpack.c.l.b16 %v6842
    %v6938 = vunpack.c.l.b16 %v6852
    %v6939 = vunpack.c.l.b16 %v6866
    %v6940 = vunpack.c.l.b16 %v6876
    %v6941 = vpack.c.b16 %v6878, %v6877
    %v6942 = vpack.c.b16 %v6880, %v6879
    %v6943 = vpack.c.b16 %v6882, %v6881
    %v6944 = vpack.c.b16 %v6884, %v6883
    %v6945 = vpack.c.b16 %v6886, %v6885
    %v6946 = vpack.c.b16 %v6888, %v6887
    %v6947 = vpack.c.b16 %v6890, %v6889
    %v6948 = vpack.c.b16 %v6892, %v6891
    %v6949 = vpack.c.b16 %v6894, %v6893
    %v6950 = vpack.c.b16 %v6896, %v6895
    %v6951 = vpack.c.b16 %v6898, %v6897
    %v6952 = vpack.c.b16 %v6900, %v6899
    %v6953 = vpack.c.b16 %v6902, %v6901
    %v6954 = vpack.c.b16 %v6904, %v6903
    %v6955 = vpack.c.b16 %v6906, %v6905
    %v6956 = vpack.c.b16 %v6908, %v6907
    %v6957 = vpack.c.b16 %v6910, %v6909
    %v6958 = vpack.c.b16 %v6912, %v6911
    %v6959 = vpack.c.b16 %v6914, %v6913
    %v6960 = vpack.c.b16 %v6916, %v6915
    %v6961 = vpack.c.b16 %v6918, %v6917
    %v6962 = vpack.c.b16 %v6920, %v6919
    %v6963 = vpack.c.b16 %v6922, %v6921
    %v6964 = vpack.c.b16 %v6924, %v6923
    %v6965 = vpack.c.b16 %v6926, %v6925
    %v6966 = vpack.c.b16 %v6928, %v6927
    %v6967 = vpack.c.b16 %v6930, %v6929
    %v6968 = vpack.c.b16 %v6932, %v6931
    %v6969 = vpack.c.b16 %v6934, %v6933
    %v6970 = vpack.c.b16 %v6936, %v6935
    %v6971 = vpack.c.b16 %v6938, %v6937
    %v6972 = vpack.c.b16 %v6940, %v6939
    %6973 = vrot.lane.b32.xlu0 %v6941, 16
    %v6974 = vpop.permute.xlu0 %6973
    %6975 = vrot.lane.b32.xlu0 %v6942, 16
    %v6976 = vpop.permute.xlu0 %6975
    %6977 = vrot.lane.b32.xlu0 %v6943, 16
    %v6978 = vpop.permute.xlu0 %6977
    %6979 = vrot.lane.b32.xlu0 %v6944, 16
    %v6980 = vpop.permute.xlu0 %6979
    %6981 = vrot.lane.b32.xlu0 %v6945, 16
    %v6982 = vpop.permute.xlu0 %6981
    %6983 = vrot.lane.b32.xlu0 %v6946, 16
    %v6984 = vpop.permute.xlu0 %6983
    %6985 = vrot.lane.b32.xlu0 %v6947, 16
    %v6986 = vpop.permute.xlu0 %6985
    %6987 = vrot.lane.b32.xlu0 %v6948, 16
    %v6988 = vpop.permute.xlu0 %6987
    %6989 = vrot.lane.b32.xlu0 %v6949, 16
    %v6990 = vpop.permute.xlu0 %6989
    %6991 = vrot.lane.b32.xlu0 %v6950, 16
    %v6992 = vpop.permute.xlu0 %6991
    %6993 = vrot.lane.b32.xlu0 %v6951, 16
    %v6994 = vpop.permute.xlu0 %6993
    %6995 = vrot.lane.b32.xlu0 %v6952, 16
    %v6996 = vpop.permute.xlu0 %6995
    %6997 = vrot.lane.b32.xlu0 %v6953, 16
    %v6998 = vpop.permute.xlu0 %6997
    %6999 = vrot.lane.b32.xlu0 %v6954, 16
    %v7000 = vpop.permute.xlu0 %6999
    %7001 = vrot.lane.b32.xlu0 %v6955, 16
    %v7002 = vpop.permute.xlu0 %7001
    %7003 = vrot.lane.b32.xlu0 %v6956, 16
    %v7004 = vpop.permute.xlu0 %7003
    %7005 = vrot.lane.b32.xlu0 %v6957, 16
    %v7006 = vpop.permute.xlu0 %7005
    %7007 = vrot.lane.b32.xlu0 %v6958, 16
    %v7008 = vpop.permute.xlu0 %7007
    %7009 = vrot.lane.b32.xlu0 %v6959, 16
    %v7010 = vpop.permute.xlu0 %7009
    %7011 = vrot.lane.b32.xlu0 %v6960, 16
    %v7012 = vpop.permute.xlu0 %7011
    %7013 = vrot.lane.b32.xlu0 %v6961, 16
    %v7014 = vpop.permute.xlu0 %7013
    %7015 = vrot.lane.b32.xlu0 %v6962, 16
    %v7016 = vpop.permute.xlu0 %7015
    %7017 = vrot.lane.b32.xlu0 %v6963, 16
    %v7018 = vpop.permute.xlu0 %7017
    %7019 = vrot.lane.b32.xlu0 %v6964, 16
    %v7020 = vpop.permute.xlu0 %7019
    %7021 = vrot.lane.b32.xlu0 %v6965, 16
    %v7022 = vpop.permute.xlu0 %7021
    %7023 = vrot.lane.b32.xlu0 %v6966, 16
    %v7024 = vpop.permute.xlu0 %7023
    %7025 = vrot.lane.b32.xlu0 %v6967, 16
    %v7026 = vpop.permute.xlu0 %7025
    %7027 = vrot.lane.b32.xlu0 %v6968, 16
    %v7028 = vpop.permute.xlu0 %7027
    %7029 = vrot.lane.b32.xlu0 %v6969, 16
    %v7030 = vpop.permute.xlu0 %7029
    %7031 = vrot.lane.b32.xlu0 %v6970, 16
    %v7032 = vpop.permute.xlu0 %7031
    %7033 = vrot.lane.b32.xlu0 %v6971, 16
    %v7034 = vpop.permute.xlu0 %7033
    %7035 = vrot.lane.b32.xlu0 %v6972, 16
    %v7036 = vpop.permute.xlu0 %7035
    %7069 = vst.msk [vmem:[#allocation5] sm:$0xff] %vm2501, %v6974
    %7070 = vst.msk [vmem:[#allocation5 + $0x10] sm:$0xff] %vm2501, %v6976
    %7071 = vst.msk [vmem:[#allocation5 + $0x20] sm:$0xff] %vm2501, %v6978
    %7072 = vst.msk [vmem:[#allocation5 + $0x30] sm:$0xff] %vm2501, %v6980
    %7073 = vst.msk [vmem:[#allocation5 + $0x40] sm:$0xff] %vm2501, %v6982
    %7074 = vst.msk [vmem:[#allocation5 + $0x50] sm:$0xff] %vm2501, %v6984
    %7075 = vst.msk [vmem:[#allocation5 + $0x60] sm:$0xff] %vm2501, %v6986
    %7076 = vst.msk [vmem:[#allocation5 + $0x70] sm:$0xff] %vm2501, %v6988
    %7077 = vst.msk [vmem:[#allocation5 + $0x80] sm:$0xff] %vm2501, %v6990
    %7078 = vst.msk [vmem:[#allocation5 + $0x90] sm:$0xff] %vm2501, %v6992
    %7079 = vst.msk [vmem:[#allocation5 + $0xa0] sm:$0xff] %vm2501, %v6994
    %7080 = vst.msk [vmem:[#allocation5 + $0xb0] sm:$0xff] %vm2501, %v6996
    %7081 = vst.msk [vmem:[#allocation5 + $0xc0] sm:$0xff] %vm2501, %v6998
    %7082 = vst.msk [vmem:[#allocation5 + $0xd0] sm:$0xff] %vm2501, %v7000
    %7083 = vst.msk [vmem:[#allocation5 + $0xe0] sm:$0xff] %vm2501, %v7002
    %7084 = vst.msk [vmem:[#allocation5 + $0xf0] sm:$0xff] %vm2501, %v7004
    %7085 = vst.msk [vmem:[#allocation5 + $0x100] sm:$0xff] %vm2501, %v7006
    %7086 = vst.msk [vmem:[#allocation5 + $0x110] sm:$0xff] %vm2501, %v7008
    %7087 = vst.msk [vmem:[#allocation5 + $0x120] sm:$0xff] %vm2501, %v7010
    %7088 = vst.msk [vmem:[#allocation5 + $0x130] sm:$0xff] %vm2501, %v7012
    %7089 = vst.msk [vmem:[#allocation5 + $0x140] sm:$0xff] %vm2501, %v7014
    %7090 = vst.msk [vmem:[#allocation5 + $0x150] sm:$0xff] %vm2501, %v7016
    %7091 = vst.msk [vmem:[#allocation5 + $0x160] sm:$0xff] %vm2501, %v7018
    %7092 = vst.msk [vmem:[#allocation5 + $0x170] sm:$0xff] %vm2501, %v7020
    %7093 = vst.msk [vmem:[#allocation5 + $0x180] sm:$0xff] %vm2501, %v7022
    %7094 = vst.msk [vmem:[#allocation5 + $0x190] sm:$0xff] %vm2501, %v7024
    %7095 = vst.msk [vmem:[#allocation5 + $0x1a0] sm:$0xff] %vm2501, %v7026
    %7096 = vst.msk [vmem:[#allocation5 + $0x1b0] sm:$0xff] %vm2501, %v7028
    %7097 = vst.msk [vmem:[#allocation5 + $0x1c0] sm:$0xff] %vm2501, %v7030
    %7098 = vst.msk [vmem:[#allocation5 + $0x1d0] sm:$0xff] %vm2501, %v7032
    %7099 = vst.msk [vmem:[#allocation5 + $0x1e0] sm:$0xff] %vm2501, %v7034
    %7100 = vst.msk [vmem:[#allocation5 + $0x1f0] sm:$0xff] %vm2501, %v7036
    %v7133 = vrot.slane %v5777, 5
    %v7134 = vrot.slane %v7133, 4
    %v7135 = vrot.slane %v5778, 5
    %v7136 = vsel %vm2568, %v7134, %v7135
    %v7137 = vrot.slane %v7135, 4
    %v7138 = vrot.slane %v5779, 5
    %v7139 = vsel %vm2568, %v7137, %v7138
    %v7140 = vrot.slane %v5780, 5
    %v7141 = vrot.slane %v7140, 4
    %v7142 = vrot.slane %v5781, 5
    %v7143 = vsel %vm2568, %v7141, %v7142
    %v7144 = vrot.slane %v7142, 4
    %v7145 = vrot.slane %v5782, 5
    %v7146 = vsel %vm2568, %v7144, %v7145
    %v7147 = vrot.slane %v5783, 5
    %v7148 = vrot.slane %v7147, 4
    %v7149 = vrot.slane %v5784, 5
    %v7150 = vsel %vm2568, %v7148, %v7149
    %v7151 = vrot.slane %v7149, 4
    %v7152 = vrot.slane %v5785, 5
    %v7153 = vsel %vm2568, %v7151, %v7152
    %v7154 = vrot.slane %v5786, 5
    %v7155 = vrot.slane %v7154, 4
    %v7156 = vrot.slane %v5787, 5
    %v7157 = vsel %vm2568, %v7155, %v7156
    %v7158 = vrot.slane %v7156, 4
    %v7159 = vrot.slane %v5788, 5
    %v7160 = vsel %vm2568, %v7158, %v7159
    %v7161 = vrot.slane %v5789, 5
    %v7162 = vrot.slane %v7161, 4
    %v7163 = vrot.slane %v5790, 5
    %v7164 = vsel %vm2568, %v7162, %v7163
    %v7165 = vrot.slane %v7163, 4
    %v7166 = vrot.slane %v5791, 5
    %v7167 = vsel %vm2568, %v7165, %v7166
    %v7168 = vrot.slane %v5792, 5
    %v7169 = vrot.slane %v7168, 4
    %v7170 = vrot.slane %v5793, 5
    %v7171 = vsel %vm2568, %v7169, %v7170
    %v7172 = vrot.slane %v7170, 4
    %v7173 = vrot.slane %v5794, 5
    %v7174 = vsel %vm2568, %v7172, %v7173
    %v7175 = vrot.slane %v5795, 5
    %v7176 = vrot.slane %v7175, 4
    %v7177 = vrot.slane %v5796, 5
    %v7178 = vsel %vm2568, %v7176, %v7177
    %v7179 = vrot.slane %v7177, 4
    %v7180 = vrot.slane %v5797, 5
    %v7181 = vsel %vm2568, %v7179, %v7180
    %v7182 = vrot.slane %v5798, 5
    %v7183 = vrot.slane %v7182, 4
    %v7184 = vrot.slane %v5799, 5
    %v7185 = vsel %vm2568, %v7183, %v7184
    %v7186 = vrot.slane %v7184, 4
    %v7187 = vrot.slane %v5800, 5
    %v7188 = vsel %vm2568, %v7186, %v7187
    %v7189 = vrot.slane %v5801, 5
    %v7190 = vrot.slane %v7189, 4
    %v7191 = vrot.slane %v5802, 5
    %v7192 = vsel %vm2568, %v7190, %v7191
    %v7193 = vrot.slane %v7191, 4
    %v7194 = vrot.slane %v5803, 5
    %v7195 = vsel %vm2568, %v7193, %v7194
    %v7196 = vrot.slane %v5804, 5
    %v7197 = vrot.slane %v7196, 4
    %v7198 = vrot.slane %v5805, 5
    %v7199 = vsel %vm2568, %v7197, %v7198
    %v7200 = vrot.slane %v7198, 4
    %v7201 = vrot.slane %v5806, 5
    %v7202 = vsel %vm2568, %v7200, %v7201
    %v7203 = vrot.slane %v5807, 5
    %v7204 = vrot.slane %v7203, 4
    %v7205 = vrot.slane %v5808, 5
    %v7206 = vsel %vm2568, %v7204, %v7205
    %v7207 = vrot.slane %v7205, 4
    %v7208 = vrot.slane %v5809, 5
    %v7209 = vsel %vm2568, %v7207, %v7208
    %v7210 = vrot.slane %v5810, 5
    %v7211 = vrot.slane %v7210, 4
    %v7212 = vrot.slane %v5811, 5
    %v7213 = vsel %vm2568, %v7211, %v7212
    %v7214 = vrot.slane %v7212, 4
    %v7215 = vrot.slane %v5812, 5
    %v7216 = vsel %vm2568, %v7214, %v7215
    %v7217 = vrot.slane %v5813, 5
    %v7218 = vrot.slane %v7217, 4
    %v7219 = vrot.slane %v5814, 5
    %v7220 = vsel %vm2568, %v7218, %v7219
    %v7221 = vrot.slane %v7219, 4
    %v7222 = vrot.slane %v5815, 5
    %v7223 = vsel %vm2568, %v7221, %v7222
    %v7224 = vrot.slane %v5816, 5
    %v7225 = vrot.slane %v7224, 4
    %v7226 = vrot.slane %v5817, 5
    %v7227 = vsel %vm2568, %v7225, %v7226
    %v7228 = vrot.slane %v7226, 4
    %v7229 = vrot.slane %v5818, 5
    %v7230 = vsel %vm2568, %v7228, %v7229
    %v7231 = vrot.slane %v5819, 5
    %v7232 = vrot.slane %v7231, 4
    %v7233 = vrot.slane %v5820, 5
    %v7234 = vsel %vm2568, %v7232, %v7233
    %v7235 = vrot.slane %v7233, 4
    %v7236 = vrot.slane %v5821, 5
    %v7237 = vsel %vm2568, %v7235, %v7236
    %v7238 = vrot.slane %v5822, 5
    %v7239 = vrot.slane %v7238, 4
    %v7240 = vrot.slane %v5823, 5
    %v7241 = vsel %vm2568, %v7239, %v7240
    %v7242 = vrot.slane %v7240, 4
    %v7243 = vrot.slane %v5824, 5
    %v7244 = vsel %vm2568, %v7242, %v7243
    %v7245 = vrot.slane %v5831, 5
    %v7246 = vrot.slane %v7245, 4
    %v7247 = vrot.slane %v5832, 5
    %v7248 = vsel %vm2568, %v7246, %v7247
    %v7249 = vrot.slane %v7247, 4
    %v7250 = vrot.slane %v5833, 5
    %v7251 = vsel %vm2568, %v7249, %v7250
    %v7252 = vrot.slane %v5834, 5
    %v7253 = vrot.slane %v7252, 4
    %v7254 = vrot.slane %v5835, 5
    %v7255 = vsel %vm2568, %v7253, %v7254
    %v7256 = vrot.slane %v7254, 4
    %v7257 = vrot.slane %v5836, 5
    %v7258 = vsel %vm2568, %v7256, %v7257
    %v7259 = vrot.slane %v5837, 5
    %v7260 = vrot.slane %v7259, 4
    %v7261 = vrot.slane %v5838, 5
    %v7262 = vsel %vm2568, %v7260, %v7261
    %v7263 = vrot.slane %v7261, 4
    %v7264 = vrot.slane %v5839, 5
    %v7265 = vsel %vm2568, %v7263, %v7264
    %v7266 = vrot.slane %v5840, 5
    %v7267 = vrot.slane %v7266, 4
    %v7268 = vrot.slane %v5841, 5
    %v7269 = vsel %vm2568, %v7267, %v7268
    %v7270 = vrot.slane %v7268, 4
    %v7271 = vrot.slane %v5842, 5
    %v7272 = vsel %vm2568, %v7270, %v7271
    %v7273 = vrot.slane %v5843, 5
    %v7274 = vrot.slane %v7273, 4
    %v7275 = vrot.slane %v5844, 5
    %v7276 = vsel %vm2568, %v7274, %v7275
    %v7277 = vrot.slane %v7275, 4
    %v7278 = vrot.slane %v5845, 5
    %v7279 = vsel %vm2568, %v7277, %v7278
    %v7280 = vrot.slane %v5846, 5
    %v7281 = vrot.slane %v7280, 4
    %v7282 = vrot.slane %v5847, 5
    %v7283 = vsel %vm2568, %v7281, %v7282
    %v7284 = vrot.slane %v7282, 4
    %v7285 = vrot.slane %v5848, 5
    %v7286 = vsel %vm2568, %v7284, %v7285
    %v7287 = vrot.slane %v5849, 5
    %v7288 = vrot.slane %v7287, 4
    %v7289 = vrot.slane %v5850, 5
    %v7290 = vsel %vm2568, %v7288, %v7289
    %v7291 = vrot.slane %v7289, 4
    %v7292 = vrot.slane %v5851, 5
    %v7293 = vsel %vm2568, %v7291, %v7292
    %v7294 = vrot.slane %v5852, 5
    %v7295 = vrot.slane %v7294, 4
    %v7296 = vrot.slane %v5853, 5
    %v7297 = vsel %vm2568, %v7295, %v7296
    %v7298 = vrot.slane %v7296, 4
    %v7299 = vrot.slane %v5854, 5
    %v7300 = vsel %vm2568, %v7298, %v7299
    %v7301 = vrot.slane %v5855, 5
    %v7302 = vrot.slane %v7301, 4
    %v7303 = vrot.slane %v5856, 5
    %v7304 = vsel %vm2568, %v7302, %v7303
    %v7305 = vrot.slane %v7303, 4
    %v7306 = vrot.slane %v5857, 5
    %v7307 = vsel %vm2568, %v7305, %v7306
    %v7308 = vrot.slane %v5858, 5
    %v7309 = vrot.slane %v7308, 4
    %v7310 = vrot.slane %v5859, 5
    %v7311 = vsel %vm2568, %v7309, %v7310
    %v7312 = vrot.slane %v7310, 4
    %v7313 = vrot.slane %v5860, 5
    %v7314 = vsel %vm2568, %v7312, %v7313
    %v7315 = vrot.slane %v5861, 5
    %v7316 = vrot.slane %v7315, 4
    %v7317 = vrot.slane %v5862, 5
    %v7318 = vsel %vm2568, %v7316, %v7317
    %v7319 = vrot.slane %v7317, 4
    %v7320 = vrot.slane %v5863, 5
    %v7321 = vsel %vm2568, %v7319, %v7320
    %v7322 = vrot.slane %v5864, 5
    %v7323 = vrot.slane %v7322, 4
    %v7324 = vrot.slane %v5865, 5
    %v7325 = vsel %vm2568, %v7323, %v7324
    %v7326 = vrot.slane %v7324, 4
    %v7327 = vrot.slane %v5866, 5
    %v7328 = vsel %vm2568, %v7326, %v7327
    %v7329 = vrot.slane %v5867, 5
    %v7330 = vrot.slane %v7329, 4
    %v7331 = vrot.slane %v5868, 5
    %v7332 = vsel %vm2568, %v7330, %v7331
    %v7333 = vrot.slane %v7331, 4
    %v7334 = vrot.slane %v5869, 5
    %v7335 = vsel %vm2568, %v7333, %v7334
    %v7336 = vrot.slane %v5870, 5
    %v7337 = vrot.slane %v7336, 4
    %v7338 = vrot.slane %v5871, 5
    %v7339 = vsel %vm2568, %v7337, %v7338
    %v7340 = vrot.slane %v7338, 4
    %v7341 = vrot.slane %v5872, 5
    %v7342 = vsel %vm2568, %v7340, %v7341
    %v7343 = vrot.slane %v5873, 5
    %v7344 = vrot.slane %v7343, 4
    %v7345 = vrot.slane %v5874, 5
    %v7346 = vsel %vm2568, %v7344, %v7345
    %v7347 = vrot.slane %v7345, 4
    %v7348 = vrot.slane %v5875, 5
    %v7349 = vsel %vm2568, %v7347, %v7348
    %v7350 = vrot.slane %v5876, 5
    %v7351 = vrot.slane %v7350, 4
    %v7352 = vrot.slane %v5877, 5
    %v7353 = vsel %vm2568, %v7351, %v7352
    %v7354 = vrot.slane %v7352, 4
    %v7355 = vrot.slane %v5878, 5
    %v7356 = vsel %vm2568, %v7354, %v7355
    %v7357 = vunpack.c.l.b16 %v7136
    %v7358 = vunpack.c.l.b16 %v7139
    %v7359 = vunpack.c.l.b16 %v7143
    %v7360 = vunpack.c.l.b16 %v7146
    %v7361 = vunpack.c.l.b16 %v7150
    %v7362 = vunpack.c.l.b16 %v7153
    %v7363 = vunpack.c.l.b16 %v7157
    %v7364 = vunpack.c.l.b16 %v7160
    %v7365 = vunpack.c.l.b16 %v7164
    %v7366 = vunpack.c.l.b16 %v7167
    %v7367 = vunpack.c.l.b16 %v7171
    %v7368 = vunpack.c.l.b16 %v7174
    %v7369 = vunpack.c.l.b16 %v7178
    %v7370 = vunpack.c.l.b16 %v7181
    %v7371 = vunpack.c.l.b16 %v7185
    %v7372 = vunpack.c.l.b16 %v7188
    %v7373 = vunpack.c.l.b16 %v7192
    %v7374 = vunpack.c.l.b16 %v7195
    %v7375 = vunpack.c.l.b16 %v7199
    %v7376 = vunpack.c.l.b16 %v7202
    %v7377 = vunpack.c.l.b16 %v7206
    %v7378 = vunpack.c.l.b16 %v7209
    %v7379 = vunpack.c.l.b16 %v7213
    %v7380 = vunpack.c.l.b16 %v7216
    %v7381 = vunpack.c.l.b16 %v7220
    %v7382 = vunpack.c.l.b16 %v7223
    %v7383 = vunpack.c.l.b16 %v7227
    %v7384 = vunpack.c.l.b16 %v7230
    %v7385 = vunpack.c.l.b16 %v7234
    %v7386 = vunpack.c.l.b16 %v7237
    %v7387 = vunpack.c.l.b16 %v7241
    %v7388 = vunpack.c.l.b16 %v7244
    %v7389 = vunpack.c.l.b16 %v7248
    %v7390 = vunpack.c.l.b16 %v7251
    %v7391 = vunpack.c.l.b16 %v7255
    %v7392 = vunpack.c.l.b16 %v7258
    %v7393 = vunpack.c.l.b16 %v7262
    %v7394 = vunpack.c.l.b16 %v7265
    %v7395 = vunpack.c.l.b16 %v7269
    %v7396 = vunpack.c.l.b16 %v7272
    %v7397 = vunpack.c.l.b16 %v7276
    %v7398 = vunpack.c.l.b16 %v7279
    %v7399 = vunpack.c.l.b16 %v7283
    %v7400 = vunpack.c.l.b16 %v7286
    %v7401 = vunpack.c.l.b16 %v7290
    %v7402 = vunpack.c.l.b16 %v7293
    %v7403 = vunpack.c.l.b16 %v7297
    %v7404 = vunpack.c.l.b16 %v7300
    %v7405 = vunpack.c.l.b16 %v7304
    %v7406 = vunpack.c.l.b16 %v7307
    %v7407 = vunpack.c.l.b16 %v7311
    %v7408 = vunpack.c.l.b16 %v7314
    %v7409 = vunpack.c.l.b16 %v7318
    %v7410 = vunpack.c.l.b16 %v7321
    %v7411 = vunpack.c.l.b16 %v7325
    %v7412 = vunpack.c.l.b16 %v7328
    %v7413 = vunpack.c.l.b16 %v7332
    %v7414 = vunpack.c.l.b16 %v7335
    %v7415 = vunpack.c.l.b16 %v7339
    %v7416 = vunpack.c.l.b16 %v7342
    %v7417 = vunpack.c.l.b16 %v7346
    %v7418 = vunpack.c.l.b16 %v7349
    %v7419 = vunpack.c.l.b16 %v7353
    %v7420 = vunpack.c.l.b16 %v7356
    %v7421 = vpack.c.b16 %v7358, %v7357
    %v7422 = vpack.c.b16 %v7360, %v7359
    %v7423 = vpack.c.b16 %v7362, %v7361
    %v7424 = vpack.c.b16 %v7364, %v7363
    %v7425 = vpack.c.b16 %v7366, %v7365
    %v7426 = vpack.c.b16 %v7368, %v7367
    %v7427 = vpack.c.b16 %v7370, %v7369
    %v7428 = vpack.c.b16 %v7372, %v7371
    %v7429 = vpack.c.b16 %v7374, %v7373
    %v7430 = vpack.c.b16 %v7376, %v7375
    %v7431 = vpack.c.b16 %v7378, %v7377
    %v7432 = vpack.c.b16 %v7380, %v7379
    %v7433 = vpack.c.b16 %v7382, %v7381
    %v7434 = vpack.c.b16 %v7384, %v7383
    %v7435 = vpack.c.b16 %v7386, %v7385
    %v7436 = vpack.c.b16 %v7388, %v7387
    %v7437 = vpack.c.b16 %v7390, %v7389
    %v7438 = vpack.c.b16 %v7392, %v7391
    %v7439 = vpack.c.b16 %v7394, %v7393
    %v7440 = vpack.c.b16 %v7396, %v7395
    %v7441 = vpack.c.b16 %v7398, %v7397
    %v7442 = vpack.c.b16 %v7400, %v7399
    %v7443 = vpack.c.b16 %v7402, %v7401
    %v7444 = vpack.c.b16 %v7404, %v7403
    %v7445 = vpack.c.b16 %v7406, %v7405
    %v7446 = vpack.c.b16 %v7408, %v7407
    %v7447 = vpack.c.b16 %v7410, %v7409
    %v7448 = vpack.c.b16 %v7412, %v7411
    %v7449 = vpack.c.b16 %v7414, %v7413
    %v7450 = vpack.c.b16 %v7416, %v7415
    %v7451 = vpack.c.b16 %v7418, %v7417
    %v7452 = vpack.c.b16 %v7420, %v7419
    %7453 = vrot.lane.b32.xlu0 %v7421, 32
    %v7454 = vpop.permute.xlu0 %7453
    %7455 = vrot.lane.b32.xlu0 %v7422, 32
    %v7456 = vpop.permute.xlu0 %7455
    %7457 = vrot.lane.b32.xlu0 %v7423, 32
    %v7458 = vpop.permute.xlu0 %7457
    %7459 = vrot.lane.b32.xlu0 %v7424, 32
    %v7460 = vpop.permute.xlu0 %7459
    %7461 = vrot.lane.b32.xlu0 %v7425, 32
    %v7462 = vpop.permute.xlu0 %7461
    %7463 = vrot.lane.b32.xlu0 %v7426, 32
    %v7464 = vpop.permute.xlu0 %7463
    %7465 = vrot.lane.b32.xlu0 %v7427, 32
    %v7466 = vpop.permute.xlu0 %7465
    %7467 = vrot.lane.b32.xlu0 %v7428, 32
    %v7468 = vpop.permute.xlu0 %7467
    %7469 = vrot.lane.b32.xlu0 %v7429, 32
    %v7470 = vpop.permute.xlu0 %7469
    %7471 = vrot.lane.b32.xlu0 %v7430, 32
    %v7472 = vpop.permute.xlu0 %7471
    %7473 = vrot.lane.b32.xlu0 %v7431, 32
    %v7474 = vpop.permute.xlu0 %7473
    %7475 = vrot.lane.b32.xlu0 %v7432, 32
    %v7476 = vpop.permute.xlu0 %7475
    %7477 = vrot.lane.b32.xlu0 %v7433, 32
    %v7478 = vpop.permute.xlu0 %7477
    %7479 = vrot.lane.b32.xlu0 %v7434, 32
    %v7480 = vpop.permute.xlu0 %7479
    %7481 = vrot.lane.b32.xlu0 %v7435, 32
    %v7482 = vpop.permute.xlu0 %7481
    %7483 = vrot.lane.b32.xlu0 %v7436, 32
    %v7484 = vpop.permute.xlu0 %7483
    %7485 = vrot.lane.b32.xlu0 %v7437, 32
    %v7486 = vpop.permute.xlu0 %7485
    %7487 = vrot.lane.b32.xlu0 %v7438, 32
    %v7488 = vpop.permute.xlu0 %7487
    %7489 = vrot.lane.b32.xlu0 %v7439, 32
    %v7490 = vpop.permute.xlu0 %7489
    %7491 = vrot.lane.b32.xlu0 %v7440, 32
    %v7492 = vpop.permute.xlu0 %7491
    %7493 = vrot.lane.b32.xlu0 %v7441, 32
    %v7494 = vpop.permute.xlu0 %7493
    %7495 = vrot.lane.b32.xlu0 %v7442, 32
    %v7496 = vpop.permute.xlu0 %7495
    %7497 = vrot.lane.b32.xlu0 %v7443, 32
    %v7498 = vpop.permute.xlu0 %7497
    %7499 = vrot.lane.b32.xlu0 %v7444, 32
    %v7500 = vpop.permute.xlu0 %7499
    %7501 = vrot.lane.b32.xlu0 %v7445, 32
    %v7502 = vpop.permute.xlu0 %7501
    %7503 = vrot.lane.b32.xlu0 %v7446, 32
    %v7504 = vpop.permute.xlu0 %7503
    %7505 = vrot.lane.b32.xlu0 %v7447, 32
    %v7506 = vpop.permute.xlu0 %7505
    %7507 = vrot.lane.b32.xlu0 %v7448, 32
    %v7508 = vpop.permute.xlu0 %7507
    %7509 = vrot.lane.b32.xlu0 %v7449, 32
    %v7510 = vpop.permute.xlu0 %7509
    %7511 = vrot.lane.b32.xlu0 %v7450, 32
    %v7512 = vpop.permute.xlu0 %7511
    %7513 = vrot.lane.b32.xlu0 %v7451, 32
    %v7514 = vpop.permute.xlu0 %7513
    %7515 = vrot.lane.b32.xlu0 %v7452, 32
    %v7516 = vpop.permute.xlu0 %7515
    %7549 = vst.msk [vmem:[#allocation5] sm:$0xff] %vm2985, %v7454
    %7550 = vst.msk [vmem:[#allocation5 + $0x10] sm:$0xff] %vm2985, %v7456
    %7551 = vst.msk [vmem:[#allocation5 + $0x20] sm:$0xff] %vm2985, %v7458
    %7552 = vst.msk [vmem:[#allocation5 + $0x30] sm:$0xff] %vm2985, %v7460
    %7553 = vst.msk [vmem:[#allocation5 + $0x40] sm:$0xff] %vm2985, %v7462
    %7554 = vst.msk [vmem:[#allocation5 + $0x50] sm:$0xff] %vm2985, %v7464
    %7555 = vst.msk [vmem:[#allocation5 + $0x60] sm:$0xff] %vm2985, %v7466
    %7556 = vst.msk [vmem:[#allocation5 + $0x70] sm:$0xff] %vm2985, %v7468
    %7557 = vst.msk [vmem:[#allocation5 + $0x80] sm:$0xff] %vm2985, %v7470
    %7558 = vst.msk [vmem:[#allocation5 + $0x90] sm:$0xff] %vm2985, %v7472
    %7559 = vst.msk [vmem:[#allocation5 + $0xa0] sm:$0xff] %vm2985, %v7474
    %7560 = vst.msk [vmem:[#allocation5 + $0xb0] sm:$0xff] %vm2985, %v7476
    %7561 = vst.msk [vmem:[#allocation5 + $0xc0] sm:$0xff] %vm2985, %v7478
    %7562 = vst.msk [vmem:[#allocation5 + $0xd0] sm:$0xff] %vm2985, %v7480
    %7563 = vst.msk [vmem:[#allocation5 + $0xe0] sm:$0xff] %vm2985, %v7482
    %7564 = vst.msk [vmem:[#allocation5 + $0xf0] sm:$0xff] %vm2985, %v7484
    %7565 = vst.msk [vmem:[#allocation5 + $0x100] sm:$0xff] %vm2985, %v7486
    %7566 = vst.msk [vmem:[#allocation5 + $0x110] sm:$0xff] %vm2985, %v7488
    %7567 = vst.msk [vmem:[#allocation5 + $0x120] sm:$0xff] %vm2985, %v7490
    %7568 = vst.msk [vmem:[#allocation5 + $0x130] sm:$0xff] %vm2985, %v7492
    %7569 = vst.msk [vmem:[#allocation5 + $0x140] sm:$0xff] %vm2985, %v7494
    %7570 = vst.msk [vmem:[#allocation5 + $0x150] sm:$0xff] %vm2985, %v7496
    %7571 = vst.msk [vmem:[#allocation5 + $0x160] sm:$0xff] %vm2985, %v7498
    %7572 = vst.msk [vmem:[#allocation5 + $0x170] sm:$0xff] %vm2985, %v7500
    %7573 = vst.msk [vmem:[#allocation5 + $0x180] sm:$0xff] %vm2985, %v7502
    %7574 = vst.msk [vmem:[#allocation5 + $0x190] sm:$0xff] %vm2985, %v7504
    %7575 = vst.msk [vmem:[#allocation5 + $0x1a0] sm:$0xff] %vm2985, %v7506
    %7576 = vst.msk [vmem:[#allocation5 + $0x1b0] sm:$0xff] %vm2985, %v7508
    %7577 = vst.msk [vmem:[#allocation5 + $0x1c0] sm:$0xff] %vm2985, %v7510
    %7578 = vst.msk [vmem:[#allocation5 + $0x1d0] sm:$0xff] %vm2985, %v7512
    %7579 = vst.msk [vmem:[#allocation5 + $0x1e0] sm:$0xff] %vm2985, %v7514
    %7580 = vst.msk [vmem:[#allocation5 + $0x1f0] sm:$0xff] %vm2985, %v7516
    %v7585 = vunpack.c.l.b16 %v5825
    %v7586 = vunpack.c.l.b16 %v5826
    %v7587 = vunpack.c.l.b16 %v5879
    %v7588 = vunpack.c.l.b16 %v5880
    %v7589 = vpack.c.b16 %v7586, %v7585
    %v7590 = vpack.c.b16 %v7588, %v7587
    %7591 = vrot.lane.b32.xlu0 %v6014, 48
    %v7592 = vpop.permute.xlu0 %7591
    %7593 = vrot.lane.b32.xlu0 %v6015, 48
    %v7594 = vpop.permute.xlu0 %7593
    %7595 = vrot.lane.b32.xlu0 %v6016, 48
    %v7596 = vpop.permute.xlu0 %7595
    %7597 = vrot.lane.b32.xlu0 %v6017, 48
    %v7598 = vpop.permute.xlu0 %7597
    %7599 = vrot.lane.b32.xlu0 %v6018, 48
    %v7600 = vpop.permute.xlu0 %7599
    %7601 = vrot.lane.b32.xlu0 %v6019, 48
    %v7602 = vpop.permute.xlu0 %7601
    %7603 = vrot.lane.b32.xlu0 %v6020, 48
    %v7604 = vpop.permute.xlu0 %7603
    %7605 = vrot.lane.b32.xlu0 %v6021, 48
    %v7606 = vpop.permute.xlu0 %7605
    %7607 = vrot.lane.b32.xlu0 %v6022, 48
    %v7608 = vpop.permute.xlu0 %7607
    %7609 = vrot.lane.b32.xlu0 %v6023, 48
    %v7610 = vpop.permute.xlu0 %7609
    %7611 = vrot.lane.b32.xlu0 %v6024, 48
    %v7612 = vpop.permute.xlu0 %7611
    %7613 = vrot.lane.b32.xlu0 %v6025, 48
    %v7614 = vpop.permute.xlu0 %7613
    %7615 = vrot.lane.b32.xlu0 %v6026, 48
    %v7616 = vpop.permute.xlu0 %7615
    %7617 = vrot.lane.b32.xlu0 %v6027, 48
    %v7618 = vpop.permute.xlu0 %7617
    %7619 = vrot.lane.b32.xlu0 %v6028, 48
    %v7620 = vpop.permute.xlu0 %7619
    %7621 = vrot.lane.b32.xlu0 %v7589, 48
    %v7622 = vpop.permute.xlu0 %7621
    %7623 = vrot.lane.b32.xlu0 %v6030, 48
    %v7624 = vpop.permute.xlu0 %7623
    %7625 = vrot.lane.b32.xlu0 %v6031, 48
    %v7626 = vpop.permute.xlu0 %7625
    %7627 = vrot.lane.b32.xlu0 %v6032, 48
    %v7628 = vpop.permute.xlu0 %7627
    %7629 = vrot.lane.b32.xlu0 %v6033, 48
    %v7630 = vpop.permute.xlu0 %7629
    %7631 = vrot.lane.b32.xlu0 %v6034, 48
    %v7632 = vpop.permute.xlu0 %7631
    %7633 = vrot.lane.b32.xlu0 %v6035, 48
    %v7634 = vpop.permute.xlu0 %7633
    %7635 = vrot.lane.b32.xlu0 %v6036, 48
    %v7636 = vpop.permute.xlu0 %7635
    %7637 = vrot.lane.b32.xlu0 %v6037, 48
    %v7638 = vpop.permute.xlu0 %7637
    %7639 = vrot.lane.b32.xlu0 %v6038, 48
    %v7640 = vpop.permute.xlu0 %7639
    %7641 = vrot.lane.b32.xlu0 %v6039, 48
    %v7642 = vpop.permute.xlu0 %7641
    %7643 = vrot.lane.b32.xlu0 %v6040, 48
    %v7644 = vpop.permute.xlu0 %7643
    %7645 = vrot.lane.b32.xlu0 %v6041, 48
    %v7646 = vpop.permute.xlu0 %7645
    %7647 = vrot.lane.b32.xlu0 %v6042, 48
    %v7648 = vpop.permute.xlu0 %7647
    %7649 = vrot.lane.b32.xlu0 %v6043, 48
    %v7650 = vpop.permute.xlu0 %7649
    %7651 = vrot.lane.b32.xlu0 %v6044, 48
    %v7652 = vpop.permute.xlu0 %7651
    %7653 = vrot.lane.b32.xlu0 %v7590, 48
    %v7654 = vpop.permute.xlu0 %7653
    %7687 = vst.msk [vmem:[#allocation5] sm:$0xff] %vm3124, %v7592
    %7688 = vst.msk [vmem:[#allocation5 + $0x10] sm:$0xff] %vm3124, %v7594
    %7689 = vst.msk [vmem:[#allocation5 + $0x20] sm:$0xff] %vm3124, %v7596
    %7690 = vst.msk [vmem:[#allocation5 + $0x30] sm:$0xff] %vm3124, %v7598
    %7691 = vst.msk [vmem:[#allocation5 + $0x40] sm:$0xff] %vm3124, %v7600
    %7692 = vst.msk [vmem:[#allocation5 + $0x50] sm:$0xff] %vm3124, %v7602
    %7693 = vst.msk [vmem:[#allocation5 + $0x60] sm:$0xff] %vm3124, %v7604
    %7694 = vst.msk [vmem:[#allocation5 + $0x70] sm:$0xff] %vm3124, %v7606
    %7695 = vst.msk [vmem:[#allocation5 + $0x80] sm:$0xff] %vm3124, %v7608
    %7696 = vst.msk [vmem:[#allocation5 + $0x90] sm:$0xff] %vm3124, %v7610
    %7697 = vst.msk [vmem:[#allocation5 + $0xa0] sm:$0xff] %vm3124, %v7612
    %7698 = vst.msk [vmem:[#allocation5 + $0xb0] sm:$0xff] %vm3124, %v7614
    %7699 = vst.msk [vmem:[#allocation5 + $0xc0] sm:$0xff] %vm3124, %v7616
    %7700 = vst.msk [vmem:[#allocation5 + $0xd0] sm:$0xff] %vm3124, %v7618
    %7701 = vst.msk [vmem:[#allocation5 + $0xe0] sm:$0xff] %vm3124, %v7620
    %7702 = vst.msk [vmem:[#allocation5 + $0xf0] sm:$0xff] %vm3124, %v7622
    %7703 = vst.msk [vmem:[#allocation5 + $0x100] sm:$0xff] %vm3124, %v7624
    %7704 = vst.msk [vmem:[#allocation5 + $0x110] sm:$0xff] %vm3124, %v7626
    %7705 = vst.msk [vmem:[#allocation5 + $0x120] sm:$0xff] %vm3124, %v7628
    %7706 = vst.msk [vmem:[#allocation5 + $0x130] sm:$0xff] %vm3124, %v7630
    %7707 = vst.msk [vmem:[#allocation5 + $0x140] sm:$0xff] %vm3124, %v7632
    %7708 = vst.msk [vmem:[#allocation5 + $0x150] sm:$0xff] %vm3124, %v7634
    %7709 = vst.msk [vmem:[#allocation5 + $0x160] sm:$0xff] %vm3124, %v7636
    %7710 = vst.msk [vmem:[#allocation5 + $0x170] sm:$0xff] %vm3124, %v7638
    %7711 = vst.msk [vmem:[#allocation5 + $0x180] sm:$0xff] %vm3124, %v7640
    %7712 = vst.msk [vmem:[#allocation5 + $0x190] sm:$0xff] %vm3124, %v7642
    %7713 = vst.msk [vmem:[#allocation5 + $0x1a0] sm:$0xff] %vm3124, %v7644
    %7714 = vst.msk [vmem:[#allocation5 + $0x1b0] sm:$0xff] %vm3124, %v7646
    %7715 = vst.msk [vmem:[#allocation5 + $0x1c0] sm:$0xff] %vm3124, %v7648
    %7716 = vst.msk [vmem:[#allocation5 + $0x1d0] sm:$0xff] %vm3124, %v7650
    %7717 = vst.msk [vmem:[#allocation5 + $0x1e0] sm:$0xff] %vm3124, %v7652
    %7718 = vst.msk [vmem:[#allocation5 + $0x1f0] sm:$0xff] %vm3124, %v7654
    %v7720 = vshrl.u32 %v5825, 16
    %v7722 = vrot.slane %v7720, 4
    %v7723 = vshll.u32 %v5825, 16
    %v7725 = vrot.slane %v7723, 5
    %v7726 = vor.u32 %v7722, %v7725
    %v7727 = vrot.slane %v7726, 4
    %v7729 = vshll.u32 %v5826, 16
    %v7731 = vrot.slane %v7729, 5
    %v7732 = vsel %vm1540, %v7727, %v7731
    %v7733 = vshrl.u32 %v5826, 16
    %v7735 = vrot.slane %v7733, 4
    %v7736 = vor.u32 %v7735, %v7731
    %v7737 = vrot.slane %v7736, 4
    %v7739 = vshll.u32 %v5827, 16
    %v7741 = vrot.slane %v7739, 5
    %v7742 = vsel %vm1540, %v7737, %v7741
    %v7744 = vshrl.u32 %v5879, 16
    %v7746 = vrot.slane %v7744, 4
    %v7747 = vshll.u32 %v5879, 16
    %v7749 = vrot.slane %v7747, 5
    %v7750 = vor.u32 %v7746, %v7749
    %v7751 = vrot.slane %v7750, 4
    %v7753 = vshll.u32 %v5880, 16
    %v7755 = vrot.slane %v7753, 5
    %v7756 = vsel %vm1540, %v7751, %v7755
    %v7757 = vshrl.u32 %v5880, 16
    %v7759 = vrot.slane %v7757, 4
    %v7760 = vor.u32 %v7759, %v7755
    %v7761 = vrot.slane %v7760, 4
    %v7763 = vshll.u32 %v5881, 16
    %v7765 = vrot.slane %v7763, 5
    %v7766 = vsel %vm1540, %v7761, %v7765
    %v7767 = vunpack.c.l.b16 %v7732
    %v7768 = vunpack.c.l.b16 %v7742
    %v7769 = vunpack.c.l.b16 %v7756
    %v7770 = vunpack.c.l.b16 %v7766
    %v7771 = vpack.c.b16 %v7768, %v7767
    %v7772 = vpack.c.b16 %v7770, %v7769
    %7773 = vrot.lane.b32.xlu0 %v6942, 64
    %v7774 = vpop.permute.xlu0 %7773
    %7775 = vrot.lane.b32.xlu0 %v6943, 64
    %v7776 = vpop.permute.xlu0 %7775
    %7777 = vrot.lane.b32.xlu0 %v6944, 64
    %v7778 = vpop.permute.xlu0 %7777
    %7779 = vrot.lane.b32.xlu0 %v6945, 64
    %v7780 = vpop.permute.xlu0 %7779
    %7781 = vrot.lane.b32.xlu0 %v6946, 64
    %v7782 = vpop.permute.xlu0 %7781
    %7783 = vrot.lane.b32.xlu0 %v6947, 64
    %v7784 = vpop.permute.xlu0 %7783
    %7785 = vrot.lane.b32.xlu0 %v6948, 64
    %v7786 = vpop.permute.xlu0 %7785
    %7787 = vrot.lane.b32.xlu0 %v6949, 64
    %v7788 = vpop.permute.xlu0 %7787
    %7789 = vrot.lane.b32.xlu0 %v6950, 64
    %v7790 = vpop.permute.xlu0 %7789
    %7791 = vrot.lane.b32.xlu0 %v6951, 64
    %v7792 = vpop.permute.xlu0 %7791
    %7793 = vrot.lane.b32.xlu0 %v6952, 64
    %v7794 = vpop.permute.xlu0 %7793
    %7795 = vrot.lane.b32.xlu0 %v6953, 64
    %v7796 = vpop.permute.xlu0 %7795
    %7797 = vrot.lane.b32.xlu0 %v6954, 64
    %v7798 = vpop.permute.xlu0 %7797
    %7799 = vrot.lane.b32.xlu0 %v6955, 64
    %v7800 = vpop.permute.xlu0 %7799
    %7801 = vrot.lane.b32.xlu0 %v6956, 64
    %v7802 = vpop.permute.xlu0 %7801
    %7803 = vrot.lane.b32.xlu0 %v7771, 64
    %v7804 = vpop.permute.xlu0 %7803
    %7805 = vrot.lane.b32.xlu0 %v6958, 64
    %v7806 = vpop.permute.xlu0 %7805
    %7807 = vrot.lane.b32.xlu0 %v6959, 64
    %v7808 = vpop.permute.xlu0 %7807
    %7809 = vrot.lane.b32.xlu0 %v6960, 64
    %v7810 = vpop.permute.xlu0 %7809
    %7811 = vrot.lane.b32.xlu0 %v6961, 64
    %v7812 = vpop.permute.xlu0 %7811
    %7813 = vrot.lane.b32.xlu0 %v6962, 64
    %v7814 = vpop.permute.xlu0 %7813
    %7815 = vrot.lane.b32.xlu0 %v6963, 64
    %v7816 = vpop.permute.xlu0 %7815
    %7817 = vrot.lane.b32.xlu0 %v6964, 64
    %v7818 = vpop.permute.xlu0 %7817
    %7819 = vrot.lane.b32.xlu0 %v6965, 64
    %v7820 = vpop.permute.xlu0 %7819
    %7821 = vrot.lane.b32.xlu0 %v6966, 64
    %v7822 = vpop.permute.xlu0 %7821
    %7823 = vrot.lane.b32.xlu0 %v6967, 64
    %v7824 = vpop.permute.xlu0 %7823
    %7825 = vrot.lane.b32.xlu0 %v6968, 64
    %v7826 = vpop.permute.xlu0 %7825
    %7827 = vrot.lane.b32.xlu0 %v6969, 64
    %v7828 = vpop.permute.xlu0 %7827
    %7829 = vrot.lane.b32.xlu0 %v6970, 64
    %v7830 = vpop.permute.xlu0 %7829
    %7831 = vrot.lane.b32.xlu0 %v6971, 64
    %v7832 = vpop.permute.xlu0 %7831
    %7833 = vrot.lane.b32.xlu0 %v6972, 64
    %v7834 = vpop.permute.xlu0 %7833
    %7835 = vrot.lane.b32.xlu0 %v7772, 64
    %v7836 = vpop.permute.xlu0 %7835
    %7869 = vst.msk [vmem:[#allocation5] sm:$0xff] %vm3307, %v7774
    %7870 = vst.msk [vmem:[#allocation5 + $0x10] sm:$0xff] %vm3307, %v7776
    %7871 = vst.msk [vmem:[#allocation5 + $0x20] sm:$0xff] %vm3307, %v7778
    %7872 = vst.msk [vmem:[#allocation5 + $0x30] sm:$0xff] %vm3307, %v7780
    %7873 = vst.msk [vmem:[#allocation5 + $0x40] sm:$0xff] %vm3307, %v7782
    %7874 = vst.msk [vmem:[#allocation5 + $0x50] sm:$0xff] %vm3307, %v7784
    %7875 = vst.msk [vmem:[#allocation5 + $0x60] sm:$0xff] %vm3307, %v7786
    %7876 = vst.msk [vmem:[#allocation5 + $0x70] sm:$0xff] %vm3307, %v7788
    %7877 = vst.msk [vmem:[#allocation5 + $0x80] sm:$0xff] %vm3307, %v7790
    %7878 = vst.msk [vmem:[#allocation5 + $0x90] sm:$0xff] %vm3307, %v7792
    %7879 = vst.msk [vmem:[#allocation5 + $0xa0] sm:$0xff] %vm3307, %v7794
    %7880 = vst.msk [vmem:[#allocation5 + $0xb0] sm:$0xff] %vm3307, %v7796
    %7881 = vst.msk [vmem:[#allocation5 + $0xc0] sm:$0xff] %vm3307, %v7798
    %7882 = vst.msk [vmem:[#allocation5 + $0xd0] sm:$0xff] %vm3307, %v7800
    %7883 = vst.msk [vmem:[#allocation5 + $0xe0] sm:$0xff] %vm3307, %v7802
    %7884 = vst.msk [vmem:[#allocation5 + $0xf0] sm:$0xff] %vm3307, %v7804
    %7885 = vst.msk [vmem:[#allocation5 + $0x100] sm:$0xff] %vm3307, %v7806
    %7886 = vst.msk [vmem:[#allocation5 + $0x110] sm:$0xff] %vm3307, %v7808
    %7887 = vst.msk [vmem:[#allocation5 + $0x120] sm:$0xff] %vm3307, %v7810
    %7888 = vst.msk [vmem:[#allocation5 + $0x130] sm:$0xff] %vm3307, %v7812
    %7889 = vst.msk [vmem:[#allocation5 + $0x140] sm:$0xff] %vm3307, %v7814
    %7890 = vst.msk [vmem:[#allocation5 + $0x150] sm:$0xff] %vm3307, %v7816
    %7891 = vst.msk [vmem:[#allocation5 + $0x160] sm:$0xff] %vm3307, %v7818
    %7892 = vst.msk [vmem:[#allocation5 + $0x170] sm:$0xff] %vm3307, %v7820
    %7893 = vst.msk [vmem:[#allocation5 + $0x180] sm:$0xff] %vm3307, %v7822
    %7894 = vst.msk [vmem:[#allocation5 + $0x190] sm:$0xff] %vm3307, %v7824
    %7895 = vst.msk [vmem:[#allocation5 + $0x1a0] sm:$0xff] %vm3307, %v7826
    %7896 = vst.msk [vmem:[#allocation5 + $0x1b0] sm:$0xff] %vm3307, %v7828
    %7897 = vst.msk [vmem:[#allocation5 + $0x1c0] sm:$0xff] %vm3307, %v7830
    %7898 = vst.msk [vmem:[#allocation5 + $0x1d0] sm:$0xff] %vm3307, %v7832
    %7899 = vst.msk [vmem:[#allocation5 + $0x1e0] sm:$0xff] %vm3307, %v7834
    %7900 = vst.msk [vmem:[#allocation5 + $0x1f0] sm:$0xff] %vm3307, %v7836
    %v7903 = vrot.slane %v5825, 5
    %v7904 = vrot.slane %v7903, 4
    %v7905 = vrot.slane %v5826, 5
    %v7906 = vsel %vm2568, %v7904, %v7905
    %v7907 = vrot.slane %v7905, 4
    %v7908 = vrot.slane %v5827, 5
    %v7909 = vsel %vm2568, %v7907, %v7908
    %v7910 = vrot.slane %v5879, 5
    %v7911 = vrot.slane %v7910, 4
    %v7912 = vrot.slane %v5880, 5
    %v7913 = vsel %vm2568, %v7911, %v7912
    %v7914 = vrot.slane %v7912, 4
    %v7915 = vrot.slane %v5881, 5
    %v7916 = vsel %vm2568, %v7914, %v7915
    %v7917 = vunpack.c.l.b16 %v7906
    %v7918 = vunpack.c.l.b16 %v7909
    %v7919 = vunpack.c.l.b16 %v7913
    %v7920 = vunpack.c.l.b16 %v7916
    %v7921 = vpack.c.b16 %v7918, %v7917
    %v7922 = vpack.c.b16 %v7920, %v7919
    %7923 = vrot.lane.b32.xlu0 %v7422, 80
    %v7924 = vpop.permute.xlu0 %7923
    %7925 = vrot.lane.b32.xlu0 %v7423, 80
    %v7926 = vpop.permute.xlu0 %7925
    %7927 = vrot.lane.b32.xlu0 %v7424, 80
    %v7928 = vpop.permute.xlu0 %7927
    %7929 = vrot.lane.b32.xlu0 %v7425, 80
    %v7930 = vpop.permute.xlu0 %7929
    %7931 = vrot.lane.b32.xlu0 %v7426, 80
    %v7932 = vpop.permute.xlu0 %7931
    %7933 = vrot.lane.b32.xlu0 %v7427, 80
    %v7934 = vpop.permute.xlu0 %7933
    %7935 = vrot.lane.b32.xlu0 %v7428, 80
    %v7936 = vpop.permute.xlu0 %7935
    %7937 = vrot.lane.b32.xlu0 %v7429, 80
    %v7938 = vpop.permute.xlu0 %7937
    %7939 = vrot.lane.b32.xlu0 %v7430, 80
    %v7940 = vpop.permute.xlu0 %7939
    %7941 = vrot.lane.b32.xlu0 %v7431, 80
    %v7942 = vpop.permute.xlu0 %7941
    %7943 = vrot.lane.b32.xlu0 %v7432, 80
    %v7944 = vpop.permute.xlu0 %7943
    %7945 = vrot.lane.b32.xlu0 %v7433, 80
    %v7946 = vpop.permute.xlu0 %7945
    %7947 = vrot.lane.b32.xlu0 %v7434, 80
    %v7948 = vpop.permute.xlu0 %7947
    %7949 = vrot.lane.b32.xlu0 %v7435, 80
    %v7950 = vpop.permute.xlu0 %7949
    %7951 = vrot.lane.b32.xlu0 %v7436, 80
    %v7952 = vpop.permute.xlu0 %7951
    %7953 = vrot.lane.b32.xlu0 %v7921, 80
    %v7954 = vpop.permute.xlu0 %7953
    %7955 = vrot.lane.b32.xlu0 %v7438, 80
    %v7956 = vpop.permute.xlu0 %7955
    %7957 = vrot.lane.b32.xlu0 %v7439, 80
    %v7958 = vpop.permute.xlu0 %7957
    %7959 = vrot.lane.b32.xlu0 %v7440, 80
    %v7960 = vpop.permute.xlu0 %7959
    %7961 = vrot.lane.b32.xlu0 %v7441, 80
    %v7962 = vpop.permute.xlu0 %7961
    %7963 = vrot.lane.b32.xlu0 %v7442, 80
    %v7964 = vpop.permute.xlu0 %7963
    %7965 = vrot.lane.b32.xlu0 %v7443, 80
    %v7966 = vpop.permute.xlu0 %7965
    %7967 = vrot.lane.b32.xlu0 %v7444, 80
    %v7968 = vpop.permute.xlu0 %7967
    %7969 = vrot.lane.b32.xlu0 %v7445, 80
    %v7970 = vpop.permute.xlu0 %7969
    %7971 = vrot.lane.b32.xlu0 %v7446, 80
    %v7972 = vpop.permute.xlu0 %7971
    %7973 = vrot.lane.b32.xlu0 %v7447, 80
    %v7974 = vpop.permute.xlu0 %7973
    %7975 = vrot.lane.b32.xlu0 %v7448, 80
    %v7976 = vpop.permute.xlu0 %7975
    %7977 = vrot.lane.b32.xlu0 %v7449, 80
    %v7978 = vpop.permute.xlu0 %7977
    %7979 = vrot.lane.b32.xlu0 %v7450, 80
    %v7980 = vpop.permute.xlu0 %7979
    %7981 = vrot.lane.b32.xlu0 %v7451, 80
    %v7982 = vpop.permute.xlu0 %7981
    %7983 = vrot.lane.b32.xlu0 %v7452, 80
    %v7984 = vpop.permute.xlu0 %7983
    %7985 = vrot.lane.b32.xlu0 %v7922, 80
    %v7986 = vpop.permute.xlu0 %7985
    %8019 = vst.msk [vmem:[#allocation5] sm:$0xff] %vm3458, %v7924
    %8020 = vst.msk [vmem:[#allocation5 + $0x10] sm:$0xff] %vm3458, %v7926
    %8021 = vst.msk [vmem:[#allocation5 + $0x20] sm:$0xff] %vm3458, %v7928
    %8022 = vst.msk [vmem:[#allocation5 + $0x30] sm:$0xff] %vm3458, %v7930
    %8023 = vst.msk [vmem:[#allocation5 + $0x40] sm:$0xff] %vm3458, %v7932
    %8024 = vst.msk [vmem:[#allocation5 + $0x50] sm:$0xff] %vm3458, %v7934
    %8025 = vst.msk [vmem:[#allocation5 + $0x60] sm:$0xff] %vm3458, %v7936
    %8026 = vst.msk [vmem:[#allocation5 + $0x70] sm:$0xff] %vm3458, %v7938
    %8027 = vst.msk [vmem:[#allocation5 + $0x80] sm:$0xff] %vm3458, %v7940
    %8028 = vst.msk [vmem:[#allocation5 + $0x90] sm:$0xff] %vm3458, %v7942
    %8029 = vst.msk [vmem:[#allocation5 + $0xa0] sm:$0xff] %vm3458, %v7944
    %8030 = vst.msk [vmem:[#allocation5 + $0xb0] sm:$0xff] %vm3458, %v7946
    %8031 = vst.msk [vmem:[#allocation5 + $0xc0] sm:$0xff] %vm3458, %v7948
    %8032 = vst.msk [vmem:[#allocation5 + $0xd0] sm:$0xff] %vm3458, %v7950
    %8033 = vst.msk [vmem:[#allocation5 + $0xe0] sm:$0xff] %vm3458, %v7952
    %8034 = vst.msk [vmem:[#allocation5 + $0xf0] sm:$0xff] %vm3458, %v7954
    %8035 = vst.msk [vmem:[#allocation5 + $0x100] sm:$0xff] %vm3458, %v7956
    %8036 = vst.msk [vmem:[#allocation5 + $0x110] sm:$0xff] %vm3458, %v7958
    %8037 = vst.msk [vmem:[#allocation5 + $0x120] sm:$0xff] %vm3458, %v7960
    %8038 = vst.msk [vmem:[#allocation5 + $0x130] sm:$0xff] %vm3458, %v7962
    %8039 = vst.msk [vmem:[#allocation5 + $0x140] sm:$0xff] %vm3458, %v7964
    %8040 = vst.msk [vmem:[#allocation5 + $0x150] sm:$0xff] %vm3458, %v7966
    %8041 = vst.msk [vmem:[#allocation5 + $0x160] sm:$0xff] %vm3458, %v7968
    %8042 = vst.msk [vmem:[#allocation5 + $0x170] sm:$0xff] %vm3458, %v7970
    %8043 = vst.msk [vmem:[#allocation5 + $0x180] sm:$0xff] %vm3458, %v7972
    %8044 = vst.msk [vmem:[#allocation5 + $0x190] sm:$0xff] %vm3458, %v7974
    %8045 = vst.msk [vmem:[#allocation5 + $0x1a0] sm:$0xff] %vm3458, %v7976
    %8046 = vst.msk [vmem:[#allocation5 + $0x1b0] sm:$0xff] %vm3458, %v7978
    %8047 = vst.msk [vmem:[#allocation5 + $0x1c0] sm:$0xff] %vm3458, %v7980
    %8048 = vst.msk [vmem:[#allocation5 + $0x1d0] sm:$0xff] %vm3458, %v7982
    %8049 = vst.msk [vmem:[#allocation5 + $0x1e0] sm:$0xff] %vm3458, %v7984
    %8050 = vst.msk [vmem:[#allocation5 + $0x1f0] sm:$0xff] %vm3458, %v7986
    %v8055 = vunpack.c.l.b16 %v5828
    %v8056 = vunpack.c.l.b16 %v5829
    %v8057 = vunpack.c.l.b16 %v5882
    %v8058 = vunpack.c.l.b16 %v5883
    %v8059 = vpack.c.b16 %v8056, %v8055
    %v8060 = vpack.c.b16 %v8058, %v8057
    %8061 = vrot.lane.b32.xlu0 %v6015, 96
    %v8062 = vpop.permute.xlu0 %8061
    %8063 = vrot.lane.b32.xlu0 %v6016, 96
    %v8064 = vpop.permute.xlu0 %8063
    %8065 = vrot.lane.b32.xlu0 %v6017, 96
    %v8066 = vpop.permute.xlu0 %8065
    %8067 = vrot.lane.b32.xlu0 %v6018, 96
    %v8068 = vpop.permute.xlu0 %8067
    %8069 = vrot.lane.b32.xlu0 %v6019, 96
    %v8070 = vpop.permute.xlu0 %8069
    %8071 = vrot.lane.b32.xlu0 %v6020, 96
    %v8072 = vpop.permute.xlu0 %8071
    %8073 = vrot.lane.b32.xlu0 %v6021, 96
    %v8074 = vpop.permute.xlu0 %8073
    %8075 = vrot.lane.b32.xlu0 %v6022, 96
    %v8076 = vpop.permute.xlu0 %8075
    %8077 = vrot.lane.b32.xlu0 %v6023, 96
    %v8078 = vpop.permute.xlu0 %8077
    %8079 = vrot.lane.b32.xlu0 %v6024, 96
    %v8080 = vpop.permute.xlu0 %8079
    %8081 = vrot.lane.b32.xlu0 %v6025, 96
    %v8082 = vpop.permute.xlu0 %8081
    %8083 = vrot.lane.b32.xlu0 %v6026, 96
    %v8084 = vpop.permute.xlu0 %8083
    %8085 = vrot.lane.b32.xlu0 %v6027, 96
    %v8086 = vpop.permute.xlu0 %8085
    %8087 = vrot.lane.b32.xlu0 %v6028, 96
    %v8088 = vpop.permute.xlu0 %8087
    %8089 = vrot.lane.b32.xlu0 %v7589, 96
    %v8090 = vpop.permute.xlu0 %8089
    %8091 = vrot.lane.b32.xlu0 %v8059, 96
    %v8092 = vpop.permute.xlu0 %8091
    %8093 = vrot.lane.b32.xlu0 %v6031, 96
    %v8094 = vpop.permute.xlu0 %8093
    %8095 = vrot.lane.b32.xlu0 %v6032, 96
    %v8096 = vpop.permute.xlu0 %8095
    %8097 = vrot.lane.b32.xlu0 %v6033, 96
    %v8098 = vpop.permute.xlu0 %8097
    %8099 = vrot.lane.b32.xlu0 %v6034, 96
    %v8100 = vpop.permute.xlu0 %8099
    %8101 = vrot.lane.b32.xlu0 %v6035, 96
    %v8102 = vpop.permute.xlu0 %8101
    %8103 = vrot.lane.b32.xlu0 %v6036, 96
    %v8104 = vpop.permute.xlu0 %8103
    %8105 = vrot.lane.b32.xlu0 %v6037, 96
    %v8106 = vpop.permute.xlu0 %8105
    %8107 = vrot.lane.b32.xlu0 %v6038, 96
    %v8108 = vpop.permute.xlu0 %8107
    %8109 = vrot.lane.b32.xlu0 %v6039, 96
    %v8110 = vpop.permute.xlu0 %8109
    %8111 = vrot.lane.b32.xlu0 %v6040, 96
    %v8112 = vpop.permute.xlu0 %8111
    %8113 = vrot.lane.b32.xlu0 %v6041, 96
    %v8114 = vpop.permute.xlu0 %8113
    %8115 = vrot.lane.b32.xlu0 %v6042, 96
    %v8116 = vpop.permute.xlu0 %8115
    %8117 = vrot.lane.b32.xlu0 %v6043, 96
    %v8118 = vpop.permute.xlu0 %8117
    %8119 = vrot.lane.b32.xlu0 %v6044, 96
    %v8120 = vpop.permute.xlu0 %8119
    %8121 = vrot.lane.b32.xlu0 %v7590, 96
    %v8122 = vpop.permute.xlu0 %8121
    %8123 = vrot.lane.b32.xlu0 %v8060, 96
    %v8124 = vpop.permute.xlu0 %8123
    %8157 = vst.msk [vmem:[#allocation5] sm:$0xff] %vm3597, %v8062
    %8158 = vst.msk [vmem:[#allocation5 + $0x10] sm:$0xff] %vm3597, %v8064
    %8159 = vst.msk [vmem:[#allocation5 + $0x20] sm:$0xff] %vm3597, %v8066
    %8160 = vst.msk [vmem:[#allocation5 + $0x30] sm:$0xff] %vm3597, %v8068
    %8161 = vst.msk [vmem:[#allocation5 + $0x40] sm:$0xff] %vm3597, %v8070
    %8162 = vst.msk [vmem:[#allocation5 + $0x50] sm:$0xff] %vm3597, %v8072
    %8163 = vst.msk [vmem:[#allocation5 + $0x60] sm:$0xff] %vm3597, %v8074
    %8164 = vst.msk [vmem:[#allocation5 + $0x70] sm:$0xff] %vm3597, %v8076
    %8165 = vst.msk [vmem:[#allocation5 + $0x80] sm:$0xff] %vm3597, %v8078
    %8166 = vst.msk [vmem:[#allocation5 + $0x90] sm:$0xff] %vm3597, %v8080
    %8167 = vst.msk [vmem:[#allocation5 + $0xa0] sm:$0xff] %vm3597, %v8082
    %8168 = vst.msk [vmem:[#allocation5 + $0xb0] sm:$0xff] %vm3597, %v8084
    %8169 = vst.msk [vmem:[#allocation5 + $0xc0] sm:$0xff] %vm3597, %v8086
    %8170 = vst.msk [vmem:[#allocation5 + $0xd0] sm:$0xff] %vm3597, %v8088
    %8171 = vst.msk [vmem:[#allocation5 + $0xe0] sm:$0xff] %vm3597, %v8090
    %8172 = vst.msk [vmem:[#allocation5 + $0xf0] sm:$0xff] %vm3597, %v8092
    %8173 = vst.msk [vmem:[#allocation5 + $0x100] sm:$0xff] %vm3597, %v8094
    %8174 = vst.msk [vmem:[#allocation5 + $0x110] sm:$0xff] %vm3597, %v8096
    %8175 = vst.msk [vmem:[#allocation5 + $0x120] sm:$0xff] %vm3597, %v8098
    %8176 = vst.msk [vmem:[#allocation5 + $0x130] sm:$0xff] %vm3597, %v8100
    %8177 = vst.msk [vmem:[#allocation5 + $0x140] sm:$0xff] %vm3597, %v8102
    %8178 = vst.msk [vmem:[#allocation5 + $0x150] sm:$0xff] %vm3597, %v8104
    %8179 = vst.msk [vmem:[#allocation5 + $0x160] sm:$0xff] %vm3597, %v8106
    %8180 = vst.msk [vmem:[#allocation5 + $0x170] sm:$0xff] %vm3597, %v8108
    %8181 = vst.msk [vmem:[#allocation5 + $0x180] sm:$0xff] %vm3597, %v8110
    %8182 = vst.msk [vmem:[#allocation5 + $0x190] sm:$0xff] %vm3597, %v8112
    %8183 = vst.msk [vmem:[#allocation5 + $0x1a0] sm:$0xff] %vm3597, %v8114
    %8184 = vst.msk [vmem:[#allocation5 + $0x1b0] sm:$0xff] %vm3597, %v8116
    %8185 = vst.msk [vmem:[#allocation5 + $0x1c0] sm:$0xff] %vm3597, %v8118
    %8186 = vst.msk [vmem:[#allocation5 + $0x1d0] sm:$0xff] %vm3597, %v8120
    %8187 = vst.msk [vmem:[#allocation5 + $0x1e0] sm:$0xff] %vm3597, %v8122
    %8188 = vst.msk [vmem:[#allocation5 + $0x1f0] sm:$0xff] %vm3597, %v8124
    %v8190 = vshrl.u32 %v5828, 16
    %v8192 = vrot.slane %v8190, 4
    %v8193 = vshll.u32 %v5828, 16
    %v8195 = vrot.slane %v8193, 5
    %v8196 = vor.u32 %v8192, %v8195
    %v8197 = vrot.slane %v8196, 4
    %v8199 = vshll.u32 %v5829, 16
    %v8201 = vrot.slane %v8199, 5
    %v8202 = vsel %vm1540, %v8197, %v8201
    %v8203 = vshrl.u32 %v5829, 16
    %v8205 = vrot.slane %v8203, 4
    %v8206 = vor.u32 %v8205, %v8201
    %v8207 = vrot.slane %v8206, 4
    %v8209 = vshll.u32 %v5830, 16
    %v8211 = vrot.slane %v8209, 5
    %v8212 = vsel %vm1540, %v8207, %v8211
    %v8214 = vshrl.u32 %v5882, 16
    %v8216 = vrot.slane %v8214, 4
    %v8217 = vshll.u32 %v5882, 16
    %v8219 = vrot.slane %v8217, 5
    %v8220 = vor.u32 %v8216, %v8219
    %v8221 = vrot.slane %v8220, 4
    %v8223 = vshll.u32 %v5883, 16
    %v8225 = vrot.slane %v8223, 5
    %v8226 = vsel %vm1540, %v8221, %v8225
    %v8227 = vshrl.u32 %v5883, 16
    %v8229 = vrot.slane %v8227, 4
    %v8230 = vor.u32 %v8229, %v8225
    %v8231 = vrot.slane %v8230, 4
    %v8233 = vshll.u32 %v5884, 16
    %v8235 = vrot.slane %v8233, 5
    %v8236 = vsel %vm1540, %v8231, %v8235
    %v8237 = vunpack.c.l.b16 %v8202
    %v8238 = vunpack.c.l.b16 %v8212
    %v8239 = vunpack.c.l.b16 %v8226
    %v8240 = vunpack.c.l.b16 %v8236
    %v8241 = vpack.c.b16 %v8238, %v8237
    %v8242 = vpack.c.b16 %v8240, %v8239
    %8243 = vrot.lane.b32.xlu0 %v6943, 112
    %v8244 = vpop.permute.xlu0 %8243
    %8245 = vrot.lane.b32.xlu0 %v6944, 112
    %v8246 = vpop.permute.xlu0 %8245
    %8247 = vrot.lane.b32.xlu0 %v6945, 112
    %v8248 = vpop.permute.xlu0 %8247
    %8249 = vrot.lane.b32.xlu0 %v6946, 112
    %v8250 = vpop.permute.xlu0 %8249
    %8251 = vrot.lane.b32.xlu0 %v6947, 112
    %v8252 = vpop.permute.xlu0 %8251
    %8253 = vrot.lane.b32.xlu0 %v6948, 112
    %v8254 = vpop.permute.xlu0 %8253
    %8255 = vrot.lane.b32.xlu0 %v6949, 112
    %v8256 = vpop.permute.xlu0 %8255
    %8257 = vrot.lane.b32.xlu0 %v6950, 112
    %v8258 = vpop.permute.xlu0 %8257
    %8259 = vrot.lane.b32.xlu0 %v6951, 112
    %v8260 = vpop.permute.xlu0 %8259
    %8261 = vrot.lane.b32.xlu0 %v6952, 112
    %v8262 = vpop.permute.xlu0 %8261
    %8263 = vrot.lane.b32.xlu0 %v6953, 112
    %v8264 = vpop.permute.xlu0 %8263
    %8265 = vrot.lane.b32.xlu0 %v6954, 112
    %v8266 = vpop.permute.xlu0 %8265
    %8267 = vrot.lane.b32.xlu0 %v6955, 112
    %v8268 = vpop.permute.xlu0 %8267
    %8269 = vrot.lane.b32.xlu0 %v6956, 112
    %v8270 = vpop.permute.xlu0 %8269
    %8271 = vrot.lane.b32.xlu0 %v7771, 112
    %v8272 = vpop.permute.xlu0 %8271
    %8273 = vrot.lane.b32.xlu0 %v8241, 112
    %v8274 = vpop.permute.xlu0 %8273
    %8275 = vrot.lane.b32.xlu0 %v6959, 112
    %v8276 = vpop.permute.xlu0 %8275
    %8277 = vrot.lane.b32.xlu0 %v6960, 112
    %v8278 = vpop.permute.xlu0 %8277
    %8279 = vrot.lane.b32.xlu0 %v6961, 112
    %v8280 = vpop.permute.xlu0 %8279
    %8281 = vrot.lane.b32.xlu0 %v6962, 112
    %v8282 = vpop.permute.xlu0 %8281
    %8283 = vrot.lane.b32.xlu0 %v6963, 112
    %v8284 = vpop.permute.xlu0 %8283
    %8285 = vrot.lane.b32.xlu0 %v6964, 112
    %v8286 = vpop.permute.xlu0 %8285
    %8287 = vrot.lane.b32.xlu0 %v6965, 112
    %v8288 = vpop.permute.xlu0 %8287
    %8289 = vrot.lane.b32.xlu0 %v6966, 112
    %v8290 = vpop.permute.xlu0 %8289
    %8291 = vrot.lane.b32.xlu0 %v6967, 112
    %v8292 = vpop.permute.xlu0 %8291
    %8293 = vrot.lane.b32.xlu0 %v6968, 112
    %v8294 = vpop.permute.xlu0 %8293
    %8295 = vrot.lane.b32.xlu0 %v6969, 112
    %v8296 = vpop.permute.xlu0 %8295
    %8297 = vrot.lane.b32.xlu0 %v6970, 112
    %v8298 = vpop.permute.xlu0 %8297
    %8299 = vrot.lane.b32.xlu0 %v6971, 112
    %v8300 = vpop.permute.xlu0 %8299
    %8301 = vrot.lane.b32.xlu0 %v6972, 112
    %v8302 = vpop.permute.xlu0 %8301
    %8303 = vrot.lane.b32.xlu0 %v7772, 112
    %v8304 = vpop.permute.xlu0 %8303
    %8305 = vrot.lane.b32.xlu0 %v8242, 112
    %v8306 = vpop.permute.xlu0 %8305
    %8339 = vst.msk [vmem:[#allocation5] sm:$0xff] %vm3780, %v8244
    %8340 = vst.msk [vmem:[#allocation5 + $0x10] sm:$0xff] %vm3780, %v8246
    %8341 = vst.msk [vmem:[#allocation5 + $0x20] sm:$0xff] %vm3780, %v8248
    %8342 = vst.msk [vmem:[#allocation5 + $0x30] sm:$0xff] %vm3780, %v8250
    %8343 = vst.msk [vmem:[#allocation5 + $0x40] sm:$0xff] %vm3780, %v8252
    %8344 = vst.msk [vmem:[#allocation5 + $0x50] sm:$0xff] %vm3780, %v8254
    %8345 = vst.msk [vmem:[#allocation5 + $0x60] sm:$0xff] %vm3780, %v8256
    %8346 = vst.msk [vmem:[#allocation5 + $0x70] sm:$0xff] %vm3780, %v8258
    %8347 = vst.msk [vmem:[#allocation5 + $0x80] sm:$0xff] %vm3780, %v8260
    %8348 = vst.msk [vmem:[#allocation5 + $0x90] sm:$0xff] %vm3780, %v8262
    %8349 = vst.msk [vmem:[#allocation5 + $0xa0] sm:$0xff] %vm3780, %v8264
    %8350 = vst.msk [vmem:[#allocation5 + $0xb0] sm:$0xff] %vm3780, %v8266
    %8351 = vst.msk [vmem:[#allocation5 + $0xc0] sm:$0xff] %vm3780, %v8268
    %8352 = vst.msk [vmem:[#allocation5 + $0xd0] sm:$0xff] %vm3780, %v8270
    %8353 = vst.msk [vmem:[#allocation5 + $0xe0] sm:$0xff] %vm3780, %v8272
    %8354 = vst.msk [vmem:[#allocation5 + $0xf0] sm:$0xff] %vm3780, %v8274
    %8355 = vst.msk [vmem:[#allocation5 + $0x100] sm:$0xff] %vm3780, %v8276
    %8356 = vst.msk [vmem:[#allocation5 + $0x110] sm:$0xff] %vm3780, %v8278
    %8357 = vst.msk [vmem:[#allocation5 + $0x120] sm:$0xff] %vm3780, %v8280
    %8358 = vst.msk [vmem:[#allocation5 + $0x130] sm:$0xff] %vm3780, %v8282
    %8359 = vst.msk [vmem:[#allocation5 + $0x140] sm:$0xff] %vm3780, %v8284
    %8360 = vst.msk [vmem:[#allocation5 + $0x150] sm:$0xff] %vm3780, %v8286
    %8361 = vst.msk [vmem:[#allocation5 + $0x160] sm:$0xff] %vm3780, %v8288
    %8362 = vst.msk [vmem:[#allocation5 + $0x170] sm:$0xff] %vm3780, %v8290
    %8363 = vst.msk [vmem:[#allocation5 + $0x180] sm:$0xff] %vm3780, %v8292
    %8364 = vst.msk [vmem:[#allocation5 + $0x190] sm:$0xff] %vm3780, %v8294
    %8365 = vst.msk [vmem:[#allocation5 + $0x1a0] sm:$0xff] %vm3780, %v8296
    %8366 = vst.msk [vmem:[#allocation5 + $0x1b0] sm:$0xff] %vm3780, %v8298
    %8367 = vst.msk [vmem:[#allocation5 + $0x1c0] sm:$0xff] %vm3780, %v8300
    %8368 = vst.msk [vmem:[#allocation5 + $0x1d0] sm:$0xff] %vm3780, %v8302
    %8369 = vst.msk [vmem:[#allocation5 + $0x1e0] sm:$0xff] %vm3780, %v8304
    %8370 = vst.msk [vmem:[#allocation5 + $0x1f0] sm:$0xff] %vm3780, %v8306
    %v8373 = vrot.slane %v5828, 5
    %v8374 = vrot.slane %v8373, 4
    %v8375 = vrot.slane %v5829, 5
    %v8376 = vsel %vm2568, %v8374, %v8375
    %v8377 = vrot.slane %v8375, 4
    %v8378 = vrot.slane %v5830, 5
    %v8379 = vsel %vm2568, %v8377, %v8378
    %v8380 = vrot.slane %v5882, 5
    %v8381 = vrot.slane %v8380, 4
    %v8382 = vrot.slane %v5883, 5
    %v8383 = vsel %vm2568, %v8381, %v8382
    %v8384 = vrot.slane %v8382, 4
    %v8385 = vrot.slane %v5884, 5
    %v8386 = vsel %vm2568, %v8384, %v8385
    %v8387 = vunpack.c.l.b16 %v8376
    %v8388 = vunpack.c.l.b16 %v8379
    %v8389 = vunpack.c.l.b16 %v8383
    %v8390 = vunpack.c.l.b16 %v8386
    %v8391 = vpack.c.b16 %v8388, %v8387
    %v8392 = vpack.c.b16 %v8390, %v8389
    %8425 = vst.msk [vmem:[#allocation5 + $0x8] sm:$0xff] %vm1505, %v7423
    %8426 = vst.msk [vmem:[#allocation5 + $0x18] sm:$0xff] %vm1505, %v7424
    %8427 = vst.msk [vmem:[#allocation5 + $0x28] sm:$0xff] %vm1505, %v7425
    %8428 = vst.msk [vmem:[#allocation5 + $0x38] sm:$0xff] %vm1505, %v7426
    %8429 = vst.msk [vmem:[#allocation5 + $0x48] sm:$0xff] %vm1505, %v7427
    %8430 = vst.msk [vmem:[#allocation5 + $0x58] sm:$0xff] %vm1505, %v7428
    %8431 = vst.msk [vmem:[#allocation5 + $0x68] sm:$0xff] %vm1505, %v7429
    %8432 = vst.msk [vmem:[#allocation5 + $0x78] sm:$0xff] %vm1505, %v7430
    %8433 = vst.msk [vmem:[#allocation5 + $0x88] sm:$0xff] %vm1505, %v7431
    %8434 = vst.msk [vmem:[#allocation5 + $0x98] sm:$0xff] %vm1505, %v7432
    %8435 = vst.msk [vmem:[#allocation5 + $0xa8] sm:$0xff] %vm1505, %v7433
    %8436 = vst.msk [vmem:[#allocation5 + $0xb8] sm:$0xff] %vm1505, %v7434
    %8437 = vst.msk [vmem:[#allocation5 + $0xc8] sm:$0xff] %vm1505, %v7435
    %8438 = vst.msk [vmem:[#allocation5 + $0xd8] sm:$0xff] %vm1505, %v7436
    %8439 = vst.msk [vmem:[#allocation5 + $0xe8] sm:$0xff] %vm1505, %v7921
    %8440 = vst.msk [vmem:[#allocation5 + $0xf8] sm:$0xff] %vm1505, %v8391
    %8441 = vst.msk [vmem:[#allocation5 + $0x108] sm:$0xff] %vm1505, %v7439
    %8442 = vst.msk [vmem:[#allocation5 + $0x118] sm:$0xff] %vm1505, %v7440
    %8443 = vst.msk [vmem:[#allocation5 + $0x128] sm:$0xff] %vm1505, %v7441
    %8444 = vst.msk [vmem:[#allocation5 + $0x138] sm:$0xff] %vm1505, %v7442
    %8445 = vst.msk [vmem:[#allocation5 + $0x148] sm:$0xff] %vm1505, %v7443
    %8446 = vst.msk [vmem:[#allocation5 + $0x158] sm:$0xff] %vm1505, %v7444
    %8447 = vst.msk [vmem:[#allocation5 + $0x168] sm:$0xff] %vm1505, %v7445
    %8448 = vst.msk [vmem:[#allocation5 + $0x178] sm:$0xff] %vm1505, %v7446
    %8449 = vst.msk [vmem:[#allocation5 + $0x188] sm:$0xff] %vm1505, %v7447
    %8450 = vst.msk [vmem:[#allocation5 + $0x198] sm:$0xff] %vm1505, %v7448
    %8451 = vst.msk [vmem:[#allocation5 + $0x1a8] sm:$0xff] %vm1505, %v7449
    %8452 = vst.msk [vmem:[#allocation5 + $0x1b8] sm:$0xff] %vm1505, %v7450
    %8453 = vst.msk [vmem:[#allocation5 + $0x1c8] sm:$0xff] %vm1505, %v7451
    %8454 = vst.msk [vmem:[#allocation5 + $0x1d8] sm:$0xff] %vm1505, %v7452
    %8455 = vst.msk [vmem:[#allocation5 + $0x1e8] sm:$0xff] %vm1505, %v7922
    %8456 = vst.msk [vmem:[#allocation5 + $0x1f8] sm:$0xff] %vm1505, %v8392
    %v8457 = vld [vmem:[#allocation5] sm:$0xff]
    %v8458 = vld [vmem:[#allocation5 + $0x8] sm:$0xff]
    %v8459 = vld [vmem:[#allocation5 + $0x10] sm:$0xff]
    %v8460 = vld [vmem:[#allocation5 + $0x18] sm:$0xff]
    %v8461 = vld [vmem:[#allocation5 + $0x20] sm:$0xff]
    %v8462 = vld [vmem:[#allocation5 + $0x28] sm:$0xff]
    %v8463 = vld [vmem:[#allocation5 + $0x30] sm:$0xff]
    %v8464 = vld [vmem:[#allocation5 + $0x38] sm:$0xff]
    %v8465 = vld [vmem:[#allocation5 + $0x40] sm:$0xff]
    %v8466 = vld [vmem:[#allocation5 + $0x48] sm:$0xff]
    %v8467 = vld [vmem:[#allocation5 + $0x50] sm:$0xff]
    %v8468 = vld [vmem:[#allocation5 + $0x58] sm:$0xff]
    %v8469 = vld [vmem:[#allocation5 + $0x60] sm:$0xff]
    %v8470 = vld [vmem:[#allocation5 + $0x68] sm:$0xff]
    %v8471 = vld [vmem:[#allocation5 + $0x70] sm:$0xff]
    %v8472 = vld [vmem:[#allocation5 + $0x78] sm:$0xff]
    %v8473 = vld [vmem:[#allocation5 + $0x80] sm:$0xff]
    %v8474 = vld [vmem:[#allocation5 + $0x88] sm:$0xff]
    %v8475 = vld [vmem:[#allocation5 + $0x90] sm:$0xff]
    %v8476 = vld [vmem:[#allocation5 + $0x98] sm:$0xff]
    %v8477 = vld [vmem:[#allocation5 + $0xa0] sm:$0xff]
    %v8478 = vld [vmem:[#allocation5 + $0xa8] sm:$0xff]
    %v8479 = vld [vmem:[#allocation5 + $0xb0] sm:$0xff]
    %v8480 = vld [vmem:[#allocation5 + $0xb8] sm:$0xff]
    %v8481 = vld [vmem:[#allocation5 + $0xc0] sm:$0xff]
    %v8482 = vld [vmem:[#allocation5 + $0xc8] sm:$0xff]
    %v8483 = vld [vmem:[#allocation5 + $0xd0] sm:$0xff]
    %v8484 = vld [vmem:[#allocation5 + $0xd8] sm:$0xff]
    %v8485 = vld [vmem:[#allocation5 + $0xe0] sm:$0xff]
    %v8486 = vld [vmem:[#allocation5 + $0xe8] sm:$0xff]
    %v8487 = vld [vmem:[#allocation5 + $0xf0] sm:$0xff]
    %v8488 = vld [vmem:[#allocation5 + $0xf8] sm:$0xff]
    %v8489 = vld [vmem:[#allocation5 + $0x100] sm:$0xff]
    %v8490 = vld [vmem:[#allocation5 + $0x108] sm:$0xff]
    %v8491 = vld [vmem:[#allocation5 + $0x110] sm:$0xff]
    %v8492 = vld [vmem:[#allocation5 + $0x118] sm:$0xff]
    %v8493 = vld [vmem:[#allocation5 + $0x120] sm:$0xff]
    %v8494 = vld [vmem:[#allocation5 + $0x128] sm:$0xff]
    %v8495 = vld [vmem:[#allocation5 + $0x130] sm:$0xff]
    %v8496 = vld [vmem:[#allocation5 + $0x138] sm:$0xff]
    %v8497 = vld [vmem:[#allocation5 + $0x140] sm:$0xff]
    %v8498 = vld [vmem:[#allocation5 + $0x148] sm:$0xff]
    %v8499 = vld [vmem:[#allocation5 + $0x150] sm:$0xff]
    %v8500 = vld [vmem:[#allocation5 + $0x158] sm:$0xff]
    %v8501 = vld [vmem:[#allocation5 + $0x160] sm:$0xff]
    %v8502 = vld [vmem:[#allocation5 + $0x168] sm:$0xff]
    %v8503 = vld [vmem:[#allocation5 + $0x170] sm:$0xff]
    %v8504 = vld [vmem:[#allocation5 + $0x178] sm:$0xff]
    %v8505 = vld [vmem:[#allocation5 + $0x180] sm:$0xff]
    %v8506 = vld [vmem:[#allocation5 + $0x188] sm:$0xff]
    %v8507 = vld [vmem:[#allocation5 + $0x190] sm:$0xff]
    %v8508 = vld [vmem:[#allocation5 + $0x198] sm:$0xff]
    %v8509 = vld [vmem:[#allocation5 + $0x1a0] sm:$0xff]
    %v8510 = vld [vmem:[#allocation5 + $0x1a8] sm:$0xff]
    %v8511 = vld [vmem:[#allocation5 + $0x1b0] sm:$0xff]
    %v8512 = vld [vmem:[#allocation5 + $0x1b8] sm:$0xff]
    %v8513 = vld [vmem:[#allocation5 + $0x1c0] sm:$0xff]
    %v8514 = vld [vmem:[#allocation5 + $0x1c8] sm:$0xff]
    %v8515 = vld [vmem:[#allocation5 + $0x1d0] sm:$0xff]
    %v8516 = vld [vmem:[#allocation5 + $0x1d8] sm:$0xff]
    %v8517 = vld [vmem:[#allocation5 + $0x1e0] sm:$0xff]
    %v8518 = vld [vmem:[#allocation5 + $0x1e8] sm:$0xff]
    %v8519 = vld [vmem:[#allocation5 + $0x1f0] sm:$0xff]
    %v8520 = vld [vmem:[#allocation5 + $0x1f8] sm:$0xff]
    %v8521 = vld [vmem:[%s3] sm:$0xf]
    %v8522 = vld [vmem:[%s3 + $0x4] sm:$0xf]
    %v8523 = vld [vmem:[%s3 + $0x8] sm:$0xf]
    %v8524 = vld [vmem:[%s3 + $0xc] sm:$0xf]
    %v8525 = vld [vmem:[%s3 + $0x10] sm:$0xf]
    %v8526 = vld [vmem:[%s3 + $0x14] sm:$0xf]
    %v8527 = vld [vmem:[%s3 + $0x18] sm:$0xf]
    %v8528 = vld [vmem:[%s3 + $0x1c] sm:$0xf]
    %v8529 = vld [vmem:[%s3 + $0x20] sm:$0xf]
    %v8530 = vld [vmem:[%s3 + $0x24] sm:$0xf]
    %v8531 = vld [vmem:[%s3 + $0x28] sm:$0xf]
    %v8532 = vld [vmem:[%s3 + $0x2c] sm:$0xf]
    %v8533 = vld [vmem:[%s3 + $0x30] sm:$0xf]
    %v8534 = vld [vmem:[%s3 + $0x34] sm:$0xf]
    %v8535 = vld [vmem:[%s3 + $0x38] sm:$0xf]
    %v8536 = vld [vmem:[%s3 + $0x3c] sm:$0xf]
    %v8537 = vld [vmem:[%s3 + $0x40] sm:$0xf]
    %v8538 = vld [vmem:[%s3 + $0x44] sm:$0xf]
    %v8539 = vld [vmem:[%s4] sm:$0x1]
    %v8541 = vlaneseq
    %v8542 = vshrl.u32 %v8541, 7
    %v8543 = vsub.s32 0, %v8542
    %v8544 = vrot.slane %v8539, %v8543
    %v8564 = vunpack.c.l.b16 %v8521
    %v8565 = vunpack.c.l.b16 %v8522
    %v8566 = vunpack.c.l.b16 %v8523
    %v8567 = vunpack.c.l.b16 %v8524
    %v8568 = vunpack.c.l.b16 %v8525
    %v8569 = vunpack.c.l.b16 %v8526
    %v8570 = vunpack.c.l.b16 %v8527
    %v8571 = vunpack.c.l.b16 %v8528
    %v8572 = vunpack.c.l.b16 %v8529
    %v8573 = vunpack.c.l.b16 %v8530
    %v8574 = vunpack.c.l.b16 %v8531
    %v8575 = vunpack.c.l.b16 %v8532
    %v8576 = vunpack.c.l.b16 %v8533
    %v8577 = vunpack.c.l.b16 %v8534
    %v8578 = vunpack.c.l.b16 %v8535
    %v8579 = vunpack.c.l.b16 %v8536
    %v8580 = vunpack.c.l.b16 %v8537
    %v8581 = vunpack.c.l.b16 %v8538
    %v8582 = vpack.c.b16 %v8565, %v8564
    %v8583 = vpack.c.b16 %v8567, %v8566
    %v8584 = vpack.c.b16 %v8569, %v8568
    %v8585 = vpack.c.b16 %v8571, %v8570
    %v8586 = vpack.c.b16 %v8573, %v8572
    %v8587 = vpack.c.b16 %v8575, %v8574
    %v8588 = vpack.c.b16 %v8577, %v8576
    %v8589 = vpack.c.b16 %v8579, %v8578
    %v8590 = vpack.c.b16 %v8581, %v8580
    %v8601 = vsel %vm1505, %v8458, 0
    %v8604 = vsel %vm1505, %v8460, 0
    %v8607 = vsel %vm1505, %v8462, 0
    %v8610 = vsel %vm1505, %v8464, 0
    %v8613 = vsel %vm1505, %v8466, 0
    %v8616 = vsel %vm1505, %v8468, 0
    %v8619 = vsel %vm1505, %v8470, 0
    %v8622 = vsel %vm1505, %v8472, 0
    %v8625 = vsel %vm1505, %v8474, 0
    %v8628 = vsel %vm1505, %v8476, 0
    %v8631 = vsel %vm1505, %v8478, 0
    %v8634 = vsel %vm1505, %v8480, 0
    %v8637 = vsel %vm1505, %v8482, 0
    %v8640 = vsel %vm1505, %v8484, 0
    %v8643 = vsel %vm1505, %v8486, 0
    %v8646 = vsel %vm1505, %v8488, 0
    %v8649 = vsel %vm1505, %v8490, 0
    %v8652 = vsel %vm1505, %v8492, 0
    %v8655 = vsel %vm1505, %v8494, 0
    %v8658 = vsel %vm1505, %v8496, 0
    %v8661 = vsel %vm1505, %v8498, 0
    %v8664 = vsel %vm1505, %v8500, 0
    %v8667 = vsel %vm1505, %v8502, 0
    %v8670 = vsel %vm1505, %v8504, 0
    %v8673 = vsel %vm1505, %v8506, 0
    %v8676 = vsel %vm1505, %v8508, 0
    %v8679 = vsel %vm1505, %v8510, 0
    %v8682 = vsel %vm1505, %v8512, 0
    %v8685 = vsel %vm1505, %v8514, 0
    %v8688 = vsel %vm1505, %v8516, 0
    %v8691 = vsel %vm1505, %v8518, 0
    %v8694 = vsel %vm1505, %v8520, 0
    %8696 = vmatprep.subr.bf16.mxu0 0
    %8697 = vmatpush1.bf16.msra.mxu0 %v8582
    %8698 = vmatprep.subr.bf16.mxu0 0
    %8699 = vmatpush1.bf16.msra.mxu0 %v8583
    %8700 = vmatprep.subr.bf16.mxu0 0
    %8701 = vmatpush1.bf16.msra.mxu0 %v8584
    %8702 = vmatprep.subr.bf16.mxu0 0
    %8703 = vmatpush1.bf16.msra.mxu0 %v8585
    %8704 = vmatprep.subr.bf16.mxu0 0
    %8705 = vmatpush1.bf16.msra.mxu0 %v8586
    %8706 = vmatprep.subr.bf16.mxu0 0
    %8707 = vmatpush1.bf16.msra.mxu0 %v8587
    %8708 = vmatprep.subr.bf16.mxu0 0
    %8709 = vmatpush1.bf16.msra.mxu0 %v8588
    %8710 = vmatprep.subr.bf16.mxu0 0
    %8711 = vmatpush1.bf16.msra.mxu0 %v8589
    %8712 = vmatprep.subr.bf16.mxu0 0
    %8713 = vmatpush1.bf16.msra.mxu0 %v8590
    %8714 = vmatprep.subr.bf16.mxu0 0
    %8715 = vmatpush1.bf16.msra.mxu0 0
    %8716 = vmatprep.subr.bf16.mxu0 0
    %8717 = vmatpush1.bf16.msra.mxu0 0
    %8718 = vmatprep.subr.bf16.mxu0 0
    %8719 = vmatpush1.bf16.msra.mxu0 0
    %8720 = vmatprep.subr.bf16.mxu0 0
    %8721 = vmatpush1.bf16.msra.mxu0 0
    %8722 = vmatprep.subr.bf16.mxu0 0
    %8723 = vmatpush1.bf16.msra.mxu0 0
    %8724 = vmatprep.subr.bf16.mxu0 0
    %8725 = vmatpush1.bf16.msra.mxu0 0
    %8726 = vmatprep.subr.bf16.mxu0 0
    %8727 = vmatpush1.bf16.msra.mxu0 0
    %8728 = vmatprep.mubr.bf16.mxu0 %v8601
    %8729 = vmatmul.mubr.bf16.gmra.mrb[0].mxu0 %v8457
    %v8730 = vpop.f32.mrb[0].mxu0
    %v8731 = vadd.f32 %v8544, %v8730
    %v8732 = vpop.f32.mrb[0].mxu0
    %v8733 = vpop.f32.mrb[0].mxu0
    %v8734 = vadd.f32 %v8544, %v8733
    %v8735 = vpop.f32.mrb[0].mxu0
    %8736 = vmatprep.mubr.bf16.mxu0 %v8604
    %8737 = vmatmul.mubr.bf16.gmra.mrb[0].mxu0 %v8459
    %v8738 = vpop.f32.mrb[0].mxu0
    %v8739 = vadd.f32 %v8544, %v8738
    %v8740 = vpop.f32.mrb[0].mxu0
    %v8741 = vpop.f32.mrb[0].mxu0
    %v8742 = vadd.f32 %v8544, %v8741
    %v8743 = vpop.f32.mrb[0].mxu0
    %8744 = vmatprep.mubr.bf16.mxu0 %v8607
    %8745 = vmatmul.mubr.bf16.gmra.mrb[0].mxu0 %v8461
    %v8746 = vpop.f32.mrb[0].mxu0
    %v8747 = vadd.f32 %v8544, %v8746
    %v8748 = vpop.f32.mrb[0].mxu0
    %v8749 = vpop.f32.mrb[0].mxu0
    %v8750 = vadd.f32 %v8544, %v8749
    %v8751 = vpop.f32.mrb[0].mxu0
    %8752 = vmatprep.mubr.bf16.mxu0 %v8610
    %8753 = vmatmul.mubr.bf16.gmra.mrb[0].mxu0 %v8463
    %v8754 = vpop.f32.mrb[0].mxu0
    %v8755 = vadd.f32 %v8544, %v8754
    %v8756 = vpop.f32.mrb[0].mxu0
    %v8757 = vpop.f32.mrb[0].mxu0
    %v8758 = vadd.f32 %v8544, %v8757
    %v8759 = vpop.f32.mrb[0].mxu0
    %8760 = vmatprep.mubr.bf16.mxu0 %v8613
    %8761 = vmatmul.mubr.bf16.gmra.mrb[0].mxu0 %v8465
    %v8762 = vpop.f32.mrb[0].mxu0
    %v8763 = vadd.f32 %v8544, %v8762
    %v8764 = vpop.f32.mrb[0].mxu0
    %v8765 = vpop.f32.mrb[0].mxu0
    %v8766 = vadd.f32 %v8544, %v8765
    %v8767 = vpop.f32.mrb[0].mxu0
    %8768 = vmatprep.mubr.bf16.mxu0 %v8616
    %8769 = vmatmul.mubr.bf16.gmra.mrb[0].mxu0 %v8467
    %v8770 = vpop.f32.mrb[0].mxu0
    %v8771 = vadd.f32 %v8544, %v8770
    %v8772 = vpop.f32.mrb[0].mxu0
    %v8773 = vpop.f32.mrb[0].mxu0
    %v8774 = vadd.f32 %v8544, %v8773
    %v8775 = vpop.f32.mrb[0].mxu0
    %8776 = vmatprep.mubr.bf16.mxu0 %v8619
    %8777 = vmatmul.mubr.bf16.gmra.mrb[0].mxu0 %v8469
    %v8778 = vpop.f32.mrb[0].mxu0
    %v8779 = vadd.f32 %v8544, %v8778
    %v8780 = vpop.f32.mrb[0].mxu0
    %v8781 = vpop.f32.mrb[0].mxu0
    %v8782 = vadd.f32 %v8544, %v8781
    %v8783 = vpop.f32.mrb[0].mxu0
    %8784 = vmatprep.mubr.bf16.mxu0 %v8622
    %8785 = vmatmul.mubr.bf16.gmra.mrb[0].mxu0 %v8471
    %v8786 = vpop.f32.mrb[0].mxu0
    %v8787 = vadd.f32 %v8544, %v8786
    %v8788 = vpop.f32.mrb[0].mxu0
    %v8789 = vpop.f32.mrb[0].mxu0
    %v8790 = vadd.f32 %v8544, %v8789
    %v8791 = vpop.f32.mrb[0].mxu0
    %8792 = vmatprep.mubr.bf16.mxu0 %v8625
    %8793 = vmatmul.mubr.bf16.gmra.mrb[0].mxu0 %v8473
    %v8794 = vpop.f32.mrb[0].mxu0
    %v8795 = vadd.f32 %v8544, %v8794
    %v8796 = vpop.f32.mrb[0].mxu0
    %v8797 = vpop.f32.mrb[0].mxu0
    %v8798 = vadd.f32 %v8544, %v8797
    %v8799 = vpop.f32.mrb[0].mxu0
    %8800 = vmatprep.mubr.bf16.mxu0 %v8628
    %8801 = vmatmul.mubr.bf16.gmra.mrb[0].mxu0 %v8475
    %v8802 = vpop.f32.mrb[0].mxu0
    %v8803 = vadd.f32 %v8544, %v8802
    %v8804 = vpop.f32.mrb[0].mxu0
    %v8805 = vpop.f32.mrb[0].mxu0
    %v8806 = vadd.f32 %v8544, %v8805
    %v8807 = vpop.f32.mrb[0].mxu0
    %8808 = vmatprep.mubr.bf16.mxu0 %v8631
    %8809 = vmatmul.mubr.bf16.gmra.mrb[0].mxu0 %v8477
    %v8810 = vpop.f32.mrb[0].mxu0
    %v8811 = vadd.f32 %v8544, %v8810
    %v8812 = vpop.f32.mrb[0].mxu0
    %v8813 = vpop.f32.mrb[0].mxu0
    %v8814 = vadd.f32 %v8544, %v8813
    %v8815 = vpop.f32.mrb[0].mxu0
    %8816 = vmatprep.mubr.bf16.mxu0 %v8634
    %8817 = vmatmul.mubr.bf16.gmra.mrb[0].mxu0 %v8479
    %v8818 = vpop.f32.mrb[0].mxu0
    %v8819 = vadd.f32 %v8544, %v8818
    %v8820 = vpop.f32.mrb[0].mxu0
    %v8821 = vpop.f32.mrb[0].mxu0
    %v8822 = vadd.f32 %v8544, %v8821
    %v8823 = vpop.f32.mrb[0].mxu0
    %8824 = vmatprep.mubr.bf16.mxu0 %v8637
    %8825 = vmatmul.mubr.bf16.gmra.mrb[0].mxu0 %v8481
    %v8826 = vpop.f32.mrb[0].mxu0
    %v8827 = vadd.f32 %v8544, %v8826
    %v8828 = vpop.f32.mrb[0].mxu0
    %v8829 = vpop.f32.mrb[0].mxu0
    %v8830 = vadd.f32 %v8544, %v8829
    %v8831 = vpop.f32.mrb[0].mxu0
    %8832 = vmatprep.mubr.bf16.mxu0 %v8640
    %8833 = vmatmul.mubr.bf16.gmra.mrb[0].mxu0 %v8483
    %v8834 = vpop.f32.mrb[0].mxu0
    %v8835 = vadd.f32 %v8544, %v8834
    %v8836 = vpop.f32.mrb[0].mxu0
    %v8837 = vpop.f32.mrb[0].mxu0
    %v8838 = vadd.f32 %v8544, %v8837
    %v8839 = vpop.f32.mrb[0].mxu0
    %8840 = vmatprep.mubr.bf16.mxu0 %v8643
    %8841 = vmatmul.mubr.bf16.gmra.mrb[0].mxu0 %v8485
    %v8842 = vpop.f32.mrb[0].mxu0
    %v8843 = vadd.f32 %v8544, %v8842
    %v8844 = vpop.f32.mrb[0].mxu0
    %v8845 = vpop.f32.mrb[0].mxu0
    %v8846 = vadd.f32 %v8544, %v8845
    %v8847 = vpop.f32.mrb[0].mxu0
    %8848 = vmatprep.mubr.bf16.mxu0 %v8646
    %8849 = vmatmul.mubr.bf16.gmra.mrb[0].mxu0 %v8487
    %v8850 = vpop.f32.mrb[0].mxu0
    %v8851 = vadd.f32 %v8544, %v8850
    %v8852 = vpop.f32.mrb[0].mxu0
    %v8853 = vpop.f32.mrb[0].mxu0
    %v8854 = vadd.f32 %v8544, %v8853
    %v8855 = vpop.f32.mrb[0].mxu0
    %8856 = vmatprep.mubr.bf16.mxu0 %v8649
    %8857 = vmatmul.mubr.bf16.gmra.mrb[0].mxu0 %v8489
    %v8858 = vpop.f32.mrb[0].mxu0
    %v8859 = vadd.f32 %v8544, %v8858
    %v8860 = vpop.f32.mrb[0].mxu0
    %v8861 = vpop.f32.mrb[0].mxu0
    %v8862 = vadd.f32 %v8544, %v8861
    %v8863 = vpop.f32.mrb[0].mxu0
    %8864 = vmatprep.mubr.bf16.mxu0 %v8652
    %8865 = vmatmul.mubr.bf16.gmra.mrb[0].mxu0 %v8491
    %v8866 = vpop.f32.mrb[0].mxu0
    %v8867 = vadd.f32 %v8544, %v8866
    %v8868 = vpop.f32.mrb[0].mxu0
    %v8869 = vpop.f32.mrb[0].mxu0
    %v8870 = vadd.f32 %v8544, %v8869
    %v8871 = vpop.f32.mrb[0].mxu0
    %8872 = vmatprep.mubr.bf16.mxu0 %v8655
    %8873 = vmatmul.mubr.bf16.gmra.mrb[0].mxu0 %v8493
    %v8874 = vpop.f32.mrb[0].mxu0
    %v8875 = vadd.f32 %v8544, %v8874
    %v8876 = vpop.f32.mrb[0].mxu0
    %v8877 = vpop.f32.mrb[0].mxu0
    %v8878 = vadd.f32 %v8544, %v8877
    %v8879 = vpop.f32.mrb[0].mxu0
    %8880 = vmatprep.mubr.bf16.mxu0 %v8658
    %8881 = vmatmul.mubr.bf16.gmra.mrb[0].mxu0 %v8495
    %v8882 = vpop.f32.mrb[0].mxu0
    %v8883 = vadd.f32 %v8544, %v8882
    %v8884 = vpop.f32.mrb[0].mxu0
    %v8885 = vpop.f32.mrb[0].mxu0
    %v8886 = vadd.f32 %v8544, %v8885
    %v8887 = vpop.f32.mrb[0].mxu0
    %8888 = vmatprep.mubr.bf16.mxu0 %v8661
    %8889 = vmatmul.mubr.bf16.gmra.mrb[0].mxu0 %v8497
    %v8890 = vpop.f32.mrb[0].mxu0
    %v8891 = vadd.f32 %v8544, %v8890
    %v8892 = vpop.f32.mrb[0].mxu0
    %v8893 = vpop.f32.mrb[0].mxu0
    %v8894 = vadd.f32 %v8544, %v8893
    %v8895 = vpop.f32.mrb[0].mxu0
    %8896 = vmatprep.mubr.bf16.mxu0 %v8664
    %8897 = vmatmul.mubr.bf16.gmra.mrb[0].mxu0 %v8499
    %v8898 = vpop.f32.mrb[0].mxu0
    %v8899 = vadd.f32 %v8544, %v8898
    %v8900 = vpop.f32.mrb[0].mxu0
    %v8901 = vpop.f32.mrb[0].mxu0
    %v8902 = vadd.f32 %v8544, %v8901
    %v8903 = vpop.f32.mrb[0].mxu0
    %8904 = vmatprep.mubr.bf16.mxu0 %v8667
    %8905 = vmatmul.mubr.bf16.gmra.mrb[0].mxu0 %v8501
    %v8906 = vpop.f32.mrb[0].mxu0
    %v8907 = vadd.f32 %v8544, %v8906
    %v8908 = vpop.f32.mrb[0].mxu0
    %v8909 = vpop.f32.mrb[0].mxu0
    %v8910 = vadd.f32 %v8544, %v8909
    %v8911 = vpop.f32.mrb[0].mxu0
    %8912 = vmatprep.mubr.bf16.mxu0 %v8670
    %8913 = vmatmul.mubr.bf16.gmra.mrb[0].mxu0 %v8503
    %v8914 = vpop.f32.mrb[0].mxu0
    %v8915 = vadd.f32 %v8544, %v8914
    %v8916 = vpop.f32.mrb[0].mxu0
    %v8917 = vpop.f32.mrb[0].mxu0
    %v8918 = vadd.f32 %v8544, %v8917
    %v8919 = vpop.f32.mrb[0].mxu0
    %8920 = vmatprep.mubr.bf16.mxu0 %v8673
    %8921 = vmatmul.mubr.bf16.gmra.mrb[0].mxu0 %v8505
    %v8922 = vpop.f32.mrb[0].mxu0
    %v8923 = vadd.f32 %v8544, %v8922
    %v8924 = vpop.f32.mrb[0].mxu0
    %v8925 = vpop.f32.mrb[0].mxu0
    %v8926 = vadd.f32 %v8544, %v8925
    %v8927 = vpop.f32.mrb[0].mxu0
    %8928 = vmatprep.mubr.bf16.mxu0 %v8676
    %8929 = vmatmul.mubr.bf16.gmra.mrb[0].mxu0 %v8507
    %v8930 = vpop.f32.mrb[0].mxu0
    %v8931 = vadd.f32 %v8544, %v8930
    %v8932 = vpop.f32.mrb[0].mxu0
    %v8933 = vpop.f32.mrb[0].mxu0
    %v8934 = vadd.f32 %v8544, %v8933
    %v8935 = vpop.f32.mrb[0].mxu0
    %8936 = vmatprep.mubr.bf16.mxu0 %v8679
    %8937 = vmatmul.mubr.bf16.gmra.mrb[0].mxu0 %v8509
    %v8938 = vpop.f32.mrb[0].mxu0
    %v8939 = vadd.f32 %v8544, %v8938
    %v8940 = vpop.f32.mrb[0].mxu0
    %v8941 = vpop.f32.mrb[0].mxu0
    %v8942 = vadd.f32 %v8544, %v8941
    %v8943 = vpop.f32.mrb[0].mxu0
    %8944 = vmatprep.mubr.bf16.mxu0 %v8682
    %8945 = vmatmul.mubr.bf16.gmra.mrb[0].mxu0 %v8511
    %v8946 = vpop.f32.mrb[0].mxu0
    %v8947 = vadd.f32 %v8544, %v8946
    %v8948 = vpop.f32.mrb[0].mxu0
    %v8949 = vpop.f32.mrb[0].mxu0
    %v8950 = vadd.f32 %v8544, %v8949
    %v8951 = vpop.f32.mrb[0].mxu0
    %8952 = vmatprep.mubr.bf16.mxu0 %v8685
    %8953 = vmatmul.mubr.bf16.gmra.mrb[0].mxu0 %v8513
    %v8954 = vpop.f32.mrb[0].mxu0
    %v8955 = vadd.f32 %v8544, %v8954
    %v8956 = vpop.f32.mrb[0].mxu0
    %v8957 = vpop.f32.mrb[0].mxu0
    %v8958 = vadd.f32 %v8544, %v8957
    %v8959 = vpop.f32.mrb[0].mxu0
    %8960 = vmatprep.mubr.bf16.mxu0 %v8688
    %8961 = vmatmul.mubr.bf16.gmra.mrb[0].mxu0 %v8515
    %v8962 = vpop.f32.mrb[0].mxu0
    %v8963 = vadd.f32 %v8544, %v8962
    %v8964 = vpop.f32.mrb[0].mxu0
    %v8965 = vpop.f32.mrb[0].mxu0
    %v8966 = vadd.f32 %v8544, %v8965
    %v8967 = vpop.f32.mrb[0].mxu0
    %8968 = vmatprep.mubr.bf16.mxu0 %v8691
    %8969 = vmatmul.mubr.bf16.gmra.mrb[0].mxu0 %v8517
    %v8970 = vpop.f32.mrb[0].mxu0
    %v8971 = vadd.f32 %v8544, %v8970
    %v8972 = vpop.f32.mrb[0].mxu0
    %v8973 = vpop.f32.mrb[0].mxu0
    %v8974 = vadd.f32 %v8544, %v8973
    %v8975 = vpop.f32.mrb[0].mxu0
    %8976 = vmatprep.mubr.bf16.mxu0 %v8694
    %8977 = vmatmul.mubr.bf16.gmra.mrb[0].mxu0 %v8519
    %v8978 = vpop.f32.mrb[0].mxu0
    %v8979 = vadd.f32 %v8544, %v8978
    %v8980 = vpop.f32.mrb[0].mxu0
    %v8981 = vpop.f32.mrb[0].mxu0
    %v8982 = vadd.f32 %v8544, %v8981
    %v8983 = vpop.f32.mrb[0].mxu0
    %8984 = vdwg.mxu0
    %v8985 = vmax.f32 %v8731, 0.0
    %v8986 = vmax.f32 %v8734, 0.0
    %v8987 = vmax.f32 %v8739, 0.0
    %v8988 = vmax.f32 %v8742, 0.0
    %v8989 = vmax.f32 %v8747, 0.0
    %v8990 = vmax.f32 %v8750, 0.0
    %v8991 = vmax.f32 %v8755, 0.0
    %v8992 = vmax.f32 %v8758, 0.0
    %v8993 = vmax.f32 %v8763, 0.0
    %v8994 = vmax.f32 %v8766, 0.0
    %v8995 = vmax.f32 %v8771, 0.0
    %v8996 = vmax.f32 %v8774, 0.0
    %v8997 = vmax.f32 %v8779, 0.0
    %v8998 = vmax.f32 %v8782, 0.0
    %v8999 = vmax.f32 %v8787, 0.0
    %v9000 = vmax.f32 %v8790, 0.0
    %v9001 = vmax.f32 %v8795, 0.0
    %v9002 = vmax.f32 %v8798, 0.0
    %v9003 = vmax.f32 %v8803, 0.0
    %v9004 = vmax.f32 %v8806, 0.0
    %v9005 = vmax.f32 %v8811, 0.0
    %v9006 = vmax.f32 %v8814, 0.0
    %v9007 = vmax.f32 %v8819, 0.0
    %v9008 = vmax.f32 %v8822, 0.0
    %v9009 = vmax.f32 %v8827, 0.0
    %v9010 = vmax.f32 %v8830, 0.0
    %v9011 = vmax.f32 %v8835, 0.0
    %v9012 = vmax.f32 %v8838, 0.0
    %v9013 = vmax.f32 %v8843, 0.0
    %v9014 = vmax.f32 %v8846, 0.0
    %v9015 = vmax.f32 %v8851, 0.0
    %v9016 = vmax.f32 %v8854, 0.0
    %v9017 = vmax.f32 %v8859, 0.0
    %v9018 = vmax.f32 %v8862, 0.0
    %v9019 = vmax.f32 %v8867, 0.0
    %v9020 = vmax.f32 %v8870, 0.0
    %v9021 = vmax.f32 %v8875, 0.0
    %v9022 = vmax.f32 %v8878, 0.0
    %v9023 = vmax.f32 %v8883, 0.0
    %v9024 = vmax.f32 %v8886, 0.0
    %v9025 = vmax.f32 %v8891, 0.0
    %v9026 = vmax.f32 %v8894, 0.0
    %v9027 = vmax.f32 %v8899, 0.0
    %v9028 = vmax.f32 %v8902, 0.0
    %v9029 = vmax.f32 %v8907, 0.0
    %v9030 = vmax.f32 %v8910, 0.0
    %v9031 = vmax.f32 %v8915, 0.0
    %v9032 = vmax.f32 %v8918, 0.0
    %v9033 = vmax.f32 %v8923, 0.0
    %v9034 = vmax.f32 %v8926, 0.0
    %v9035 = vmax.f32 %v8931, 0.0
    %v9036 = vmax.f32 %v8934, 0.0
    %v9037 = vmax.f32 %v8939, 0.0
    %v9038 = vmax.f32 %v8942, 0.0
    %v9039 = vmax.f32 %v8947, 0.0
    %v9040 = vmax.f32 %v8950, 0.0
    %v9041 = vmax.f32 %v8955, 0.0
    %v9042 = vmax.f32 %v8958, 0.0
    %v9043 = vmax.f32 %v8963, 0.0
    %v9044 = vmax.f32 %v8966, 0.0
    %v9045 = vmax.f32 %v8971, 0.0
    %v9046 = vmax.f32 %v8974, 0.0
    %v9047 = vmax.f32 %v8979, 0.0
    %v9048 = vmax.f32 %v8982, 0.0
    %9049 = vst [vmem:[#allocation9] sm:$0xff] %v8985
    %9050 = vst [vmem:[#allocation9 + $0x8] sm:$0xff] %v8986
    %9051 = vst [vmem:[#allocation9 + $0x10] sm:$0xff] %v8987
    %9052 = vst [vmem:[#allocation9 + $0x18] sm:$0xff] %v8988
    %9053 = vst [vmem:[#allocation9 + $0x20] sm:$0xff] %v8989
    %9054 = vst [vmem:[#allocation9 + $0x28] sm:$0xff] %v8990
    %9055 = vst [vmem:[#allocation9 + $0x30] sm:$0xff] %v8991
    %9056 = vst [vmem:[#allocation9 + $0x38] sm:$0xff] %v8992
    %9057 = vst [vmem:[#allocation9 + $0x40] sm:$0xff] %v8993
    %9058 = vst [vmem:[#allocation9 + $0x48] sm:$0xff] %v8994
    %9059 = vst [vmem:[#allocation9 + $0x50] sm:$0xff] %v8995
    %9060 = vst [vmem:[#allocation9 + $0x58] sm:$0xff] %v8996
    %9061 = vst [vmem:[#allocation9 + $0x60] sm:$0xff] %v8997
    %9062 = vst [vmem:[#allocation9 + $0x68] sm:$0xff] %v8998
    %9063 = vst [vmem:[#allocation9 + $0x70] sm:$0xff] %v8999
    %9064 = vst [vmem:[#allocation9 + $0x78] sm:$0xff] %v9000
    %9065 = vst [vmem:[#allocation9 + $0x80] sm:$0xff] %v9001
    %9066 = vst [vmem:[#allocation9 + $0x88] sm:$0xff] %v9002
    %9067 = vst [vmem:[#allocation9 + $0x90] sm:$0xff] %v9003
    %9068 = vst [vmem:[#allocation9 + $0x98] sm:$0xff] %v9004
    %9069 = vst [vmem:[#allocation9 + $0xa0] sm:$0xff] %v9005
    %9070 = vst [vmem:[#allocation9 + $0xa8] sm:$0xff] %v9006
    %9071 = vst [vmem:[#allocation9 + $0xb0] sm:$0xff] %v9007
    %9072 = vst [vmem:[#allocation9 + $0xb8] sm:$0xff] %v9008
    %9073 = vst [vmem:[#allocation9 + $0xc0] sm:$0xff] %v9009
    %9074 = vst [vmem:[#allocation9 + $0xc8] sm:$0xff] %v9010
    %9075 = vst [vmem:[#allocation9 + $0xd0] sm:$0xff] %v9011
    %9076 = vst [vmem:[#allocation9 + $0xd8] sm:$0xff] %v9012
    %9077 = vst [vmem:[#allocation9 + $0xe0] sm:$0xff] %v9013
    %9078 = vst [vmem:[#allocation9 + $0xe8] sm:$0xff] %v9014
    %9079 = vst [vmem:[#allocation9 + $0xf0] sm:$0xff] %v9015
    %9080 = vst [vmem:[#allocation9 + $0xf8] sm:$0xff] %v9016
    %9081 = vst [vmem:[#allocation9 + $0x100] sm:$0xff] %v9017
    %9082 = vst [vmem:[#allocation9 + $0x108] sm:$0xff] %v9018
    %9083 = vst [vmem:[#allocation9 + $0x110] sm:$0xff] %v9019
    %9084 = vst [vmem:[#allocation9 + $0x118] sm:$0xff] %v9020
    %9085 = vst [vmem:[#allocation9 + $0x120] sm:$0xff] %v9021
    %9086 = vst [vmem:[#allocation9 + $0x128] sm:$0xff] %v9022
    %9087 = vst [vmem:[#allocation9 + $0x130] sm:$0xff] %v9023
    %9088 = vst [vmem:[#allocation9 + $0x138] sm:$0xff] %v9024
    %9089 = vst [vmem:[#allocation9 + $0x140] sm:$0xff] %v9025
    %9090 = vst [vmem:[#allocation9 + $0x148] sm:$0xff] %v9026
    %9091 = vst [vmem:[#allocation9 + $0x150] sm:$0xff] %v9027
    %9092 = vst [vmem:[#allocation9 + $0x158] sm:$0xff] %v9028
    %9093 = vst [vmem:[#allocation9 + $0x160] sm:$0xff] %v9029
    %9094 = vst [vmem:[#allocation9 + $0x168] sm:$0xff] %v9030
    %9095 = vst [vmem:[#allocation9 + $0x170] sm:$0xff] %v9031
    %9096 = vst [vmem:[#allocation9 + $0x178] sm:$0xff] %v9032
    %9097 = vst [vmem:[#allocation9 + $0x180] sm:$0xff] %v9033
    %9098 = vst [vmem:[#allocation9 + $0x188] sm:$0xff] %v9034
    %9099 = vst [vmem:[#allocation9 + $0x190] sm:$0xff] %v9035
    %9100 = vst [vmem:[#allocation9 + $0x198] sm:$0xff] %v9036
    %9101 = vst [vmem:[#allocation9 + $0x1a0] sm:$0xff] %v9037
    %9102 = vst [vmem:[#allocation9 + $0x1a8] sm:$0xff] %v9038
    %9103 = vst [vmem:[#allocation9 + $0x1b0] sm:$0xff] %v9039
    %9104 = vst [vmem:[#allocation9 + $0x1b8] sm:$0xff] %v9040
    %9105 = vst [vmem:[#allocation9 + $0x1c0] sm:$0xff] %v9041
    %9106 = vst [vmem:[#allocation9 + $0x1c8] sm:$0xff] %v9042
    %9107 = vst [vmem:[#allocation9 + $0x1d0] sm:$0xff] %v9043
    %9108 = vst [vmem:[#allocation9 + $0x1d8] sm:$0xff] %v9044
    %9109 = vst [vmem:[#allocation9 + $0x1e0] sm:$0xff] %v9045
    %9110 = vst [vmem:[#allocation9 + $0x1e8] sm:$0xff] %v9046
    %9111 = vst [vmem:[#allocation9 + $0x1f0] sm:$0xff] %v9047
    %9112 = vst [vmem:[#allocation9 + $0x1f8] sm:$0xff] %v9048
    // Predicated region
    $region26: #{tpu_custom_call.1} parent=1 // pred_check
      _
    $region27: #{tpu_custom_call.1} parent=1 // pred_check_branch
      %9114 = sbr.rel (0) target = $region29
    $region28: #{tpu_custom_call.1} parent=1 // pred_region
      %s9116 = ssub.s32 8192, 8192
      %9117 = vsyncadd [#allocation8], %s9116
      %s9118 = sshll.u32 [#allocation9], 4
      %s9119 = int_to_ptr.vmem [resolvable:$true] %s9118
      %9124 = dma.vmem_to_hbm [thread:$0]  %s9119, 8192, %s5, [#allocation8], 128, 128, 8
    $region29: #{tpu_custom_call.1} parent=1 // pred_fallthru
      _
    // Predicated region
    $region30: #{tpu_custom_call.1} parent=1 // pred_check
      _
    $region31: #{tpu_custom_call.1} parent=1 // pred_check_branch
      %9126 = sbr.rel (0) target = $region33
    $region32: #{tpu_custom_call.1} parent=1 // pred_region
      %9127 = dma.done [#allocation8], 8192
    $region33: #{tpu_custom_call.1} parent=1 // pred_fallthru
      _
    %9128 = vsyncpa [#allocation7], 1
    %9129 = vsyncpa [#allocation8], 1

</llo_original>
